<compile_context>
chip_gen: v5e
topology: v5e:2x2
jax: 0.10.0
libtpu: 0.0.40
codegen_flags: <defaults>
</compile_context>

<pallas_src>
import jax
import jax.numpy as jnp
from jax import lax
from jax.experimental import pallas as pl
from jax.experimental.pallas import tpu as pltpu

N_MELS = 16
HIDDEN = 128
LANES = 128   # conv1 output padded to 128 lanes (lane-aligned concat downstream)


def _vmem():
    return pl.BlockSpec(memory_space=pltpu.MemorySpace.VMEM)


def _sigmoid(x):
    # 1/(1+exp(-x)) == 0.5*tanh(0.5*x)+0.5 : transcendental stays on the EUP,
    # no full-precision divide on the VALU.
    return 0.5 * jnp.tanh(0.5 * x) + 0.5


# ----------------------------------------------------------------------------
# Single fused Pallas kernel
# ----------------------------------------------------------------------------
def fused_forward_kernel(
    # conv block 1: pool-member-stacked im2col patches + packed weights
    p1_ref, w1_ref, b1_ref,
    # conv block 2: stacked row-selection matrix + kh-folded weights
    tsel_ref, w2k_ref, b2_ref,
    # LSTM layer 1 (gate cols per direction: i,f,o,g ; [fwd | bwd])
    wih1_ref, whh1_ref, bl1_ref,
    # LSTM layer 2
    wih2_ref, whh2_ref, bl2_ref,
    # FC head (output projection zero-padded to 128 lanes)
    fc1_ref, fc1b_ref, fc2_ref, fc2b_ref, ow_ref, ob_ref,
    # output (T*8, 128)
    o_ref,
    # scratch: hoisted gate projections + per-layer fwd/bwd hidden sequences
    gx_ref, hf1_ref, hb1_ref, hf2_ref, hb2_ref,
):
    HID = HIDDEN
    tp8 = hf1_ref.shape[0]               # T * 8  (rows = t*8 + b, b < B real)
    t_steps = tp8 // 8
    bh2 = p1_ref.shape[0] // 4           # B * H/2

    # ---- conv1 (3x3, pad 1) + ReLU + maxpool(2): ONE matmul ------------------
    flat = jnp.maximum(
        jnp.dot(p1_ref[...], w1_ref[...], preferred_element_type=jnp.float32)
        + b1_ref[...], 0.0)                               # (4*B*h2, 128)
    y1 = jnp.maximum(jnp.maximum(flat[0:bh2, :], flat[bh2:2 * bh2, :]),
                     jnp.maximum(flat[2 * bh2:3 * bh2, :], flat[3 * bh2:4 * bh2, :]))
    # y1: (B*h2, 128)  rows = (b, h), lanes = (w, c) real in [0:64], zeros above

    # ---- conv2 (3x3, pad 1) + ReLU + maxpool(2) -------------------------------
    # ONE stacked selection matmul (height taps + pool members + zero padding +
    # (b,t) row reordering), then per pool member (dh,dw) one K=384 matmul with
    # the 3 kh taps folded into the contraction (lane-aligned 128-wide blocks).
    b2 = b2_ref[...]
    U = jnp.dot(tsel_ref[...], y1, preferred_element_type=jnp.float32)  # (6*T*8, 128)
    seq = None
    for dh in range(2):
        base = dh * 3 * tp8
        L = jnp.concatenate(
            [U[base:base + tp8, :],
             U[base + tp8:base + 2 * tp8, :],
             U[base + 2 * tp8:base + 3 * tp8, :]], axis=1)               # (T*8, 384)
        for dw in range(2):
            v = jnp.maximum(
                jnp.dot(L, w2k_ref[dw], preferred_element_type=jnp.float32) + b2, 0.0)
            seq = v if seq is None else jnp.maximum(seq, v)
    # seq: (T*8, 64); padded batch rows carry relu(conv2_bias) garbage -- harmless,
    # every downstream op is row-independent and the wrapper slices them off.

    # ---- one bidirectional LSTM layer (both directions, one matmul / step) ---
    def bi_lstm_layer(whh_ref, hf_ref, hb_ref):
        whh = whh_ref[...]                                 # (256, 1024) block-diag
        h_cat = jnp.zeros((8, 2 * HID), jnp.float32)       # [h_f | h_b] lanes
        c_st = jnp.zeros((16, HID), jnp.float32)           # fwd rows 0:8, bwd 8:16
        # T is tiny (H/4) -> full unroll; use lax.fori_loop(unroll=2..4) for big T.
        for s in range(t_steps):
            tf = s
            tb = t_steps - 1 - s
            g_all = jnp.dot(h_cat, whh, preferred_element_type=jnp.float32)  # (8,1024)
            g_f = g_all[:, 0:4 * HID] + gx_ref[tf * 8:(tf + 1) * 8, 0:4 * HID]
            g_b = g_all[:, 4 * HID:8 * HID] + gx_ref[tb * 8:(tb + 1) * 8, 4 * HID:8 * HID]
            g_st = jnp.concatenate([g_f, g_b], axis=0)     # (16, 512), cols (i,f,o,g)
            sig = _sigmoid(g_st[:, 0:3 * HID])             # i | f | o   (one EUP slab)
            gg = jnp.tanh(g_st[:, 3 * HID:4 * HID])        # g
            c_st = sig[:, HID:2 * HID] * c_st + sig[:, 0:HID] * gg
            h_st = sig[:, 2 * HID:3 * HID] * jnp.tanh(c_st)          # (16, 128)
            h_f = h_st[0:8, :]
            h_b = h_st[8:16, :]
            hf_ref[tf * 8:(tf + 1) * 8, :] = h_f           # aligned (8,128) stores
            hb_ref[tb * 8:(tb + 1) * 8, :] = h_b
            h_cat = jnp.concatenate([h_f, h_b], axis=1)    # (8, 256) for next step

    # layer 1: hoisted input projection (all timesteps, both directions) -> VMEM
    gx_ref[...] = jnp.dot(seq, wih1_ref[...],
                          preferred_element_type=jnp.float32) + bl1_ref[...]
    bi_lstm_layer(whh1_ref, hf1_ref, hb1_ref)

    # layer 2: input = [fwd | bwd] of layer 1, one fused K=256 projection
    x2 = jnp.concatenate([hf1_ref[...], hb1_ref[...]], axis=1)       # (T*8, 256)
    gx_ref[...] = jnp.dot(x2, wih2_ref[...],
                          preferred_element_type=jnp.float32) + bl2_ref[...]
    bi_lstm_layer(whh2_ref, hf2_ref, hb2_ref)

    # ---- FC head: Linear(256->128)+ReLU, Linear(128->128)+ReLU, Linear(->16) -
    hcat = jnp.concatenate([hf2_ref[...], hb2_ref[...]], axis=1)     # (T*8, 256)
    h = jnp.maximum(
        jnp.dot(hcat, fc1_ref[...], preferred_element_type=jnp.float32)
        + fc1b_ref[...], 0.0)
    h = jnp.maximum(
        jnp.dot(h, fc2_ref[...], preferred_element_type=jnp.float32)
        + fc2b_ref[...], 0.0)
    # output projection zero-padded to 128 lanes -> lane-dense unmasked store
    o_ref[...] = (jnp.dot(h, ow_ref[...], preferred_element_type=jnp.float32)
                  + ob_ref[...])


# ----------------------------------------------------------------------------
# One-time weight packing (PyTorch layout -> fused-kernel layout)
# ----------------------------------------------------------------------------
def pack_params(params, batch, height, width):
    assert width == 4, "model requires W == 4 (LSTM input_size = 64 * W/4)"
    assert height % 4 == 0 and 1 <= batch <= 8
    h2, w2 = height // 2, width // 2            # conv1 pooled spatial, w2 == 2
    t_steps = height // 4
    H = HIDDEN

    # conv1: block-diagonal over output width, output lanes zero-padded to 128
    w1flat = jnp.transpose(params['conv1_w'], (2, 3, 1, 0)).reshape(9, 32)
    w1big = jnp.zeros((w2 * 9, LANES), jnp.float32)
    for wp in range(w2):
        w1big = w1big.at[wp * 9:(wp + 1) * 9, wp * 32:(wp + 1) * 32].set(w1flat)
    b1w = jnp.zeros((1, LANES), jnp.float32).at[0, :w2 * 32].set(
        jnp.tile(params['conv1_b'], (w2,)))

    # conv2: stacked 0/1 selection matrix (rows = (dh*3+kh)*T*8 + t*8 + b) and
    # kh-folded, width-folded weights (contraction blocks of 128 per kh).
    tsel = jnp.zeros((6 * t_steps * 8, batch * h2), jnp.float32)
    for dh in range(2):
        for kh in range(3):
            idx = dh * 3 + kh
            for t in range(t_steps):
                hp = 2 * t + dh + kh - 1
                if 0 <= hp < h2:
                    for bb in range(batch):
                        tsel = tsel.at[idx * t_steps * 8 + t * 8 + bb,
                                       bb * h2 + hp].set(1.0)
    w2t = params['conv2_w']                      # (64, 32, 3, 3)
    w2k = jnp.zeros((2, 3 * LANES, 64), jnp.float32)
    for dw in range(2):
        for kh in range(3):
            for wp in range(w2):
                kw = wp - dw + 1
                if 0 <= kw < 3:
                    w2k = w2k.at[dw, kh * LANES + wp * 32:kh * LANES + (wp + 1) * 32, :].set(
                        jnp.transpose(w2t[:, :, kh, kw], (1, 0)))
    b2row = params['conv2_b'].reshape(1, 64)

    # LSTM: gate columns reordered (i,f,g,o) -> (i,f,o,g); bias_ih+bias_hh folded;
    # Whh packed block-diagonally so one (8,256)x(256,1024) matmul serves both dirs.
    def reorder_cols(w_t):
        return jnp.concatenate([w_t[:, 0:2 * H], w_t[:, 3 * H:4 * H],
                                w_t[:, 2 * H:3 * H]], axis=1)

    def reorder_vec(b):
        return jnp.concatenate([b[0:2 * H], b[3 * H:4 * H], b[2 * H:3 * H]])

    def lstm_dir(layer, name):
        wih_t = reorder_cols(params[f'lstm_wih_l{layer}_{name}'].T)
        whh_t = reorder_cols(params[f'lstm_whh_l{layer}_{name}'].T)
        bias = reorder_vec(params[f'lstm_bih_l{layer}_{name}']
                           + params[f'lstm_bhh_l{layer}_{name}'])
        return wih_t, whh_t, bias

    def block_diag_whh(whh_f, whh_b):
        w = jnp.zeros((2 * H, 8 * H), jnp.float32)
        w = w.at[0:H, 0:4 * H].set(whh_f)
        w = w.at[H:2 * H, 4 * H:8 * H].set(whh_b)
        return w

    wih1f, whh1f, bf1 = lstm_dir(0, 'fwd')
    wih1b, whh1b, bb1 = lstm_dir(0, 'bwd')
    wih1 = jnp.concatenate([wih1f, wih1b], axis=1)            # (64, 1024)
    whh1 = block_diag_whh(whh1f, whh1b)                       # (256, 1024)
    bl1 = jnp.concatenate([bf1, bb1]).reshape(1, 8 * H)

    wih2f, whh2f, bf2 = lstm_dir(1, 'fwd')
    wih2b, whh2b, bb2 = lstm_dir(1, 'bwd')
    wih2 = jnp.concatenate([wih2f, wih2b], axis=1)            # (256, 1024)
    whh2 = block_diag_whh(whh2f, whh2b)
    bl2 = jnp.concatenate([bf2, bb2]).reshape(1, 8 * H)

    fc1t = params['fc1_w'].T                                  # (256, 128)
    fc1bias = params['fc1_b'].reshape(1, -1)
    fc2t = params['fc2_w'].T
    fc2bias = params['fc2_b'].reshape(1, -1)
    oww = jnp.zeros((H, H), jnp.float32).at[:, :N_MELS].set(params['out_w'].T)
    owb = jnp.zeros((1, H), jnp.float32).at[0, :N_MELS].set(params['out_b'])

    return (w1big, b1w, tsel, w2k, b2row,
            wih1, whh1, bl1, wih2, whh2, bl2,
            fc1t, fc1bias, fc2t, fc2bias, oww, owb)


# ----------------------------------------------------------------------------
# Forward wrapper (one pallas_call, no grid, everything VMEM-resident)
# ----------------------------------------------------------------------------
@jax.jit
def model_forward_pallas(x_nchw, packed):
    b, _, h, w = x_nchw.shape
    assert w == 4, "SpeakerSeparationModel forward requires input width == 4"
    assert h % 4 == 0 and 1 <= b <= 8
    h2, w2 = h // 2, w // 2
    t_steps = h // 4
    # packed-vs-runtime consistency (tsel bakes batch & height at pack time)
    assert packed[2].shape == (6 * t_steps * 8, b * h2), (
        "packed params were built for a different (batch, height)")

    # conv1 im2col patches stacked by 2x2 pool-window member (data movement on
    # the HBM input only; everything downstream stays in VMEM).
    x = jnp.transpose(x_nchw, (0, 2, 3, 1))                   # NHWC, cin = 1
    xp = jnp.pad(x, ((0, 0), (1, 1), (1, 1), (0, 0)))
    members = []
    for dh in range(2):
        for dw in range(2):
            taps = [xp[:, dh + kh:dh + kh + 2 * h2:2,
                        dw + kw:dw + kw + 2 * w2:2, 0]
                    for kh in range(3) for kw in range(3)]
            m = jnp.stack(taps, axis=-1)                      # (B, h2, w2, 9)
            members.append(m.reshape(b * h2, w2 * 9))
    p1 = jnp.concatenate(members, axis=0)                     # (4*B*h2, w2*9)

    n_in = 1 + len(packed)
    out_pad = pl.pallas_call(
        fused_forward_kernel,
        out_shape=jax.ShapeDtypeStruct((t_steps * 8, HIDDEN), jnp.float32),
        in_specs=[_vmem()] * n_in,
        out_specs=_vmem(),
        scratch_shapes=[
            pltpu.VMEM((t_steps * 8, 8 * HIDDEN), jnp.float32),   # gx (reused by both layers)
            pltpu.VMEM((t_steps * 8, HIDDEN), jnp.float32),        # hf1
            pltpu.VMEM((t_steps * 8, HIDDEN), jnp.float32),        # hb1
            pltpu.VMEM((t_steps * 8, HIDDEN), jnp.float32),        # hf2
            pltpu.VMEM((t_steps * 8, HIDDEN), jnp.float32),        # hb2
        ],
        compiler_params=pltpu.CompilerParams(
            vmem_limit_bytes=32 * 1024 * 1024,
            # allow the wrapper-side im2col (operand 0) to fuse into the kernel
            allow_input_fusion=[True] + [False] * (n_in - 1),
        ),
    )(p1, *packed)

    # drop row padding (b < 8 real rows) and lane padding (first N_MELS real)
    out = out_pad.reshape(t_steps, 8, HIDDEN)[:, :b, :N_MELS]
    return jnp.transpose(out, (1, 0, 2))                      # (B, T, N_MELS)


# ----------------------------------------------------------------------------
# Pure-JAX reference (mirrors the PyTorch forward exactly)
# ----------------------------------------------------------------------------
@jax.jit
def model_forward_ref(x_nchw, params):
    def conv(x, w, bias):
        y = lax.conv_general_dilated(x, w, (1, 1), 'SAME',
                                     dimension_numbers=('NCHW', 'OIHW', 'NCHW'))
        return y + bias.reshape(1, -1, 1, 1)

    def pool(x):
        return lax.reduce_window(x, -jnp.inf, lax.max, (1, 1, 2, 2), (1, 1, 2, 2), 'VALID')

    y = pool(jnp.maximum(conv(x_nchw, params['conv1_w'], params['conv1_b']), 0.0))
    y = pool(jnp.maximum(conv(y, params['conv2_w'], params['conv2_b']), 0.0))
    b, c, h4, w4 = y.shape
    seq = jnp.transpose(y, (0, 2, 1, 3)).reshape(b, h4, c * w4)

    def lstm_dir(x_btd, wih, whh, bih, bhh):
        hid = whh.shape[1]
        h = jnp.zeros((x_btd.shape[0], hid), jnp.float32)
        c_s = jnp.zeros_like(h)
        outs = []
        for t in range(x_btd.shape[1]):
            g = x_btd[:, t, :] @ wih.T + bih + h @ whh.T + bhh
            i_g = jax.nn.sigmoid(g[:, :hid])
            f_g = jax.nn.sigmoid(g[:, hid:2 * hid])
            g_g = jnp.tanh(g[:, 2 * hid:3 * hid])
            o_g = jax.nn.sigmoid(g[:, 3 * hid:])
            c_s = f_g * c_s + i_g * g_g
            h = o_g * jnp.tanh(c_s)
            outs.append(h)
        return jnp.stack(outs, axis=1)

    h_seq = seq
    for layer in range(2):
        fw = lstm_dir(h_seq, params[f'lstm_wih_l{layer}_fwd'], params[f'lstm_whh_l{layer}_fwd'],
                      params[f'lstm_bih_l{layer}_fwd'], params[f'lstm_bhh_l{layer}_fwd'])
        bw = lstm_dir(h_seq[:, ::-1, :], params[f'lstm_wih_l{layer}_bwd'],
                      params[f'lstm_whh_l{layer}_bwd'], params[f'lstm_bih_l{layer}_bwd'],
                      params[f'lstm_bhh_l{layer}_bwd'])[:, ::-1, :]
        h_seq = jnp.concatenate([fw, bw], axis=-1)

    h = jnp.maximum(h_seq @ params['fc1_w'].T + params['fc1_b'], 0.0)
    h = jnp.maximum(h @ params['fc2_w'].T + params['fc2_b'], 0.0)
    return h @ params['out_w'].T + params['out_b']


# ----------------------------------------------------------------------------
# Deterministic parameter init (PyTorch-layout weights)
# ----------------------------------------------------------------------------
def init_params(key):
    keys = iter(jax.random.split(key, 32))

    def nrm(shape, scale=0.05):
        return (scale * jax.random.normal(next(keys), shape)).astype(jnp.float32)

    p = {'conv1_w': nrm((32, 1, 3, 3)), 'conv1_b': nrm((32,)),
         'conv2_w': nrm((64, 32, 3, 3)), 'conv2_b': nrm((64,))}
    for layer, din in ((0, 64), (1, 2 * HIDDEN)):
        for name in ('fwd', 'bwd'):
            p[f'lstm_wih_l{layer}_{name}'] = nrm((4 * HIDDEN, din))
            p[f'lstm_whh_l{layer}_{name}'] = nrm((4 * HIDDEN, HIDDEN))
            p[f'lstm_bih_l{layer}_{name}'] = nrm((4 * HIDDEN,))
            p[f'lstm_bhh_l{layer}_{name}'] = nrm((4 * HIDDEN,))
    p['fc1_w'] = nrm((128, 256)); p['fc1_b'] = nrm((128,))
    p['fc2_w'] = nrm((128, 128)); p['fc2_b'] = nrm((128,))
    p['out_w'] = nrm((N_MELS, 128)); p['out_b'] = nrm((N_MELS,))
    return p


if __name__ == "__main__":
    key = jax.random.PRNGKey(0)
    k_x, k_p = jax.random.split(key)
    # (B, C=1, H, W) with W=4 so the LSTM sees feature dim 64 (module constraint).
    x = jax.random.normal(k_x, (2, 1, 16, 4), dtype=jnp.float32)
    params = init_params(k_p)

    packed = pack_params(params, batch=2, height=16, width=4)  # one-time pack

    out = jax.block_until_ready(model_forward_pallas(x, packed))
    ref = jax.block_until_ready(model_forward_ref(x, params))

    assert out.shape == (2, 4, N_MELS), out.shape
    assert bool(jnp.all(jnp.isfinite(out)))
    max_err = float(jnp.max(jnp.abs(out - ref)))
    assert max_err < 1e-2, f"mismatch vs reference: {max_err}"
    print("KERNEL_OK")
</pallas_src>

<mosaic_0001>
module attributes {stable_mosaic.version = 11 : i64} {
  func.func @fused_forward_kernel(%arg0: memref<64x18xf32, #tpu.memory_space<vmem>>, %arg1: memref<18x128xf32, #tpu.memory_space<vmem>>, %arg2: memref<1x128xf32, #tpu.memory_space<vmem>>, %arg3: memref<192x16xf32, #tpu.memory_space<vmem>>, %arg4: memref<2x384x64xf32, #tpu.memory_space<vmem>>, %arg5: memref<1x64xf32, #tpu.memory_space<vmem>>, %arg6: memref<64x1024xf32, #tpu.memory_space<vmem>>, %arg7: memref<256x1024xf32, #tpu.memory_space<vmem>>, %arg8: memref<1x1024xf32, #tpu.memory_space<vmem>>, %arg9: memref<256x1024xf32, #tpu.memory_space<vmem>>, %arg10: memref<256x1024xf32, #tpu.memory_space<vmem>>, %arg11: memref<1x1024xf32, #tpu.memory_space<vmem>>, %arg12: memref<256x128xf32, #tpu.memory_space<vmem>>, %arg13: memref<1x128xf32, #tpu.memory_space<vmem>>, %arg14: memref<128x128xf32, #tpu.memory_space<vmem>>, %arg15: memref<1x128xf32, #tpu.memory_space<vmem>>, %arg16: memref<128x128xf32, #tpu.memory_space<vmem>>, %arg17: memref<1x128xf32, #tpu.memory_space<vmem>>, %arg18: memref<32x128xf32, #tpu.memory_space<vmem>>, %arg19: memref<32x1024xf32, #tpu.memory_space<vmem>>, %arg20: memref<32x128xf32, #tpu.memory_space<vmem>>, %arg21: memref<32x128xf32, #tpu.memory_space<vmem>>, %arg22: memref<32x128xf32, #tpu.memory_space<vmem>>, %arg23: memref<32x128xf32, #tpu.memory_space<vmem>>) attributes {dimension_semantics = [], scalar_prefetch = 0 : i64, scratch_operands = 5 : i64, tpu.core_type = #tpu.core_type<tc>} {
    %c0 = arith.constant 0 : index
    %c0_0 = arith.constant 0 : index
    %0 = vector.load %arg0[%c0, %c0_0] : memref<64x18xf32, #tpu.memory_space<vmem>>, vector<64x18xf32>
    %c0_1 = arith.constant 0 : index
    %c0_2 = arith.constant 0 : index
    %1 = vector.load %arg1[%c0_1, %c0_2] : memref<18x128xf32, #tpu.memory_space<vmem>>, vector<18x128xf32>
    %cst = arith.constant dense<0.000000e+00> : vector<64x128xf32>
    %2 = tpu.matmul %0, %1, %cst {dimension_numbers = #tpu.dot_dimension_numbers<[1], [0], [0], [1], [0, 0, 1, 1], [], []>} : vector<64x18xf32>, vector<18x128xf32>, vector<64x128xf32> -> vector<64x128xf32>
    %c0_3 = arith.constant 0 : index
    %c0_4 = arith.constant 0 : index
    %3 = vector.load %arg2[%c0_3, %c0_4] : memref<1x128xf32, #tpu.memory_space<vmem>>, vector<1x128xf32>
    %4 = vector.broadcast %3 : vector<1x128xf32> to vector<64x128xf32>
    %5 = arith.addf %2, %4 : vector<64x128xf32>
    %cst_5 = arith.constant 0.000000e+00 : f32
    %6 = vector.broadcast %cst_5 : f32 to vector<64x128xf32>
    %7 = arith.maximumf %5, %6 : vector<64x128xf32>
    %8 = vector.extract_strided_slice %7 {offsets = [0, 0], sizes = [16, 128], strides = [1, 1]} : vector<64x128xf32> to vector<16x128xf32>
    %9 = vector.extract_strided_slice %7 {offsets = [16, 0], sizes = [16, 128], strides = [1, 1]} : vector<64x128xf32> to vector<16x128xf32>
    %10 = arith.maximumf %8, %9 : vector<16x128xf32>
    %11 = vector.extract_strided_slice %7 {offsets = [32, 0], sizes = [16, 128], strides = [1, 1]} : vector<64x128xf32> to vector<16x128xf32>
    %12 = vector.extract_strided_slice %7 {offsets = [48, 0], sizes = [16, 128], strides = [1, 1]} : vector<64x128xf32> to vector<16x128xf32>
    %13 = arith.maximumf %11, %12 : vector<16x128xf32>
    %14 = arith.maximumf %10, %13 : vector<16x128xf32>
    %c0_6 = arith.constant 0 : index
    %c0_7 = arith.constant 0 : index
    %15 = vector.load %arg5[%c0_6, %c0_7] : memref<1x64xf32, #tpu.memory_space<vmem>>, vector<1x64xf32>
    %c0_8 = arith.constant 0 : index
    %c0_9 = arith.constant 0 : index
    %16 = vector.load %arg3[%c0_8, %c0_9] : memref<192x16xf32, #tpu.memory_space<vmem>>, vector<192x16xf32>
    %cst_10 = arith.constant dense<0.000000e+00> : vector<192x128xf32>
    %17 = tpu.matmul %16, %14, %cst_10 {dimension_numbers = #tpu.dot_dimension_numbers<[1], [0], [0], [1], [0, 0, 1, 1], [], []>} : vector<192x16xf32>, vector<16x128xf32>, vector<192x128xf32> -> vector<192x128xf32>
    %18 = vector.extract_strided_slice %17 {offsets = [0, 0], sizes = [32, 128], strides = [1, 1]} : vector<192x128xf32> to vector<32x128xf32>
    %19 = vector.extract_strided_slice %17 {offsets = [32, 0], sizes = [32, 128], strides = [1, 1]} : vector<192x128xf32> to vector<32x128xf32>
    %20 = vector.extract_strided_slice %17 {offsets = [64, 0], sizes = [32, 128], strides = [1, 1]} : vector<192x128xf32> to vector<32x128xf32>
    %21 = tpu.concatenate %18, %19, %20 in 1 : vector<32x128xf32>, vector<32x128xf32>, vector<32x128xf32> -> vector<32x384xf32>
    %c0_11 = arith.constant 0 : index
    %c0_12 = arith.constant 0 : index
    %c0_13 = arith.constant 0 : index
    %22 = vector.load %arg4[%c0_11, %c0_12, %c0_13] : memref<2x384x64xf32, #tpu.memory_space<vmem>>, vector<1x384x64xf32>
    %23 = vector.shape_cast %22 : vector<1x384x64xf32> to vector<384x64xf32>
    %cst_14 = arith.constant dense<0.000000e+00> : vector<32x64xf32>
    %24 = tpu.matmul %21, %23, %cst_14 {dimension_numbers = #tpu.dot_dimension_numbers<[1], [0], [0], [1], [0, 0, 1, 1], [], []>} : vector<32x384xf32>, vector<384x64xf32>, vector<32x64xf32> -> vector<32x64xf32>
    %25 = vector.broadcast %15 : vector<1x64xf32> to vector<32x64xf32>
    %26 = arith.addf %24, %25 : vector<32x64xf32>
    %cst_15 = arith.constant 0.000000e+00 : f32
    %27 = vector.broadcast %cst_15 : f32 to vector<32x64xf32>
    %28 = arith.maximumf %26, %27 : vector<32x64xf32>
    %c1 = arith.constant 1 : index
    %c0_16 = arith.constant 0 : index
    %c0_17 = arith.constant 0 : index
    %29 = vector.load %arg4[%c1, %c0_16, %c0_17] : memref<2x384x64xf32, #tpu.memory_space<vmem>>, vector<1x384x64xf32>
    %30 = vector.shape_cast %29 : vector<1x384x64xf32> to vector<384x64xf32>
    %cst_18 = arith.constant dense<0.000000e+00> : vector<32x64xf32>
    %31 = tpu.matmul %21, %30, %cst_18 {dimension_numbers = #tpu.dot_dimension_numbers<[1], [0], [0], [1], [0, 0, 1, 1], [], []>} : vector<32x384xf32>, vector<384x64xf32>, vector<32x64xf32> -> vector<32x64xf32>
    %32 = vector.broadcast %15 : vector<1x64xf32> to vector<32x64xf32>
    %33 = arith.addf %31, %32 : vector<32x64xf32>
    %cst_19 = arith.constant 0.000000e+00 : f32
    %34 = vector.broadcast %cst_19 : f32 to vector<32x64xf32>
    %35 = arith.maximumf %33, %34 : vector<32x64xf32>
    %36 = arith.maximumf %28, %35 : vector<32x64xf32>
    %37 = vector.extract_strided_slice %17 {offsets = [96, 0], sizes = [32, 128], strides = [1, 1]} : vector<192x128xf32> to vector<32x128xf32>
    %38 = vector.extract_strided_slice %17 {offsets = [128, 0], sizes = [32, 128], strides = [1, 1]} : vector<192x128xf32> to vector<32x128xf32>
    %39 = vector.extract_strided_slice %17 {offsets = [160, 0], sizes = [32, 128], strides = [1, 1]} : vector<192x128xf32> to vector<32x128xf32>
    %40 = tpu.concatenate %37, %38, %39 in 1 : vector<32x128xf32>, vector<32x128xf32>, vector<32x128xf32> -> vector<32x384xf32>
    %c0_20 = arith.constant 0 : index
    %c0_21 = arith.constant 0 : index
    %c0_22 = arith.constant 0 : index
    %41 = vector.load %arg4[%c0_20, %c0_21, %c0_22] : memref<2x384x64xf32, #tpu.memory_space<vmem>>, vector<1x384x64xf32>
    %42 = vector.shape_cast %41 : vector<1x384x64xf32> to vector<384x64xf32>
    %cst_23 = arith.constant dense<0.000000e+00> : vector<32x64xf32>
    %43 = tpu.matmul %40, %42, %cst_23 {dimension_numbers = #tpu.dot_dimension_numbers<[1], [0], [0], [1], [0, 0, 1, 1], [], []>} : vector<32x384xf32>, vector<384x64xf32>, vector<32x64xf32> -> vector<32x64xf32>
    %44 = vector.broadcast %15 : vector<1x64xf32> to vector<32x64xf32>
    %45 = arith.addf %43, %44 : vector<32x64xf32>
    %cst_24 = arith.constant 0.000000e+00 : f32
    %46 = vector.broadcast %cst_24 : f32 to vector<32x64xf32>
    %47 = arith.maximumf %45, %46 : vector<32x64xf32>
    %48 = arith.maximumf %36, %47 : vector<32x64xf32>
    %c1_25 = arith.constant 1 : index
    %c0_26 = arith.constant 0 : index
    %c0_27 = arith.constant 0 : index
    %49 = vector.load %arg4[%c1_25, %c0_26, %c0_27] : memref<2x384x64xf32, #tpu.memory_space<vmem>>, vector<1x384x64xf32>
    %50 = vector.shape_cast %49 : vector<1x384x64xf32> to vector<384x64xf32>
    %cst_28 = arith.constant dense<0.000000e+00> : vector<32x64xf32>
    %51 = tpu.matmul %40, %50, %cst_28 {dimension_numbers = #tpu.dot_dimension_numbers<[1], [0], [0], [1], [0, 0, 1, 1], [], []>} : vector<32x384xf32>, vector<384x64xf32>, vector<32x64xf32> -> vector<32x64xf32>
    %52 = vector.broadcast %15 : vector<1x64xf32> to vector<32x64xf32>
    %53 = arith.addf %51, %52 : vector<32x64xf32>
    %cst_29 = arith.constant 0.000000e+00 : f32
    %54 = vector.broadcast %cst_29 : f32 to vector<32x64xf32>
    %55 = arith.maximumf %53, %54 : vector<32x64xf32>
    %56 = arith.maximumf %48, %55 : vector<32x64xf32>
    %c0_30 = arith.constant 0 : index
    %c0_31 = arith.constant 0 : index
    %57 = vector.load %arg6[%c0_30, %c0_31] : memref<64x1024xf32, #tpu.memory_space<vmem>>, vector<64x1024xf32>
    %cst_32 = arith.constant dense<0.000000e+00> : vector<32x1024xf32>
    %58 = tpu.matmul %56, %57, %cst_32 {dimension_numbers = #tpu.dot_dimension_numbers<[1], [0], [0], [1], [0, 0, 1, 1], [], []>} : vector<32x64xf32>, vector<64x1024xf32>, vector<32x1024xf32> -> vector<32x1024xf32>
    %c0_33 = arith.constant 0 : index
    %c0_34 = arith.constant 0 : index
    %59 = vector.load %arg8[%c0_33, %c0_34] : memref<1x1024xf32, #tpu.memory_space<vmem>>, vector<1x1024xf32>
    %60 = vector.broadcast %59 : vector<1x1024xf32> to vector<32x1024xf32>
    %61 = arith.addf %58, %60 : vector<32x1024xf32>
    %c0_35 = arith.constant 0 : index
    %c0_36 = arith.constant 0 : index
    %62 = vector.load %arg19[%c0_35, %c0_36] : memref<32x1024xf32, #tpu.memory_space<vmem>>, vector<32x1024xf32>
    tpu.vector_store %arg19[%c0_35, %c0_36], %61 {strides = array<i32>} : memref<32x1024xf32, #tpu.memory_space<vmem>>, vector<32x1024xf32>,
    %c0_37 = arith.constant 0 : index
    %c0_38 = arith.constant 0 : index
    %63 = vector.load %arg7[%c0_37, %c0_38] : memref<256x1024xf32, #tpu.memory_space<vmem>>, vector<256x1024xf32>
    %cst_39 = arith.constant 0.000000e+00 : f32
    %64 = vector.broadcast %cst_39 : f32 to vector<8x256xf32>
    %cst_40 = arith.constant 0.000000e+00 : f32
    %65 = vector.broadcast %cst_40 : f32 to vector<16x128xf32>
    %cst_41 = arith.constant dense<0.000000e+00> : vector<8x1024xf32>
    %66 = tpu.matmul %64, %63, %cst_41 {dimension_numbers = #tpu.dot_dimension_numbers<[1], [0], [0], [1], [0, 0, 1, 1], [], []>} : vector<8x256xf32>, vector<256x1024xf32>, vector<8x1024xf32> -> vector<8x1024xf32>
    %67 = vector.extract_strided_slice %66 {offsets = [0, 0], sizes = [8, 512], strides = [1, 1]} : vector<8x1024xf32> to vector<8x512xf32>
    %c0_42 = arith.constant 0 : index
    %c0_43 = arith.constant 0 : index
    %68 = vector.load %arg19[%c0_42, %c0_43] : memref<32x1024xf32, #tpu.memory_space<vmem>>, vector<8x512xf32>
    %69 = arith.addf %67, %68 : vector<8x512xf32>
    %70 = vector.extract_strided_slice %66 {offsets = [0, 512], sizes = [8, 512], strides = [1, 1]} : vector<8x1024xf32> to vector<8x512xf32>
    %c24 = arith.constant 24 : index
    %c512 = arith.constant 512 : index
    %71 = vector.load %arg19[%c24, %c512] : memref<32x1024xf32, #tpu.memory_space<vmem>>, vector<8x512xf32>
    %72 = arith.addf %70, %71 : vector<8x512xf32>
    %73 = tpu.concatenate %69, %72 in 0 : vector<8x512xf32>, vector<8x512xf32> -> vector<16x512xf32>
    %74 = vector.extract_strided_slice %73 {offsets = [0, 0], sizes = [16, 384], strides = [1, 1]} : vector<16x512xf32> to vector<16x384xf32>
    %cst_44 = arith.constant 5.000000e-01 : f32
    %75 = vector.broadcast %cst_44 : f32 to vector<16x384xf32>
    %76 = arith.mulf %75, %74 : vector<16x384xf32>
    %77 = math.tanh %76 : vector<16x384xf32>
    %cst_45 = arith.constant 5.000000e-01 : f32
    %78 = vector.broadcast %cst_45 : f32 to vector<16x384xf32>
    %79 = arith.mulf %78, %77 : vector<16x384xf32>
    %cst_46 = arith.constant 5.000000e-01 : f32
    %80 = vector.broadcast %cst_46 : f32 to vector<16x384xf32>
    %81 = arith.addf %79, %80 : vector<16x384xf32>
    %82 = vector.extract_strided_slice %73 {offsets = [0, 384], sizes = [16, 128], strides = [1, 1]} : vector<16x512xf32> to vector<16x128xf32>
    %83 = math.tanh %82 : vector<16x128xf32>
    %84 = vector.extract_strided_slice %81 {offsets = [0, 128], sizes = [16, 128], strides = [1, 1]} : vector<16x384xf32> to vector<16x128xf32>
    %85 = arith.mulf %84, %65 : vector<16x128xf32>
    %86 = vector.extract_strided_slice %81 {offsets = [0, 0], sizes = [16, 128], strides = [1, 1]} : vector<16x384xf32> to vector<16x128xf32>
    %87 = arith.mulf %86, %83 : vector<16x128xf32>
    %88 = arith.addf %85, %87 : vector<16x128xf32>
    %89 = vector.extract_strided_slice %81 {offsets = [0, 256], sizes = [16, 128], strides = [1, 1]} : vector<16x384xf32> to vector<16x128xf32>
    %90 = math.tanh %88 : vector<16x128xf32>
    %91 = arith.mulf %89, %90 : vector<16x128xf32>
    %92 = vector.extract_strided_slice %91 {offsets = [0, 0], sizes = [8, 128], strides = [1, 1]} : vector<16x128xf32> to vector<8x128xf32>
    %93 = vector.extract_strided_slice %91 {offsets = [8, 0], sizes = [8, 128], strides = [1, 1]} : vector<16x128xf32> to vector<8x128xf32>
    %c0_47 = arith.constant 0 : index
    %c0_48 = arith.constant 0 : index
    %94 = vector.load %arg20[%c0_47, %c0_48] : memref<32x128xf32, #tpu.memory_space<vmem>>, vector<8x128xf32>
    tpu.vector_store %arg20[%c0_47, %c0_48], %92 {strides = array<i32>} : memref<32x128xf32, #tpu.memory_space<vmem>>, vector<8x128xf32>,
    %c24_49 = arith.constant 24 : index
    %c0_50 = arith.constant 0 : index
    %95 = vector.load %arg21[%c24_49, %c0_50] : memref<32x128xf32, #tpu.memory_space<vmem>>, vector<8x128xf32>
    tpu.vector_store %arg21[%c24_49, %c0_50], %93 {strides = array<i32>} : memref<32x128xf32, #tpu.memory_space<vmem>>, vector<8x128xf32>,
    %96 = tpu.concatenate %92, %93 in 1 : vector<8x128xf32>, vector<8x128xf32> -> vector<8x256xf32>
    %cst_51 = arith.constant dense<0.000000e+00> : vector<8x1024xf32>
    %97 = tpu.matmul %96, %63, %cst_51 {dimension_numbers = #tpu.dot_dimension_numbers<[1], [0], [0], [1], [0, 0, 1, 1], [], []>} : vector<8x256xf32>, vector<256x1024xf32>, vector<8x1024xf32> -> vector<8x1024xf32>
    %98 = vector.extract_strided_slice %97 {offsets = [0, 0], sizes = [8, 512], strides = [1, 1]} : vector<8x1024xf32> to vector<8x512xf32>
    %c8 = arith.constant 8 : index
    %c0_52 = arith.constant 0 : index
    %99 = vector.load %arg19[%c8, %c0_52] : memref<32x1024xf32, #tpu.memory_space<vmem>>, vector<8x512xf32>
    %100 = arith.addf %98, %99 : vector<8x512xf32>
    %101 = vector.extract_strided_slice %97 {offsets = [0, 512], sizes = [8, 512], strides = [1, 1]} : vector<8x1024xf32> to vector<8x512xf32>
    %c16 = arith.constant 16 : index
    %c512_53 = arith.constant 512 : index
    %102 = vector.load %arg19[%c16, %c512_53] : memref<32x1024xf32, #tpu.memory_space<vmem>>, vector<8x512xf32>
    %103 = arith.addf %101, %102 : vector<8x512xf32>
    %104 = tpu.concatenate %100, %103 in 0 : vector<8x512xf32>, vector<8x512xf32> -> vector<16x512xf32>
    %105 = vector.extract_strided_slice %104 {offsets = [0, 0], sizes = [16, 384], strides = [1, 1]} : vector<16x512xf32> to vector<16x384xf32>
    %cst_54 = arith.constant 5.000000e-01 : f32
    %106 = vector.broadcast %cst_54 : f32 to vector<16x384xf32>
    %107 = arith.mulf %106, %105 : vector<16x384xf32>
    %108 = math.tanh %107 : vector<16x384xf32>
    %cst_55 = arith.constant 5.000000e-01 : f32
    %109 = vector.broadcast %cst_55 : f32 to vector<16x384xf32>
    %110 = arith.mulf %109, %108 : vector<16x384xf32>
    %cst_56 = arith.constant 5.000000e-01 : f32
    %111 = vector.broadcast %cst_56 : f32 to vector<16x384xf32>
    %112 = arith.addf %110, %111 : vector<16x384xf32>
    %113 = vector.extract_strided_slice %104 {offsets = [0, 384], sizes = [16, 128], strides = [1, 1]} : vector<16x512xf32> to vector<16x128xf32>
    %114 = math.tanh %113 : vector<16x128xf32>
    %115 = vector.extract_strided_slice %112 {offsets = [0, 128], sizes = [16, 128], strides = [1, 1]} : vector<16x384xf32> to vector<16x128xf32>
    %116 = arith.mulf %115, %88 : vector<16x128xf32>
    %117 = vector.extract_strided_slice %112 {offsets = [0, 0], sizes = [16, 128], strides = [1, 1]} : vector<16x384xf32> to vector<16x128xf32>
    %118 = arith.mulf %117, %114 : vector<16x128xf32>
    %119 = arith.addf %116, %118 : vector<16x128xf32>
    %120 = vector.extract_strided_slice %112 {offsets = [0, 256], sizes = [16, 128], strides = [1, 1]} : vector<16x384xf32> to vector<16x128xf32>
    %121 = math.tanh %119 : vector<16x128xf32>
    %122 = arith.mulf %120, %121 : vector<16x128xf32>
    %123 = vector.extract_strided_slice %122 {offsets = [0, 0], sizes = [8, 128], strides = [1, 1]} : vector<16x128xf32> to vector<8x128xf32>
    %124 = vector.extract_strided_slice %122 {offsets = [8, 0], sizes = [8, 128], strides = [1, 1]} : vector<16x128xf32> to vector<8x128xf32>
    %c8_57 = arith.constant 8 : index
    %c0_58 = arith.constant 0 : index
    %125 = vector.load %arg20[%c8_57, %c0_58] : memref<32x128xf32, #tpu.memory_space<vmem>>, vector<8x128xf32>
    tpu.vector_store %arg20[%c8_57, %c0_58], %123 {strides = array<i32>} : memref<32x128xf32, #tpu.memory_space<vmem>>, vector<8x128xf32>,
    %c16_59 = arith.constant 16 : index
    %c0_60 = arith.constant 0 : index
    %126 = vector.load %arg21[%c16_59, %c0_60] : memref<32x128xf32, #tpu.memory_space<vmem>>, vector<8x128xf32>
    tpu.vector_store %arg21[%c16_59, %c0_60], %124 {strides = array<i32>} : memref<32x128xf32, #tpu.memory_space<vmem>>, vector<8x128xf32>,
    %127 = tpu.concatenate %123, %124 in 1 : vector<8x128xf32>, vector<8x128xf32> -> vector<8x256xf32>
    %cst_61 = arith.constant dense<0.000000e+00> : vector<8x1024xf32>
    %128 = tpu.matmul %127, %63, %cst_61 {dimension_numbers = #tpu.dot_dimension_numbers<[1], [0], [0], [1], [0, 0, 1, 1], [], []>} : vector<8x256xf32>, vector<256x1024xf32>, vector<8x1024xf32> -> vector<8x1024xf32>
    %129 = vector.extract_strided_slice %128 {offsets = [0, 0], sizes = [8, 512], strides = [1, 1]} : vector<8x1024xf32> to vector<8x512xf32>
    %c16_62 = arith.constant 16 : index
    %c0_63 = arith.constant 0 : index
    %130 = vector.load %arg19[%c16_62, %c0_63] : memref<32x1024xf32, #tpu.memory_space<vmem>>, vector<8x512xf32>
    %131 = arith.addf %129, %130 : vector<8x512xf32>
    %132 = vector.extract_strided_slice %128 {offsets = [0, 512], sizes = [8, 512], strides = [1, 1]} : vector<8x1024xf32> to vector<8x512xf32>
    %c8_64 = arith.constant 8 : index
    %c512_65 = arith.constant 512 : index
    %133 = vector.load %arg19[%c8_64, %c512_65] : memref<32x1024xf32, #tpu.memory_space<vmem>>, vector<8x512xf32>
    %134 = arith.addf %132, %133 : vector<8x512xf32>
    %135 = tpu.concatenate %131, %134 in 0 : vector<8x512xf32>, vector<8x512xf32> -> vector<16x512xf32>
    %136 = vector.extract_strided_slice %135 {offsets = [0, 0], sizes = [16, 384], strides = [1, 1]} : vector<16x512xf32> to vector<16x384xf32>
    %cst_66 = arith.constant 5.000000e-01 : f32
    %137 = vector.broadcast %cst_66 : f32 to vector<16x384xf32>
    %138 = arith.mulf %137, %136 : vector<16x384xf32>
    %139 = math.tanh %138 : vector<16x384xf32>
    %cst_67 = arith.constant 5.000000e-01 : f32
    %140 = vector.broadcast %cst_67 : f32 to vector<16x384xf32>
    %141 = arith.mulf %140, %139 : vector<16x384xf32>
    %cst_68 = arith.constant 5.000000e-01 : f32
    %142 = vector.broadcast %cst_68 : f32 to vector<16x384xf32>
    %143 = arith.addf %141, %142 : vector<16x384xf32>
    %144 = vector.extract_strided_slice %135 {offsets = [0, 384], sizes = [16, 128], strides = [1, 1]} : vector<16x512xf32> to vector<16x128xf32>
    %145 = math.tanh %144 : vector<16x128xf32>
    %146 = vector.extract_strided_slice %143 {offsets = [0, 128], sizes = [16, 128], strides = [1, 1]} : vector<16x384xf32> to vector<16x128xf32>
    %147 = arith.mulf %146, %119 : vector<16x128xf32>
    %148 = vector.extract_strided_slice %143 {offsets = [0, 0], sizes = [16, 128], strides = [1, 1]} : vector<16x384xf32> to vector<16x128xf32>
    %149 = arith.mulf %148, %145 : vector<16x128xf32>
    %150 = arith.addf %147, %149 : vector<16x128xf32>
    %151 = vector.extract_strided_slice %143 {offsets = [0, 256], sizes = [16, 128], strides = [1, 1]} : vector<16x384xf32> to vector<16x128xf32>
    %152 = math.tanh %150 : vector<16x128xf32>
    %153 = arith.mulf %151, %152 : vector<16x128xf32>
    %154 = vector.extract_strided_slice %153 {offsets = [0, 0], sizes = [8, 128], strides = [1, 1]} : vector<16x128xf32> to vector<8x128xf32>
    %155 = vector.extract_strided_slice %153 {offsets = [8, 0], sizes = [8, 128], strides = [1, 1]} : vector<16x128xf32> to vector<8x128xf32>
    %c16_69 = arith.constant 16 : index
    %c0_70 = arith.constant 0 : index
    %156 = vector.load %arg20[%c16_69, %c0_70] : memref<32x128xf32, #tpu.memory_space<vmem>>, vector<8x128xf32>
    tpu.vector_store %arg20[%c16_69, %c0_70], %154 {strides = array<i32>} : memref<32x128xf32, #tpu.memory_space<vmem>>, vector<8x128xf32>,
    %c8_71 = arith.constant 8 : index
    %c0_72 = arith.constant 0 : index
    %157 = vector.load %arg21[%c8_71, %c0_72] : memref<32x128xf32, #tpu.memory_space<vmem>>, vector<8x128xf32>
    tpu.vector_store %arg21[%c8_71, %c0_72], %155 {strides = array<i32>} : memref<32x128xf32, #tpu.memory_space<vmem>>, vector<8x128xf32>,
    %158 = tpu.concatenate %154, %155 in 1 : vector<8x128xf32>, vector<8x128xf32> -> vector<8x256xf32>
    %cst_73 = arith.constant dense<0.000000e+00> : vector<8x1024xf32>
    %159 = tpu.matmul %158, %63, %cst_73 {dimension_numbers = #tpu.dot_dimension_numbers<[1], [0], [0], [1], [0, 0, 1, 1], [], []>} : vector<8x256xf32>, vector<256x1024xf32>, vector<8x1024xf32> -> vector<8x1024xf32>
    %160 = vector.extract_strided_slice %159 {offsets = [0, 0], sizes = [8, 512], strides = [1, 1]} : vector<8x1024xf32> to vector<8x512xf32>
    %c24_74 = arith.constant 24 : index
    %c0_75 = arith.constant 0 : index
    %161 = vector.load %arg19[%c24_74, %c0_75] : memref<32x1024xf32, #tpu.memory_space<vmem>>, vector<8x512xf32>
    %162 = arith.addf %160, %161 : vector<8x512xf32>
    %163 = vector.extract_strided_slice %159 {offsets = [0, 512], sizes = [8, 512], strides = [1, 1]} : vector<8x1024xf32> to vector<8x512xf32>
    %c0_76 = arith.constant 0 : index
    %c512_77 = arith.constant 512 : index
    %164 = vector.load %arg19[%c0_76, %c512_77] : memref<32x1024xf32, #tpu.memory_space<vmem>>, vector<8x512xf32>
    %165 = arith.addf %163, %164 : vector<8x512xf32>
    %166 = tpu.concatenate %162, %165 in 0 : vector<8x512xf32>, vector<8x512xf32> -> vector<16x512xf32>
    %167 = vector.extract_strided_slice %166 {offsets = [0, 0], sizes = [16, 384], strides = [1, 1]} : vector<16x512xf32> to vector<16x384xf32>
    %cst_78 = arith.constant 5.000000e-01 : f32
    %168 = vector.broadcast %cst_78 : f32 to vector<16x384xf32>
    %169 = arith.mulf %168, %167 : vector<16x384xf32>
    %170 = math.tanh %169 : vector<16x384xf32>
    %cst_79 = arith.constant 5.000000e-01 : f32
    %171 = vector.broadcast %cst_79 : f32 to vector<16x384xf32>
    %172 = arith.mulf %171, %170 : vector<16x384xf32>
    %cst_80 = arith.constant 5.000000e-01 : f32
    %173 = vector.broadcast %cst_80 : f32 to vector<16x384xf32>
    %174 = arith.addf %172, %173 : vector<16x384xf32>
    %175 = vector.extract_strided_slice %166 {offsets = [0, 384], sizes = [16, 128], strides = [1, 1]} : vector<16x512xf32> to vector<16x128xf32>
    %176 = math.tanh %175 : vector<16x128xf32>
    %177 = vector.extract_strided_slice %174 {offsets = [0, 128], sizes = [16, 128], strides = [1, 1]} : vector<16x384xf32> to vector<16x128xf32>
    %178 = arith.mulf %177, %150 : vector<16x128xf32>
    %179 = vector.extract_strided_slice %174 {offsets = [0, 0], sizes = [16, 128], strides = [1, 1]} : vector<16x384xf32> to vector<16x128xf32>
    %180 = arith.mulf %179, %176 : vector<16x128xf32>
    %181 = arith.addf %178, %180 : vector<16x128xf32>
    %182 = vector.extract_strided_slice %174 {offsets = [0, 256], sizes = [16, 128], strides = [1, 1]} : vector<16x384xf32> to vector<16x128xf32>
    %183 = math.tanh %181 : vector<16x128xf32>
    %184 = arith.mulf %182, %183 : vector<16x128xf32>
    %185 = vector.extract_strided_slice %184 {offsets = [0, 0], sizes = [8, 128], strides = [1, 1]} : vector<16x128xf32> to vector<8x128xf32>
    %186 = vector.extract_strided_slice %184 {offsets = [8, 0], sizes = [8, 128], strides = [1, 1]} : vector<16x128xf32> to vector<8x128xf32>
    %c24_81 = arith.constant 24 : index
    %c0_82 = arith.constant 0 : index
    %187 = vector.load %arg20[%c24_81, %c0_82] : memref<32x128xf32, #tpu.memory_space<vmem>>, vector<8x128xf32>
    tpu.vector_store %arg20[%c24_81, %c0_82], %185 {strides = array<i32>} : memref<32x128xf32, #tpu.memory_space<vmem>>, vector<8x128xf32>,
    %c0_83 = arith.constant 0 : index
    %c0_84 = arith.constant 0 : index
    %188 = vector.load %arg21[%c0_83, %c0_84] : memref<32x128xf32, #tpu.memory_space<vmem>>, vector<8x128xf32>
    tpu.vector_store %arg21[%c0_83, %c0_84], %186 {strides = array<i32>} : memref<32x128xf32, #tpu.memory_space<vmem>>, vector<8x128xf32>,
    %c0_85 = arith.constant 0 : index
    %c0_86 = arith.constant 0 : index
    %189 = vector.load %arg20[%c0_85, %c0_86] : memref<32x128xf32, #tpu.memory_space<vmem>>, vector<32x128xf32>
    %c0_87 = arith.constant 0 : index
    %c0_88 = arith.constant 0 : index
    %190 = vector.load %arg21[%c0_87, %c0_88] : memref<32x128xf32, #tpu.memory_space<vmem>>, vector<32x128xf32>
    %191 = tpu.concatenate %189, %190 in 1 : vector<32x128xf32>, vector<32x128xf32> -> vector<32x256xf32>
    %c0_89 = arith.constant 0 : index
    %c0_90 = arith.constant 0 : index
    %192 = vector.load %arg9[%c0_89, %c0_90] : memref<256x1024xf32, #tpu.memory_space<vmem>>, vector<256x1024xf32>
    %cst_91 = arith.constant dense<0.000000e+00> : vector<32x1024xf32>
    %193 = tpu.matmul %191, %192, %cst_91 {dimension_numbers = #tpu.dot_dimension_numbers<[1], [0], [0], [1], [0, 0, 1, 1], [], []>} : vector<32x256xf32>, vector<256x1024xf32>, vector<32x1024xf32> -> vector<32x1024xf32>
    %c0_92 = arith.constant 0 : index
    %c0_93 = arith.constant 0 : index
    %194 = vector.load %arg11[%c0_92, %c0_93] : memref<1x1024xf32, #tpu.memory_space<vmem>>, vector<1x1024xf32>
    %195 = vector.broadcast %194 : vector<1x1024xf32> to vector<32x1024xf32>
    %196 = arith.addf %193, %195 : vector<32x1024xf32>
    %c0_94 = arith.constant 0 : index
    %c0_95 = arith.constant 0 : index
    %197 = vector.load %arg19[%c0_94, %c0_95] : memref<32x1024xf32, #tpu.memory_space<vmem>>, vector<32x1024xf32>
    tpu.vector_store %arg19[%c0_94, %c0_95], %196 {strides = array<i32>} : memref<32x1024xf32, #tpu.memory_space<vmem>>, vector<32x1024xf32>,
    %c0_96 = arith.constant 0 : index
    %c0_97 = arith.constant 0 : index
    %198 = vector.load %arg10[%c0_96, %c0_97] : memref<256x1024xf32, #tpu.memory_space<vmem>>, vector<256x1024xf32>
    %cst_98 = arith.constant 0.000000e+00 : f32
    %199 = vector.broadcast %cst_98 : f32 to vector<8x256xf32>
    %cst_99 = arith.constant 0.000000e+00 : f32
    %200 = vector.broadcast %cst_99 : f32 to vector<16x128xf32>
    %cst_100 = arith.constant dense<0.000000e+00> : vector<8x1024xf32>
    %201 = tpu.matmul %199, %198, %cst_100 {dimension_numbers = #tpu.dot_dimension_numbers<[1], [0], [0], [1], [0, 0, 1, 1], [], []>} : vector<8x256xf32>, vector<256x1024xf32>, vector<8x1024xf32> -> vector<8x1024xf32>
    %202 = vector.extract_strided_slice %201 {offsets = [0, 0], sizes = [8, 512], strides = [1, 1]} : vector<8x1024xf32> to vector<8x512xf32>
    %c0_101 = arith.constant 0 : index
    %c0_102 = arith.constant 0 : index
    %203 = vector.load %arg19[%c0_101, %c0_102] : memref<32x1024xf32, #tpu.memory_space<vmem>>, vector<8x512xf32>
    %204 = arith.addf %202, %203 : vector<8x512xf32>
    %205 = vector.extract_strided_slice %201 {offsets = [0, 512], sizes = [8, 512], strides = [1, 1]} : vector<8x1024xf32> to vector<8x512xf32>
    %c24_103 = arith.constant 24 : index
    %c512_104 = arith.constant 512 : index
    %206 = vector.load %arg19[%c24_103, %c512_104] : memref<32x1024xf32, #tpu.memory_space<vmem>>, vector<8x512xf32>
    %207 = arith.addf %205, %206 : vector<8x512xf32>
    %208 = tpu.concatenate %204, %207 in 0 : vector<8x512xf32>, vector<8x512xf32> -> vector<16x512xf32>
    %209 = vector.extract_strided_slice %208 {offsets = [0, 0], sizes = [16, 384], strides = [1, 1]} : vector<16x512xf32> to vector<16x384xf32>
    %cst_105 = arith.constant 5.000000e-01 : f32
    %210 = vector.broadcast %cst_105 : f32 to vector<16x384xf32>
    %211 = arith.mulf %210, %209 : vector<16x384xf32>
    %212 = math.tanh %211 : vector<16x384xf32>
    %cst_106 = arith.constant 5.000000e-01 : f32
    %213 = vector.broadcast %cst_106 : f32 to vector<16x384xf32>
    %214 = arith.mulf %213, %212 : vector<16x384xf32>
    %cst_107 = arith.constant 5.000000e-01 : f32
    %215 = vector.broadcast %cst_107 : f32 to vector<16x384xf32>
    %216 = arith.addf %214, %215 : vector<16x384xf32>
    %217 = vector.extract_strided_slice %208 {offsets = [0, 384], sizes = [16, 128], strides = [1, 1]} : vector<16x512xf32> to vector<16x128xf32>
    %218 = math.tanh %217 : vector<16x128xf32>
    %219 = vector.extract_strided_slice %216 {offsets = [0, 128], sizes = [16, 128], strides = [1, 1]} : vector<16x384xf32> to vector<16x128xf32>
    %220 = arith.mulf %219, %200 : vector<16x128xf32>
    %221 = vector.extract_strided_slice %216 {offsets = [0, 0], sizes = [16, 128], strides = [1, 1]} : vector<16x384xf32> to vector<16x128xf32>
    %222 = arith.mulf %221, %218 : vector<16x128xf32>
    %223 = arith.addf %220, %222 : vector<16x128xf32>
    %224 = vector.extract_strided_slice %216 {offsets = [0, 256], sizes = [16, 128], strides = [1, 1]} : vector<16x384xf32> to vector<16x128xf32>
    %225 = math.tanh %223 : vector<16x128xf32>
    %226 = arith.mulf %224, %225 : vector<16x128xf32>
    %227 = vector.extract_strided_slice %226 {offsets = [0, 0], sizes = [8, 128], strides = [1, 1]} : vector<16x128xf32> to vector<8x128xf32>
    %228 = vector.extract_strided_slice %226 {offsets = [8, 0], sizes = [8, 128], strides = [1, 1]} : vector<16x128xf32> to vector<8x128xf32>
    %c0_108 = arith.constant 0 : index
    %c0_109 = arith.constant 0 : index
    %229 = vector.load %arg22[%c0_108, %c0_109] : memref<32x128xf32, #tpu.memory_space<vmem>>, vector<8x128xf32>
    tpu.vector_store %arg22[%c0_108, %c0_109], %227 {strides = array<i32>} : memref<32x128xf32, #tpu.memory_space<vmem>>, vector<8x128xf32>,
    %c24_110 = arith.constant 24 : index
    %c0_111 = arith.constant 0 : index
    %230 = vector.load %arg23[%c24_110, %c0_111] : memref<32x128xf32, #tpu.memory_space<vmem>>, vector<8x128xf32>
    tpu.vector_store %arg23[%c24_110, %c0_111], %228 {strides = array<i32>} : memref<32x128xf32, #tpu.memory_space<vmem>>, vector<8x128xf32>,
    %231 = tpu.concatenate %227, %228 in 1 : vector<8x128xf32>, vector<8x128xf32> -> vector<8x256xf32>
    %cst_112 = arith.constant dense<0.000000e+00> : vector<8x1024xf32>
    %232 = tpu.matmul %231, %198, %cst_112 {dimension_numbers = #tpu.dot_dimension_numbers<[1], [0], [0], [1], [0, 0, 1, 1], [], []>} : vector<8x256xf32>, vector<256x1024xf32>, vector<8x1024xf32> -> vector<8x1024xf32>
    %233 = vector.extract_strided_slice %232 {offsets = [0, 0], sizes = [8, 512], strides = [1, 1]} : vector<8x1024xf32> to vector<8x512xf32>
    %c8_113 = arith.constant 8 : index
    %c0_114 = arith.constant 0 : index
    %234 = vector.load %arg19[%c8_113, %c0_114] : memref<32x1024xf32, #tpu.memory_space<vmem>>, vector<8x512xf32>
    %235 = arith.addf %233, %234 : vector<8x512xf32>
    %236 = vector.extract_strided_slice %232 {offsets = [0, 512], sizes = [8, 512], strides = [1, 1]} : vector<8x1024xf32> to vector<8x512xf32>
    %c16_115 = arith.constant 16 : index
    %c512_116 = arith.constant 512 : index
    %237 = vector.load %arg19[%c16_115, %c512_116] : memref<32x1024xf32, #tpu.memory_space<vmem>>, vector<8x512xf32>
    %238 = arith.addf %236, %237 : vector<8x512xf32>
    %239 = tpu.concatenate %235, %238 in 0 : vector<8x512xf32>, vector<8x512xf32> -> vector<16x512xf32>
    %240 = vector.extract_strided_slice %239 {offsets = [0, 0], sizes = [16, 384], strides = [1, 1]} : vector<16x512xf32> to vector<16x384xf32>
    %cst_117 = arith.constant 5.000000e-01 : f32
    %241 = vector.broadcast %cst_117 : f32 to vector<16x384xf32>
    %242 = arith.mulf %241, %240 : vector<16x384xf32>
    %243 = math.tanh %242 : vector<16x384xf32>
    %cst_118 = arith.constant 5.000000e-01 : f32
    %244 = vector.broadcast %cst_118 : f32 to vector<16x384xf32>
    %245 = arith.mulf %244, %243 : vector<16x384xf32>
    %cst_119 = arith.constant 5.000000e-01 : f32
    %246 = vector.broadcast %cst_119 : f32 to vector<16x384xf32>
    %247 = arith.addf %245, %246 : vector<16x384xf32>
    %248 = vector.extract_strided_slice %239 {offsets = [0, 384], sizes = [16, 128], strides = [1, 1]} : vector<16x512xf32> to vector<16x128xf32>
    %249 = math.tanh %248 : vector<16x128xf32>
    %250 = vector.extract_strided_slice %247 {offsets = [0, 128], sizes = [16, 128], strides = [1, 1]} : vector<16x384xf32> to vector<16x128xf32>
    %251 = arith.mulf %250, %223 : vector<16x128xf32>
    %252 = vector.extract_strided_slice %247 {offsets = [0, 0], sizes = [16, 128], strides = [1, 1]} : vector<16x384xf32> to vector<16x128xf32>
    %253 = arith.mulf %252, %249 : vector<16x128xf32>
    %254 = arith.addf %251, %253 : vector<16x128xf32>
    %255 = vector.extract_strided_slice %247 {offsets = [0, 256], sizes = [16, 128], strides = [1, 1]} : vector<16x384xf32> to vector<16x128xf32>
    %256 = math.tanh %254 : vector<16x128xf32>
    %257 = arith.mulf %255, %256 : vector<16x128xf32>
    %258 = vector.extract_strided_slice %257 {offsets = [0, 0], sizes = [8, 128], strides = [1, 1]} : vector<16x128xf32> to vector<8x128xf32>
    %259 = vector.extract_strided_slice %257 {offsets = [8, 0], sizes = [8, 128], strides = [1, 1]} : vector<16x128xf32> to vector<8x128xf32>
    %c8_120 = arith.constant 8 : index
    %c0_121 = arith.constant 0 : index
    %260 = vector.load %arg22[%c8_120, %c0_121] : memref<32x128xf32, #tpu.memory_space<vmem>>, vector<8x128xf32>
    tpu.vector_store %arg22[%c8_120, %c0_121], %258 {strides = array<i32>} : memref<32x128xf32, #tpu.memory_space<vmem>>, vector<8x128xf32>,
    %c16_122 = arith.constant 16 : index
    %c0_123 = arith.constant 0 : index
    %261 = vector.load %arg23[%c16_122, %c0_123] : memref<32x128xf32, #tpu.memory_space<vmem>>, vector<8x128xf32>
    tpu.vector_store %arg23[%c16_122, %c0_123], %259 {strides = array<i32>} : memref<32x128xf32, #tpu.memory_space<vmem>>, vector<8x128xf32>,
    %262 = tpu.concatenate %258, %259 in 1 : vector<8x128xf32>, vector<8x128xf32> -> vector<8x256xf32>
    %cst_124 = arith.constant dense<0.000000e+00> : vector<8x1024xf32>
    %263 = tpu.matmul %262, %198, %cst_124 {dimension_numbers = #tpu.dot_dimension_numbers<[1], [0], [0], [1], [0, 0, 1, 1], [], []>} : vector<8x256xf32>, vector<256x1024xf32>, vector<8x1024xf32> -> vector<8x1024xf32>
    %264 = vector.extract_strided_slice %263 {offsets = [0, 0], sizes = [8, 512], strides = [1, 1]} : vector<8x1024xf32> to vector<8x512xf32>
    %c16_125 = arith.constant 16 : index
    %c0_126 = arith.constant 0 : index
    %265 = vector.load %arg19[%c16_125, %c0_126] : memref<32x1024xf32, #tpu.memory_space<vmem>>, vector<8x512xf32>
    %266 = arith.addf %264, %265 : vector<8x512xf32>
    %267 = vector.extract_strided_slice %263 {offsets = [0, 512], sizes = [8, 512], strides = [1, 1]} : vector<8x1024xf32> to vector<8x512xf32>
    %c8_127 = arith.constant 8 : index
    %c512_128 = arith.constant 512 : index
    %268 = vector.load %arg19[%c8_127, %c512_128] : memref<32x1024xf32, #tpu.memory_space<vmem>>, vector<8x512xf32>
    %269 = arith.addf %267, %268 : vector<8x512xf32>
    %270 = tpu.concatenate %266, %269 in 0 : vector<8x512xf32>, vector<8x512xf32> -> vector<16x512xf32>
    %271 = vector.extract_strided_slice %270 {offsets = [0, 0], sizes = [16, 384], strides = [1, 1]} : vector<16x512xf32> to vector<16x384xf32>
    %cst_129 = arith.constant 5.000000e-01 : f32
    %272 = vector.broadcast %cst_129 : f32 to vector<16x384xf32>
    %273 = arith.mulf %272, %271 : vector<16x384xf32>
    %274 = math.tanh %273 : vector<16x384xf32>
    %cst_130 = arith.constant 5.000000e-01 : f32
    %275 = vector.broadcast %cst_130 : f32 to vector<16x384xf32>
    %276 = arith.mulf %275, %274 : vector<16x384xf32>
    %cst_131 = arith.constant 5.000000e-01 : f32
    %277 = vector.broadcast %cst_131 : f32 to vector<16x384xf32>
    %278 = arith.addf %276, %277 : vector<16x384xf32>
    %279 = vector.extract_strided_slice %270 {offsets = [0, 384], sizes = [16, 128], strides = [1, 1]} : vector<16x512xf32> to vector<16x128xf32>
    %280 = math.tanh %279 : vector<16x128xf32>
    %281 = vector.extract_strided_slice %278 {offsets = [0, 128], sizes = [16, 128], strides = [1, 1]} : vector<16x384xf32> to vector<16x128xf32>
    %282 = arith.mulf %281, %254 : vector<16x128xf32>
    %283 = vector.extract_strided_slice %278 {offsets = [0, 0], sizes = [16, 128], strides = [1, 1]} : vector<16x384xf32> to vector<16x128xf32>
    %284 = arith.mulf %283, %280 : vector<16x128xf32>
    %285 = arith.addf %282, %284 : vector<16x128xf32>
    %286 = vector.extract_strided_slice %278 {offsets = [0, 256], sizes = [16, 128], strides = [1, 1]} : vector<16x384xf32> to vector<16x128xf32>
    %287 = math.tanh %285 : vector<16x128xf32>
    %288 = arith.mulf %286, %287 : vector<16x128xf32>
    %289 = vector.extract_strided_slice %288 {offsets = [0, 0], sizes = [8, 128], strides = [1, 1]} : vector<16x128xf32> to vector<8x128xf32>
    %290 = vector.extract_strided_slice %288 {offsets = [8, 0], sizes = [8, 128], strides = [1, 1]} : vector<16x128xf32> to vector<8x128xf32>
    %c16_132 = arith.constant 16 : index
    %c0_133 = arith.constant 0 : index
    %291 = vector.load %arg22[%c16_132, %c0_133] : memref<32x128xf32, #tpu.memory_space<vmem>>, vector<8x128xf32>
    tpu.vector_store %arg22[%c16_132, %c0_133], %289 {strides = array<i32>} : memref<32x128xf32, #tpu.memory_space<vmem>>, vector<8x128xf32>,
    %c8_134 = arith.constant 8 : index
    %c0_135 = arith.constant 0 : index
    %292 = vector.load %arg23[%c8_134, %c0_135] : memref<32x128xf32, #tpu.memory_space<vmem>>, vector<8x128xf32>
    tpu.vector_store %arg23[%c8_134, %c0_135], %290 {strides = array<i32>} : memref<32x128xf32, #tpu.memory_space<vmem>>, vector<8x128xf32>,
    %293 = tpu.concatenate %289, %290 in 1 : vector<8x128xf32>, vector<8x128xf32> -> vector<8x256xf32>
    %cst_136 = arith.constant dense<0.000000e+00> : vector<8x1024xf32>
    %294 = tpu.matmul %293, %198, %cst_136 {dimension_numbers = #tpu.dot_dimension_numbers<[1], [0], [0], [1], [0, 0, 1, 1], [], []>} : vector<8x256xf32>, vector<256x1024xf32>, vector<8x1024xf32> -> vector<8x1024xf32>
    %295 = vector.extract_strided_slice %294 {offsets = [0, 0], sizes = [8, 512], strides = [1, 1]} : vector<8x1024xf32> to vector<8x512xf32>
    %c24_137 = arith.constant 24 : index
    %c0_138 = arith.constant 0 : index
    %296 = vector.load %arg19[%c24_137, %c0_138] : memref<32x1024xf32, #tpu.memory_space<vmem>>, vector<8x512xf32>
    %297 = arith.addf %295, %296 : vector<8x512xf32>
    %298 = vector.extract_strided_slice %294 {offsets = [0, 512], sizes = [8, 512], strides = [1, 1]} : vector<8x1024xf32> to vector<8x512xf32>
    %c0_139 = arith.constant 0 : index
    %c512_140 = arith.constant 512 : index
    %299 = vector.load %arg19[%c0_139, %c512_140] : memref<32x1024xf32, #tpu.memory_space<vmem>>, vector<8x512xf32>
    %300 = arith.addf %298, %299 : vector<8x512xf32>
    %301 = tpu.concatenate %297, %300 in 0 : vector<8x512xf32>, vector<8x512xf32> -> vector<16x512xf32>
    %302 = vector.extract_strided_slice %301 {offsets = [0, 0], sizes = [16, 384], strides = [1, 1]} : vector<16x512xf32> to vector<16x384xf32>
    %cst_141 = arith.constant 5.000000e-01 : f32
    %303 = vector.broadcast %cst_141 : f32 to vector<16x384xf32>
    %304 = arith.mulf %303, %302 : vector<16x384xf32>
    %305 = math.tanh %304 : vector<16x384xf32>
    %cst_142 = arith.constant 5.000000e-01 : f32
    %306 = vector.broadcast %cst_142 : f32 to vector<16x384xf32>
    %307 = arith.mulf %306, %305 : vector<16x384xf32>
    %cst_143 = arith.constant 5.000000e-01 : f32
    %308 = vector.broadcast %cst_143 : f32 to vector<16x384xf32>
    %309 = arith.addf %307, %308 : vector<16x384xf32>
    %310 = vector.extract_strided_slice %301 {offsets = [0, 384], sizes = [16, 128], strides = [1, 1]} : vector<16x512xf32> to vector<16x128xf32>
    %311 = math.tanh %310 : vector<16x128xf32>
    %312 = vector.extract_strided_slice %309 {offsets = [0, 128], sizes = [16, 128], strides = [1, 1]} : vector<16x384xf32> to vector<16x128xf32>
    %313 = arith.mulf %312, %285 : vector<16x128xf32>
    %314 = vector.extract_strided_slice %309 {offsets = [0, 0], sizes = [16, 128], strides = [1, 1]} : vector<16x384xf32> to vector<16x128xf32>
    %315 = arith.mulf %314, %311 : vector<16x128xf32>
    %316 = arith.addf %313, %315 : vector<16x128xf32>
    %317 = vector.extract_strided_slice %309 {offsets = [0, 256], sizes = [16, 128], strides = [1, 1]} : vector<16x384xf32> to vector<16x128xf32>
    %318 = math.tanh %316 : vector<16x128xf32>
    %319 = arith.mulf %317, %318 : vector<16x128xf32>
    %320 = vector.extract_strided_slice %319 {offsets = [0, 0], sizes = [8, 128], strides = [1, 1]} : vector<16x128xf32> to vector<8x128xf32>
    %321 = vector.extract_strided_slice %319 {offsets = [8, 0], sizes = [8, 128], strides = [1, 1]} : vector<16x128xf32> to vector<8x128xf32>
    %c24_144 = arith.constant 24 : index
    %c0_145 = arith.constant 0 : index
    %322 = vector.load %arg22[%c24_144, %c0_145] : memref<32x128xf32, #tpu.memory_space<vmem>>, vector<8x128xf32>
    tpu.vector_store %arg22[%c24_144, %c0_145], %320 {strides = array<i32>} : memref<32x128xf32, #tpu.memory_space<vmem>>, vector<8x128xf32>,
    %c0_146 = arith.constant 0 : index
    %c0_147 = arith.constant 0 : index
    %323 = vector.load %arg23[%c0_146, %c0_147] : memref<32x128xf32, #tpu.memory_space<vmem>>, vector<8x128xf32>
    tpu.vector_store %arg23[%c0_146, %c0_147], %321 {strides = array<i32>} : memref<32x128xf32, #tpu.memory_space<vmem>>, vector<8x128xf32>,
    %c0_148 = arith.constant 0 : index
    %c0_149 = arith.constant 0 : index
    %324 = vector.load %arg22[%c0_148, %c0_149] : memref<32x128xf32, #tpu.memory_space<vmem>>, vector<32x128xf32>
    %c0_150 = arith.constant 0 : index
    %c0_151 = arith.constant 0 : index
    %325 = vector.load %arg23[%c0_150, %c0_151] : memref<32x128xf32, #tpu.memory_space<vmem>>, vector<32x128xf32>
    %326 = tpu.concatenate %324, %325 in 1 : vector<32x128xf32>, vector<32x128xf32> -> vector<32x256xf32>
    %c0_152 = arith.constant 0 : index
    %c0_153 = arith.constant 0 : index
    %327 = vector.load %arg12[%c0_152, %c0_153] : memref<256x128xf32, #tpu.memory_space<vmem>>, vector<256x128xf32>
    %cst_154 = arith.constant dense<0.000000e+00> : vector<32x128xf32>
    %328 = tpu.matmul %326, %327, %cst_154 {dimension_numbers = #tpu.dot_dimension_numbers<[1], [0], [0], [1], [0, 0, 1, 1], [], []>} : vector<32x256xf32>, vector<256x128xf32>, vector<32x128xf32> -> vector<32x128xf32>
    %c0_155 = arith.constant 0 : index
    %c0_156 = arith.constant 0 : index
    %329 = vector.load %arg13[%c0_155, %c0_156] : memref<1x128xf32, #tpu.memory_space<vmem>>, vector<1x128xf32>
    %330 = vector.broadcast %329 : vector<1x128xf32> to vector<32x128xf32>
    %331 = arith.addf %328, %330 : vector<32x128xf32>
    %cst_157 = arith.constant 0.000000e+00 : f32
    %332 = vector.broadcast %cst_157 : f32 to vector<32x128xf32>
    %333 = arith.maximumf %331, %332 : vector<32x128xf32>
    %c0_158 = arith.constant 0 : index
    %c0_159 = arith.constant 0 : index
    %334 = vector.load %arg14[%c0_158, %c0_159] : memref<128x128xf32, #tpu.memory_space<vmem>>, vector<128x128xf32>
    %cst_160 = arith.constant dense<0.000000e+00> : vector<32x128xf32>
    %335 = tpu.matmul %333, %334, %cst_160 {dimension_numbers = #tpu.dot_dimension_numbers<[1], [0], [0], [1], [0, 0, 1, 1], [], []>} : vector<32x128xf32>, vector<128x128xf32>, vector<32x128xf32> -> vector<32x128xf32>
    %c0_161 = arith.constant 0 : index
    %c0_162 = arith.constant 0 : index
    %336 = vector.load %arg15[%c0_161, %c0_162] : memref<1x128xf32, #tpu.memory_space<vmem>>, vector<1x128xf32>
    %337 = vector.broadcast %336 : vector<1x128xf32> to vector<32x128xf32>
    %338 = arith.addf %335, %337 : vector<32x128xf32>
    %cst_163 = arith.constant 0.000000e+00 : f32
    %339 = vector.broadcast %cst_163 : f32 to vector<32x128xf32>
    %340 = arith.maximumf %338, %339 : vector<32x128xf32>
    %c0_164 = arith.constant 0 : index
    %c0_165 = arith.constant 0 : index
    %341 = vector.load %arg16[%c0_164, %c0_165] : memref<128x128xf32, #tpu.memory_space<vmem>>, vector<128x128xf32>
    %cst_166 = arith.constant dense<0.000000e+00> : vector<32x128xf32>
    %342 = tpu.matmul %340, %341, %cst_166 {dimension_numbers = #tpu.dot_dimension_numbers<[1], [0], [0], [1], [0, 0, 1, 1], [], []>} : vector<32x128xf32>, vector<128x128xf32>, vector<32x128xf32> -> vector<32x128xf32>
    %c0_167 = arith.constant 0 : index
    %c0_168 = arith.constant 0 : index
    %343 = vector.load %arg17[%c0_167, %c0_168] : memref<1x128xf32, #tpu.memory_space<vmem>>, vector<1x128xf32>
    %344 = vector.broadcast %343 : vector<1x128xf32> to vector<32x128xf32>
    %345 = arith.addf %342, %344 : vector<32x128xf32>
    %c0_169 = arith.constant 0 : index
    %c0_170 = arith.constant 0 : index
    %346 = vector.load %arg18[%c0_169, %c0_170] : memref<32x128xf32, #tpu.memory_space<vmem>>, vector<32x128xf32>
    tpu.vector_store %arg18[%c0_169, %c0_170], %345 {strides = array<i32>} : memref<32x128xf32, #tpu.memory_space<vmem>>, vector<32x128xf32>,
    return
  }
}

</mosaic_0001>

<llo_original>
// kernel: model_forward_pallas.2
$region0: #{model_forward_pallas.2}
  #allocation0 [shape = 'u32[]', space=smem, size = 0x4, offset = 0x4, fixed_abs, tag = 'smem constant byte address 0x4 - core index']
  #allocation1 [shape = 'u32[72,128]{1,0:T(1,128)}', space=vmem, size = 0x9000, scoped, tag = 'internal scratch']
  #allocation2 [shape = 'f32[32,1024]{1,0:T(8,128)}', space=vmem, size = 0x20000, scoped, tag = 'scratch operand']
  #allocation3 [shape = 'f32[32,128]{1,0:T(8,128)}', space=vmem, size = 0x4000, scoped, tag = 'scratch operand']
  #allocation4 [shape = 'f32[32,128]{1,0:T(8,128)}', space=vmem, size = 0x4000, scoped, tag = 'scratch operand']
  #allocation5 [shape = 'f32[32,128]{1,0:T(8,128)}', space=vmem, size = 0x4000, scoped, tag = 'scratch operand']
  #allocation6 [shape = 'f32[32,128]{1,0:T(8,128)}', space=vmem, size = 0x4000, scoped, tag = 'scratch operand']
  #allocation7 [shape = 'u32[2048]{0}', space=vmem, size = 0x2000, scoped, tag = 'scoped memory for model_forward_pallas.2']
  #allocation8 [shape = 'u32[2048]{0}', space=vmem, size = 0x2000, scoped, tag = 'scoped memory for model_forward_pallas.2']
  #allocation9 [shape = 'u32[2048]{0}', space=vmem, size = 0x2000, scoped, tag = 'scoped memory for model_forward_pallas.2']
  #allocation10 [shape = 'u32[2048]{0}', space=vmem, size = 0x2000, scoped, tag = 'scoped memory for model_forward_pallas.2']
  #allocation11 [shape = 'u32[2048]{0}', space=vmem, size = 0x2000, scoped, tag = 'scoped memory for model_forward_pallas.2']
  #allocation12 [shape = 'u32[2048]{0}', space=vmem, size = 0x2000, scoped, tag = 'scoped memory for model_forward_pallas.2']
  #allocation13 [shape = 'u32[2048]{0}', space=vmem, size = 0x2000, scoped, tag = 'scoped memory for model_forward_pallas.2']
  #allocation14 [shape = 'u32[2048]{0}', space=vmem, size = 0x2000, scoped, tag = 'scoped memory for model_forward_pallas.2']
  #allocation15 [shape = 'u32[2048]{0}', space=vmem, size = 0x2000, scoped, tag = 'scoped memory for model_forward_pallas.2']
  #allocation16 [shape = 'u32[2048]{0}', space=vmem, size = 0x2000, scoped, tag = 'scoped memory for model_forward_pallas.2']
  #allocation17 [shape = 'u32[2048]{0}', space=vmem, size = 0x2000, scoped, tag = 'scoped memory for model_forward_pallas.2']
  #allocation18 [shape = 'u32[2048]{0}', space=vmem, size = 0x2000, scoped, tag = 'scoped memory for model_forward_pallas.2']
  #allocation19 [shape = 'u32[2048]{0}', space=vmem, size = 0x2000, scoped, tag = 'scoped memory for model_forward_pallas.2']
  #allocation20 [shape = 'u32[2048]{0}', space=vmem, size = 0x2000, scoped, tag = 'scoped memory for model_forward_pallas.2']
  #allocation21 [shape = 'u32[2048]{0}', space=vmem, size = 0x2000, scoped, tag = 'scoped memory for model_forward_pallas.2']
  #allocation22 [shape = 'u32[2048]{0}', space=vmem, size = 0x2000, scoped, tag = 'scoped memory for model_forward_pallas.2']
  #allocation23 [shape = 'u32[2048]{0}', space=vmem, size = 0x2000, scoped, tag = 'scoped memory for model_forward_pallas.2']
  #allocation24 [shape = 'u32[2048]{0}', space=vmem, size = 0x2000, scoped, tag = 'scoped memory for model_forward_pallas.2']
  #allocation25 [shape = 'u32[2048]{0}', space=vmem, size = 0x2000, scoped, tag = 'scoped memory for model_forward_pallas.2']
  #allocation26 [shape = 'u32[2048]{0}', space=vmem, size = 0x2000, scoped, tag = 'scoped memory for model_forward_pallas.2']
  %s0 = inlined_call_operand.vmem [shape: f32[18,128], index: 0, kind: input, shape index: {}]
  %s1 = inlined_call_operand.vmem [shape: f32[1,128], index: 1, kind: input, shape index: {}]
  %s2 = inlined_call_operand.vmem [shape: f32[192,16], index: 2, kind: input, shape index: {}]
  %s3 = inlined_call_operand.vmem [shape: f32[2,384,64], index: 3, kind: input, shape index: {}]
  %s4 = inlined_call_operand.vmem [shape: f32[1,64], index: 4, kind: input, shape index: {}]
  %s5 = inlined_call_operand.hbm [shape: f32[64,1024], index: 5, kind: input, shape index: {}]
  %s6 = inlined_call_operand.vmem [shape: f32[256,1024], index: 6, kind: input, shape index: {}]
  %s7 = inlined_call_operand.vmem [shape: f32[1,1024], index: 7, kind: input, shape index: {}]
  %s8 = inlined_call_operand.hbm [shape: f32[256,1024], index: 8, kind: input, shape index: {}]
  %s9 = inlined_call_operand.hbm [shape: f32[256,1024], index: 9, kind: input, shape index: {}]
  %s10 = inlined_call_operand.vmem [shape: f32[1,1024], index: 10, kind: input, shape index: {}]
  %s11 = inlined_call_operand.hbm [shape: f32[256,128], index: 11, kind: input, shape index: {}]
  %s12 = inlined_call_operand.vmem [shape: f32[1,128], index: 12, kind: input, shape index: {}]
  %s13 = inlined_call_operand.vmem [shape: f32[128,128], index: 13, kind: input, shape index: {}]
  %s14 = inlined_call_operand.vmem [shape: f32[1,128], index: 14, kind: input, shape index: {}]
  %s15 = inlined_call_operand.hbm [shape: f32[128,128], index: 15, kind: input, shape index: {}]
  %s16 = inlined_call_operand.vmem [shape: f32[1,128], index: 16, kind: input, shape index: {}]
  %s17 = inlined_call_operand.vmem [shape: f32[16,18], index: 17, kind: input, shape index: {}]
  %s18 = inlined_call_operand.<no memory space> [shape: f32[], index: 18, kind: input, shape index: {}]
  %s19 = inlined_call_operand.vmem [shape: f32[16,18], index: 19, kind: input, shape index: {}]
  %s20 = inlined_call_operand.vmem [shape: f32[16,18], index: 20, kind: input, shape index: {}]
  %s21 = inlined_call_operand.vmem [shape: f32[16,18], index: 21, kind: input, shape index: {}]
  %s22 = inlined_call_operand.vmem [shape: f32[32,128], index: 22, kind: output, shape index: {}]
  %s23 = sld [smem:[#allocation0]]
  $region114: #{model_forward_pallas.2} parent=0
    _
  %s25 = ssub.s32 1, %s23
  %s26 = scalar_select 0, %s25, %s23
  %v27 = vstv %s18
  %v28 = vstv %s18
  %v29 = vstv %s18
  %v30 = vstv %s18
  $region1: #{model_forward_pallas.2} parent=0
    #allocation27 [shape = 'u8[262144]{0}', space=vmem, size = 0x40000, scoped, tag = 'input window, operand 6, single buffered']
    #allocation28 [shape = 's32[1]{0}', space=sflag, size = 0x4, scoped, tag = 'scoped memory for model_forward_pallas.2']
    #allocation29 [shape = 'u8[1048576]{0}', space=vmem, size = 0x100000, scoped, tag = 'input window, operand 9, single buffered']
    #allocation30 [shape = 's32[1]{0}', space=sflag, size = 0x4, scoped, tag = 'scoped memory for model_forward_pallas.2']
    #allocation31 [shape = 'u8[1048576]{0}', space=vmem, size = 0x100000, scoped, tag = 'input window, operand 10, single buffered']
    #allocation32 [shape = 'u8[131072]{0}', space=vmem, size = 0x20000, scoped, tag = 'input window, operand 12, single buffered']
    #allocation33 [shape = 's32[1]{0}', space=sflag, size = 0x4, scoped, tag = 'scoped memory for model_forward_pallas.2']
    #allocation34 [shape = 'u8[65536]{0}', space=vmem, size = 0x10000, scoped, tag = 'input window, operand 16, single buffered']
    #allocation35 [shape = 'u8[32768]{0}', space=vmem, size = 0x8000, dematerialized = true, scoped, tag = 'FusionAdapter Buffer %fusion.1 = f32[64,18]{1,0:T(8,128)} fusion(%param_17.2, %param_18.2, %param_19.2, %param_20.3, %param_21.2), kind=kLoop, calls=%fused_computation.37.clone, metadata={op_name="jit(model_forward_pallas)/concatenate" stack_frame_id=12}']
    %31 = vsyncpa [#allocation28], 0
    %32 = vsyncpa [#allocation30], 0
    %33 = vsyncpa [#allocation33], 0
    // Predicated region
    $region2: #{model_forward_pallas.2} parent=1 // pred_check
      _
    $region3: #{model_forward_pallas.2} parent=1 // pred_check_branch
      %35 = sbr.rel (0) target = $region5
    $region4: #{model_forward_pallas.2} parent=1 // pred_region
      %s36 = scalar_lea.vmem %s17, 4294967248
    $region5: #{model_forward_pallas.2} parent=1 // pred_fallthru
      _
    // Predicated region
    $region6: #{model_forward_pallas.2} parent=1 // pred_check
      _
    $region7: #{model_forward_pallas.2} parent=1 // pred_check_branch
      %38 = sbr.rel (0) target = $region9
    $region8: #{model_forward_pallas.2} parent=1 // pred_region
      %s39 = scalar_lea.vmem %s19, 4294967264
    $region9: #{model_forward_pallas.2} parent=1 // pred_fallthru
      _
    // Predicated region
    $region10: #{model_forward_pallas.2} parent=1 // pred_check
      _
    $region11: #{model_forward_pallas.2} parent=1 // pred_check_branch
      %41 = sbr.rel (0) target = $region13
    $region12: #{model_forward_pallas.2} parent=1 // pred_region
      %s42 = scalar_lea.vmem %s20, 4294967280
    $region13: #{model_forward_pallas.2} parent=1 // pred_fallthru
      _
    // Predicated region
    $region14: #{model_forward_pallas.2} parent=1 // pred_check
      _
    $region15: #{model_forward_pallas.2} parent=1 // pred_check_branch
      %44 = sbr.rel (0) target = $region17
    $region16: #{model_forward_pallas.2} parent=1 // pred_region
      _
    $region17: #{model_forward_pallas.2} parent=1 // pred_fallthru
      _
    // Predicated region
    $region18: #{model_forward_pallas.2} parent=1 // pred_check
      _
    $region19: #{model_forward_pallas.2} parent=1 // pred_check_branch
      %46 = sbr.rel (0) target = $region21
    $region20: #{model_forward_pallas.2} parent=1 // pred_region
      _
    $region21: #{model_forward_pallas.2} parent=1 // pred_fallthru
      _
    // Predicated region
    $region22: #{model_forward_pallas.2} parent=1 // pred_check
      _
    $region23: #{model_forward_pallas.2} parent=1 // pred_check_branch
      %48 = sbr.rel (0) target = $region25
    $region24: #{model_forward_pallas.2} parent=1 // pred_region
      _
    $region25: #{model_forward_pallas.2} parent=1 // pred_fallthru
      _
    // Predicated region
    $region26: #{model_forward_pallas.2} parent=1 // pred_check
      _
    $region27: #{model_forward_pallas.2} parent=1 // pred_check_branch
      %50 = sbr.rel (0) target = $region29
    $region28: #{model_forward_pallas.2} parent=1 // pred_region
      _
    $region29: #{model_forward_pallas.2} parent=1 // pred_fallthru
      _
    // Predicated region
    $region30: #{model_forward_pallas.2} parent=1 // pred_check
      _
    $region31: #{model_forward_pallas.2} parent=1 // pred_check_branch
      %52 = sbr.rel (0) target = $region33
    $region32: #{model_forward_pallas.2} parent=1 // pred_region
      _
    $region33: #{model_forward_pallas.2} parent=1 // pred_fallthru
      _
    // Predicated region
    $region34: #{model_forward_pallas.2} parent=1 // pred_check
      _
    $region35: #{model_forward_pallas.2} parent=1 // pred_check_branch
      %54 = sbr.rel (0) target = $region37
    $region36: #{model_forward_pallas.2} parent=1 // pred_region
      _
    $region37: #{model_forward_pallas.2} parent=1 // pred_fallthru
      _
    // Predicated region
    $region38: #{model_forward_pallas.2} parent=1 // pred_check
      _
    $region39: #{model_forward_pallas.2} parent=1 // pred_check_branch
      %56 = sbr.rel (0) target = $region41
    $region40: #{model_forward_pallas.2} parent=1 // pred_region
      %58 = vsyncadd [#allocation28], 0
      %s59 = sshll.u32 %s5, 4
      %s60 = int_to_ptr.hbm [resolvable:$true] %s59
      %s61 = sshll.u32 [#allocation27], 4
      %s62 = int_to_ptr.vmem [resolvable:$true] %s61
      %67 = dma.hbm_to_vmem [thread:$0]  %s60, 8192, %s62, [#allocation28], 1024, 1024, 64
    $region41: #{model_forward_pallas.2} parent=1 // pred_fallthru
      _
    // Predicated region
    $region42: #{model_forward_pallas.2} parent=1 // pred_check
      _
    $region43: #{model_forward_pallas.2} parent=1 // pred_check_branch
      %69 = sbr.rel (0) target = $region45
    $region44: #{model_forward_pallas.2} parent=1 // pred_region
      _
    $region45: #{model_forward_pallas.2} parent=1 // pred_fallthru
      _
    // Predicated region
    $region46: #{model_forward_pallas.2} parent=1 // pred_check
      _
    $region47: #{model_forward_pallas.2} parent=1 // pred_check_branch
      %71 = sbr.rel (0) target = $region49
    $region48: #{model_forward_pallas.2} parent=1 // pred_region
      _
    $region49: #{model_forward_pallas.2} parent=1 // pred_fallthru
      _
    // Predicated region
    $region50: #{model_forward_pallas.2} parent=1 // pred_check
      _
    $region51: #{model_forward_pallas.2} parent=1 // pred_check_branch
      %73 = sbr.rel (0) target = $region53
    $region52: #{model_forward_pallas.2} parent=1 // pred_region
      %75 = vsyncadd [#allocation30], 0
      %s76 = sshll.u32 %s8, 4
      %s77 = int_to_ptr.hbm [resolvable:$true] %s76
      %s78 = sshll.u32 [#allocation29], 4
      %s79 = int_to_ptr.vmem [resolvable:$true] %s78
      %84 = dma.hbm_to_vmem [thread:$0]  %s77, 32768, %s79, [#allocation30], 1024, 1024, 64
    $region53: #{model_forward_pallas.2} parent=1 // pred_fallthru
      _
    // Predicated region
    $region54: #{model_forward_pallas.2} parent=1 // pred_check
      _
    $region55: #{model_forward_pallas.2} parent=1 // pred_check_branch
      %86 = sbr.rel (0) target = $region57
    $region56: #{model_forward_pallas.2} parent=1 // pred_region
      %88 = vsyncadd [#allocation30], 0
      %s89 = sshll.u32 %s9, 4
      %s90 = int_to_ptr.hbm [resolvable:$true] %s89
      %s91 = sshll.u32 [#allocation31], 4
      %s92 = int_to_ptr.vmem [resolvable:$true] %s91
      %97 = dma.hbm_to_vmem [thread:$0]  %s90, 32768, %s92, [#allocation30], 1024, 1024, 64
    $region57: #{model_forward_pallas.2} parent=1 // pred_fallthru
      _
    // Predicated region
    $region58: #{model_forward_pallas.2} parent=1 // pred_check
      _
    $region59: #{model_forward_pallas.2} parent=1 // pred_check_branch
      %99 = sbr.rel (0) target = $region61
    $region60: #{model_forward_pallas.2} parent=1 // pred_region
      _
    $region61: #{model_forward_pallas.2} parent=1 // pred_fallthru
      _
    // Predicated region
    $region62: #{model_forward_pallas.2} parent=1 // pred_check
      _
    $region63: #{model_forward_pallas.2} parent=1 // pred_check_branch
      %101 = sbr.rel (0) target = $region65
    $region64: #{model_forward_pallas.2} parent=1 // pred_region
      %103 = vsyncadd [#allocation33], 0
      %s104 = sshll.u32 %s11, 4
      %s105 = int_to_ptr.hbm [resolvable:$true] %s104
      %s106 = sshll.u32 [#allocation32], 4
      %s107 = int_to_ptr.vmem [resolvable:$true] %s106
      %112 = dma.hbm_to_vmem [thread:$0]  %s105, 4096, %s107, [#allocation33], 128, 128, 8
    $region65: #{model_forward_pallas.2} parent=1 // pred_fallthru
      _
    // Predicated region
    $region66: #{model_forward_pallas.2} parent=1 // pred_check
      _
    $region67: #{model_forward_pallas.2} parent=1 // pred_check_branch
      %114 = sbr.rel (0) target = $region69
    $region68: #{model_forward_pallas.2} parent=1 // pred_region
      _
    $region69: #{model_forward_pallas.2} parent=1 // pred_fallthru
      _
    // Predicated region
    $region70: #{model_forward_pallas.2} parent=1 // pred_check
      _
    $region71: #{model_forward_pallas.2} parent=1 // pred_check_branch
      %116 = sbr.rel (0) target = $region73
    $region72: #{model_forward_pallas.2} parent=1 // pred_region
      _
    $region73: #{model_forward_pallas.2} parent=1 // pred_fallthru
      _
    // Predicated region
    $region74: #{model_forward_pallas.2} parent=1 // pred_check
      _
    $region75: #{model_forward_pallas.2} parent=1 // pred_check_branch
      %118 = sbr.rel (0) target = $region77
    $region76: #{model_forward_pallas.2} parent=1 // pred_region
      _
    $region77: #{model_forward_pallas.2} parent=1 // pred_fallthru
      _
    // Predicated region
    $region78: #{model_forward_pallas.2} parent=1 // pred_check
      _
    $region79: #{model_forward_pallas.2} parent=1 // pred_check_branch
      %120 = sbr.rel (0) target = $region81
    $region80: #{model_forward_pallas.2} parent=1 // pred_region
      %122 = vsyncadd [#allocation33], 0
      %s123 = sshll.u32 %s15, 4
      %s124 = int_to_ptr.hbm [resolvable:$true] %s123
      %s125 = sshll.u32 [#allocation34], 4
      %s126 = int_to_ptr.vmem [resolvable:$true] %s125
      %131 = dma.hbm_to_vmem [thread:$0]  %s124, 2048, %s126, [#allocation33], 128, 128, 8
    $region81: #{model_forward_pallas.2} parent=1 // pred_fallthru
      _
    // Predicated region
    $region82: #{model_forward_pallas.2} parent=1 // pred_check
      _
    $region83: #{model_forward_pallas.2} parent=1 // pred_check_branch
      %133 = sbr.rel (0) target = $region85
    $region84: #{model_forward_pallas.2} parent=1 // pred_region
      _
    $region85: #{model_forward_pallas.2} parent=1 // pred_fallthru
      _
    // Predicated region
    $region86: #{model_forward_pallas.2} parent=1 // pred_check
      _
    $region87: #{model_forward_pallas.2} parent=1 // pred_check_branch
      %135 = sbr.rel (0) target = $region89
    $region88: #{model_forward_pallas.2} parent=1 // pred_region
      %137 = dma.done [#allocation28], 8192
    $region89: #{model_forward_pallas.2} parent=1 // pred_fallthru
      _
    // Predicated region
    $region90: #{model_forward_pallas.2} parent=1 // pred_check
      _
    $region91: #{model_forward_pallas.2} parent=1 // pred_check_branch
      %139 = sbr.rel (0) target = $region93
    $region92: #{model_forward_pallas.2} parent=1 // pred_region
      %141 = dma.done [#allocation30], 32768
    $region93: #{model_forward_pallas.2} parent=1 // pred_fallthru
      _
    // Predicated region
    $region94: #{model_forward_pallas.2} parent=1 // pred_check
      _
    $region95: #{model_forward_pallas.2} parent=1 // pred_check_branch
      %143 = sbr.rel (0) target = $region97
    $region96: #{model_forward_pallas.2} parent=1 // pred_region
      %145 = dma.done [#allocation30], 32768
    $region97: #{model_forward_pallas.2} parent=1 // pred_fallthru
      _
    // Predicated region
    $region98: #{model_forward_pallas.2} parent=1 // pred_check
      _
    $region99: #{model_forward_pallas.2} parent=1 // pred_check_branch
      %147 = sbr.rel (0) target = $region101
    $region100: #{model_forward_pallas.2} parent=1 // pred_region
      %149 = dma.done [#allocation33], 4096
    $region101: #{model_forward_pallas.2} parent=1 // pred_fallthru
      _
    // Predicated region
    $region102: #{model_forward_pallas.2} parent=1 // pred_check
      _
    $region103: #{model_forward_pallas.2} parent=1 // pred_check_branch
      %151 = sbr.rel (0) target = $region105
    $region104: #{model_forward_pallas.2} parent=1 // pred_region
      %153 = dma.done [#allocation33], 2048
    $region105: #{model_forward_pallas.2} parent=1 // pred_fallthru
      _
    %s154 = scalar_lea.vmem %s17, 4294967248
    %s155 = scalar_lea.vmem %s19, 4294967264
    %s156 = scalar_lea.vmem %s20, 4294967280
    %s157 = scalar_lea.vmem %s17, 4294967248
    %s158 = scalar_lea.vmem %s19, 4294967264
    %s159 = scalar_lea.vmem %s20, 4294967280
    %v160 = vld [vmem:[%s21] sm:$0xff]
    %v161 = vlaneseq
    %v162 = vand.u32 %v161, 127
    %vm164 = vcmp.lt.s32.totalorder %v162, 18
    %v165 = vsel %vm164, %v160, %v30
    %166 = xla_tuple %v165, %v29
    %167 = xla_tuple %166
    %v168 = vmax.f32 %v165, %v29
    %169 = xla_tuple %v168
    %170 = xla_tuple %v168, %v28
    %171 = xla_tuple %170
    %v172 = vmax.f32 %v168, %v28
    %173 = xla_tuple %v172
    %174 = xla_tuple %v172, %v27
    %175 = xla_tuple %174
    %v176 = vmax.f32 %v172, %v27
    %177 = xla_tuple %v176
    %s179 = ssub.s32 256, 1
    %180 = vst [vmem:[#allocation35] sm:%s179] %v176
    %s181 = scalar_lea.vmem %s157, 8
    %s182 = scalar_lea.vmem %s158, 8
    %s183 = scalar_lea.vmem %s159, 8
    %s184 = scalar_lea.vmem %s21, 8
    %v185 = vld [vmem:[%s184] sm:$0xff]
    %v186 = vlaneseq
    %v187 = vand.u32 %v186, 127
    %vm189 = vcmp.lt.s32.totalorder %v187, 18
    %v190 = vsel %vm189, %v185, %v30
    %191 = xla_tuple %v190, %v29
    %192 = xla_tuple %191
    %v193 = vmax.f32 %v190, %v29
    %194 = xla_tuple %v193
    %195 = xla_tuple %v193, %v28
    %196 = xla_tuple %195
    %v197 = vmax.f32 %v193, %v28
    %198 = xla_tuple %v197
    %199 = xla_tuple %v197, %v27
    %200 = xla_tuple %199
    %v201 = vmax.f32 %v197, %v27
    %202 = xla_tuple %v201
    %s203 = scalar_lea.vmem [#allocation35], 8
    %s205 = ssub.s32 256, 1
    %206 = vst [vmem:[%s203] sm:%s205] %v201
    %s207 = scalar_lea.vmem %s157, 16
    %s208 = scalar_lea.vmem %s158, 16
    %s209 = scalar_lea.vmem %s159, 16
    %v210 = vld [vmem:[%s209] sm:$0xff]
    %v211 = vlaneseq
    %v212 = vand.u32 %v211, 127
    %vm214 = vcmp.lt.s32.totalorder %v212, 18
    %v215 = vsel %vm214, %v210, %v29
    %216 = xla_tuple %v30, %v215
    %217 = xla_tuple %216
    %v218 = vmax.f32 %v30, %v215
    %219 = xla_tuple %v218
    %220 = xla_tuple %v218, %v28
    %221 = xla_tuple %220
    %v222 = vmax.f32 %v218, %v28
    %223 = xla_tuple %v222
    %224 = xla_tuple %v222, %v27
    %225 = xla_tuple %224
    %v226 = vmax.f32 %v222, %v27
    %227 = xla_tuple %v226
    %s228 = scalar_lea.vmem [#allocation35], 16
    %s230 = ssub.s32 256, 1
    %231 = vst [vmem:[%s228] sm:%s230] %v226
    %s232 = scalar_lea.vmem %s157, 24
    %s233 = scalar_lea.vmem %s158, 24
    %s234 = scalar_lea.vmem %s159, 24
    %v235 = vld [vmem:[%s234] sm:$0xff]
    %v236 = vlaneseq
    %v237 = vand.u32 %v236, 127
    %vm239 = vcmp.lt.s32.totalorder %v237, 18
    %v240 = vsel %vm239, %v235, %v29
    %241 = xla_tuple %v30, %v240
    %242 = xla_tuple %241
    %v243 = vmax.f32 %v30, %v240
    %244 = xla_tuple %v243
    %245 = xla_tuple %v243, %v28
    %246 = xla_tuple %245
    %v247 = vmax.f32 %v243, %v28
    %248 = xla_tuple %v247
    %249 = xla_tuple %v247, %v27
    %250 = xla_tuple %249
    %v251 = vmax.f32 %v247, %v27
    %252 = xla_tuple %v251
    %s253 = scalar_lea.vmem [#allocation35], 24
    %s255 = ssub.s32 256, 1
    %256 = vst [vmem:[%s253] sm:%s255] %v251
    %s257 = scalar_lea.vmem %s157, 32
    %s258 = scalar_lea.vmem %s158, 32
    %v259 = vld [vmem:[%s258] sm:$0xff]
    %v260 = vlaneseq
    %v261 = vand.u32 %v260, 127
    %vm263 = vcmp.lt.s32.totalorder %v261, 18
    %v264 = vsel %vm263, %v259, %v28
    %265 = xla_tuple %v30, %v29
    %266 = xla_tuple %265
    %v267 = vmax.f32 %v30, %v29
    %268 = xla_tuple %v267
    %269 = xla_tuple %v267, %v264
    %270 = xla_tuple %269
    %v271 = vmax.f32 %v267, %v264
    %272 = xla_tuple %v271
    %273 = xla_tuple %v271, %v27
    %274 = xla_tuple %273
    %v275 = vmax.f32 %v271, %v27
    %276 = xla_tuple %v275
    %s277 = scalar_lea.vmem [#allocation35], 32
    %s279 = ssub.s32 256, 1
    %280 = vst [vmem:[%s277] sm:%s279] %v275
    %s281 = scalar_lea.vmem %s157, 40
    %s282 = scalar_lea.vmem %s158, 40
    %v283 = vld [vmem:[%s282] sm:$0xff]
    %v284 = vlaneseq
    %v285 = vand.u32 %v284, 127
    %vm287 = vcmp.lt.s32.totalorder %v285, 18
    %v288 = vsel %vm287, %v283, %v28
    %289 = xla_tuple %v30, %v29
    %290 = xla_tuple %289
    %v291 = vmax.f32 %v30, %v29
    %292 = xla_tuple %v291
    %293 = xla_tuple %v291, %v288
    %294 = xla_tuple %293
    %v295 = vmax.f32 %v291, %v288
    %296 = xla_tuple %v295
    %297 = xla_tuple %v295, %v27
    %298 = xla_tuple %297
    %v299 = vmax.f32 %v295, %v27
    %300 = xla_tuple %v299
    %s301 = scalar_lea.vmem [#allocation35], 40
    %s303 = ssub.s32 256, 1
    %304 = vst [vmem:[%s301] sm:%s303] %v299
    %s305 = scalar_lea.vmem %s157, 48
    %v306 = vld [vmem:[%s305] sm:$0xff]
    %v307 = vlaneseq
    %v308 = vand.u32 %v307, 127
    %vm310 = vcmp.lt.s32.totalorder %v308, 18
    %v311 = vsel %vm310, %v306, %v27
    %312 = xla_tuple %v30, %v29
    %313 = xla_tuple %312
    %v314 = vmax.f32 %v30, %v29
    %315 = xla_tuple %v314
    %316 = xla_tuple %v314, %v28
    %317 = xla_tuple %316
    %v318 = vmax.f32 %v314, %v28
    %319 = xla_tuple %v318
    %320 = xla_tuple %v318, %v311
    %321 = xla_tuple %320
    %v322 = vmax.f32 %v318, %v311
    %323 = xla_tuple %v322
    %s324 = scalar_lea.vmem [#allocation35], 48
    %s326 = ssub.s32 256, 1
    %327 = vst [vmem:[%s324] sm:%s326] %v322
    %s328 = scalar_lea.vmem %s157, 56
    %v329 = vld [vmem:[%s328] sm:$0xff]
    %v330 = vlaneseq
    %v331 = vand.u32 %v330, 127
    %vm333 = vcmp.lt.s32.totalorder %v331, 18
    %v334 = vsel %vm333, %v329, %v27
    %335 = xla_tuple %v30, %v29
    %336 = xla_tuple %335
    %v337 = vmax.f32 %v30, %v29
    %338 = xla_tuple %v337
    %339 = xla_tuple %v337, %v28
    %340 = xla_tuple %339
    %v341 = vmax.f32 %v337, %v28
    %342 = xla_tuple %v341
    %343 = xla_tuple %v341, %v334
    %344 = xla_tuple %343
    %v345 = vmax.f32 %v341, %v334
    %346 = xla_tuple %v345
    %s347 = scalar_lea.vmem [#allocation35], 56
    %s349 = ssub.s32 256, 1
    %350 = vst [vmem:[%s347] sm:%s349] %v345
    %v351 = vld [vmem:[#allocation35] sm:$0xff]
    %v352 = vld [vmem:[#allocation35 + $0x8] sm:$0xff]
    %v353 = vld [vmem:[#allocation35 + $0x10] sm:$0xff]
    %v354 = vld [vmem:[#allocation35 + $0x18] sm:$0xff]
    %v355 = vld [vmem:[#allocation35 + $0x20] sm:$0xff]
    %v356 = vld [vmem:[#allocation35 + $0x28] sm:$0xff]
    %v357 = vld [vmem:[#allocation35 + $0x30] sm:$0xff]
    %v358 = vld [vmem:[#allocation35 + $0x38] sm:$0xff]
    %v359 = vld [vmem:[%s0] sm:$0xff]
    %v360 = vld [vmem:[%s0 + $0x8] sm:$0xff]
    %v361 = vld [vmem:[%s0 + $0x10] sm:$0x3]
    %v362 = vld [vmem:[%s1] sm:$0x1]
    %v364 = vperm.slane %v362, 0
    %vm366 = vcmask 146432
    %v368 = vsel %vm366, %v351, 0
    %v371 = vsel %vm366, %v352, 0
    %v374 = vsel %vm366, %v353, 0
    %v377 = vsel %vm366, %v354, 0
    %v380 = vsel %vm366, %v355, 0
    %v383 = vsel %vm366, %v356, 0
    %v386 = vsel %vm366, %v357, 0
    %v389 = vsel %vm366, %v358, 0
    %vm391 = vcmask 1041408
    %v393 = vsel %vm391, %v361, 0
    %395 = vmatpush.msra.mxu0 0.0
    %396 = vmatpush.msra.mxu0 0.0
    %397 = vmatpush.msra.mxu0 0.0
    %398 = vmatpush.msra.mxu0 0.0
    %399 = vmatpush.msra.mxu0 0.0
    %400 = vmatpush.msra.mxu0 0.0
    %401 = vmatpush.msra.mxu0 0.0
    %402 = vmatpush.msra.mxu0 0.0
    %403 = vmatpush.msra.mxu0 0.0
    %404 = vmatpush.msra.mxu0 0.0
    %405 = vmatpush.msra.mxu0 0.0
    %406 = vmatpush.msra.mxu0 0.0
    %407 = vmatpush.msra.mxu0 0.0
    %408 = vmatpush.msra.mxu0 %v393
    %409 = vmatpush.msra.mxu0 %v360
    %410 = vmatpush.msra.mxu0 %v359
    %411 = vmatmul.f32.gmra.mxu0 %v368
    %v412 = vpop.f32.mrf.mxu0
    %v413 = vadd.f32 %v364, %v412
    %414 = vmatmul.f32.gmra.mxu0 %v371
    %v415 = vpop.f32.mrf.mxu0
    %v416 = vadd.f32 %v364, %v415
    %417 = vmatmul.f32.gmra.mxu0 %v374
    %v418 = vpop.f32.mrf.mxu0
    %v419 = vadd.f32 %v364, %v418
    %420 = vmatmul.f32.gmra.mxu0 %v377
    %v421 = vpop.f32.mrf.mxu0
    %v422 = vadd.f32 %v364, %v421
    %423 = vmatmul.f32.gmra.mxu0 %v380
    %v424 = vpop.f32.mrf.mxu0
    %v425 = vadd.f32 %v364, %v424
    %426 = vmatmul.f32.gmra.mxu0 %v383
    %v427 = vpop.f32.mrf.mxu0
    %v428 = vadd.f32 %v364, %v427
    %429 = vmatmul.f32.gmra.mxu0 %v386
    %v430 = vpop.f32.mrf.mxu0
    %v431 = vadd.f32 %v364, %v430
    %432 = vmatmul.f32.gmra.mxu0 %v389
    %v433 = vpop.f32.mrf.mxu0
    %v434 = vadd.f32 %v364, %v433
    %435 = vdwg.mxu0
    %v436 = vmax.f32 %v413, 0.0
    %v437 = vmax.f32 %v416, 0.0
    %v438 = vmax.f32 %v419, 0.0
    %v439 = vmax.f32 %v422, 0.0
    %v440 = vmax.f32 %v425, 0.0
    %v441 = vmax.f32 %v428, 0.0
    %v442 = vmax.f32 %v431, 0.0
    %v443 = vmax.f32 %v434, 0.0
    %v444 = vmax.f32 %v436, %v438
    %v445 = vmax.f32 %v437, %v439
    %v446 = vmax.f32 %v440, %v442
    %v447 = vmax.f32 %v441, %v443
    %v448 = vmax.f32 %v444, %v446
    %v449 = vmax.f32 %v445, %v447
    %v450 = vld [vmem:[%s4] sm:$0x1]
    %v451 = vld [vmem:[%s2] sm:$0xff]
    %v452 = vld [vmem:[%s2 + $0x8] sm:$0xff]
    %v453 = vld [vmem:[%s2 + $0x10] sm:$0xff]
    %v454 = vld [vmem:[%s2 + $0x18] sm:$0xff]
    %v455 = vld [vmem:[%s2 + $0x20] sm:$0xff]
    %v456 = vld [vmem:[%s2 + $0x28] sm:$0xff]
    %v457 = vld [vmem:[%s2 + $0x30] sm:$0xff]
    %v458 = vld [vmem:[%s2 + $0x38] sm:$0xff]
    %v459 = vld [vmem:[%s2 + $0x40] sm:$0xff]
    %v460 = vld [vmem:[%s2 + $0x48] sm:$0xff]
    %v461 = vld [vmem:[%s2 + $0x50] sm:$0xff]
    %v462 = vld [vmem:[%s2 + $0x58] sm:$0xff]
    %v463 = vld [vmem:[%s2 + $0x60] sm:$0xff]
    %v464 = vld [vmem:[%s2 + $0x68] sm:$0xff]
    %v465 = vld [vmem:[%s2 + $0x70] sm:$0xff]
    %v466 = vld [vmem:[%s2 + $0x78] sm:$0xff]
    %v467 = vld [vmem:[%s2 + $0x80] sm:$0xff]
    %v468 = vld [vmem:[%s2 + $0x88] sm:$0xff]
    %v469 = vld [vmem:[%s2 + $0x90] sm:$0xff]
    %v470 = vld [vmem:[%s2 + $0x98] sm:$0xff]
    %v471 = vld [vmem:[%s2 + $0xa0] sm:$0xff]
    %v472 = vld [vmem:[%s2 + $0xa8] sm:$0xff]
    %v473 = vld [vmem:[%s2 + $0xb0] sm:$0xff]
    %v474 = vld [vmem:[%s2 + $0xb8] sm:$0xff]
    %vm475 = vcmask 130048
    %v477 = vsel %vm475, %v451, 0
    %v480 = vsel %vm475, %v452, 0
    %v483 = vsel %vm475, %v453, 0
    %v486 = vsel %vm475, %v454, 0
    %v489 = vsel %vm475, %v455, 0
    %v492 = vsel %vm475, %v456, 0
    %v495 = vsel %vm475, %v457, 0
    %v498 = vsel %vm475, %v458, 0
    %v501 = vsel %vm475, %v459, 0
    %v504 = vsel %vm475, %v460, 0
    %v507 = vsel %vm475, %v461, 0
    %v510 = vsel %vm475, %v462, 0
    %v513 = vsel %vm475, %v463, 0
    %v516 = vsel %vm475, %v464, 0
    %v519 = vsel %vm475, %v465, 0
    %v522 = vsel %vm475, %v466, 0
    %v525 = vsel %vm475, %v467, 0
    %v528 = vsel %vm475, %v468, 0
    %v531 = vsel %vm475, %v469, 0
    %v534 = vsel %vm475, %v470, 0
    %v537 = vsel %vm475, %v471, 0
    %v540 = vsel %vm475, %v472, 0
    %v543 = vsel %vm475, %v473, 0
    %v546 = vsel %vm475, %v474, 0
    %548 = vmatpush.msra.mxu0 0.0
    %549 = vmatpush.msra.mxu0 0.0
    %550 = vmatpush.msra.mxu0 0.0
    %551 = vmatpush.msra.mxu0 0.0
    %552 = vmatpush.msra.mxu0 0.0
    %553 = vmatpush.msra.mxu0 0.0
    %554 = vmatpush.msra.mxu0 0.0
    %555 = vmatpush.msra.mxu0 0.0
    %556 = vmatpush.msra.mxu0 0.0
    %557 = vmatpush.msra.mxu0 0.0
    %558 = vmatpush.msra.mxu0 0.0
    %559 = vmatpush.msra.mxu0 0.0
    %560 = vmatpush.msra.mxu0 0.0
    %561 = vmatpush.msra.mxu0 0.0
    %562 = vmatpush.msra.mxu0 %v449
    %563 = vmatpush.msra.mxu0 %v448
    %564 = vmatmul.f32.gmra.mxu0 %v477
    %v565 = vpop.f32.mrf.mxu0
    %v566 = vadd.f32 0.0, %v565
    %567 = vmatmul.f32.gmra.mxu0 %v480
    %v568 = vpop.f32.mrf.mxu0
    %v569 = vadd.f32 0.0, %v568
    %570 = vmatmul.f32.gmra.mxu0 %v483
    %v571 = vpop.f32.mrf.mxu0
    %v572 = vadd.f32 0.0, %v571
    %573 = vmatmul.f32.gmra.mxu0 %v486
    %v574 = vpop.f32.mrf.mxu0
    %v575 = vadd.f32 0.0, %v574
    %576 = vmatmul.f32.gmra.mxu0 %v489
    %v577 = vpop.f32.mrf.mxu0
    %v578 = vadd.f32 0.0, %v577
    %579 = vmatmul.f32.gmra.mxu0 %v492
    %v580 = vpop.f32.mrf.mxu0
    %v581 = vadd.f32 0.0, %v580
    %582 = vmatmul.f32.gmra.mxu0 %v495
    %v583 = vpop.f32.mrf.mxu0
    %v584 = vadd.f32 0.0, %v583
    %585 = vmatmul.f32.gmra.mxu0 %v498
    %v586 = vpop.f32.mrf.mxu0
    %v587 = vadd.f32 0.0, %v586
    %588 = vmatmul.f32.gmra.mxu0 %v501
    %v589 = vpop.f32.mrf.mxu0
    %v590 = vadd.f32 0.0, %v589
    %591 = vmatmul.f32.gmra.mxu0 %v504
    %v592 = vpop.f32.mrf.mxu0
    %v593 = vadd.f32 0.0, %v592
    %594 = vmatmul.f32.gmra.mxu0 %v507
    %v595 = vpop.f32.mrf.mxu0
    %v596 = vadd.f32 0.0, %v595
    %597 = vmatmul.f32.gmra.mxu0 %v510
    %v598 = vpop.f32.mrf.mxu0
    %v599 = vadd.f32 0.0, %v598
    %600 = vmatmul.f32.gmra.mxu0 %v513
    %v601 = vpop.f32.mrf.mxu0
    %v602 = vadd.f32 0.0, %v601
    %603 = vmatmul.f32.gmra.mxu0 %v516
    %v604 = vpop.f32.mrf.mxu0
    %v605 = vadd.f32 0.0, %v604
    %606 = vmatmul.f32.gmra.mxu0 %v519
    %v607 = vpop.f32.mrf.mxu0
    %v608 = vadd.f32 0.0, %v607
    %609 = vmatmul.f32.gmra.mxu0 %v522
    %v610 = vpop.f32.mrf.mxu0
    %v611 = vadd.f32 0.0, %v610
    %612 = vmatmul.f32.gmra.mxu0 %v525
    %v613 = vpop.f32.mrf.mxu0
    %v614 = vadd.f32 0.0, %v613
    %615 = vmatmul.f32.gmra.mxu0 %v528
    %v616 = vpop.f32.mrf.mxu0
    %v617 = vadd.f32 0.0, %v616
    %618 = vmatmul.f32.gmra.mxu0 %v531
    %v619 = vpop.f32.mrf.mxu0
    %v620 = vadd.f32 0.0, %v619
    %621 = vmatmul.f32.gmra.mxu0 %v534
    %v622 = vpop.f32.mrf.mxu0
    %v623 = vadd.f32 0.0, %v622
    %624 = vmatmul.f32.gmra.mxu0 %v537
    %v625 = vpop.f32.mrf.mxu0
    %v626 = vadd.f32 0.0, %v625
    %627 = vmatmul.f32.gmra.mxu0 %v540
    %v628 = vpop.f32.mrf.mxu0
    %v629 = vadd.f32 0.0, %v628
    %630 = vmatmul.f32.gmra.mxu0 %v543
    %v631 = vpop.f32.mrf.mxu0
    %v632 = vadd.f32 0.0, %v631
    %633 = vmatmul.f32.gmra.mxu0 %v546
    %v634 = vpop.f32.mrf.mxu0
    %v635 = vadd.f32 0.0, %v634
    %636 = vdwg.mxu0
    %v637 = vld [vmem:[%s3] sm:$0xff]
    %v638 = vld [vmem:[%s3 + $0x8] sm:$0xff]
    %v639 = vld [vmem:[%s3 + $0x10] sm:$0xff]
    %v640 = vld [vmem:[%s3 + $0x18] sm:$0xff]
    %v641 = vld [vmem:[%s3 + $0x20] sm:$0xff]
    %v642 = vld [vmem:[%s3 + $0x28] sm:$0xff]
    %v643 = vld [vmem:[%s3 + $0x30] sm:$0xff]
    %v644 = vld [vmem:[%s3 + $0x38] sm:$0xff]
    %v645 = vld [vmem:[%s3 + $0x40] sm:$0xff]
    %v646 = vld [vmem:[%s3 + $0x48] sm:$0xff]
    %v647 = vld [vmem:[%s3 + $0x50] sm:$0xff]
    %v648 = vld [vmem:[%s3 + $0x58] sm:$0xff]
    %v649 = vld [vmem:[%s3 + $0x60] sm:$0xff]
    %v650 = vld [vmem:[%s3 + $0x68] sm:$0xff]
    %v651 = vld [vmem:[%s3 + $0x70] sm:$0xff]
    %v652 = vld [vmem:[%s3 + $0x78] sm:$0xff]
    %v653 = vld [vmem:[%s3 + $0x80] sm:$0xff]
    %v654 = vld [vmem:[%s3 + $0x88] sm:$0xff]
    %v655 = vld [vmem:[%s3 + $0x90] sm:$0xff]
    %v656 = vld [vmem:[%s3 + $0x98] sm:$0xff]
    %v657 = vld [vmem:[%s3 + $0xa0] sm:$0xff]
    %v658 = vld [vmem:[%s3 + $0xa8] sm:$0xff]
    %v659 = vld [vmem:[%s3 + $0xb0] sm:$0xff]
    %v660 = vld [vmem:[%s3 + $0xb8] sm:$0xff]
    %v661 = vld [vmem:[%s3 + $0xc0] sm:$0xff]
    %v662 = vld [vmem:[%s3 + $0xc8] sm:$0xff]
    %v663 = vld [vmem:[%s3 + $0xd0] sm:$0xff]
    %v664 = vld [vmem:[%s3 + $0xd8] sm:$0xff]
    %v665 = vld [vmem:[%s3 + $0xe0] sm:$0xff]
    %v666 = vld [vmem:[%s3 + $0xe8] sm:$0xff]
    %v667 = vld [vmem:[%s3 + $0xf0] sm:$0xff]
    %v668 = vld [vmem:[%s3 + $0xf8] sm:$0xff]
    %v669 = vld [vmem:[%s3 + $0x100] sm:$0xff]
    %v670 = vld [vmem:[%s3 + $0x108] sm:$0xff]
    %v671 = vld [vmem:[%s3 + $0x110] sm:$0xff]
    %v672 = vld [vmem:[%s3 + $0x118] sm:$0xff]
    %v673 = vld [vmem:[%s3 + $0x120] sm:$0xff]
    %v674 = vld [vmem:[%s3 + $0x128] sm:$0xff]
    %v675 = vld [vmem:[%s3 + $0x130] sm:$0xff]
    %v676 = vld [vmem:[%s3 + $0x138] sm:$0xff]
    %v677 = vld [vmem:[%s3 + $0x140] sm:$0xff]
    %v678 = vld [vmem:[%s3 + $0x148] sm:$0xff]
    %v679 = vld [vmem:[%s3 + $0x150] sm:$0xff]
    %v680 = vld [vmem:[%s3 + $0x158] sm:$0xff]
    %v681 = vld [vmem:[%s3 + $0x160] sm:$0xff]
    %v682 = vld [vmem:[%s3 + $0x168] sm:$0xff]
    %v683 = vld [vmem:[%s3 + $0x170] sm:$0xff]
    %v684 = vld [vmem:[%s3 + $0x178] sm:$0xff]
    %v686 = vperm.slane %v450, 0
    %688 = vmatpush.msra.mxu0 %v652
    %689 = vmatpush.msra.mxu0 %v651
    %690 = vmatpush.msra.mxu0 %v650
    %691 = vmatpush.msra.mxu0 %v649
    %692 = vmatpush.msra.mxu0 %v648
    %693 = vmatpush.msra.mxu0 %v647
    %694 = vmatpush.msra.mxu0 %v646
    %695 = vmatpush.msra.mxu0 %v645
    %696 = vmatpush.msra.mxu0 %v644
    %697 = vmatpush.msra.mxu0 %v643
    %698 = vmatpush.msra.mxu0 %v642
    %699 = vmatpush.msra.mxu0 %v641
    %700 = vmatpush.msra.mxu0 %v640
    %701 = vmatpush.msra.mxu0 %v639
    %702 = vmatpush.msra.mxu0 %v638
    %703 = vmatpush.msra.mxu0 %v637
    %704 = vmatmul.f32.gmra.mxu0 %v566
    %v705 = vpop.f32.mrf.mxu0
    %v706 = vadd.f32 %v686, %v705
    %707 = vmatmul.f32.gmra.mxu0 %v569
    %v708 = vpop.f32.mrf.mxu0
    %v709 = vadd.f32 %v686, %v708
    %710 = vmatmul.f32.gmra.mxu0 %v572
    %v711 = vpop.f32.mrf.mxu0
    %v712 = vadd.f32 %v686, %v711
    %713 = vmatmul.f32.gmra.mxu0 %v575
    %v714 = vpop.f32.mrf.mxu0
    %v715 = vadd.f32 %v686, %v714
    %716 = vdwg.mxu0
    %717 = vmatpush.msra.mxu0 %v668
    %718 = vmatpush.msra.mxu0 %v667
    %719 = vmatpush.msra.mxu0 %v666
    %720 = vmatpush.msra.mxu0 %v665
    %721 = vmatpush.msra.mxu0 %v664
    %722 = vmatpush.msra.mxu0 %v663
    %723 = vmatpush.msra.mxu0 %v662
    %724 = vmatpush.msra.mxu0 %v661
    %725 = vmatpush.msra.mxu0 %v660
    %726 = vmatpush.msra.mxu0 %v659
    %727 = vmatpush.msra.mxu0 %v658
    %728 = vmatpush.msra.mxu0 %v657
    %729 = vmatpush.msra.mxu0 %v656
    %730 = vmatpush.msra.mxu0 %v655
    %731 = vmatpush.msra.mxu0 %v654
    %732 = vmatpush.msra.mxu0 %v653
    %733 = vmatmul.f32.gmra.mxu0 %v578
    %v734 = vpop.f32.mrf.mxu0
    %v735 = vadd.f32 %v706, %v734
    %736 = vmatmul.f32.gmra.mxu0 %v581
    %v737 = vpop.f32.mrf.mxu0
    %v738 = vadd.f32 %v709, %v737
    %739 = vmatmul.f32.gmra.mxu0 %v584
    %v740 = vpop.f32.mrf.mxu0
    %v741 = vadd.f32 %v712, %v740
    %742 = vmatmul.f32.gmra.mxu0 %v587
    %v743 = vpop.f32.mrf.mxu0
    %v744 = vadd.f32 %v715, %v743
    %745 = vdwg.mxu0
    %746 = vmatpush.msra.mxu0 %v684
    %747 = vmatpush.msra.mxu0 %v683
    %748 = vmatpush.msra.mxu0 %v682
    %749 = vmatpush.msra.mxu0 %v681
    %750 = vmatpush.msra.mxu0 %v680
    %751 = vmatpush.msra.mxu0 %v679
    %752 = vmatpush.msra.mxu0 %v678
    %753 = vmatpush.msra.mxu0 %v677
    %754 = vmatpush.msra.mxu0 %v676
    %755 = vmatpush.msra.mxu0 %v675
    %756 = vmatpush.msra.mxu0 %v674
    %757 = vmatpush.msra.mxu0 %v673
    %758 = vmatpush.msra.mxu0 %v672
    %759 = vmatpush.msra.mxu0 %v671
    %760 = vmatpush.msra.mxu0 %v670
    %761 = vmatpush.msra.mxu0 %v669
    %762 = vmatmul.f32.gmra.mxu0 %v590
    %v763 = vpop.f32.mrf.mxu0
    %v764 = vadd.f32 %v735, %v763
    %765 = vmatmul.f32.gmra.mxu0 %v593
    %v766 = vpop.f32.mrf.mxu0
    %v767 = vadd.f32 %v738, %v766
    %768 = vmatmul.f32.gmra.mxu0 %v596
    %v769 = vpop.f32.mrf.mxu0
    %v770 = vadd.f32 %v741, %v769
    %771 = vmatmul.f32.gmra.mxu0 %v599
    %v772 = vpop.f32.mrf.mxu0
    %v773 = vadd.f32 %v744, %v772
    %774 = vdwg.mxu0
    %v775 = vmax.f32 %v764, 0.0
    %v776 = vmax.f32 %v767, 0.0
    %v777 = vmax.f32 %v770, 0.0
    %v778 = vmax.f32 %v773, 0.0
    %s779 = scalar_lea.vmem %s3, 384
    %v780 = vld [vmem:[%s779] sm:$0xff]
    %v781 = vld [vmem:[%s779 + $0x8] sm:$0xff]
    %v782 = vld [vmem:[%s779 + $0x10] sm:$0xff]
    %v783 = vld [vmem:[%s779 + $0x18] sm:$0xff]
    %v784 = vld [vmem:[%s779 + $0x20] sm:$0xff]
    %v785 = vld [vmem:[%s779 + $0x28] sm:$0xff]
    %v786 = vld [vmem:[%s779 + $0x30] sm:$0xff]
    %v787 = vld [vmem:[%s779 + $0x38] sm:$0xff]
    %v788 = vld [vmem:[%s779 + $0x40] sm:$0xff]
    %v789 = vld [vmem:[%s779 + $0x48] sm:$0xff]
    %v790 = vld [vmem:[%s779 + $0x50] sm:$0xff]
    %v791 = vld [vmem:[%s779 + $0x58] sm:$0xff]
    %v792 = vld [vmem:[%s779 + $0x60] sm:$0xff]
    %v793 = vld [vmem:[%s779 + $0x68] sm:$0xff]
    %v794 = vld [vmem:[%s779 + $0x70] sm:$0xff]
    %v795 = vld [vmem:[%s779 + $0x78] sm:$0xff]
    %v796 = vld [vmem:[%s779 + $0x80] sm:$0xff]
    %v797 = vld [vmem:[%s779 + $0x88] sm:$0xff]
    %v798 = vld [vmem:[%s779 + $0x90] sm:$0xff]
    %v799 = vld [vmem:[%s779 + $0x98] sm:$0xff]
    %v800 = vld [vmem:[%s779 + $0xa0] sm:$0xff]
    %v801 = vld [vmem:[%s779 + $0xa8] sm:$0xff]
    %v802 = vld [vmem:[%s779 + $0xb0] sm:$0xff]
    %v803 = vld [vmem:[%s779 + $0xb8] sm:$0xff]
    %v804 = vld [vmem:[%s779 + $0xc0] sm:$0xff]
    %v805 = vld [vmem:[%s779 + $0xc8] sm:$0xff]
    %v806 = vld [vmem:[%s779 + $0xd0] sm:$0xff]
    %v807 = vld [vmem:[%s779 + $0xd8] sm:$0xff]
    %v808 = vld [vmem:[%s779 + $0xe0] sm:$0xff]
    %v809 = vld [vmem:[%s779 + $0xe8] sm:$0xff]
    %v810 = vld [vmem:[%s779 + $0xf0] sm:$0xff]
    %v811 = vld [vmem:[%s779 + $0xf8] sm:$0xff]
    %v812 = vld [vmem:[%s779 + $0x100] sm:$0xff]
    %v813 = vld [vmem:[%s779 + $0x108] sm:$0xff]
    %v814 = vld [vmem:[%s779 + $0x110] sm:$0xff]
    %v815 = vld [vmem:[%s779 + $0x118] sm:$0xff]
    %v816 = vld [vmem:[%s779 + $0x120] sm:$0xff]
    %v817 = vld [vmem:[%s779 + $0x128] sm:$0xff]
    %v818 = vld [vmem:[%s779 + $0x130] sm:$0xff]
    %v819 = vld [vmem:[%s779 + $0x138] sm:$0xff]
    %v820 = vld [vmem:[%s779 + $0x140] sm:$0xff]
    %v821 = vld [vmem:[%s779 + $0x148] sm:$0xff]
    %v822 = vld [vmem:[%s779 + $0x150] sm:$0xff]
    %v823 = vld [vmem:[%s779 + $0x158] sm:$0xff]
    %v824 = vld [vmem:[%s779 + $0x160] sm:$0xff]
    %v825 = vld [vmem:[%s779 + $0x168] sm:$0xff]
    %v826 = vld [vmem:[%s779 + $0x170] sm:$0xff]
    %v827 = vld [vmem:[%s779 + $0x178] sm:$0xff]
    %828 = vmatpush.msra.mxu0 %v795
    %829 = vmatpush.msra.mxu0 %v794
    %830 = vmatpush.msra.mxu0 %v793
    %831 = vmatpush.msra.mxu0 %v792
    %832 = vmatpush.msra.mxu0 %v791
    %833 = vmatpush.msra.mxu0 %v790
    %834 = vmatpush.msra.mxu0 %v789
    %835 = vmatpush.msra.mxu0 %v788
    %836 = vmatpush.msra.mxu0 %v787
    %837 = vmatpush.msra.mxu0 %v786
    %838 = vmatpush.msra.mxu0 %v785
    %839 = vmatpush.msra.mxu0 %v784
    %840 = vmatpush.msra.mxu0 %v783
    %841 = vmatpush.msra.mxu0 %v782
    %842 = vmatpush.msra.mxu0 %v781
    %843 = vmatpush.msra.mxu0 %v780
    %844 = vmatmul.f32.gmra.mxu0 %v566
    %v845 = vpop.f32.mrf.mxu0
    %v846 = vadd.f32 %v686, %v845
    %847 = vmatmul.f32.gmra.mxu0 %v569
    %v848 = vpop.f32.mrf.mxu0
    %v849 = vadd.f32 %v686, %v848
    %850 = vmatmul.f32.gmra.mxu0 %v572
    %v851 = vpop.f32.mrf.mxu0
    %v852 = vadd.f32 %v686, %v851
    %853 = vmatmul.f32.gmra.mxu0 %v575
    %v854 = vpop.f32.mrf.mxu0
    %v855 = vadd.f32 %v686, %v854
    %856 = vdwg.mxu0
    %857 = vmatpush.msra.mxu0 %v811
    %858 = vmatpush.msra.mxu0 %v810
    %859 = vmatpush.msra.mxu0 %v809
    %860 = vmatpush.msra.mxu0 %v808
    %861 = vmatpush.msra.mxu0 %v807
    %862 = vmatpush.msra.mxu0 %v806
    %863 = vmatpush.msra.mxu0 %v805
    %864 = vmatpush.msra.mxu0 %v804
    %865 = vmatpush.msra.mxu0 %v803
    %866 = vmatpush.msra.mxu0 %v802
    %867 = vmatpush.msra.mxu0 %v801
    %868 = vmatpush.msra.mxu0 %v800
    %869 = vmatpush.msra.mxu0 %v799
    %870 = vmatpush.msra.mxu0 %v798
    %871 = vmatpush.msra.mxu0 %v797
    %872 = vmatpush.msra.mxu0 %v796
    %873 = vmatmul.f32.gmra.mxu0 %v578
    %v874 = vpop.f32.mrf.mxu0
    %v875 = vadd.f32 %v846, %v874
    %876 = vmatmul.f32.gmra.mxu0 %v581
    %v877 = vpop.f32.mrf.mxu0
    %v878 = vadd.f32 %v849, %v877
    %879 = vmatmul.f32.gmra.mxu0 %v584
    %v880 = vpop.f32.mrf.mxu0
    %v881 = vadd.f32 %v852, %v880
    %882 = vmatmul.f32.gmra.mxu0 %v587
    %v883 = vpop.f32.mrf.mxu0
    %v884 = vadd.f32 %v855, %v883
    %885 = vdwg.mxu0
    %886 = vmatpush.msra.mxu0 %v827
    %887 = vmatpush.msra.mxu0 %v826
    %888 = vmatpush.msra.mxu0 %v825
    %889 = vmatpush.msra.mxu0 %v824
    %890 = vmatpush.msra.mxu0 %v823
    %891 = vmatpush.msra.mxu0 %v822
    %892 = vmatpush.msra.mxu0 %v821
    %893 = vmatpush.msra.mxu0 %v820
    %894 = vmatpush.msra.mxu0 %v819
    %895 = vmatpush.msra.mxu0 %v818
    %896 = vmatpush.msra.mxu0 %v817
    %897 = vmatpush.msra.mxu0 %v816
    %898 = vmatpush.msra.mxu0 %v815
    %899 = vmatpush.msra.mxu0 %v814
    %900 = vmatpush.msra.mxu0 %v813
    %901 = vmatpush.msra.mxu0 %v812
    %902 = vmatmul.f32.gmra.mxu0 %v590
    %v903 = vpop.f32.mrf.mxu0
    %v904 = vadd.f32 %v875, %v903
    %905 = vmatmul.f32.gmra.mxu0 %v593
    %v906 = vpop.f32.mrf.mxu0
    %v907 = vadd.f32 %v878, %v906
    %908 = vmatmul.f32.gmra.mxu0 %v596
    %v909 = vpop.f32.mrf.mxu0
    %v910 = vadd.f32 %v881, %v909
    %911 = vmatmul.f32.gmra.mxu0 %v599
    %v912 = vpop.f32.mrf.mxu0
    %v913 = vadd.f32 %v884, %v912
    %914 = vdwg.mxu0
    %v915 = vmax.f32 %v904, 0.0
    %v916 = vmax.f32 %v907, 0.0
    %v917 = vmax.f32 %v910, 0.0
    %v918 = vmax.f32 %v913, 0.0
    %v919 = vmax.f32 %v775, %v915
    %v920 = vmax.f32 %v776, %v916
    %v921 = vmax.f32 %v777, %v917
    %v922 = vmax.f32 %v778, %v918
    %923 = vmatpush.msra.mxu0 %v652
    %924 = vmatpush.msra.mxu0 %v651
    %925 = vmatpush.msra.mxu0 %v650
    %926 = vmatpush.msra.mxu0 %v649
    %927 = vmatpush.msra.mxu0 %v648
    %928 = vmatpush.msra.mxu0 %v647
    %929 = vmatpush.msra.mxu0 %v646
    %930 = vmatpush.msra.mxu0 %v645
    %931 = vmatpush.msra.mxu0 %v644
    %932 = vmatpush.msra.mxu0 %v643
    %933 = vmatpush.msra.mxu0 %v642
    %934 = vmatpush.msra.mxu0 %v641
    %935 = vmatpush.msra.mxu0 %v640
    %936 = vmatpush.msra.mxu0 %v639
    %937 = vmatpush.msra.mxu0 %v638
    %938 = vmatpush.msra.mxu0 %v637
    %939 = vmatmul.f32.gmra.mxu0 %v602
    %v940 = vpop.f32.mrf.mxu0
    %v941 = vadd.f32 %v686, %v940
    %942 = vmatmul.f32.gmra.mxu0 %v605
    %v943 = vpop.f32.mrf.mxu0
    %v944 = vadd.f32 %v686, %v943
    %945 = vmatmul.f32.gmra.mxu0 %v608
    %v946 = vpop.f32.mrf.mxu0
    %v947 = vadd.f32 %v686, %v946
    %948 = vmatmul.f32.gmra.mxu0 %v611
    %v949 = vpop.f32.mrf.mxu0
    %v950 = vadd.f32 %v686, %v949
    %951 = vdwg.mxu0
    %952 = vmatpush.msra.mxu0 %v668
    %953 = vmatpush.msra.mxu0 %v667
    %954 = vmatpush.msra.mxu0 %v666
    %955 = vmatpush.msra.mxu0 %v665
    %956 = vmatpush.msra.mxu0 %v664
    %957 = vmatpush.msra.mxu0 %v663
    %958 = vmatpush.msra.mxu0 %v662
    %959 = vmatpush.msra.mxu0 %v661
    %960 = vmatpush.msra.mxu0 %v660
    %961 = vmatpush.msra.mxu0 %v659
    %962 = vmatpush.msra.mxu0 %v658
    %963 = vmatpush.msra.mxu0 %v657
    %964 = vmatpush.msra.mxu0 %v656
    %965 = vmatpush.msra.mxu0 %v655
    %966 = vmatpush.msra.mxu0 %v654
    %967 = vmatpush.msra.mxu0 %v653
    %968 = vmatmul.f32.gmra.mxu0 %v614
    %v969 = vpop.f32.mrf.mxu0
    %v970 = vadd.f32 %v941, %v969
    %971 = vmatmul.f32.gmra.mxu0 %v617
    %v972 = vpop.f32.mrf.mxu0
    %v973 = vadd.f32 %v944, %v972
    %974 = vmatmul.f32.gmra.mxu0 %v620
    %v975 = vpop.f32.mrf.mxu0
    %v976 = vadd.f32 %v947, %v975
    %977 = vmatmul.f32.gmra.mxu0 %v623
    %v978 = vpop.f32.mrf.mxu0
    %v979 = vadd.f32 %v950, %v978
    %980 = vdwg.mxu0
    %981 = vmatpush.msra.mxu0 %v684
    %982 = vmatpush.msra.mxu0 %v683
    %983 = vmatpush.msra.mxu0 %v682
    %984 = vmatpush.msra.mxu0 %v681
    %985 = vmatpush.msra.mxu0 %v680
    %986 = vmatpush.msra.mxu0 %v679
    %987 = vmatpush.msra.mxu0 %v678
    %988 = vmatpush.msra.mxu0 %v677
    %989 = vmatpush.msra.mxu0 %v676
    %990 = vmatpush.msra.mxu0 %v675
    %991 = vmatpush.msra.mxu0 %v674
    %992 = vmatpush.msra.mxu0 %v673
    %993 = vmatpush.msra.mxu0 %v672
    %994 = vmatpush.msra.mxu0 %v671
    %995 = vmatpush.msra.mxu0 %v670
    %996 = vmatpush.msra.mxu0 %v669
    %997 = vmatmul.f32.gmra.mxu0 %v626
    %v998 = vpop.f32.mrf.mxu0
    %v999 = vadd.f32 %v970, %v998
    %1000 = vmatmul.f32.gmra.mxu0 %v629
    %v1001 = vpop.f32.mrf.mxu0
    %v1002 = vadd.f32 %v973, %v1001
    %1003 = vmatmul.f32.gmra.mxu0 %v632
    %v1004 = vpop.f32.mrf.mxu0
    %v1005 = vadd.f32 %v976, %v1004
    %1006 = vmatmul.f32.gmra.mxu0 %v635
    %v1007 = vpop.f32.mrf.mxu0
    %v1008 = vadd.f32 %v979, %v1007
    %1009 = vdwg.mxu0
    %v1010 = vmax.f32 %v999, 0.0
    %v1011 = vmax.f32 %v1002, 0.0
    %v1012 = vmax.f32 %v1005, 0.0
    %v1013 = vmax.f32 %v1008, 0.0
    %v1014 = vmax.f32 %v919, %v1010
    %v1015 = vmax.f32 %v920, %v1011
    %v1016 = vmax.f32 %v921, %v1012
    %v1017 = vmax.f32 %v922, %v1013
    %1018 = vmatpush.msra.mxu0 %v795
    %1019 = vmatpush.msra.mxu0 %v794
    %1020 = vmatpush.msra.mxu0 %v793
    %1021 = vmatpush.msra.mxu0 %v792
    %1022 = vmatpush.msra.mxu0 %v791
    %1023 = vmatpush.msra.mxu0 %v790
    %1024 = vmatpush.msra.mxu0 %v789
    %1025 = vmatpush.msra.mxu0 %v788
    %1026 = vmatpush.msra.mxu0 %v787
    %1027 = vmatpush.msra.mxu0 %v786
    %1028 = vmatpush.msra.mxu0 %v785
    %1029 = vmatpush.msra.mxu0 %v784
    %1030 = vmatpush.msra.mxu0 %v783
    %1031 = vmatpush.msra.mxu0 %v782
    %1032 = vmatpush.msra.mxu0 %v781
    %1033 = vmatpush.msra.mxu0 %v780
    %1034 = vmatmul.f32.gmra.mxu0 %v602
    %v1035 = vpop.f32.mrf.mxu0
    %v1036 = vadd.f32 %v686, %v1035
    %1037 = vmatmul.f32.gmra.mxu0 %v605
    %v1038 = vpop.f32.mrf.mxu0
    %v1039 = vadd.f32 %v686, %v1038
    %1040 = vmatmul.f32.gmra.mxu0 %v608
    %v1041 = vpop.f32.mrf.mxu0
    %v1042 = vadd.f32 %v686, %v1041
    %1043 = vmatmul.f32.gmra.mxu0 %v611
    %v1044 = vpop.f32.mrf.mxu0
    %v1045 = vadd.f32 %v686, %v1044
    %1046 = vdwg.mxu0
    %1047 = vmatpush.msra.mxu0 %v811
    %1048 = vmatpush.msra.mxu0 %v810
    %1049 = vmatpush.msra.mxu0 %v809
    %1050 = vmatpush.msra.mxu0 %v808
    %1051 = vmatpush.msra.mxu0 %v807
    %1052 = vmatpush.msra.mxu0 %v806
    %1053 = vmatpush.msra.mxu0 %v805
    %1054 = vmatpush.msra.mxu0 %v804
    %1055 = vmatpush.msra.mxu0 %v803
    %1056 = vmatpush.msra.mxu0 %v802
    %1057 = vmatpush.msra.mxu0 %v801
    %1058 = vmatpush.msra.mxu0 %v800
    %1059 = vmatpush.msra.mxu0 %v799
    %1060 = vmatpush.msra.mxu0 %v798
    %1061 = vmatpush.msra.mxu0 %v797
    %1062 = vmatpush.msra.mxu0 %v796
    %1063 = vmatmul.f32.gmra.mxu0 %v614
    %v1064 = vpop.f32.mrf.mxu0
    %v1065 = vadd.f32 %v1036, %v1064
    %1066 = vmatmul.f32.gmra.mxu0 %v617
    %v1067 = vpop.f32.mrf.mxu0
    %v1068 = vadd.f32 %v1039, %v1067
    %1069 = vmatmul.f32.gmra.mxu0 %v620
    %v1070 = vpop.f32.mrf.mxu0
    %v1071 = vadd.f32 %v1042, %v1070
    %1072 = vmatmul.f32.gmra.mxu0 %v623
    %v1073 = vpop.f32.mrf.mxu0
    %v1074 = vadd.f32 %v1045, %v1073
    %1075 = vdwg.mxu0
    %1076 = vmatpush.msra.mxu0 %v827
    %1077 = vmatpush.msra.mxu0 %v826
    %1078 = vmatpush.msra.mxu0 %v825
    %1079 = vmatpush.msra.mxu0 %v824
    %1080 = vmatpush.msra.mxu0 %v823
    %1081 = vmatpush.msra.mxu0 %v822
    %1082 = vmatpush.msra.mxu0 %v821
    %1083 = vmatpush.msra.mxu0 %v820
    %1084 = vmatpush.msra.mxu0 %v819
    %1085 = vmatpush.msra.mxu0 %v818
    %1086 = vmatpush.msra.mxu0 %v817
    %1087 = vmatpush.msra.mxu0 %v816
    %1088 = vmatpush.msra.mxu0 %v815
    %1089 = vmatpush.msra.mxu0 %v814
    %1090 = vmatpush.msra.mxu0 %v813
    %1091 = vmatpush.msra.mxu0 %v812
    %1092 = vmatmul.f32.gmra.mxu0 %v626
    %v1093 = vpop.f32.mrf.mxu0
    %v1094 = vadd.f32 %v1065, %v1093
    %1095 = vmatmul.f32.gmra.mxu0 %v629
    %v1096 = vpop.f32.mrf.mxu0
    %v1097 = vadd.f32 %v1068, %v1096
    %1098 = vmatmul.f32.gmra.mxu0 %v632
    %v1099 = vpop.f32.mrf.mxu0
    %v1100 = vadd.f32 %v1071, %v1099
    %1101 = vmatmul.f32.gmra.mxu0 %v635
    %v1102 = vpop.f32.mrf.mxu0
    %v1103 = vadd.f32 %v1074, %v1102
    %1104 = vdwg.mxu0
    %v1105 = vmax.f32 %v1094, 0.0
    %v1106 = vmax.f32 %v1097, 0.0
    %v1107 = vmax.f32 %v1100, 0.0
    %v1108 = vmax.f32 %v1103, 0.0
    %v1109 = vmax.f32 %v1014, %v1105
    %v1110 = vmax.f32 %v1015, %v1106
    %v1111 = vmax.f32 %v1016, %v1107
    %v1112 = vmax.f32 %v1017, %v1108
    %v1113 = vld [vmem:[#allocation27] sm:$0xff]
    %v1114 = vld [vmem:[#allocation27 + $0x8] sm:$0xff]
    %v1115 = vld [vmem:[#allocation27 + $0x10] sm:$0xff]
    %v1116 = vld [vmem:[#allocation27 + $0x18] sm:$0xff]
    %v1117 = vld [vmem:[#allocation27 + $0x20] sm:$0xff]
    %v1118 = vld [vmem:[#allocation27 + $0x28] sm:$0xff]
    %v1119 = vld [vmem:[#allocation27 + $0x30] sm:$0xff]
    %v1120 = vld [vmem:[#allocation27 + $0x38] sm:$0xff]
    %v1121 = vld [vmem:[#allocation27 + $0x40] sm:$0xff]
    %v1122 = vld [vmem:[#allocation27 + $0x48] sm:$0xff]
    %v1123 = vld [vmem:[#allocation27 + $0x50] sm:$0xff]
    %v1124 = vld [vmem:[#allocation27 + $0x58] sm:$0xff]
    %v1125 = vld [vmem:[#allocation27 + $0x60] sm:$0xff]
    %v1126 = vld [vmem:[#allocation27 + $0x68] sm:$0xff]
    %v1127 = vld [vmem:[#allocation27 + $0x70] sm:$0xff]
    %v1128 = vld [vmem:[#allocation27 + $0x78] sm:$0xff]
    %v1129 = vld [vmem:[#allocation27 + $0x80] sm:$0xff]
    %v1130 = vld [vmem:[#allocation27 + $0x88] sm:$0xff]
    %v1131 = vld [vmem:[#allocation27 + $0x90] sm:$0xff]
    %v1132 = vld [vmem:[#allocation27 + $0x98] sm:$0xff]
    %v1133 = vld [vmem:[#allocation27 + $0xa0] sm:$0xff]
    %v1134 = vld [vmem:[#allocation27 + $0xa8] sm:$0xff]
    %v1135 = vld [vmem:[#allocation27 + $0xb0] sm:$0xff]
    %v1136 = vld [vmem:[#allocation27 + $0xb8] sm:$0xff]
    %v1137 = vld [vmem:[#allocation27 + $0xc0] sm:$0xff]
    %v1138 = vld [vmem:[#allocation27 + $0xc8] sm:$0xff]
    %v1139 = vld [vmem:[#allocation27 + $0xd0] sm:$0xff]
    %v1140 = vld [vmem:[#allocation27 + $0xd8] sm:$0xff]
    %v1141 = vld [vmem:[#allocation27 + $0xe0] sm:$0xff]
    %v1142 = vld [vmem:[#allocation27 + $0xe8] sm:$0xff]
    %v1143 = vld [vmem:[#allocation27 + $0xf0] sm:$0xff]
    %v1144 = vld [vmem:[#allocation27 + $0xf8] sm:$0xff]
    %v1145 = vld [vmem:[#allocation27 + $0x100] sm:$0xff]
    %v1146 = vld [vmem:[#allocation27 + $0x108] sm:$0xff]
    %v1147 = vld [vmem:[#allocation27 + $0x110] sm:$0xff]
    %v1148 = vld [vmem:[#allocation27 + $0x118] sm:$0xff]
    %v1149 = vld [vmem:[#allocation27 + $0x120] sm:$0xff]
    %v1150 = vld [vmem:[#allocation27 + $0x128] sm:$0xff]
    %v1151 = vld [vmem:[#allocation27 + $0x130] sm:$0xff]
    %v1152 = vld [vmem:[#allocation27 + $0x138] sm:$0xff]
    %v1153 = vld [vmem:[#allocation27 + $0x140] sm:$0xff]
    %v1154 = vld [vmem:[#allocation27 + $0x148] sm:$0xff]
    %v1155 = vld [vmem:[#allocation27 + $0x150] sm:$0xff]
    %v1156 = vld [vmem:[#allocation27 + $0x158] sm:$0xff]
    %v1157 = vld [vmem:[#allocation27 + $0x160] sm:$0xff]
    %v1158 = vld [vmem:[#allocation27 + $0x168] sm:$0xff]
    %v1159 = vld [vmem:[#allocation27 + $0x170] sm:$0xff]
    %v1160 = vld [vmem:[#allocation27 + $0x178] sm:$0xff]
    %v1161 = vld [vmem:[#allocation27 + $0x180] sm:$0xff]
    %v1162 = vld [vmem:[#allocation27 + $0x188] sm:$0xff]
    %v1163 = vld [vmem:[#allocation27 + $0x190] sm:$0xff]
    %v1164 = vld [vmem:[#allocation27 + $0x198] sm:$0xff]
    %v1165 = vld [vmem:[#allocation27 + $0x1a0] sm:$0xff]
    %v1166 = vld [vmem:[#allocation27 + $0x1a8] sm:$0xff]
    %v1167 = vld [vmem:[#allocation27 + $0x1b0] sm:$0xff]
    %v1168 = vld [vmem:[#allocation27 + $0x1b8] sm:$0xff]
    %v1169 = vld [vmem:[#allocation27 + $0x1c0] sm:$0xff]
    %v1170 = vld [vmem:[#allocation27 + $0x1c8] sm:$0xff]
    %v1171 = vld [vmem:[#allocation27 + $0x1d0] sm:$0xff]
    %v1172 = vld [vmem:[#allocation27 + $0x1d8] sm:$0xff]
    %v1173 = vld [vmem:[#allocation27 + $0x1e0] sm:$0xff]
    %v1174 = vld [vmem:[#allocation27 + $0x1e8] sm:$0xff]
    %v1175 = vld [vmem:[#allocation27 + $0x1f0] sm:$0xff]
    %v1176 = vld [vmem:[#allocation27 + $0x1f8] sm:$0xff]
    %v1177 = vld [vmem:[%s7] sm:$0xff]
    %v1179 = vperm.slane %v1177, 0
    %v1180 = vperm.slane %v1177, 1
    %v1181 = vperm.slane %v1177, 2
    %v1182 = vperm.slane %v1177, 3
    %v1183 = vperm.slane %v1177, 4
    %v1184 = vperm.slane %v1177, 5
    %v1185 = vperm.slane %v1177, 6
    %v1186 = vperm.slane %v1177, 7
    %vm1195 = vcmask 523264
    %v1197 = vsel %vm1195, %v1109, 0
    %v1200 = vsel %vm1195, %v1110, 0
    %v1203 = vsel %vm1195, %v1111, 0
    %v1206 = vsel %vm1195, %v1112, 0
    %1208 = vmatpush.msra.mxu0 0.0
    %1209 = vmatpush.msra.mxu0 0.0
    %1210 = vmatpush.msra.mxu0 0.0
    %1211 = vmatpush.msra.mxu0 0.0
    %1212 = vmatpush.msra.mxu0 0.0
    %1213 = vmatpush.msra.mxu0 0.0
    %1214 = vmatpush.msra.mxu0 0.0
    %1215 = vmatpush.msra.mxu0 0.0
    %1216 = vmatpush.msra.mxu0 %v1169
    %1217 = vmatpush.msra.mxu0 %v1161
    %1218 = vmatpush.msra.mxu0 %v1153
    %1219 = vmatpush.msra.mxu0 %v1145
    %1220 = vmatpush.msra.mxu0 %v1137
    %1221 = vmatpush.msra.mxu0 %v1129
    %1222 = vmatpush.msra.mxu0 %v1121
    %1223 = vmatpush.msra.mxu0 %v1113
    %1224 = vmatmul.f32.gmra.mxu0 %v1197
    %v1225 = vpop.f32.mrf.mxu0
    %v1226 = vadd.f32 %v1179, %v1225
    %1227 = vmatmul.f32.gmra.mxu0 %v1200
    %v1228 = vpop.f32.mrf.mxu0
    %v1229 = vadd.f32 %v1179, %v1228
    %1230 = vmatmul.f32.gmra.mxu0 %v1203
    %v1231 = vpop.f32.mrf.mxu0
    %v1232 = vadd.f32 %v1179, %v1231
    %1233 = vmatmul.f32.gmra.mxu0 %v1206
    %v1234 = vpop.f32.mrf.mxu0
    %v1235 = vadd.f32 %v1179, %v1234
    %1236 = vdwg.mxu0
    %1237 = vmatpush.msra.mxu0 0.0
    %1238 = vmatpush.msra.mxu0 0.0
    %1239 = vmatpush.msra.mxu0 0.0
    %1240 = vmatpush.msra.mxu0 0.0
    %1241 = vmatpush.msra.mxu0 0.0
    %1242 = vmatpush.msra.mxu0 0.0
    %1243 = vmatpush.msra.mxu0 0.0
    %1244 = vmatpush.msra.mxu0 0.0
    %1245 = vmatpush.msra.mxu0 %v1170
    %1246 = vmatpush.msra.mxu0 %v1162
    %1247 = vmatpush.msra.mxu0 %v1154
    %1248 = vmatpush.msra.mxu0 %v1146
    %1249 = vmatpush.msra.mxu0 %v1138
    %1250 = vmatpush.msra.mxu0 %v1130
    %1251 = vmatpush.msra.mxu0 %v1122
    %1252 = vmatpush.msra.mxu0 %v1114
    %1253 = vmatmul.f32.gmra.mxu0 %v1197
    %v1254 = vpop.f32.mrf.mxu0
    %v1255 = vadd.f32 %v1180, %v1254
    %1256 = vmatmul.f32.gmra.mxu0 %v1200
    %v1257 = vpop.f32.mrf.mxu0
    %v1258 = vadd.f32 %v1180, %v1257
    %1259 = vmatmul.f32.gmra.mxu0 %v1203
    %v1260 = vpop.f32.mrf.mxu0
    %v1261 = vadd.f32 %v1180, %v1260
    %1262 = vmatmul.f32.gmra.mxu0 %v1206
    %v1263 = vpop.f32.mrf.mxu0
    %v1264 = vadd.f32 %v1180, %v1263
    %1265 = vdwg.mxu0
    %1266 = vmatpush.msra.mxu0 0.0
    %1267 = vmatpush.msra.mxu0 0.0
    %1268 = vmatpush.msra.mxu0 0.0
    %1269 = vmatpush.msra.mxu0 0.0
    %1270 = vmatpush.msra.mxu0 0.0
    %1271 = vmatpush.msra.mxu0 0.0
    %1272 = vmatpush.msra.mxu0 0.0
    %1273 = vmatpush.msra.mxu0 0.0
    %1274 = vmatpush.msra.mxu0 %v1171
    %1275 = vmatpush.msra.mxu0 %v1163
    %1276 = vmatpush.msra.mxu0 %v1155
    %1277 = vmatpush.msra.mxu0 %v1147
    %1278 = vmatpush.msra.mxu0 %v1139
    %1279 = vmatpush.msra.mxu0 %v1131
    %1280 = vmatpush.msra.mxu0 %v1123
    %1281 = vmatpush.msra.mxu0 %v1115
    %1282 = vmatmul.f32.gmra.mxu0 %v1197
    %v1283 = vpop.f32.mrf.mxu0
    %v1284 = vadd.f32 %v1181, %v1283
    %1285 = vmatmul.f32.gmra.mxu0 %v1200
    %v1286 = vpop.f32.mrf.mxu0
    %v1287 = vadd.f32 %v1181, %v1286
    %1288 = vmatmul.f32.gmra.mxu0 %v1203
    %v1289 = vpop.f32.mrf.mxu0
    %v1290 = vadd.f32 %v1181, %v1289
    %1291 = vmatmul.f32.gmra.mxu0 %v1206
    %v1292 = vpop.f32.mrf.mxu0
    %v1293 = vadd.f32 %v1181, %v1292
    %1294 = vdwg.mxu0
    %1295 = vmatpush.msra.mxu0 0.0
    %1296 = vmatpush.msra.mxu0 0.0
    %1297 = vmatpush.msra.mxu0 0.0
    %1298 = vmatpush.msra.mxu0 0.0
    %1299 = vmatpush.msra.mxu0 0.0
    %1300 = vmatpush.msra.mxu0 0.0
    %1301 = vmatpush.msra.mxu0 0.0
    %1302 = vmatpush.msra.mxu0 0.0
    %1303 = vmatpush.msra.mxu0 %v1172
    %1304 = vmatpush.msra.mxu0 %v1164
    %1305 = vmatpush.msra.mxu0 %v1156
    %1306 = vmatpush.msra.mxu0 %v1148
    %1307 = vmatpush.msra.mxu0 %v1140
    %1308 = vmatpush.msra.mxu0 %v1132
    %1309 = vmatpush.msra.mxu0 %v1124
    %1310 = vmatpush.msra.mxu0 %v1116
    %1311 = vmatmul.f32.gmra.mxu0 %v1197
    %v1312 = vpop.f32.mrf.mxu0
    %v1313 = vadd.f32 %v1182, %v1312
    %1314 = vmatmul.f32.gmra.mxu0 %v1200
    %v1315 = vpop.f32.mrf.mxu0
    %v1316 = vadd.f32 %v1182, %v1315
    %1317 = vmatmul.f32.gmra.mxu0 %v1203
    %v1318 = vpop.f32.mrf.mxu0
    %v1319 = vadd.f32 %v1182, %v1318
    %1320 = vmatmul.f32.gmra.mxu0 %v1206
    %v1321 = vpop.f32.mrf.mxu0
    %v1322 = vadd.f32 %v1182, %v1321
    %1323 = vdwg.mxu0
    %1324 = vmatpush.msra.mxu0 0.0
    %1325 = vmatpush.msra.mxu0 0.0
    %1326 = vmatpush.msra.mxu0 0.0
    %1327 = vmatpush.msra.mxu0 0.0
    %1328 = vmatpush.msra.mxu0 0.0
    %1329 = vmatpush.msra.mxu0 0.0
    %1330 = vmatpush.msra.mxu0 0.0
    %1331 = vmatpush.msra.mxu0 0.0
    %1332 = vmatpush.msra.mxu0 %v1173
    %1333 = vmatpush.msra.mxu0 %v1165
    %1334 = vmatpush.msra.mxu0 %v1157
    %1335 = vmatpush.msra.mxu0 %v1149
    %1336 = vmatpush.msra.mxu0 %v1141
    %1337 = vmatpush.msra.mxu0 %v1133
    %1338 = vmatpush.msra.mxu0 %v1125
    %1339 = vmatpush.msra.mxu0 %v1117
    %1340 = vmatmul.f32.gmra.mxu0 %v1197
    %v1341 = vpop.f32.mrf.mxu0
    %v1342 = vadd.f32 %v1183, %v1341
    %1343 = vmatmul.f32.gmra.mxu0 %v1200
    %v1344 = vpop.f32.mrf.mxu0
    %v1345 = vadd.f32 %v1183, %v1344
    %1346 = vmatmul.f32.gmra.mxu0 %v1203
    %v1347 = vpop.f32.mrf.mxu0
    %v1348 = vadd.f32 %v1183, %v1347
    %1349 = vmatmul.f32.gmra.mxu0 %v1206
    %v1350 = vpop.f32.mrf.mxu0
    %v1351 = vadd.f32 %v1183, %v1350
    %1352 = vdwg.mxu0
    %1353 = vmatpush.msra.mxu0 0.0
    %1354 = vmatpush.msra.mxu0 0.0
    %1355 = vmatpush.msra.mxu0 0.0
    %1356 = vmatpush.msra.mxu0 0.0
    %1357 = vmatpush.msra.mxu0 0.0
    %1358 = vmatpush.msra.mxu0 0.0
    %1359 = vmatpush.msra.mxu0 0.0
    %1360 = vmatpush.msra.mxu0 0.0
    %1361 = vmatpush.msra.mxu0 %v1174
    %1362 = vmatpush.msra.mxu0 %v1166
    %1363 = vmatpush.msra.mxu0 %v1158
    %1364 = vmatpush.msra.mxu0 %v1150
    %1365 = vmatpush.msra.mxu0 %v1142
    %1366 = vmatpush.msra.mxu0 %v1134
    %1367 = vmatpush.msra.mxu0 %v1126
    %1368 = vmatpush.msra.mxu0 %v1118
    %1369 = vmatmul.f32.gmra.mxu0 %v1197
    %v1370 = vpop.f32.mrf.mxu0
    %v1371 = vadd.f32 %v1184, %v1370
    %1372 = vmatmul.f32.gmra.mxu0 %v1200
    %v1373 = vpop.f32.mrf.mxu0
    %v1374 = vadd.f32 %v1184, %v1373
    %1375 = vmatmul.f32.gmra.mxu0 %v1203
    %v1376 = vpop.f32.mrf.mxu0
    %v1377 = vadd.f32 %v1184, %v1376
    %1378 = vmatmul.f32.gmra.mxu0 %v1206
    %v1379 = vpop.f32.mrf.mxu0
    %v1380 = vadd.f32 %v1184, %v1379
    %1381 = vdwg.mxu0
    %1382 = vmatpush.msra.mxu0 0.0
    %1383 = vmatpush.msra.mxu0 0.0
    %1384 = vmatpush.msra.mxu0 0.0
    %1385 = vmatpush.msra.mxu0 0.0
    %1386 = vmatpush.msra.mxu0 0.0
    %1387 = vmatpush.msra.mxu0 0.0
    %1388 = vmatpush.msra.mxu0 0.0
    %1389 = vmatpush.msra.mxu0 0.0
    %1390 = vmatpush.msra.mxu0 %v1175
    %1391 = vmatpush.msra.mxu0 %v1167
    %1392 = vmatpush.msra.mxu0 %v1159
    %1393 = vmatpush.msra.mxu0 %v1151
    %1394 = vmatpush.msra.mxu0 %v1143
    %1395 = vmatpush.msra.mxu0 %v1135
    %1396 = vmatpush.msra.mxu0 %v1127
    %1397 = vmatpush.msra.mxu0 %v1119
    %1398 = vmatmul.f32.gmra.mxu0 %v1197
    %v1399 = vpop.f32.mrf.mxu0
    %v1400 = vadd.f32 %v1185, %v1399
    %1401 = vmatmul.f32.gmra.mxu0 %v1200
    %v1402 = vpop.f32.mrf.mxu0
    %v1403 = vadd.f32 %v1185, %v1402
    %1404 = vmatmul.f32.gmra.mxu0 %v1203
    %v1405 = vpop.f32.mrf.mxu0
    %v1406 = vadd.f32 %v1185, %v1405
    %1407 = vmatmul.f32.gmra.mxu0 %v1206
    %v1408 = vpop.f32.mrf.mxu0
    %v1409 = vadd.f32 %v1185, %v1408
    %1410 = vdwg.mxu0
    %1411 = vmatpush.msra.mxu0 0.0
    %1412 = vmatpush.msra.mxu0 0.0
    %1413 = vmatpush.msra.mxu0 0.0
    %1414 = vmatpush.msra.mxu0 0.0
    %1415 = vmatpush.msra.mxu0 0.0
    %1416 = vmatpush.msra.mxu0 0.0
    %1417 = vmatpush.msra.mxu0 0.0
    %1418 = vmatpush.msra.mxu0 0.0
    %1419 = vmatpush.msra.mxu0 %v1176
    %1420 = vmatpush.msra.mxu0 %v1168
    %1421 = vmatpush.msra.mxu0 %v1160
    %1422 = vmatpush.msra.mxu0 %v1152
    %1423 = vmatpush.msra.mxu0 %v1144
    %1424 = vmatpush.msra.mxu0 %v1136
    %1425 = vmatpush.msra.mxu0 %v1128
    %1426 = vmatpush.msra.mxu0 %v1120
    %1427 = vmatmul.f32.gmra.mxu0 %v1197
    %v1428 = vpop.f32.mrf.mxu0
    %v1429 = vadd.f32 %v1186, %v1428
    %1430 = vmatmul.f32.gmra.mxu0 %v1200
    %v1431 = vpop.f32.mrf.mxu0
    %v1432 = vadd.f32 %v1186, %v1431
    %1433 = vmatmul.f32.gmra.mxu0 %v1203
    %v1434 = vpop.f32.mrf.mxu0
    %v1435 = vadd.f32 %v1186, %v1434
    %1436 = vmatmul.f32.gmra.mxu0 %v1206
    %v1437 = vpop.f32.mrf.mxu0
    %v1438 = vadd.f32 %v1186, %v1437
    %1439 = vdwg.mxu0
    %1440 = vst [vmem:[#allocation2] sm:$0xff] %v1226
    %1441 = vst [vmem:[#allocation2 + $0x8] sm:$0xff] %v1255
    %1442 = vst [vmem:[#allocation2 + $0x10] sm:$0xff] %v1284
    %1443 = vst [vmem:[#allocation2 + $0x18] sm:$0xff] %v1313
    %1444 = vst [vmem:[#allocation2 + $0x20] sm:$0xff] %v1342
    %1445 = vst [vmem:[#allocation2 + $0x28] sm:$0xff] %v1371
    %1446 = vst [vmem:[#allocation2 + $0x30] sm:$0xff] %v1400
    %1447 = vst [vmem:[#allocation2 + $0x38] sm:$0xff] %v1429
    %1448 = vst [vmem:[#allocation2 + $0x40] sm:$0xff] %v1229
    %1449 = vst [vmem:[#allocation2 + $0x48] sm:$0xff] %v1258
    %1450 = vst [vmem:[#allocation2 + $0x50] sm:$0xff] %v1287
    %1451 = vst [vmem:[#allocation2 + $0x58] sm:$0xff] %v1316
    %1452 = vst [vmem:[#allocation2 + $0x60] sm:$0xff] %v1345
    %1453 = vst [vmem:[#allocation2 + $0x68] sm:$0xff] %v1374
    %1454 = vst [vmem:[#allocation2 + $0x70] sm:$0xff] %v1403
    %1455 = vst [vmem:[#allocation2 + $0x78] sm:$0xff] %v1432
    %1456 = vst [vmem:[#allocation2 + $0x80] sm:$0xff] %v1232
    %1457 = vst [vmem:[#allocation2 + $0x88] sm:$0xff] %v1261
    %1458 = vst [vmem:[#allocation2 + $0x90] sm:$0xff] %v1290
    %1459 = vst [vmem:[#allocation2 + $0x98] sm:$0xff] %v1319
    %1460 = vst [vmem:[#allocation2 + $0xa0] sm:$0xff] %v1348
    %1461 = vst [vmem:[#allocation2 + $0xa8] sm:$0xff] %v1377
    %1462 = vst [vmem:[#allocation2 + $0xb0] sm:$0xff] %v1406
    %1463 = vst [vmem:[#allocation2 + $0xb8] sm:$0xff] %v1435
    %1464 = vst [vmem:[#allocation2 + $0xc0] sm:$0xff] %v1235
    %1465 = vst [vmem:[#allocation2 + $0xc8] sm:$0xff] %v1264
    %1466 = vst [vmem:[#allocation2 + $0xd0] sm:$0xff] %v1293
    %1467 = vst [vmem:[#allocation2 + $0xd8] sm:$0xff] %v1322
    %1468 = vst [vmem:[#allocation2 + $0xe0] sm:$0xff] %v1351
    %1469 = vst [vmem:[#allocation2 + $0xe8] sm:$0xff] %v1380
    %1470 = vst [vmem:[#allocation2 + $0xf0] sm:$0xff] %v1409
    %1471 = vst [vmem:[#allocation2 + $0xf8] sm:$0xff] %v1438
    %v1472 = vld [vmem:[%s6] sm:$0xff]
    %v1473 = vld [vmem:[%s6 + $0x8] sm:$0xff]
    %v1474 = vld [vmem:[%s6 + $0x10] sm:$0xff]
    %v1475 = vld [vmem:[%s6 + $0x18] sm:$0xff]
    %v1476 = vld [vmem:[%s6 + $0x20] sm:$0xff]
    %v1477 = vld [vmem:[%s6 + $0x28] sm:$0xff]
    %v1478 = vld [vmem:[%s6 + $0x30] sm:$0xff]
    %v1479 = vld [vmem:[%s6 + $0x38] sm:$0xff]
    %v1480 = vld [vmem:[%s6 + $0x40] sm:$0xff]
    %v1481 = vld [vmem:[%s6 + $0x48] sm:$0xff]
    %v1482 = vld [vmem:[%s6 + $0x50] sm:$0xff]
    %v1483 = vld [vmem:[%s6 + $0x58] sm:$0xff]
    %v1484 = vld [vmem:[%s6 + $0x60] sm:$0xff]
    %v1485 = vld [vmem:[%s6 + $0x68] sm:$0xff]
    %v1486 = vld [vmem:[%s6 + $0x70] sm:$0xff]
    %v1487 = vld [vmem:[%s6 + $0x78] sm:$0xff]
    %v1488 = vld [vmem:[%s6 + $0x80] sm:$0xff]
    %v1489 = vld [vmem:[%s6 + $0x88] sm:$0xff]
    %v1490 = vld [vmem:[%s6 + $0x90] sm:$0xff]
    %v1491 = vld [vmem:[%s6 + $0x98] sm:$0xff]
    %v1492 = vld [vmem:[%s6 + $0xa0] sm:$0xff]
    %v1493 = vld [vmem:[%s6 + $0xa8] sm:$0xff]
    %v1494 = vld [vmem:[%s6 + $0xb0] sm:$0xff]
    %v1495 = vld [vmem:[%s6 + $0xb8] sm:$0xff]
    %v1496 = vld [vmem:[%s6 + $0xc0] sm:$0xff]
    %v1497 = vld [vmem:[%s6 + $0xc8] sm:$0xff]
    %v1498 = vld [vmem:[%s6 + $0xd0] sm:$0xff]
    %v1499 = vld [vmem:[%s6 + $0xd8] sm:$0xff]
    %v1500 = vld [vmem:[%s6 + $0xe0] sm:$0xff]
    %v1501 = vld [vmem:[%s6 + $0xe8] sm:$0xff]
    %v1502 = vld [vmem:[%s6 + $0xf0] sm:$0xff]
    %v1503 = vld [vmem:[%s6 + $0xf8] sm:$0xff]
    %v1504 = vld [vmem:[%s6 + $0x100] sm:$0xff]
    %v1505 = vld [vmem:[%s6 + $0x108] sm:$0xff]
    %v1506 = vld [vmem:[%s6 + $0x110] sm:$0xff]
    %v1507 = vld [vmem:[%s6 + $0x118] sm:$0xff]
    %v1508 = vld [vmem:[%s6 + $0x120] sm:$0xff]
    %v1509 = vld [vmem:[%s6 + $0x128] sm:$0xff]
    %v1510 = vld [vmem:[%s6 + $0x130] sm:$0xff]
    %v1511 = vld [vmem:[%s6 + $0x138] sm:$0xff]
    %v1512 = vld [vmem:[%s6 + $0x140] sm:$0xff]
    %v1513 = vld [vmem:[%s6 + $0x148] sm:$0xff]
    %v1514 = vld [vmem:[%s6 + $0x150] sm:$0xff]
    %v1515 = vld [vmem:[%s6 + $0x158] sm:$0xff]
    %v1516 = vld [vmem:[%s6 + $0x160] sm:$0xff]
    %v1517 = vld [vmem:[%s6 + $0x168] sm:$0xff]
    %v1518 = vld [vmem:[%s6 + $0x170] sm:$0xff]
    %v1519 = vld [vmem:[%s6 + $0x178] sm:$0xff]
    %v1520 = vld [vmem:[%s6 + $0x180] sm:$0xff]
    %v1521 = vld [vmem:[%s6 + $0x188] sm:$0xff]
    %v1522 = vld [vmem:[%s6 + $0x190] sm:$0xff]
    %v1523 = vld [vmem:[%s6 + $0x198] sm:$0xff]
    %v1524 = vld [vmem:[%s6 + $0x1a0] sm:$0xff]
    %v1525 = vld [vmem:[%s6 + $0x1a8] sm:$0xff]
    %v1526 = vld [vmem:[%s6 + $0x1b0] sm:$0xff]
    %v1527 = vld [vmem:[%s6 + $0x1b8] sm:$0xff]
    %v1528 = vld [vmem:[%s6 + $0x1c0] sm:$0xff]
    %v1529 = vld [vmem:[%s6 + $0x1c8] sm:$0xff]
    %v1530 = vld [vmem:[%s6 + $0x1d0] sm:$0xff]
    %v1531 = vld [vmem:[%s6 + $0x1d8] sm:$0xff]
    %v1532 = vld [vmem:[%s6 + $0x1e0] sm:$0xff]
    %v1533 = vld [vmem:[%s6 + $0x1e8] sm:$0xff]
    %v1534 = vld [vmem:[%s6 + $0x1f0] sm:$0xff]
    %v1535 = vld [vmem:[%s6 + $0x1f8] sm:$0xff]
    %v1536 = vld [vmem:[%s6 + $0x200] sm:$0xff]
    %v1537 = vld [vmem:[%s6 + $0x208] sm:$0xff]
    %v1538 = vld [vmem:[%s6 + $0x210] sm:$0xff]
    %v1539 = vld [vmem:[%s6 + $0x218] sm:$0xff]
    %v1540 = vld [vmem:[%s6 + $0x220] sm:$0xff]
    %v1541 = vld [vmem:[%s6 + $0x228] sm:$0xff]
    %v1542 = vld [vmem:[%s6 + $0x230] sm:$0xff]
    %v1543 = vld [vmem:[%s6 + $0x238] sm:$0xff]
    %v1544 = vld [vmem:[%s6 + $0x240] sm:$0xff]
    %v1545 = vld [vmem:[%s6 + $0x248] sm:$0xff]
    %v1546 = vld [vmem:[%s6 + $0x250] sm:$0xff]
    %v1547 = vld [vmem:[%s6 + $0x258] sm:$0xff]
    %v1548 = vld [vmem:[%s6 + $0x260] sm:$0xff]
    %v1549 = vld [vmem:[%s6 + $0x268] sm:$0xff]
    %v1550 = vld [vmem:[%s6 + $0x270] sm:$0xff]
    %v1551 = vld [vmem:[%s6 + $0x278] sm:$0xff]
    %v1552 = vld [vmem:[%s6 + $0x280] sm:$0xff]
    %v1553 = vld [vmem:[%s6 + $0x288] sm:$0xff]
    %v1554 = vld [vmem:[%s6 + $0x290] sm:$0xff]
    %v1555 = vld [vmem:[%s6 + $0x298] sm:$0xff]
    %v1556 = vld [vmem:[%s6 + $0x2a0] sm:$0xff]
    %v1557 = vld [vmem:[%s6 + $0x2a8] sm:$0xff]
    %v1558 = vld [vmem:[%s6 + $0x2b0] sm:$0xff]
    %v1559 = vld [vmem:[%s6 + $0x2b8] sm:$0xff]
    %v1560 = vld [vmem:[%s6 + $0x2c0] sm:$0xff]
    %v1561 = vld [vmem:[%s6 + $0x2c8] sm:$0xff]
    %v1562 = vld [vmem:[%s6 + $0x2d0] sm:$0xff]
    %v1563 = vld [vmem:[%s6 + $0x2d8] sm:$0xff]
    %v1564 = vld [vmem:[%s6 + $0x2e0] sm:$0xff]
    %v1565 = vld [vmem:[%s6 + $0x2e8] sm:$0xff]
    %v1566 = vld [vmem:[%s6 + $0x2f0] sm:$0xff]
    %v1567 = vld [vmem:[%s6 + $0x2f8] sm:$0xff]
    %v1568 = vld [vmem:[%s6 + $0x300] sm:$0xff]
    %v1569 = vld [vmem:[%s6 + $0x308] sm:$0xff]
    %v1570 = vld [vmem:[%s6 + $0x310] sm:$0xff]
    %v1571 = vld [vmem:[%s6 + $0x318] sm:$0xff]
    %v1572 = vld [vmem:[%s6 + $0x320] sm:$0xff]
    %v1573 = vld [vmem:[%s6 + $0x328] sm:$0xff]
    %v1574 = vld [vmem:[%s6 + $0x330] sm:$0xff]
    %v1575 = vld [vmem:[%s6 + $0x338] sm:$0xff]
    %v1576 = vld [vmem:[%s6 + $0x340] sm:$0xff]
    %v1577 = vld [vmem:[%s6 + $0x348] sm:$0xff]
    %v1578 = vld [vmem:[%s6 + $0x350] sm:$0xff]
    %v1579 = vld [vmem:[%s6 + $0x358] sm:$0xff]
    %v1580 = vld [vmem:[%s6 + $0x360] sm:$0xff]
    %v1581 = vld [vmem:[%s6 + $0x368] sm:$0xff]
    %v1582 = vld [vmem:[%s6 + $0x370] sm:$0xff]
    %v1583 = vld [vmem:[%s6 + $0x378] sm:$0xff]
    %v1584 = vld [vmem:[%s6 + $0x380] sm:$0xff]
    %v1585 = vld [vmem:[%s6 + $0x388] sm:$0xff]
    %v1586 = vld [vmem:[%s6 + $0x390] sm:$0xff]
    %v1587 = vld [vmem:[%s6 + $0x398] sm:$0xff]
    %v1588 = vld [vmem:[%s6 + $0x3a0] sm:$0xff]
    %v1589 = vld [vmem:[%s6 + $0x3a8] sm:$0xff]
    %v1590 = vld [vmem:[%s6 + $0x3b0] sm:$0xff]
    %v1591 = vld [vmem:[%s6 + $0x3b8] sm:$0xff]
    %v1592 = vld [vmem:[%s6 + $0x3c0] sm:$0xff]
    %v1593 = vld [vmem:[%s6 + $0x3c8] sm:$0xff]
    %v1594 = vld [vmem:[%s6 + $0x3d0] sm:$0xff]
    %v1595 = vld [vmem:[%s6 + $0x3d8] sm:$0xff]
    %v1596 = vld [vmem:[%s6 + $0x3e0] sm:$0xff]
    %v1597 = vld [vmem:[%s6 + $0x3e8] sm:$0xff]
    %v1598 = vld [vmem:[%s6 + $0x3f0] sm:$0xff]
    %v1599 = vld [vmem:[%s6 + $0x3f8] sm:$0xff]
    %v1600 = vld [vmem:[%s6 + $0x400] sm:$0xff]
    %v1601 = vld [vmem:[%s6 + $0x408] sm:$0xff]
    %v1602 = vld [vmem:[%s6 + $0x410] sm:$0xff]
    %v1603 = vld [vmem:[%s6 + $0x418] sm:$0xff]
    %v1604 = vld [vmem:[%s6 + $0x420] sm:$0xff]
    %v1605 = vld [vmem:[%s6 + $0x428] sm:$0xff]
    %v1606 = vld [vmem:[%s6 + $0x430] sm:$0xff]
    %v1607 = vld [vmem:[%s6 + $0x438] sm:$0xff]
    %v1608 = vld [vmem:[%s6 + $0x440] sm:$0xff]
    %v1609 = vld [vmem:[%s6 + $0x448] sm:$0xff]
    %v1610 = vld [vmem:[%s6 + $0x450] sm:$0xff]
    %v1611 = vld [vmem:[%s6 + $0x458] sm:$0xff]
    %v1612 = vld [vmem:[%s6 + $0x460] sm:$0xff]
    %v1613 = vld [vmem:[%s6 + $0x468] sm:$0xff]
    %v1614 = vld [vmem:[%s6 + $0x470] sm:$0xff]
    %v1615 = vld [vmem:[%s6 + $0x478] sm:$0xff]
    %v1616 = vld [vmem:[%s6 + $0x480] sm:$0xff]
    %v1617 = vld [vmem:[%s6 + $0x488] sm:$0xff]
    %v1618 = vld [vmem:[%s6 + $0x490] sm:$0xff]
    %v1619 = vld [vmem:[%s6 + $0x498] sm:$0xff]
    %v1620 = vld [vmem:[%s6 + $0x4a0] sm:$0xff]
    %v1621 = vld [vmem:[%s6 + $0x4a8] sm:$0xff]
    %v1622 = vld [vmem:[%s6 + $0x4b0] sm:$0xff]
    %v1623 = vld [vmem:[%s6 + $0x4b8] sm:$0xff]
    %v1624 = vld [vmem:[%s6 + $0x4c0] sm:$0xff]
    %v1625 = vld [vmem:[%s6 + $0x4c8] sm:$0xff]
    %v1626 = vld [vmem:[%s6 + $0x4d0] sm:$0xff]
    %v1627 = vld [vmem:[%s6 + $0x4d8] sm:$0xff]
    %v1628 = vld [vmem:[%s6 + $0x4e0] sm:$0xff]
    %v1629 = vld [vmem:[%s6 + $0x4e8] sm:$0xff]
    %v1630 = vld [vmem:[%s6 + $0x4f0] sm:$0xff]
    %v1631 = vld [vmem:[%s6 + $0x4f8] sm:$0xff]
    %v1632 = vld [vmem:[%s6 + $0x500] sm:$0xff]
    %v1633 = vld [vmem:[%s6 + $0x508] sm:$0xff]
    %v1634 = vld [vmem:[%s6 + $0x510] sm:$0xff]
    %v1635 = vld [vmem:[%s6 + $0x518] sm:$0xff]
    %v1636 = vld [vmem:[%s6 + $0x520] sm:$0xff]
    %v1637 = vld [vmem:[%s6 + $0x528] sm:$0xff]
    %v1638 = vld [vmem:[%s6 + $0x530] sm:$0xff]
    %v1639 = vld [vmem:[%s6 + $0x538] sm:$0xff]
    %v1640 = vld [vmem:[%s6 + $0x540] sm:$0xff]
    %v1641 = vld [vmem:[%s6 + $0x548] sm:$0xff]
    %v1642 = vld [vmem:[%s6 + $0x550] sm:$0xff]
    %v1643 = vld [vmem:[%s6 + $0x558] sm:$0xff]
    %v1644 = vld [vmem:[%s6 + $0x560] sm:$0xff]
    %v1645 = vld [vmem:[%s6 + $0x568] sm:$0xff]
    %v1646 = vld [vmem:[%s6 + $0x570] sm:$0xff]
    %v1647 = vld [vmem:[%s6 + $0x578] sm:$0xff]
    %v1648 = vld [vmem:[%s6 + $0x580] sm:$0xff]
    %v1649 = vld [vmem:[%s6 + $0x588] sm:$0xff]
    %v1650 = vld [vmem:[%s6 + $0x590] sm:$0xff]
    %v1651 = vld [vmem:[%s6 + $0x598] sm:$0xff]
    %v1652 = vld [vmem:[%s6 + $0x5a0] sm:$0xff]
    %v1653 = vld [vmem:[%s6 + $0x5a8] sm:$0xff]
    %v1654 = vld [vmem:[%s6 + $0x5b0] sm:$0xff]
    %v1655 = vld [vmem:[%s6 + $0x5b8] sm:$0xff]
    %v1656 = vld [vmem:[%s6 + $0x5c0] sm:$0xff]
    %v1657 = vld [vmem:[%s6 + $0x5c8] sm:$0xff]
    %v1658 = vld [vmem:[%s6 + $0x5d0] sm:$0xff]
    %v1659 = vld [vmem:[%s6 + $0x5d8] sm:$0xff]
    %v1660 = vld [vmem:[%s6 + $0x5e0] sm:$0xff]
    %v1661 = vld [vmem:[%s6 + $0x5e8] sm:$0xff]
    %v1662 = vld [vmem:[%s6 + $0x5f0] sm:$0xff]
    %v1663 = vld [vmem:[%s6 + $0x5f8] sm:$0xff]
    %v1664 = vld [vmem:[%s6 + $0x600] sm:$0xff]
    %v1665 = vld [vmem:[%s6 + $0x608] sm:$0xff]
    %v1666 = vld [vmem:[%s6 + $0x610] sm:$0xff]
    %v1667 = vld [vmem:[%s6 + $0x618] sm:$0xff]
    %v1668 = vld [vmem:[%s6 + $0x620] sm:$0xff]
    %v1669 = vld [vmem:[%s6 + $0x628] sm:$0xff]
    %v1670 = vld [vmem:[%s6 + $0x630] sm:$0xff]
    %v1671 = vld [vmem:[%s6 + $0x638] sm:$0xff]
    %v1672 = vld [vmem:[%s6 + $0x640] sm:$0xff]
    %v1673 = vld [vmem:[%s6 + $0x648] sm:$0xff]
    %v1674 = vld [vmem:[%s6 + $0x650] sm:$0xff]
    %v1675 = vld [vmem:[%s6 + $0x658] sm:$0xff]
    %v1676 = vld [vmem:[%s6 + $0x660] sm:$0xff]
    %v1677 = vld [vmem:[%s6 + $0x668] sm:$0xff]
    %v1678 = vld [vmem:[%s6 + $0x670] sm:$0xff]
    %v1679 = vld [vmem:[%s6 + $0x678] sm:$0xff]
    %v1680 = vld [vmem:[%s6 + $0x680] sm:$0xff]
    %v1681 = vld [vmem:[%s6 + $0x688] sm:$0xff]
    %v1682 = vld [vmem:[%s6 + $0x690] sm:$0xff]
    %v1683 = vld [vmem:[%s6 + $0x698] sm:$0xff]
    %v1684 = vld [vmem:[%s6 + $0x6a0] sm:$0xff]
    %v1685 = vld [vmem:[%s6 + $0x6a8] sm:$0xff]
    %v1686 = vld [vmem:[%s6 + $0x6b0] sm:$0xff]
    %v1687 = vld [vmem:[%s6 + $0x6b8] sm:$0xff]
    %v1688 = vld [vmem:[%s6 + $0x6c0] sm:$0xff]
    %v1689 = vld [vmem:[%s6 + $0x6c8] sm:$0xff]
    %v1690 = vld [vmem:[%s6 + $0x6d0] sm:$0xff]
    %v1691 = vld [vmem:[%s6 + $0x6d8] sm:$0xff]
    %v1692 = vld [vmem:[%s6 + $0x6e0] sm:$0xff]
    %v1693 = vld [vmem:[%s6 + $0x6e8] sm:$0xff]
    %v1694 = vld [vmem:[%s6 + $0x6f0] sm:$0xff]
    %v1695 = vld [vmem:[%s6 + $0x6f8] sm:$0xff]
    %v1696 = vld [vmem:[%s6 + $0x700] sm:$0xff]
    %v1697 = vld [vmem:[%s6 + $0x708] sm:$0xff]
    %v1698 = vld [vmem:[%s6 + $0x710] sm:$0xff]
    %v1699 = vld [vmem:[%s6 + $0x718] sm:$0xff]
    %v1700 = vld [vmem:[%s6 + $0x720] sm:$0xff]
    %v1701 = vld [vmem:[%s6 + $0x728] sm:$0xff]
    %v1702 = vld [vmem:[%s6 + $0x730] sm:$0xff]
    %v1703 = vld [vmem:[%s6 + $0x738] sm:$0xff]
    %v1704 = vld [vmem:[%s6 + $0x740] sm:$0xff]
    %v1705 = vld [vmem:[%s6 + $0x748] sm:$0xff]
    %v1706 = vld [vmem:[%s6 + $0x750] sm:$0xff]
    %v1707 = vld [vmem:[%s6 + $0x758] sm:$0xff]
    %v1708 = vld [vmem:[%s6 + $0x760] sm:$0xff]
    %v1709 = vld [vmem:[%s6 + $0x768] sm:$0xff]
    %v1710 = vld [vmem:[%s6 + $0x770] sm:$0xff]
    %v1711 = vld [vmem:[%s6 + $0x778] sm:$0xff]
    %v1712 = vld [vmem:[%s6 + $0x780] sm:$0xff]
    %v1713 = vld [vmem:[%s6 + $0x788] sm:$0xff]
    %v1714 = vld [vmem:[%s6 + $0x790] sm:$0xff]
    %v1715 = vld [vmem:[%s6 + $0x798] sm:$0xff]
    %v1716 = vld [vmem:[%s6 + $0x7a0] sm:$0xff]
    %v1717 = vld [vmem:[%s6 + $0x7a8] sm:$0xff]
    %v1718 = vld [vmem:[%s6 + $0x7b0] sm:$0xff]
    %v1719 = vld [vmem:[%s6 + $0x7b8] sm:$0xff]
    %v1720 = vld [vmem:[%s6 + $0x7c0] sm:$0xff]
    %v1721 = vld [vmem:[%s6 + $0x7c8] sm:$0xff]
    %v1722 = vld [vmem:[%s6 + $0x7d0] sm:$0xff]
    %v1723 = vld [vmem:[%s6 + $0x7d8] sm:$0xff]
    %v1724 = vld [vmem:[%s6 + $0x7e0] sm:$0xff]
    %v1725 = vld [vmem:[%s6 + $0x7e8] sm:$0xff]
    %v1726 = vld [vmem:[%s6 + $0x7f0] sm:$0xff]
    %v1727 = vld [vmem:[%s6 + $0x7f8] sm:$0xff]
    %1728 = vmatpush.msra.mxu0 %v1592
    %1729 = vmatpush.msra.mxu0 %v1584
    %1730 = vmatpush.msra.mxu0 %v1576
    %1731 = vmatpush.msra.mxu0 %v1568
    %1732 = vmatpush.msra.mxu0 %v1560
    %1733 = vmatpush.msra.mxu0 %v1552
    %1734 = vmatpush.msra.mxu0 %v1544
    %1735 = vmatpush.msra.mxu0 %v1536
    %1736 = vmatpush.msra.mxu0 %v1528
    %1737 = vmatpush.msra.mxu0 %v1520
    %1738 = vmatpush.msra.mxu0 %v1512
    %1739 = vmatpush.msra.mxu0 %v1504
    %1740 = vmatpush.msra.mxu0 %v1496
    %1741 = vmatpush.msra.mxu0 %v1488
    %1742 = vmatpush.msra.mxu0 %v1480
    %1743 = vmatpush.msra.mxu0 %v1472
    %1744 = vmatmul.f32.gmra.mxu0 0.0
    %v1745 = vpop.f32.mrf.mxu0
    %v1746 = vadd.f32 0.0, %v1745
    %1747 = vdwg.mxu0
    %1748 = vmatpush.msra.mxu0 %v1720
    %1749 = vmatpush.msra.mxu0 %v1712
    %1750 = vmatpush.msra.mxu0 %v1704
    %1751 = vmatpush.msra.mxu0 %v1696
    %1752 = vmatpush.msra.mxu0 %v1688
    %1753 = vmatpush.msra.mxu0 %v1680
    %1754 = vmatpush.msra.mxu0 %v1672
    %1755 = vmatpush.msra.mxu0 %v1664
    %1756 = vmatpush.msra.mxu0 %v1656
    %1757 = vmatpush.msra.mxu0 %v1648
    %1758 = vmatpush.msra.mxu0 %v1640
    %1759 = vmatpush.msra.mxu0 %v1632
    %1760 = vmatpush.msra.mxu0 %v1624
    %1761 = vmatpush.msra.mxu0 %v1616
    %1762 = vmatpush.msra.mxu0 %v1608
    %1763 = vmatpush.msra.mxu0 %v1600
    %1764 = vmatmul.f32.gmra.mxu0 0.0
    %v1765 = vpop.f32.mrf.mxu0
    %v1766 = vadd.f32 %v1746, %v1765
    %1767 = vdwg.mxu0
    %1768 = vmatpush.msra.mxu0 %v1593
    %1769 = vmatpush.msra.mxu0 %v1585
    %1770 = vmatpush.msra.mxu0 %v1577
    %1771 = vmatpush.msra.mxu0 %v1569
    %1772 = vmatpush.msra.mxu0 %v1561
    %1773 = vmatpush.msra.mxu0 %v1553
    %1774 = vmatpush.msra.mxu0 %v1545
    %1775 = vmatpush.msra.mxu0 %v1537
    %1776 = vmatpush.msra.mxu0 %v1529
    %1777 = vmatpush.msra.mxu0 %v1521
    %1778 = vmatpush.msra.mxu0 %v1513
    %1779 = vmatpush.msra.mxu0 %v1505
    %1780 = vmatpush.msra.mxu0 %v1497
    %1781 = vmatpush.msra.mxu0 %v1489
    %1782 = vmatpush.msra.mxu0 %v1481
    %1783 = vmatpush.msra.mxu0 %v1473
    %1784 = vmatmul.f32.gmra.mxu0 0.0
    %v1785 = vpop.f32.mrf.mxu0
    %v1786 = vadd.f32 0.0, %v1785
    %1787 = vdwg.mxu0
    %1788 = vmatpush.msra.mxu0 %v1721
    %1789 = vmatpush.msra.mxu0 %v1713
    %1790 = vmatpush.msra.mxu0 %v1705
    %1791 = vmatpush.msra.mxu0 %v1697
    %1792 = vmatpush.msra.mxu0 %v1689
    %1793 = vmatpush.msra.mxu0 %v1681
    %1794 = vmatpush.msra.mxu0 %v1673
    %1795 = vmatpush.msra.mxu0 %v1665
    %1796 = vmatpush.msra.mxu0 %v1657
    %1797 = vmatpush.msra.mxu0 %v1649
    %1798 = vmatpush.msra.mxu0 %v1641
    %1799 = vmatpush.msra.mxu0 %v1633
    %1800 = vmatpush.msra.mxu0 %v1625
    %1801 = vmatpush.msra.mxu0 %v1617
    %1802 = vmatpush.msra.mxu0 %v1609
    %1803 = vmatpush.msra.mxu0 %v1601
    %1804 = vmatmul.f32.gmra.mxu0 0.0
    %v1805 = vpop.f32.mrf.mxu0
    %v1806 = vadd.f32 %v1786, %v1805
    %1807 = vdwg.mxu0
    %1808 = vmatpush.msra.mxu0 %v1594
    %1809 = vmatpush.msra.mxu0 %v1586
    %1810 = vmatpush.msra.mxu0 %v1578
    %1811 = vmatpush.msra.mxu0 %v1570
    %1812 = vmatpush.msra.mxu0 %v1562
    %1813 = vmatpush.msra.mxu0 %v1554
    %1814 = vmatpush.msra.mxu0 %v1546
    %1815 = vmatpush.msra.mxu0 %v1538
    %1816 = vmatpush.msra.mxu0 %v1530
    %1817 = vmatpush.msra.mxu0 %v1522
    %1818 = vmatpush.msra.mxu0 %v1514
    %1819 = vmatpush.msra.mxu0 %v1506
    %1820 = vmatpush.msra.mxu0 %v1498
    %1821 = vmatpush.msra.mxu0 %v1490
    %1822 = vmatpush.msra.mxu0 %v1482
    %1823 = vmatpush.msra.mxu0 %v1474
    %1824 = vmatmul.f32.gmra.mxu0 0.0
    %v1825 = vpop.f32.mrf.mxu0
    %v1826 = vadd.f32 0.0, %v1825
    %1827 = vdwg.mxu0
    %1828 = vmatpush.msra.mxu0 %v1722
    %1829 = vmatpush.msra.mxu0 %v1714
    %1830 = vmatpush.msra.mxu0 %v1706
    %1831 = vmatpush.msra.mxu0 %v1698
    %1832 = vmatpush.msra.mxu0 %v1690
    %1833 = vmatpush.msra.mxu0 %v1682
    %1834 = vmatpush.msra.mxu0 %v1674
    %1835 = vmatpush.msra.mxu0 %v1666
    %1836 = vmatpush.msra.mxu0 %v1658
    %1837 = vmatpush.msra.mxu0 %v1650
    %1838 = vmatpush.msra.mxu0 %v1642
    %1839 = vmatpush.msra.mxu0 %v1634
    %1840 = vmatpush.msra.mxu0 %v1626
    %1841 = vmatpush.msra.mxu0 %v1618
    %1842 = vmatpush.msra.mxu0 %v1610
    %1843 = vmatpush.msra.mxu0 %v1602
    %1844 = vmatmul.f32.gmra.mxu0 0.0
    %v1845 = vpop.f32.mrf.mxu0
    %v1846 = vadd.f32 %v1826, %v1845
    %1847 = vdwg.mxu0
    %1848 = vmatpush.msra.mxu0 %v1595
    %1849 = vmatpush.msra.mxu0 %v1587
    %1850 = vmatpush.msra.mxu0 %v1579
    %1851 = vmatpush.msra.mxu0 %v1571
    %1852 = vmatpush.msra.mxu0 %v1563
    %1853 = vmatpush.msra.mxu0 %v1555
    %1854 = vmatpush.msra.mxu0 %v1547
    %1855 = vmatpush.msra.mxu0 %v1539
    %1856 = vmatpush.msra.mxu0 %v1531
    %1857 = vmatpush.msra.mxu0 %v1523
    %1858 = vmatpush.msra.mxu0 %v1515
    %1859 = vmatpush.msra.mxu0 %v1507
    %1860 = vmatpush.msra.mxu0 %v1499
    %1861 = vmatpush.msra.mxu0 %v1491
    %1862 = vmatpush.msra.mxu0 %v1483
    %1863 = vmatpush.msra.mxu0 %v1475
    %1864 = vmatmul.f32.gmra.mxu0 0.0
    %v1865 = vpop.f32.mrf.mxu0
    %v1866 = vadd.f32 0.0, %v1865
    %1867 = vdwg.mxu0
    %1868 = vmatpush.msra.mxu0 %v1723
    %1869 = vmatpush.msra.mxu0 %v1715
    %1870 = vmatpush.msra.mxu0 %v1707
    %1871 = vmatpush.msra.mxu0 %v1699
    %1872 = vmatpush.msra.mxu0 %v1691
    %1873 = vmatpush.msra.mxu0 %v1683
    %1874 = vmatpush.msra.mxu0 %v1675
    %1875 = vmatpush.msra.mxu0 %v1667
    %1876 = vmatpush.msra.mxu0 %v1659
    %1877 = vmatpush.msra.mxu0 %v1651
    %1878 = vmatpush.msra.mxu0 %v1643
    %1879 = vmatpush.msra.mxu0 %v1635
    %1880 = vmatpush.msra.mxu0 %v1627
    %1881 = vmatpush.msra.mxu0 %v1619
    %1882 = vmatpush.msra.mxu0 %v1611
    %1883 = vmatpush.msra.mxu0 %v1603
    %1884 = vmatmul.f32.gmra.mxu0 0.0
    %v1885 = vpop.f32.mrf.mxu0
    %v1886 = vadd.f32 %v1866, %v1885
    %1887 = vdwg.mxu0
    %1888 = vmatpush.msra.mxu0 %v1596
    %1889 = vmatpush.msra.mxu0 %v1588
    %1890 = vmatpush.msra.mxu0 %v1580
    %1891 = vmatpush.msra.mxu0 %v1572
    %1892 = vmatpush.msra.mxu0 %v1564
    %1893 = vmatpush.msra.mxu0 %v1556
    %1894 = vmatpush.msra.mxu0 %v1548
    %1895 = vmatpush.msra.mxu0 %v1540
    %1896 = vmatpush.msra.mxu0 %v1532
    %1897 = vmatpush.msra.mxu0 %v1524
    %1898 = vmatpush.msra.mxu0 %v1516
    %1899 = vmatpush.msra.mxu0 %v1508
    %1900 = vmatpush.msra.mxu0 %v1500
    %1901 = vmatpush.msra.mxu0 %v1492
    %1902 = vmatpush.msra.mxu0 %v1484
    %1903 = vmatpush.msra.mxu0 %v1476
    %1904 = vmatmul.f32.gmra.mxu0 0.0
    %v1905 = vpop.f32.mrf.mxu0
    %v1906 = vadd.f32 0.0, %v1905
    %1907 = vdwg.mxu0
    %1908 = vmatpush.msra.mxu0 %v1724
    %1909 = vmatpush.msra.mxu0 %v1716
    %1910 = vmatpush.msra.mxu0 %v1708
    %1911 = vmatpush.msra.mxu0 %v1700
    %1912 = vmatpush.msra.mxu0 %v1692
    %1913 = vmatpush.msra.mxu0 %v1684
    %1914 = vmatpush.msra.mxu0 %v1676
    %1915 = vmatpush.msra.mxu0 %v1668
    %1916 = vmatpush.msra.mxu0 %v1660
    %1917 = vmatpush.msra.mxu0 %v1652
    %1918 = vmatpush.msra.mxu0 %v1644
    %1919 = vmatpush.msra.mxu0 %v1636
    %1920 = vmatpush.msra.mxu0 %v1628
    %1921 = vmatpush.msra.mxu0 %v1620
    %1922 = vmatpush.msra.mxu0 %v1612
    %1923 = vmatpush.msra.mxu0 %v1604
    %1924 = vmatmul.f32.gmra.mxu0 0.0
    %v1925 = vpop.f32.mrf.mxu0
    %v1926 = vadd.f32 %v1906, %v1925
    %1927 = vdwg.mxu0
    %1928 = vmatpush.msra.mxu0 %v1597
    %1929 = vmatpush.msra.mxu0 %v1589
    %1930 = vmatpush.msra.mxu0 %v1581
    %1931 = vmatpush.msra.mxu0 %v1573
    %1932 = vmatpush.msra.mxu0 %v1565
    %1933 = vmatpush.msra.mxu0 %v1557
    %1934 = vmatpush.msra.mxu0 %v1549
    %1935 = vmatpush.msra.mxu0 %v1541
    %1936 = vmatpush.msra.mxu0 %v1533
    %1937 = vmatpush.msra.mxu0 %v1525
    %1938 = vmatpush.msra.mxu0 %v1517
    %1939 = vmatpush.msra.mxu0 %v1509
    %1940 = vmatpush.msra.mxu0 %v1501
    %1941 = vmatpush.msra.mxu0 %v1493
    %1942 = vmatpush.msra.mxu0 %v1485
    %1943 = vmatpush.msra.mxu0 %v1477
    %1944 = vmatmul.f32.gmra.mxu0 0.0
    %v1945 = vpop.f32.mrf.mxu0
    %v1946 = vadd.f32 0.0, %v1945
    %1947 = vdwg.mxu0
    %1948 = vmatpush.msra.mxu0 %v1725
    %1949 = vmatpush.msra.mxu0 %v1717
    %1950 = vmatpush.msra.mxu0 %v1709
    %1951 = vmatpush.msra.mxu0 %v1701
    %1952 = vmatpush.msra.mxu0 %v1693
    %1953 = vmatpush.msra.mxu0 %v1685
    %1954 = vmatpush.msra.mxu0 %v1677
    %1955 = vmatpush.msra.mxu0 %v1669
    %1956 = vmatpush.msra.mxu0 %v1661
    %1957 = vmatpush.msra.mxu0 %v1653
    %1958 = vmatpush.msra.mxu0 %v1645
    %1959 = vmatpush.msra.mxu0 %v1637
    %1960 = vmatpush.msra.mxu0 %v1629
    %1961 = vmatpush.msra.mxu0 %v1621
    %1962 = vmatpush.msra.mxu0 %v1613
    %1963 = vmatpush.msra.mxu0 %v1605
    %1964 = vmatmul.f32.gmra.mxu0 0.0
    %v1965 = vpop.f32.mrf.mxu0
    %v1966 = vadd.f32 %v1946, %v1965
    %1967 = vdwg.mxu0
    %1968 = vmatpush.msra.mxu0 %v1598
    %1969 = vmatpush.msra.mxu0 %v1590
    %1970 = vmatpush.msra.mxu0 %v1582
    %1971 = vmatpush.msra.mxu0 %v1574
    %1972 = vmatpush.msra.mxu0 %v1566
    %1973 = vmatpush.msra.mxu0 %v1558
    %1974 = vmatpush.msra.mxu0 %v1550
    %1975 = vmatpush.msra.mxu0 %v1542
    %1976 = vmatpush.msra.mxu0 %v1534
    %1977 = vmatpush.msra.mxu0 %v1526
    %1978 = vmatpush.msra.mxu0 %v1518
    %1979 = vmatpush.msra.mxu0 %v1510
    %1980 = vmatpush.msra.mxu0 %v1502
    %1981 = vmatpush.msra.mxu0 %v1494
    %1982 = vmatpush.msra.mxu0 %v1486
    %1983 = vmatpush.msra.mxu0 %v1478
    %1984 = vmatmul.f32.gmra.mxu0 0.0
    %v1985 = vpop.f32.mrf.mxu0
    %v1986 = vadd.f32 0.0, %v1985
    %1987 = vdwg.mxu0
    %1988 = vmatpush.msra.mxu0 %v1726
    %1989 = vmatpush.msra.mxu0 %v1718
    %1990 = vmatpush.msra.mxu0 %v1710
    %1991 = vmatpush.msra.mxu0 %v1702
    %1992 = vmatpush.msra.mxu0 %v1694
    %1993 = vmatpush.msra.mxu0 %v1686
    %1994 = vmatpush.msra.mxu0 %v1678
    %1995 = vmatpush.msra.mxu0 %v1670
    %1996 = vmatpush.msra.mxu0 %v1662
    %1997 = vmatpush.msra.mxu0 %v1654
    %1998 = vmatpush.msra.mxu0 %v1646
    %1999 = vmatpush.msra.mxu0 %v1638
    %2000 = vmatpush.msra.mxu0 %v1630
    %2001 = vmatpush.msra.mxu0 %v1622
    %2002 = vmatpush.msra.mxu0 %v1614
    %2003 = vmatpush.msra.mxu0 %v1606
    %2004 = vmatmul.f32.gmra.mxu0 0.0
    %v2005 = vpop.f32.mrf.mxu0
    %v2006 = vadd.f32 %v1986, %v2005
    %2007 = vdwg.mxu0
    %2008 = vmatpush.msra.mxu0 %v1599
    %2009 = vmatpush.msra.mxu0 %v1591
    %2010 = vmatpush.msra.mxu0 %v1583
    %2011 = vmatpush.msra.mxu0 %v1575
    %2012 = vmatpush.msra.mxu0 %v1567
    %2013 = vmatpush.msra.mxu0 %v1559
    %2014 = vmatpush.msra.mxu0 %v1551
    %2015 = vmatpush.msra.mxu0 %v1543
    %2016 = vmatpush.msra.mxu0 %v1535
    %2017 = vmatpush.msra.mxu0 %v1527
    %2018 = vmatpush.msra.mxu0 %v1519
    %2019 = vmatpush.msra.mxu0 %v1511
    %2020 = vmatpush.msra.mxu0 %v1503
    %2021 = vmatpush.msra.mxu0 %v1495
    %2022 = vmatpush.msra.mxu0 %v1487
    %2023 = vmatpush.msra.mxu0 %v1479
    %2024 = vmatmul.f32.gmra.mxu0 0.0
    %v2025 = vpop.f32.mrf.mxu0
    %v2026 = vadd.f32 0.0, %v2025
    %2027 = vdwg.mxu0
    %2028 = vmatpush.msra.mxu0 %v1727
    %2029 = vmatpush.msra.mxu0 %v1719
    %2030 = vmatpush.msra.mxu0 %v1711
    %2031 = vmatpush.msra.mxu0 %v1703
    %2032 = vmatpush.msra.mxu0 %v1695
    %2033 = vmatpush.msra.mxu0 %v1687
    %2034 = vmatpush.msra.mxu0 %v1679
    %2035 = vmatpush.msra.mxu0 %v1671
    %2036 = vmatpush.msra.mxu0 %v1663
    %2037 = vmatpush.msra.mxu0 %v1655
    %2038 = vmatpush.msra.mxu0 %v1647
    %2039 = vmatpush.msra.mxu0 %v1639
    %2040 = vmatpush.msra.mxu0 %v1631
    %2041 = vmatpush.msra.mxu0 %v1623
    %2042 = vmatpush.msra.mxu0 %v1615
    %2043 = vmatpush.msra.mxu0 %v1607
    %2044 = vmatmul.f32.gmra.mxu0 0.0
    %v2045 = vpop.f32.mrf.mxu0
    %v2046 = vadd.f32 %v2026, %v2045
    %2047 = vdwg.mxu0
    %v2048 = vld [vmem:[#allocation2] sm:$0xff]
    %v2049 = vld [vmem:[#allocation2 + $0x8] sm:$0xff]
    %v2050 = vld [vmem:[#allocation2 + $0x10] sm:$0xff]
    %v2051 = vld [vmem:[#allocation2 + $0x18] sm:$0xff]
    %v2052 = vadd.f32 %v1766, %v2048
    %v2053 = vadd.f32 %v1806, %v2049
    %v2054 = vadd.f32 %v1846, %v2050
    %v2055 = vadd.f32 %v1886, %v2051
    %v2056 = vld [vmem:[#allocation2 + $0xe0] sm:$0xff]
    %v2057 = vld [vmem:[#allocation2 + $0xe8] sm:$0xff]
    %v2058 = vld [vmem:[#allocation2 + $0xf0] sm:$0xff]
    %v2059 = vld [vmem:[#allocation2 + $0xf8] sm:$0xff]
    %v2060 = vadd.f32 %v1926, %v2056
    %v2061 = vadd.f32 %v1966, %v2057
    %v2062 = vadd.f32 %v2006, %v2058
    %v2063 = vadd.f32 %v2046, %v2059
    %v2064 = vmul.f32 %v2052, 0.5
    %v2065 = vmul.f32 %v2053, 0.5
    %v2066 = vmul.f32 %v2054, 0.5
    %v2067 = vmul.f32 %v2060, 0.5
    %v2068 = vmul.f32 %v2061, 0.5
    %v2069 = vmul.f32 %v2062, 0.5
    %v2070 = vtanh.pop %v2064
    %v2071 = vtanh.pop %v2065
    %v2072 = vtanh.pop %v2066
    %v2073 = vtanh.pop %v2067
    %v2074 = vtanh.pop %v2068
    %v2075 = vtanh.pop %v2069
    %v2076 = vmul.f32 %v2070, 0.5
    %v2077 = vmul.f32 %v2071, 0.5
    %v2078 = vmul.f32 %v2072, 0.5
    %v2079 = vmul.f32 %v2073, 0.5
    %v2080 = vmul.f32 %v2074, 0.5
    %v2081 = vmul.f32 %v2075, 0.5
    %v2082 = vadd.f32 %v2076, 0.5
    %v2083 = vadd.f32 %v2077, 0.5
    %v2084 = vadd.f32 %v2078, 0.5
    %v2085 = vadd.f32 %v2079, 0.5
    %v2086 = vadd.f32 %v2080, 0.5
    %v2087 = vadd.f32 %v2081, 0.5
    %v2088 = vtanh.pop %v2055
    %v2089 = vtanh.pop %v2063
    %v2090 = vmul.f32 %v2083, 0.0
    %v2091 = vmul.f32 %v2086, 0.0
    %v2092 = vmul.f32 %v2082, %v2088
    %v2093 = vmul.f32 %v2085, %v2089
    %v2094 = vadd.f32 %v2090, %v2092
    %v2095 = vadd.f32 %v2091, %v2093
    %v2096 = vtanh.pop %v2094
    %v2097 = vtanh.pop %v2095
    %v2098 = vmul.f32 %v2084, %v2096
    %v2099 = vmul.f32 %v2087, %v2097
    %2100 = vst [vmem:[#allocation3] sm:$0xff] %v2098
    %2101 = vst [vmem:[#allocation4 + $0x18] sm:$0xff] %v2099
    %2102 = vmatpush.msra.mxu0 %v1592
    %2103 = vmatpush.msra.mxu0 %v1584
    %2104 = vmatpush.msra.mxu0 %v1576
    %2105 = vmatpush.msra.mxu0 %v1568
    %2106 = vmatpush.msra.mxu0 %v1560
    %2107 = vmatpush.msra.mxu0 %v1552
    %2108 = vmatpush.msra.mxu0 %v1544
    %2109 = vmatpush.msra.mxu0 %v1536
    %2110 = vmatpush.msra.mxu0 %v1528
    %2111 = vmatpush.msra.mxu0 %v1520
    %2112 = vmatpush.msra.mxu0 %v1512
    %2113 = vmatpush.msra.mxu0 %v1504
    %2114 = vmatpush.msra.mxu0 %v1496
    %2115 = vmatpush.msra.mxu0 %v1488
    %2116 = vmatpush.msra.mxu0 %v1480
    %2117 = vmatpush.msra.mxu0 %v1472
    %2118 = vmatmul.f32.gmra.mxu0 %v2098
    %v2119 = vpop.f32.mrf.mxu0
    %v2120 = vadd.f32 0.0, %v2119
    %2121 = vdwg.mxu0
    %2122 = vmatpush.msra.mxu0 %v1720
    %2123 = vmatpush.msra.mxu0 %v1712
    %2124 = vmatpush.msra.mxu0 %v1704
    %2125 = vmatpush.msra.mxu0 %v1696
    %2126 = vmatpush.msra.mxu0 %v1688
    %2127 = vmatpush.msra.mxu0 %v1680
    %2128 = vmatpush.msra.mxu0 %v1672
    %2129 = vmatpush.msra.mxu0 %v1664
    %2130 = vmatpush.msra.mxu0 %v1656
    %2131 = vmatpush.msra.mxu0 %v1648
    %2132 = vmatpush.msra.mxu0 %v1640
    %2133 = vmatpush.msra.mxu0 %v1632
    %2134 = vmatpush.msra.mxu0 %v1624
    %2135 = vmatpush.msra.mxu0 %v1616
    %2136 = vmatpush.msra.mxu0 %v1608
    %2137 = vmatpush.msra.mxu0 %v1600
    %2138 = vmatmul.f32.gmra.mxu0 %v2099
    %v2139 = vpop.f32.mrf.mxu0
    %v2140 = vadd.f32 %v2120, %v2139
    %2141 = vdwg.mxu0
    %2142 = vmatpush.msra.mxu0 %v1593
    %2143 = vmatpush.msra.mxu0 %v1585
    %2144 = vmatpush.msra.mxu0 %v1577
    %2145 = vmatpush.msra.mxu0 %v1569
    %2146 = vmatpush.msra.mxu0 %v1561
    %2147 = vmatpush.msra.mxu0 %v1553
    %2148 = vmatpush.msra.mxu0 %v1545
    %2149 = vmatpush.msra.mxu0 %v1537
    %2150 = vmatpush.msra.mxu0 %v1529
    %2151 = vmatpush.msra.mxu0 %v1521
    %2152 = vmatpush.msra.mxu0 %v1513
    %2153 = vmatpush.msra.mxu0 %v1505
    %2154 = vmatpush.msra.mxu0 %v1497
    %2155 = vmatpush.msra.mxu0 %v1489
    %2156 = vmatpush.msra.mxu0 %v1481
    %2157 = vmatpush.msra.mxu0 %v1473
    %2158 = vmatmul.f32.gmra.mxu0 %v2098
    %v2159 = vpop.f32.mrf.mxu0
    %v2160 = vadd.f32 0.0, %v2159
    %2161 = vdwg.mxu0
    %2162 = vmatpush.msra.mxu0 %v1721
    %2163 = vmatpush.msra.mxu0 %v1713
    %2164 = vmatpush.msra.mxu0 %v1705
    %2165 = vmatpush.msra.mxu0 %v1697
    %2166 = vmatpush.msra.mxu0 %v1689
    %2167 = vmatpush.msra.mxu0 %v1681
    %2168 = vmatpush.msra.mxu0 %v1673
    %2169 = vmatpush.msra.mxu0 %v1665
    %2170 = vmatpush.msra.mxu0 %v1657
    %2171 = vmatpush.msra.mxu0 %v1649
    %2172 = vmatpush.msra.mxu0 %v1641
    %2173 = vmatpush.msra.mxu0 %v1633
    %2174 = vmatpush.msra.mxu0 %v1625
    %2175 = vmatpush.msra.mxu0 %v1617
    %2176 = vmatpush.msra.mxu0 %v1609
    %2177 = vmatpush.msra.mxu0 %v1601
    %2178 = vmatmul.f32.gmra.mxu0 %v2099
    %v2179 = vpop.f32.mrf.mxu0
    %v2180 = vadd.f32 %v2160, %v2179
    %2181 = vdwg.mxu0
    %2182 = vmatpush.msra.mxu0 %v1594
    %2183 = vmatpush.msra.mxu0 %v1586
    %2184 = vmatpush.msra.mxu0 %v1578
    %2185 = vmatpush.msra.mxu0 %v1570
    %2186 = vmatpush.msra.mxu0 %v1562
    %2187 = vmatpush.msra.mxu0 %v1554
    %2188 = vmatpush.msra.mxu0 %v1546
    %2189 = vmatpush.msra.mxu0 %v1538
    %2190 = vmatpush.msra.mxu0 %v1530
    %2191 = vmatpush.msra.mxu0 %v1522
    %2192 = vmatpush.msra.mxu0 %v1514
    %2193 = vmatpush.msra.mxu0 %v1506
    %2194 = vmatpush.msra.mxu0 %v1498
    %2195 = vmatpush.msra.mxu0 %v1490
    %2196 = vmatpush.msra.mxu0 %v1482
    %2197 = vmatpush.msra.mxu0 %v1474
    %2198 = vmatmul.f32.gmra.mxu0 %v2098
    %v2199 = vpop.f32.mrf.mxu0
    %v2200 = vadd.f32 0.0, %v2199
    %2201 = vdwg.mxu0
    %2202 = vmatpush.msra.mxu0 %v1722
    %2203 = vmatpush.msra.mxu0 %v1714
    %2204 = vmatpush.msra.mxu0 %v1706
    %2205 = vmatpush.msra.mxu0 %v1698
    %2206 = vmatpush.msra.mxu0 %v1690
    %2207 = vmatpush.msra.mxu0 %v1682
    %2208 = vmatpush.msra.mxu0 %v1674
    %2209 = vmatpush.msra.mxu0 %v1666
    %2210 = vmatpush.msra.mxu0 %v1658
    %2211 = vmatpush.msra.mxu0 %v1650
    %2212 = vmatpush.msra.mxu0 %v1642
    %2213 = vmatpush.msra.mxu0 %v1634
    %2214 = vmatpush.msra.mxu0 %v1626
    %2215 = vmatpush.msra.mxu0 %v1618
    %2216 = vmatpush.msra.mxu0 %v1610
    %2217 = vmatpush.msra.mxu0 %v1602
    %2218 = vmatmul.f32.gmra.mxu0 %v2099
    %v2219 = vpop.f32.mrf.mxu0
    %v2220 = vadd.f32 %v2200, %v2219
    %2221 = vdwg.mxu0
    %2222 = vmatpush.msra.mxu0 %v1595
    %2223 = vmatpush.msra.mxu0 %v1587
    %2224 = vmatpush.msra.mxu0 %v1579
    %2225 = vmatpush.msra.mxu0 %v1571
    %2226 = vmatpush.msra.mxu0 %v1563
    %2227 = vmatpush.msra.mxu0 %v1555
    %2228 = vmatpush.msra.mxu0 %v1547
    %2229 = vmatpush.msra.mxu0 %v1539
    %2230 = vmatpush.msra.mxu0 %v1531
    %2231 = vmatpush.msra.mxu0 %v1523
    %2232 = vmatpush.msra.mxu0 %v1515
    %2233 = vmatpush.msra.mxu0 %v1507
    %2234 = vmatpush.msra.mxu0 %v1499
    %2235 = vmatpush.msra.mxu0 %v1491
    %2236 = vmatpush.msra.mxu0 %v1483
    %2237 = vmatpush.msra.mxu0 %v1475
    %2238 = vmatmul.f32.gmra.mxu0 %v2098
    %v2239 = vpop.f32.mrf.mxu0
    %v2240 = vadd.f32 0.0, %v2239
    %2241 = vdwg.mxu0
    %2242 = vmatpush.msra.mxu0 %v1723
    %2243 = vmatpush.msra.mxu0 %v1715
    %2244 = vmatpush.msra.mxu0 %v1707
    %2245 = vmatpush.msra.mxu0 %v1699
    %2246 = vmatpush.msra.mxu0 %v1691
    %2247 = vmatpush.msra.mxu0 %v1683
    %2248 = vmatpush.msra.mxu0 %v1675
    %2249 = vmatpush.msra.mxu0 %v1667
    %2250 = vmatpush.msra.mxu0 %v1659
    %2251 = vmatpush.msra.mxu0 %v1651
    %2252 = vmatpush.msra.mxu0 %v1643
    %2253 = vmatpush.msra.mxu0 %v1635
    %2254 = vmatpush.msra.mxu0 %v1627
    %2255 = vmatpush.msra.mxu0 %v1619
    %2256 = vmatpush.msra.mxu0 %v1611
    %2257 = vmatpush.msra.mxu0 %v1603
    %2258 = vmatmul.f32.gmra.mxu0 %v2099
    %v2259 = vpop.f32.mrf.mxu0
    %v2260 = vadd.f32 %v2240, %v2259
    %2261 = vdwg.mxu0
    %2262 = vmatpush.msra.mxu0 %v1596
    %2263 = vmatpush.msra.mxu0 %v1588
    %2264 = vmatpush.msra.mxu0 %v1580
    %2265 = vmatpush.msra.mxu0 %v1572
    %2266 = vmatpush.msra.mxu0 %v1564
    %2267 = vmatpush.msra.mxu0 %v1556
    %2268 = vmatpush.msra.mxu0 %v1548
    %2269 = vmatpush.msra.mxu0 %v1540
    %2270 = vmatpush.msra.mxu0 %v1532
    %2271 = vmatpush.msra.mxu0 %v1524
    %2272 = vmatpush.msra.mxu0 %v1516
    %2273 = vmatpush.msra.mxu0 %v1508
    %2274 = vmatpush.msra.mxu0 %v1500
    %2275 = vmatpush.msra.mxu0 %v1492
    %2276 = vmatpush.msra.mxu0 %v1484
    %2277 = vmatpush.msra.mxu0 %v1476
    %2278 = vmatmul.f32.gmra.mxu0 %v2098
    %v2279 = vpop.f32.mrf.mxu0
    %v2280 = vadd.f32 0.0, %v2279
    %2281 = vdwg.mxu0
    %2282 = vmatpush.msra.mxu0 %v1724
    %2283 = vmatpush.msra.mxu0 %v1716
    %2284 = vmatpush.msra.mxu0 %v1708
    %2285 = vmatpush.msra.mxu0 %v1700
    %2286 = vmatpush.msra.mxu0 %v1692
    %2287 = vmatpush.msra.mxu0 %v1684
    %2288 = vmatpush.msra.mxu0 %v1676
    %2289 = vmatpush.msra.mxu0 %v1668
    %2290 = vmatpush.msra.mxu0 %v1660
    %2291 = vmatpush.msra.mxu0 %v1652
    %2292 = vmatpush.msra.mxu0 %v1644
    %2293 = vmatpush.msra.mxu0 %v1636
    %2294 = vmatpush.msra.mxu0 %v1628
    %2295 = vmatpush.msra.mxu0 %v1620
    %2296 = vmatpush.msra.mxu0 %v1612
    %2297 = vmatpush.msra.mxu0 %v1604
    %2298 = vmatmul.f32.gmra.mxu0 %v2099
    %v2299 = vpop.f32.mrf.mxu0
    %v2300 = vadd.f32 %v2280, %v2299
    %2301 = vdwg.mxu0
    %2302 = vmatpush.msra.mxu0 %v1597
    %2303 = vmatpush.msra.mxu0 %v1589
    %2304 = vmatpush.msra.mxu0 %v1581
    %2305 = vmatpush.msra.mxu0 %v1573
    %2306 = vmatpush.msra.mxu0 %v1565
    %2307 = vmatpush.msra.mxu0 %v1557
    %2308 = vmatpush.msra.mxu0 %v1549
    %2309 = vmatpush.msra.mxu0 %v1541
    %2310 = vmatpush.msra.mxu0 %v1533
    %2311 = vmatpush.msra.mxu0 %v1525
    %2312 = vmatpush.msra.mxu0 %v1517
    %2313 = vmatpush.msra.mxu0 %v1509
    %2314 = vmatpush.msra.mxu0 %v1501
    %2315 = vmatpush.msra.mxu0 %v1493
    %2316 = vmatpush.msra.mxu0 %v1485
    %2317 = vmatpush.msra.mxu0 %v1477
    %2318 = vmatmul.f32.gmra.mxu0 %v2098
    %v2319 = vpop.f32.mrf.mxu0
    %v2320 = vadd.f32 0.0, %v2319
    %2321 = vdwg.mxu0
    %2322 = vmatpush.msra.mxu0 %v1725
    %2323 = vmatpush.msra.mxu0 %v1717
    %2324 = vmatpush.msra.mxu0 %v1709
    %2325 = vmatpush.msra.mxu0 %v1701
    %2326 = vmatpush.msra.mxu0 %v1693
    %2327 = vmatpush.msra.mxu0 %v1685
    %2328 = vmatpush.msra.mxu0 %v1677
    %2329 = vmatpush.msra.mxu0 %v1669
    %2330 = vmatpush.msra.mxu0 %v1661
    %2331 = vmatpush.msra.mxu0 %v1653
    %2332 = vmatpush.msra.mxu0 %v1645
    %2333 = vmatpush.msra.mxu0 %v1637
    %2334 = vmatpush.msra.mxu0 %v1629
    %2335 = vmatpush.msra.mxu0 %v1621
    %2336 = vmatpush.msra.mxu0 %v1613
    %2337 = vmatpush.msra.mxu0 %v1605
    %2338 = vmatmul.f32.gmra.mxu0 %v2099
    %v2339 = vpop.f32.mrf.mxu0
    %v2340 = vadd.f32 %v2320, %v2339
    %2341 = vdwg.mxu0
    %2342 = vmatpush.msra.mxu0 %v1598
    %2343 = vmatpush.msra.mxu0 %v1590
    %2344 = vmatpush.msra.mxu0 %v1582
    %2345 = vmatpush.msra.mxu0 %v1574
    %2346 = vmatpush.msra.mxu0 %v1566
    %2347 = vmatpush.msra.mxu0 %v1558
    %2348 = vmatpush.msra.mxu0 %v1550
    %2349 = vmatpush.msra.mxu0 %v1542
    %2350 = vmatpush.msra.mxu0 %v1534
    %2351 = vmatpush.msra.mxu0 %v1526
    %2352 = vmatpush.msra.mxu0 %v1518
    %2353 = vmatpush.msra.mxu0 %v1510
    %2354 = vmatpush.msra.mxu0 %v1502
    %2355 = vmatpush.msra.mxu0 %v1494
    %2356 = vmatpush.msra.mxu0 %v1486
    %2357 = vmatpush.msra.mxu0 %v1478
    %2358 = vmatmul.f32.gmra.mxu0 %v2098
    %v2359 = vpop.f32.mrf.mxu0
    %v2360 = vadd.f32 0.0, %v2359
    %2361 = vdwg.mxu0
    %2362 = vmatpush.msra.mxu0 %v1726
    %2363 = vmatpush.msra.mxu0 %v1718
    %2364 = vmatpush.msra.mxu0 %v1710
    %2365 = vmatpush.msra.mxu0 %v1702
    %2366 = vmatpush.msra.mxu0 %v1694
    %2367 = vmatpush.msra.mxu0 %v1686
    %2368 = vmatpush.msra.mxu0 %v1678
    %2369 = vmatpush.msra.mxu0 %v1670
    %2370 = vmatpush.msra.mxu0 %v1662
    %2371 = vmatpush.msra.mxu0 %v1654
    %2372 = vmatpush.msra.mxu0 %v1646
    %2373 = vmatpush.msra.mxu0 %v1638
    %2374 = vmatpush.msra.mxu0 %v1630
    %2375 = vmatpush.msra.mxu0 %v1622
    %2376 = vmatpush.msra.mxu0 %v1614
    %2377 = vmatpush.msra.mxu0 %v1606
    %2378 = vmatmul.f32.gmra.mxu0 %v2099
    %v2379 = vpop.f32.mrf.mxu0
    %v2380 = vadd.f32 %v2360, %v2379
    %2381 = vdwg.mxu0
    %2382 = vmatpush.msra.mxu0 %v1599
    %2383 = vmatpush.msra.mxu0 %v1591
    %2384 = vmatpush.msra.mxu0 %v1583
    %2385 = vmatpush.msra.mxu0 %v1575
    %2386 = vmatpush.msra.mxu0 %v1567
    %2387 = vmatpush.msra.mxu0 %v1559
    %2388 = vmatpush.msra.mxu0 %v1551
    %2389 = vmatpush.msra.mxu0 %v1543
    %2390 = vmatpush.msra.mxu0 %v1535
    %2391 = vmatpush.msra.mxu0 %v1527
    %2392 = vmatpush.msra.mxu0 %v1519
    %2393 = vmatpush.msra.mxu0 %v1511
    %2394 = vmatpush.msra.mxu0 %v1503
    %2395 = vmatpush.msra.mxu0 %v1495
    %2396 = vmatpush.msra.mxu0 %v1487
    %2397 = vmatpush.msra.mxu0 %v1479
    %2398 = vmatmul.f32.gmra.mxu0 %v2098
    %v2399 = vpop.f32.mrf.mxu0
    %v2400 = vadd.f32 0.0, %v2399
    %2401 = vdwg.mxu0
    %2402 = vmatpush.msra.mxu0 %v1727
    %2403 = vmatpush.msra.mxu0 %v1719
    %2404 = vmatpush.msra.mxu0 %v1711
    %2405 = vmatpush.msra.mxu0 %v1703
    %2406 = vmatpush.msra.mxu0 %v1695
    %2407 = vmatpush.msra.mxu0 %v1687
    %2408 = vmatpush.msra.mxu0 %v1679
    %2409 = vmatpush.msra.mxu0 %v1671
    %2410 = vmatpush.msra.mxu0 %v1663
    %2411 = vmatpush.msra.mxu0 %v1655
    %2412 = vmatpush.msra.mxu0 %v1647
    %2413 = vmatpush.msra.mxu0 %v1639
    %2414 = vmatpush.msra.mxu0 %v1631
    %2415 = vmatpush.msra.mxu0 %v1623
    %2416 = vmatpush.msra.mxu0 %v1615
    %2417 = vmatpush.msra.mxu0 %v1607
    %2418 = vmatmul.f32.gmra.mxu0 %v2099
    %v2419 = vpop.f32.mrf.mxu0
    %v2420 = vadd.f32 %v2400, %v2419
    %2421 = vdwg.mxu0
    %v2422 = vld [vmem:[#allocation2 + $0x40] sm:$0xff]
    %v2423 = vld [vmem:[#allocation2 + $0x48] sm:$0xff]
    %v2424 = vld [vmem:[#allocation2 + $0x50] sm:$0xff]
    %v2425 = vld [vmem:[#allocation2 + $0x58] sm:$0xff]
    %v2426 = vadd.f32 %v2140, %v2422
    %v2427 = vadd.f32 %v2180, %v2423
    %v2428 = vadd.f32 %v2220, %v2424
    %v2429 = vadd.f32 %v2260, %v2425
    %v2430 = vld [vmem:[#allocation2 + $0xa0] sm:$0xff]
    %v2431 = vld [vmem:[#allocation2 + $0xa8] sm:$0xff]
    %v2432 = vld [vmem:[#allocation2 + $0xb0] sm:$0xff]
    %v2433 = vld [vmem:[#allocation2 + $0xb8] sm:$0xff]
    %v2434 = vadd.f32 %v2300, %v2430
    %v2435 = vadd.f32 %v2340, %v2431
    %v2436 = vadd.f32 %v2380, %v2432
    %v2437 = vadd.f32 %v2420, %v2433
    %v2438 = vmul.f32 %v2426, 0.5
    %v2439 = vmul.f32 %v2427, 0.5
    %v2440 = vmul.f32 %v2428, 0.5
    %v2441 = vmul.f32 %v2434, 0.5
    %v2442 = vmul.f32 %v2435, 0.5
    %v2443 = vmul.f32 %v2436, 0.5
    %v2444 = vtanh.pop %v2438
    %v2445 = vtanh.pop %v2439
    %v2446 = vtanh.pop %v2440
    %v2447 = vtanh.pop %v2441
    %v2448 = vtanh.pop %v2442
    %v2449 = vtanh.pop %v2443
    %v2450 = vmul.f32 %v2444, 0.5
    %v2451 = vmul.f32 %v2445, 0.5
    %v2452 = vmul.f32 %v2446, 0.5
    %v2453 = vmul.f32 %v2447, 0.5
    %v2454 = vmul.f32 %v2448, 0.5
    %v2455 = vmul.f32 %v2449, 0.5
    %v2456 = vadd.f32 %v2450, 0.5
    %v2457 = vadd.f32 %v2451, 0.5
    %v2458 = vadd.f32 %v2452, 0.5
    %v2459 = vadd.f32 %v2453, 0.5
    %v2460 = vadd.f32 %v2454, 0.5
    %v2461 = vadd.f32 %v2455, 0.5
    %v2462 = vtanh.pop %v2429
    %v2463 = vtanh.pop %v2437
    %v2464 = vmul.f32 %v2457, %v2094
    %v2465 = vmul.f32 %v2460, %v2095
    %v2466 = vmul.f32 %v2456, %v2462
    %v2467 = vmul.f32 %v2459, %v2463
    %v2468 = vadd.f32 %v2464, %v2466
    %v2469 = vadd.f32 %v2465, %v2467
    %v2470 = vtanh.pop %v2468
    %v2471 = vtanh.pop %v2469
    %v2472 = vmul.f32 %v2458, %v2470
    %v2473 = vmul.f32 %v2461, %v2471
    %2474 = vst [vmem:[#allocation3 + $0x8] sm:$0xff] %v2472
    %2475 = vst [vmem:[#allocation4 + $0x10] sm:$0xff] %v2473
    %2476 = vmatpush.msra.mxu0 %v1592
    %2477 = vmatpush.msra.mxu0 %v1584
    %2478 = vmatpush.msra.mxu0 %v1576
    %2479 = vmatpush.msra.mxu0 %v1568
    %2480 = vmatpush.msra.mxu0 %v1560
    %2481 = vmatpush.msra.mxu0 %v1552
    %2482 = vmatpush.msra.mxu0 %v1544
    %2483 = vmatpush.msra.mxu0 %v1536
    %2484 = vmatpush.msra.mxu0 %v1528
    %2485 = vmatpush.msra.mxu0 %v1520
    %2486 = vmatpush.msra.mxu0 %v1512
    %2487 = vmatpush.msra.mxu0 %v1504
    %2488 = vmatpush.msra.mxu0 %v1496
    %2489 = vmatpush.msra.mxu0 %v1488
    %2490 = vmatpush.msra.mxu0 %v1480
    %2491 = vmatpush.msra.mxu0 %v1472
    %2492 = vmatmul.f32.gmra.mxu0 %v2472
    %v2493 = vpop.f32.mrf.mxu0
    %v2494 = vadd.f32 0.0, %v2493
    %2495 = vdwg.mxu0
    %2496 = vmatpush.msra.mxu0 %v1720
    %2497 = vmatpush.msra.mxu0 %v1712
    %2498 = vmatpush.msra.mxu0 %v1704
    %2499 = vmatpush.msra.mxu0 %v1696
    %2500 = vmatpush.msra.mxu0 %v1688
    %2501 = vmatpush.msra.mxu0 %v1680
    %2502 = vmatpush.msra.mxu0 %v1672
    %2503 = vmatpush.msra.mxu0 %v1664
    %2504 = vmatpush.msra.mxu0 %v1656
    %2505 = vmatpush.msra.mxu0 %v1648
    %2506 = vmatpush.msra.mxu0 %v1640
    %2507 = vmatpush.msra.mxu0 %v1632
    %2508 = vmatpush.msra.mxu0 %v1624
    %2509 = vmatpush.msra.mxu0 %v1616
    %2510 = vmatpush.msra.mxu0 %v1608
    %2511 = vmatpush.msra.mxu0 %v1600
    %2512 = vmatmul.f32.gmra.mxu0 %v2473
    %v2513 = vpop.f32.mrf.mxu0
    %v2514 = vadd.f32 %v2494, %v2513
    %2515 = vdwg.mxu0
    %2516 = vmatpush.msra.mxu0 %v1593
    %2517 = vmatpush.msra.mxu0 %v1585
    %2518 = vmatpush.msra.mxu0 %v1577
    %2519 = vmatpush.msra.mxu0 %v1569
    %2520 = vmatpush.msra.mxu0 %v1561
    %2521 = vmatpush.msra.mxu0 %v1553
    %2522 = vmatpush.msra.mxu0 %v1545
    %2523 = vmatpush.msra.mxu0 %v1537
    %2524 = vmatpush.msra.mxu0 %v1529
    %2525 = vmatpush.msra.mxu0 %v1521
    %2526 = vmatpush.msra.mxu0 %v1513
    %2527 = vmatpush.msra.mxu0 %v1505
    %2528 = vmatpush.msra.mxu0 %v1497
    %2529 = vmatpush.msra.mxu0 %v1489
    %2530 = vmatpush.msra.mxu0 %v1481
    %2531 = vmatpush.msra.mxu0 %v1473
    %2532 = vmatmul.f32.gmra.mxu0 %v2472
    %v2533 = vpop.f32.mrf.mxu0
    %v2534 = vadd.f32 0.0, %v2533
    %2535 = vdwg.mxu0
    %2536 = vmatpush.msra.mxu0 %v1721
    %2537 = vmatpush.msra.mxu0 %v1713
    %2538 = vmatpush.msra.mxu0 %v1705
    %2539 = vmatpush.msra.mxu0 %v1697
    %2540 = vmatpush.msra.mxu0 %v1689
    %2541 = vmatpush.msra.mxu0 %v1681
    %2542 = vmatpush.msra.mxu0 %v1673
    %2543 = vmatpush.msra.mxu0 %v1665
    %2544 = vmatpush.msra.mxu0 %v1657
    %2545 = vmatpush.msra.mxu0 %v1649
    %2546 = vmatpush.msra.mxu0 %v1641
    %2547 = vmatpush.msra.mxu0 %v1633
    %2548 = vmatpush.msra.mxu0 %v1625
    %2549 = vmatpush.msra.mxu0 %v1617
    %2550 = vmatpush.msra.mxu0 %v1609
    %2551 = vmatpush.msra.mxu0 %v1601
    %2552 = vmatmul.f32.gmra.mxu0 %v2473
    %v2553 = vpop.f32.mrf.mxu0
    %v2554 = vadd.f32 %v2534, %v2553
    %2555 = vdwg.mxu0
    %2556 = vmatpush.msra.mxu0 %v1594
    %2557 = vmatpush.msra.mxu0 %v1586
    %2558 = vmatpush.msra.mxu0 %v1578
    %2559 = vmatpush.msra.mxu0 %v1570
    %2560 = vmatpush.msra.mxu0 %v1562
    %2561 = vmatpush.msra.mxu0 %v1554
    %2562 = vmatpush.msra.mxu0 %v1546
    %2563 = vmatpush.msra.mxu0 %v1538
    %2564 = vmatpush.msra.mxu0 %v1530
    %2565 = vmatpush.msra.mxu0 %v1522
    %2566 = vmatpush.msra.mxu0 %v1514
    %2567 = vmatpush.msra.mxu0 %v1506
    %2568 = vmatpush.msra.mxu0 %v1498
    %2569 = vmatpush.msra.mxu0 %v1490
    %2570 = vmatpush.msra.mxu0 %v1482
    %2571 = vmatpush.msra.mxu0 %v1474
    %2572 = vmatmul.f32.gmra.mxu0 %v2472
    %v2573 = vpop.f32.mrf.mxu0
    %v2574 = vadd.f32 0.0, %v2573
    %2575 = vdwg.mxu0
    %2576 = vmatpush.msra.mxu0 %v1722
    %2577 = vmatpush.msra.mxu0 %v1714
    %2578 = vmatpush.msra.mxu0 %v1706
    %2579 = vmatpush.msra.mxu0 %v1698
    %2580 = vmatpush.msra.mxu0 %v1690
    %2581 = vmatpush.msra.mxu0 %v1682
    %2582 = vmatpush.msra.mxu0 %v1674
    %2583 = vmatpush.msra.mxu0 %v1666
    %2584 = vmatpush.msra.mxu0 %v1658
    %2585 = vmatpush.msra.mxu0 %v1650
    %2586 = vmatpush.msra.mxu0 %v1642
    %2587 = vmatpush.msra.mxu0 %v1634
    %2588 = vmatpush.msra.mxu0 %v1626
    %2589 = vmatpush.msra.mxu0 %v1618
    %2590 = vmatpush.msra.mxu0 %v1610
    %2591 = vmatpush.msra.mxu0 %v1602
    %2592 = vmatmul.f32.gmra.mxu0 %v2473
    %v2593 = vpop.f32.mrf.mxu0
    %v2594 = vadd.f32 %v2574, %v2593
    %2595 = vdwg.mxu0
    %2596 = vmatpush.msra.mxu0 %v1595
    %2597 = vmatpush.msra.mxu0 %v1587
    %2598 = vmatpush.msra.mxu0 %v1579
    %2599 = vmatpush.msra.mxu0 %v1571
    %2600 = vmatpush.msra.mxu0 %v1563
    %2601 = vmatpush.msra.mxu0 %v1555
    %2602 = vmatpush.msra.mxu0 %v1547
    %2603 = vmatpush.msra.mxu0 %v1539
    %2604 = vmatpush.msra.mxu0 %v1531
    %2605 = vmatpush.msra.mxu0 %v1523
    %2606 = vmatpush.msra.mxu0 %v1515
    %2607 = vmatpush.msra.mxu0 %v1507
    %2608 = vmatpush.msra.mxu0 %v1499
    %2609 = vmatpush.msra.mxu0 %v1491
    %2610 = vmatpush.msra.mxu0 %v1483
    %2611 = vmatpush.msra.mxu0 %v1475
    %2612 = vmatmul.f32.gmra.mxu0 %v2472
    %v2613 = vpop.f32.mrf.mxu0
    %v2614 = vadd.f32 0.0, %v2613
    %2615 = vdwg.mxu0
    %2616 = vmatpush.msra.mxu0 %v1723
    %2617 = vmatpush.msra.mxu0 %v1715
    %2618 = vmatpush.msra.mxu0 %v1707
    %2619 = vmatpush.msra.mxu0 %v1699
    %2620 = vmatpush.msra.mxu0 %v1691
    %2621 = vmatpush.msra.mxu0 %v1683
    %2622 = vmatpush.msra.mxu0 %v1675
    %2623 = vmatpush.msra.mxu0 %v1667
    %2624 = vmatpush.msra.mxu0 %v1659
    %2625 = vmatpush.msra.mxu0 %v1651
    %2626 = vmatpush.msra.mxu0 %v1643
    %2627 = vmatpush.msra.mxu0 %v1635
    %2628 = vmatpush.msra.mxu0 %v1627
    %2629 = vmatpush.msra.mxu0 %v1619
    %2630 = vmatpush.msra.mxu0 %v1611
    %2631 = vmatpush.msra.mxu0 %v1603
    %2632 = vmatmul.f32.gmra.mxu0 %v2473
    %v2633 = vpop.f32.mrf.mxu0
    %v2634 = vadd.f32 %v2614, %v2633
    %2635 = vdwg.mxu0
    %2636 = vmatpush.msra.mxu0 %v1596
    %2637 = vmatpush.msra.mxu0 %v1588
    %2638 = vmatpush.msra.mxu0 %v1580
    %2639 = vmatpush.msra.mxu0 %v1572
    %2640 = vmatpush.msra.mxu0 %v1564
    %2641 = vmatpush.msra.mxu0 %v1556
    %2642 = vmatpush.msra.mxu0 %v1548
    %2643 = vmatpush.msra.mxu0 %v1540
    %2644 = vmatpush.msra.mxu0 %v1532
    %2645 = vmatpush.msra.mxu0 %v1524
    %2646 = vmatpush.msra.mxu0 %v1516
    %2647 = vmatpush.msra.mxu0 %v1508
    %2648 = vmatpush.msra.mxu0 %v1500
    %2649 = vmatpush.msra.mxu0 %v1492
    %2650 = vmatpush.msra.mxu0 %v1484
    %2651 = vmatpush.msra.mxu0 %v1476
    %2652 = vmatmul.f32.gmra.mxu0 %v2472
    %v2653 = vpop.f32.mrf.mxu0
    %v2654 = vadd.f32 0.0, %v2653
    %2655 = vdwg.mxu0
    %2656 = vmatpush.msra.mxu0 %v1724
    %2657 = vmatpush.msra.mxu0 %v1716
    %2658 = vmatpush.msra.mxu0 %v1708
    %2659 = vmatpush.msra.mxu0 %v1700
    %2660 = vmatpush.msra.mxu0 %v1692
    %2661 = vmatpush.msra.mxu0 %v1684
    %2662 = vmatpush.msra.mxu0 %v1676
    %2663 = vmatpush.msra.mxu0 %v1668
    %2664 = vmatpush.msra.mxu0 %v1660
    %2665 = vmatpush.msra.mxu0 %v1652
    %2666 = vmatpush.msra.mxu0 %v1644
    %2667 = vmatpush.msra.mxu0 %v1636
    %2668 = vmatpush.msra.mxu0 %v1628
    %2669 = vmatpush.msra.mxu0 %v1620
    %2670 = vmatpush.msra.mxu0 %v1612
    %2671 = vmatpush.msra.mxu0 %v1604
    %2672 = vmatmul.f32.gmra.mxu0 %v2473
    %v2673 = vpop.f32.mrf.mxu0
    %v2674 = vadd.f32 %v2654, %v2673
    %2675 = vdwg.mxu0
    %2676 = vmatpush.msra.mxu0 %v1597
    %2677 = vmatpush.msra.mxu0 %v1589
    %2678 = vmatpush.msra.mxu0 %v1581
    %2679 = vmatpush.msra.mxu0 %v1573
    %2680 = vmatpush.msra.mxu0 %v1565
    %2681 = vmatpush.msra.mxu0 %v1557
    %2682 = vmatpush.msra.mxu0 %v1549
    %2683 = vmatpush.msra.mxu0 %v1541
    %2684 = vmatpush.msra.mxu0 %v1533
    %2685 = vmatpush.msra.mxu0 %v1525
    %2686 = vmatpush.msra.mxu0 %v1517
    %2687 = vmatpush.msra.mxu0 %v1509
    %2688 = vmatpush.msra.mxu0 %v1501
    %2689 = vmatpush.msra.mxu0 %v1493
    %2690 = vmatpush.msra.mxu0 %v1485
    %2691 = vmatpush.msra.mxu0 %v1477
    %2692 = vmatmul.f32.gmra.mxu0 %v2472
    %v2693 = vpop.f32.mrf.mxu0
    %v2694 = vadd.f32 0.0, %v2693
    %2695 = vdwg.mxu0
    %2696 = vmatpush.msra.mxu0 %v1725
    %2697 = vmatpush.msra.mxu0 %v1717
    %2698 = vmatpush.msra.mxu0 %v1709
    %2699 = vmatpush.msra.mxu0 %v1701
    %2700 = vmatpush.msra.mxu0 %v1693
    %2701 = vmatpush.msra.mxu0 %v1685
    %2702 = vmatpush.msra.mxu0 %v1677
    %2703 = vmatpush.msra.mxu0 %v1669
    %2704 = vmatpush.msra.mxu0 %v1661
    %2705 = vmatpush.msra.mxu0 %v1653
    %2706 = vmatpush.msra.mxu0 %v1645
    %2707 = vmatpush.msra.mxu0 %v1637
    %2708 = vmatpush.msra.mxu0 %v1629
    %2709 = vmatpush.msra.mxu0 %v1621
    %2710 = vmatpush.msra.mxu0 %v1613
    %2711 = vmatpush.msra.mxu0 %v1605
    %2712 = vmatmul.f32.gmra.mxu0 %v2473
    %v2713 = vpop.f32.mrf.mxu0
    %v2714 = vadd.f32 %v2694, %v2713
    %2715 = vdwg.mxu0
    %2716 = vmatpush.msra.mxu0 %v1598
    %2717 = vmatpush.msra.mxu0 %v1590
    %2718 = vmatpush.msra.mxu0 %v1582
    %2719 = vmatpush.msra.mxu0 %v1574
    %2720 = vmatpush.msra.mxu0 %v1566
    %2721 = vmatpush.msra.mxu0 %v1558
    %2722 = vmatpush.msra.mxu0 %v1550
    %2723 = vmatpush.msra.mxu0 %v1542
    %2724 = vmatpush.msra.mxu0 %v1534
    %2725 = vmatpush.msra.mxu0 %v1526
    %2726 = vmatpush.msra.mxu0 %v1518
    %2727 = vmatpush.msra.mxu0 %v1510
    %2728 = vmatpush.msra.mxu0 %v1502
    %2729 = vmatpush.msra.mxu0 %v1494
    %2730 = vmatpush.msra.mxu0 %v1486
    %2731 = vmatpush.msra.mxu0 %v1478
    %2732 = vmatmul.f32.gmra.mxu0 %v2472
    %v2733 = vpop.f32.mrf.mxu0
    %v2734 = vadd.f32 0.0, %v2733
    %2735 = vdwg.mxu0
    %2736 = vmatpush.msra.mxu0 %v1726
    %2737 = vmatpush.msra.mxu0 %v1718
    %2738 = vmatpush.msra.mxu0 %v1710
    %2739 = vmatpush.msra.mxu0 %v1702
    %2740 = vmatpush.msra.mxu0 %v1694
    %2741 = vmatpush.msra.mxu0 %v1686
    %2742 = vmatpush.msra.mxu0 %v1678
    %2743 = vmatpush.msra.mxu0 %v1670
    %2744 = vmatpush.msra.mxu0 %v1662
    %2745 = vmatpush.msra.mxu0 %v1654
    %2746 = vmatpush.msra.mxu0 %v1646
    %2747 = vmatpush.msra.mxu0 %v1638
    %2748 = vmatpush.msra.mxu0 %v1630
    %2749 = vmatpush.msra.mxu0 %v1622
    %2750 = vmatpush.msra.mxu0 %v1614
    %2751 = vmatpush.msra.mxu0 %v1606
    %2752 = vmatmul.f32.gmra.mxu0 %v2473
    %v2753 = vpop.f32.mrf.mxu0
    %v2754 = vadd.f32 %v2734, %v2753
    %2755 = vdwg.mxu0
    %2756 = vmatpush.msra.mxu0 %v1599
    %2757 = vmatpush.msra.mxu0 %v1591
    %2758 = vmatpush.msra.mxu0 %v1583
    %2759 = vmatpush.msra.mxu0 %v1575
    %2760 = vmatpush.msra.mxu0 %v1567
    %2761 = vmatpush.msra.mxu0 %v1559
    %2762 = vmatpush.msra.mxu0 %v1551
    %2763 = vmatpush.msra.mxu0 %v1543
    %2764 = vmatpush.msra.mxu0 %v1535
    %2765 = vmatpush.msra.mxu0 %v1527
    %2766 = vmatpush.msra.mxu0 %v1519
    %2767 = vmatpush.msra.mxu0 %v1511
    %2768 = vmatpush.msra.mxu0 %v1503
    %2769 = vmatpush.msra.mxu0 %v1495
    %2770 = vmatpush.msra.mxu0 %v1487
    %2771 = vmatpush.msra.mxu0 %v1479
    %2772 = vmatmul.f32.gmra.mxu0 %v2472
    %v2773 = vpop.f32.mrf.mxu0
    %v2774 = vadd.f32 0.0, %v2773
    %2775 = vdwg.mxu0
    %2776 = vmatpush.msra.mxu0 %v1727
    %2777 = vmatpush.msra.mxu0 %v1719
    %2778 = vmatpush.msra.mxu0 %v1711
    %2779 = vmatpush.msra.mxu0 %v1703
    %2780 = vmatpush.msra.mxu0 %v1695
    %2781 = vmatpush.msra.mxu0 %v1687
    %2782 = vmatpush.msra.mxu0 %v1679
    %2783 = vmatpush.msra.mxu0 %v1671
    %2784 = vmatpush.msra.mxu0 %v1663
    %2785 = vmatpush.msra.mxu0 %v1655
    %2786 = vmatpush.msra.mxu0 %v1647
    %2787 = vmatpush.msra.mxu0 %v1639
    %2788 = vmatpush.msra.mxu0 %v1631
    %2789 = vmatpush.msra.mxu0 %v1623
    %2790 = vmatpush.msra.mxu0 %v1615
    %2791 = vmatpush.msra.mxu0 %v1607
    %2792 = vmatmul.f32.gmra.mxu0 %v2473
    %v2793 = vpop.f32.mrf.mxu0
    %v2794 = vadd.f32 %v2774, %v2793
    %2795 = vdwg.mxu0
    %v2796 = vld [vmem:[#allocation2 + $0x80] sm:$0xff]
    %v2797 = vld [vmem:[#allocation2 + $0x88] sm:$0xff]
    %v2798 = vld [vmem:[#allocation2 + $0x90] sm:$0xff]
    %v2799 = vld [vmem:[#allocation2 + $0x98] sm:$0xff]
    %v2800 = vadd.f32 %v2514, %v2796
    %v2801 = vadd.f32 %v2554, %v2797
    %v2802 = vadd.f32 %v2594, %v2798
    %v2803 = vadd.f32 %v2634, %v2799
    %v2804 = vld [vmem:[#allocation2 + $0x60] sm:$0xff]
    %v2805 = vld [vmem:[#allocation2 + $0x68] sm:$0xff]
    %v2806 = vld [vmem:[#allocation2 + $0x70] sm:$0xff]
    %v2807 = vld [vmem:[#allocation2 + $0x78] sm:$0xff]
    %v2808 = vadd.f32 %v2674, %v2804
    %v2809 = vadd.f32 %v2714, %v2805
    %v2810 = vadd.f32 %v2754, %v2806
    %v2811 = vadd.f32 %v2794, %v2807
    %v2812 = vmul.f32 %v2800, 0.5
    %v2813 = vmul.f32 %v2801, 0.5
    %v2814 = vmul.f32 %v2802, 0.5
    %v2815 = vmul.f32 %v2808, 0.5
    %v2816 = vmul.f32 %v2809, 0.5
    %v2817 = vmul.f32 %v2810, 0.5
    %v2818 = vtanh.pop %v2812
    %v2819 = vtanh.pop %v2813
    %v2820 = vtanh.pop %v2814
    %v2821 = vtanh.pop %v2815
    %v2822 = vtanh.pop %v2816
    %v2823 = vtanh.pop %v2817
    %v2824 = vmul.f32 %v2818, 0.5
    %v2825 = vmul.f32 %v2819, 0.5
    %v2826 = vmul.f32 %v2820, 0.5
    %v2827 = vmul.f32 %v2821, 0.5
    %v2828 = vmul.f32 %v2822, 0.5
    %v2829 = vmul.f32 %v2823, 0.5
    %v2830 = vadd.f32 %v2824, 0.5
    %v2831 = vadd.f32 %v2825, 0.5
    %v2832 = vadd.f32 %v2826, 0.5
    %v2833 = vadd.f32 %v2827, 0.5
    %v2834 = vadd.f32 %v2828, 0.5
    %v2835 = vadd.f32 %v2829, 0.5
    %v2836 = vtanh.pop %v2803
    %v2837 = vtanh.pop %v2811
    %v2838 = vmul.f32 %v2831, %v2468
    %v2839 = vmul.f32 %v2834, %v2469
    %v2840 = vmul.f32 %v2830, %v2836
    %v2841 = vmul.f32 %v2833, %v2837
    %v2842 = vadd.f32 %v2838, %v2840
    %v2843 = vadd.f32 %v2839, %v2841
    %v2844 = vtanh.pop %v2842
    %v2845 = vtanh.pop %v2843
    %v2846 = vmul.f32 %v2832, %v2844
    %v2847 = vmul.f32 %v2835, %v2845
    %2848 = vst [vmem:[#allocation3 + $0x10] sm:$0xff] %v2846
    %2849 = vst [vmem:[#allocation4 + $0x8] sm:$0xff] %v2847
    %2850 = vmatpush.msra.mxu0 %v1592
    %2851 = vmatpush.msra.mxu0 %v1584
    %2852 = vmatpush.msra.mxu0 %v1576
    %2853 = vmatpush.msra.mxu0 %v1568
    %2854 = vmatpush.msra.mxu0 %v1560
    %2855 = vmatpush.msra.mxu0 %v1552
    %2856 = vmatpush.msra.mxu0 %v1544
    %2857 = vmatpush.msra.mxu0 %v1536
    %2858 = vmatpush.msra.mxu0 %v1528
    %2859 = vmatpush.msra.mxu0 %v1520
    %2860 = vmatpush.msra.mxu0 %v1512
    %2861 = vmatpush.msra.mxu0 %v1504
    %2862 = vmatpush.msra.mxu0 %v1496
    %2863 = vmatpush.msra.mxu0 %v1488
    %2864 = vmatpush.msra.mxu0 %v1480
    %2865 = vmatpush.msra.mxu0 %v1472
    %2866 = vmatmul.f32.gmra.mxu0 %v2846
    %v2867 = vpop.f32.mrf.mxu0
    %v2868 = vadd.f32 0.0, %v2867
    %2869 = vdwg.mxu0
    %2870 = vmatpush.msra.mxu0 %v1720
    %2871 = vmatpush.msra.mxu0 %v1712
    %2872 = vmatpush.msra.mxu0 %v1704
    %2873 = vmatpush.msra.mxu0 %v1696
    %2874 = vmatpush.msra.mxu0 %v1688
    %2875 = vmatpush.msra.mxu0 %v1680
    %2876 = vmatpush.msra.mxu0 %v1672
    %2877 = vmatpush.msra.mxu0 %v1664
    %2878 = vmatpush.msra.mxu0 %v1656
    %2879 = vmatpush.msra.mxu0 %v1648
    %2880 = vmatpush.msra.mxu0 %v1640
    %2881 = vmatpush.msra.mxu0 %v1632
    %2882 = vmatpush.msra.mxu0 %v1624
    %2883 = vmatpush.msra.mxu0 %v1616
    %2884 = vmatpush.msra.mxu0 %v1608
    %2885 = vmatpush.msra.mxu0 %v1600
    %2886 = vmatmul.f32.gmra.mxu0 %v2847
    %v2887 = vpop.f32.mrf.mxu0
    %v2888 = vadd.f32 %v2868, %v2887
    %2889 = vdwg.mxu0
    %2890 = vmatpush.msra.mxu0 %v1593
    %2891 = vmatpush.msra.mxu0 %v1585
    %2892 = vmatpush.msra.mxu0 %v1577
    %2893 = vmatpush.msra.mxu0 %v1569
    %2894 = vmatpush.msra.mxu0 %v1561
    %2895 = vmatpush.msra.mxu0 %v1553
    %2896 = vmatpush.msra.mxu0 %v1545
    %2897 = vmatpush.msra.mxu0 %v1537
    %2898 = vmatpush.msra.mxu0 %v1529
    %2899 = vmatpush.msra.mxu0 %v1521
    %2900 = vmatpush.msra.mxu0 %v1513
    %2901 = vmatpush.msra.mxu0 %v1505
    %2902 = vmatpush.msra.mxu0 %v1497
    %2903 = vmatpush.msra.mxu0 %v1489
    %2904 = vmatpush.msra.mxu0 %v1481
    %2905 = vmatpush.msra.mxu0 %v1473
    %2906 = vmatmul.f32.gmra.mxu0 %v2846
    %v2907 = vpop.f32.mrf.mxu0
    %v2908 = vadd.f32 0.0, %v2907
    %2909 = vdwg.mxu0
    %2910 = vmatpush.msra.mxu0 %v1721
    %2911 = vmatpush.msra.mxu0 %v1713
    %2912 = vmatpush.msra.mxu0 %v1705
    %2913 = vmatpush.msra.mxu0 %v1697
    %2914 = vmatpush.msra.mxu0 %v1689
    %2915 = vmatpush.msra.mxu0 %v1681
    %2916 = vmatpush.msra.mxu0 %v1673
    %2917 = vmatpush.msra.mxu0 %v1665
    %2918 = vmatpush.msra.mxu0 %v1657
    %2919 = vmatpush.msra.mxu0 %v1649
    %2920 = vmatpush.msra.mxu0 %v1641
    %2921 = vmatpush.msra.mxu0 %v1633
    %2922 = vmatpush.msra.mxu0 %v1625
    %2923 = vmatpush.msra.mxu0 %v1617
    %2924 = vmatpush.msra.mxu0 %v1609
    %2925 = vmatpush.msra.mxu0 %v1601
    %2926 = vmatmul.f32.gmra.mxu0 %v2847
    %v2927 = vpop.f32.mrf.mxu0
    %v2928 = vadd.f32 %v2908, %v2927
    %2929 = vdwg.mxu0
    %2930 = vmatpush.msra.mxu0 %v1594
    %2931 = vmatpush.msra.mxu0 %v1586
    %2932 = vmatpush.msra.mxu0 %v1578
    %2933 = vmatpush.msra.mxu0 %v1570
    %2934 = vmatpush.msra.mxu0 %v1562
    %2935 = vmatpush.msra.mxu0 %v1554
    %2936 = vmatpush.msra.mxu0 %v1546
    %2937 = vmatpush.msra.mxu0 %v1538
    %2938 = vmatpush.msra.mxu0 %v1530
    %2939 = vmatpush.msra.mxu0 %v1522
    %2940 = vmatpush.msra.mxu0 %v1514
    %2941 = vmatpush.msra.mxu0 %v1506
    %2942 = vmatpush.msra.mxu0 %v1498
    %2943 = vmatpush.msra.mxu0 %v1490
    %2944 = vmatpush.msra.mxu0 %v1482
    %2945 = vmatpush.msra.mxu0 %v1474
    %2946 = vmatmul.f32.gmra.mxu0 %v2846
    %v2947 = vpop.f32.mrf.mxu0
    %v2948 = vadd.f32 0.0, %v2947
    %2949 = vdwg.mxu0
    %2950 = vmatpush.msra.mxu0 %v1722
    %2951 = vmatpush.msra.mxu0 %v1714
    %2952 = vmatpush.msra.mxu0 %v1706
    %2953 = vmatpush.msra.mxu0 %v1698
    %2954 = vmatpush.msra.mxu0 %v1690
    %2955 = vmatpush.msra.mxu0 %v1682
    %2956 = vmatpush.msra.mxu0 %v1674
    %2957 = vmatpush.msra.mxu0 %v1666
    %2958 = vmatpush.msra.mxu0 %v1658
    %2959 = vmatpush.msra.mxu0 %v1650
    %2960 = vmatpush.msra.mxu0 %v1642
    %2961 = vmatpush.msra.mxu0 %v1634
    %2962 = vmatpush.msra.mxu0 %v1626
    %2963 = vmatpush.msra.mxu0 %v1618
    %2964 = vmatpush.msra.mxu0 %v1610
    %2965 = vmatpush.msra.mxu0 %v1602
    %2966 = vmatmul.f32.gmra.mxu0 %v2847
    %v2967 = vpop.f32.mrf.mxu0
    %v2968 = vadd.f32 %v2948, %v2967
    %2969 = vdwg.mxu0
    %2970 = vmatpush.msra.mxu0 %v1595
    %2971 = vmatpush.msra.mxu0 %v1587
    %2972 = vmatpush.msra.mxu0 %v1579
    %2973 = vmatpush.msra.mxu0 %v1571
    %2974 = vmatpush.msra.mxu0 %v1563
    %2975 = vmatpush.msra.mxu0 %v1555
    %2976 = vmatpush.msra.mxu0 %v1547
    %2977 = vmatpush.msra.mxu0 %v1539
    %2978 = vmatpush.msra.mxu0 %v1531
    %2979 = vmatpush.msra.mxu0 %v1523
    %2980 = vmatpush.msra.mxu0 %v1515
    %2981 = vmatpush.msra.mxu0 %v1507
    %2982 = vmatpush.msra.mxu0 %v1499
    %2983 = vmatpush.msra.mxu0 %v1491
    %2984 = vmatpush.msra.mxu0 %v1483
    %2985 = vmatpush.msra.mxu0 %v1475
    %2986 = vmatmul.f32.gmra.mxu0 %v2846
    %v2987 = vpop.f32.mrf.mxu0
    %v2988 = vadd.f32 0.0, %v2987
    %2989 = vdwg.mxu0
    %2990 = vmatpush.msra.mxu0 %v1723
    %2991 = vmatpush.msra.mxu0 %v1715
    %2992 = vmatpush.msra.mxu0 %v1707
    %2993 = vmatpush.msra.mxu0 %v1699
    %2994 = vmatpush.msra.mxu0 %v1691
    %2995 = vmatpush.msra.mxu0 %v1683
    %2996 = vmatpush.msra.mxu0 %v1675
    %2997 = vmatpush.msra.mxu0 %v1667
    %2998 = vmatpush.msra.mxu0 %v1659
    %2999 = vmatpush.msra.mxu0 %v1651
    %3000 = vmatpush.msra.mxu0 %v1643
    %3001 = vmatpush.msra.mxu0 %v1635
    %3002 = vmatpush.msra.mxu0 %v1627
    %3003 = vmatpush.msra.mxu0 %v1619
    %3004 = vmatpush.msra.mxu0 %v1611
    %3005 = vmatpush.msra.mxu0 %v1603
    %3006 = vmatmul.f32.gmra.mxu0 %v2847
    %v3007 = vpop.f32.mrf.mxu0
    %v3008 = vadd.f32 %v2988, %v3007
    %3009 = vdwg.mxu0
    %3010 = vmatpush.msra.mxu0 %v1596
    %3011 = vmatpush.msra.mxu0 %v1588
    %3012 = vmatpush.msra.mxu0 %v1580
    %3013 = vmatpush.msra.mxu0 %v1572
    %3014 = vmatpush.msra.mxu0 %v1564
    %3015 = vmatpush.msra.mxu0 %v1556
    %3016 = vmatpush.msra.mxu0 %v1548
    %3017 = vmatpush.msra.mxu0 %v1540
    %3018 = vmatpush.msra.mxu0 %v1532
    %3019 = vmatpush.msra.mxu0 %v1524
    %3020 = vmatpush.msra.mxu0 %v1516
    %3021 = vmatpush.msra.mxu0 %v1508
    %3022 = vmatpush.msra.mxu0 %v1500
    %3023 = vmatpush.msra.mxu0 %v1492
    %3024 = vmatpush.msra.mxu0 %v1484
    %3025 = vmatpush.msra.mxu0 %v1476
    %3026 = vmatmul.f32.gmra.mxu0 %v2846
    %v3027 = vpop.f32.mrf.mxu0
    %v3028 = vadd.f32 0.0, %v3027
    %3029 = vdwg.mxu0
    %3030 = vmatpush.msra.mxu0 %v1724
    %3031 = vmatpush.msra.mxu0 %v1716
    %3032 = vmatpush.msra.mxu0 %v1708
    %3033 = vmatpush.msra.mxu0 %v1700
    %3034 = vmatpush.msra.mxu0 %v1692
    %3035 = vmatpush.msra.mxu0 %v1684
    %3036 = vmatpush.msra.mxu0 %v1676
    %3037 = vmatpush.msra.mxu0 %v1668
    %3038 = vmatpush.msra.mxu0 %v1660
    %3039 = vmatpush.msra.mxu0 %v1652
    %3040 = vmatpush.msra.mxu0 %v1644
    %3041 = vmatpush.msra.mxu0 %v1636
    %3042 = vmatpush.msra.mxu0 %v1628
    %3043 = vmatpush.msra.mxu0 %v1620
    %3044 = vmatpush.msra.mxu0 %v1612
    %3045 = vmatpush.msra.mxu0 %v1604
    %3046 = vmatmul.f32.gmra.mxu0 %v2847
    %v3047 = vpop.f32.mrf.mxu0
    %v3048 = vadd.f32 %v3028, %v3047
    %3049 = vdwg.mxu0
    %3050 = vmatpush.msra.mxu0 %v1597
    %3051 = vmatpush.msra.mxu0 %v1589
    %3052 = vmatpush.msra.mxu0 %v1581
    %3053 = vmatpush.msra.mxu0 %v1573
    %3054 = vmatpush.msra.mxu0 %v1565
    %3055 = vmatpush.msra.mxu0 %v1557
    %3056 = vmatpush.msra.mxu0 %v1549
    %3057 = vmatpush.msra.mxu0 %v1541
    %3058 = vmatpush.msra.mxu0 %v1533
    %3059 = vmatpush.msra.mxu0 %v1525
    %3060 = vmatpush.msra.mxu0 %v1517
    %3061 = vmatpush.msra.mxu0 %v1509
    %3062 = vmatpush.msra.mxu0 %v1501
    %3063 = vmatpush.msra.mxu0 %v1493
    %3064 = vmatpush.msra.mxu0 %v1485
    %3065 = vmatpush.msra.mxu0 %v1477
    %3066 = vmatmul.f32.gmra.mxu0 %v2846
    %v3067 = vpop.f32.mrf.mxu0
    %v3068 = vadd.f32 0.0, %v3067
    %3069 = vdwg.mxu0
    %3070 = vmatpush.msra.mxu0 %v1725
    %3071 = vmatpush.msra.mxu0 %v1717
    %3072 = vmatpush.msra.mxu0 %v1709
    %3073 = vmatpush.msra.mxu0 %v1701
    %3074 = vmatpush.msra.mxu0 %v1693
    %3075 = vmatpush.msra.mxu0 %v1685
    %3076 = vmatpush.msra.mxu0 %v1677
    %3077 = vmatpush.msra.mxu0 %v1669
    %3078 = vmatpush.msra.mxu0 %v1661
    %3079 = vmatpush.msra.mxu0 %v1653
    %3080 = vmatpush.msra.mxu0 %v1645
    %3081 = vmatpush.msra.mxu0 %v1637
    %3082 = vmatpush.msra.mxu0 %v1629
    %3083 = vmatpush.msra.mxu0 %v1621
    %3084 = vmatpush.msra.mxu0 %v1613
    %3085 = vmatpush.msra.mxu0 %v1605
    %3086 = vmatmul.f32.gmra.mxu0 %v2847
    %v3087 = vpop.f32.mrf.mxu0
    %v3088 = vadd.f32 %v3068, %v3087
    %3089 = vdwg.mxu0
    %3090 = vmatpush.msra.mxu0 %v1598
    %3091 = vmatpush.msra.mxu0 %v1590
    %3092 = vmatpush.msra.mxu0 %v1582
    %3093 = vmatpush.msra.mxu0 %v1574
    %3094 = vmatpush.msra.mxu0 %v1566
    %3095 = vmatpush.msra.mxu0 %v1558
    %3096 = vmatpush.msra.mxu0 %v1550
    %3097 = vmatpush.msra.mxu0 %v1542
    %3098 = vmatpush.msra.mxu0 %v1534
    %3099 = vmatpush.msra.mxu0 %v1526
    %3100 = vmatpush.msra.mxu0 %v1518
    %3101 = vmatpush.msra.mxu0 %v1510
    %3102 = vmatpush.msra.mxu0 %v1502
    %3103 = vmatpush.msra.mxu0 %v1494
    %3104 = vmatpush.msra.mxu0 %v1486
    %3105 = vmatpush.msra.mxu0 %v1478
    %3106 = vmatmul.f32.gmra.mxu0 %v2846
    %v3107 = vpop.f32.mrf.mxu0
    %v3108 = vadd.f32 0.0, %v3107
    %3109 = vdwg.mxu0
    %3110 = vmatpush.msra.mxu0 %v1726
    %3111 = vmatpush.msra.mxu0 %v1718
    %3112 = vmatpush.msra.mxu0 %v1710
    %3113 = vmatpush.msra.mxu0 %v1702
    %3114 = vmatpush.msra.mxu0 %v1694
    %3115 = vmatpush.msra.mxu0 %v1686
    %3116 = vmatpush.msra.mxu0 %v1678
    %3117 = vmatpush.msra.mxu0 %v1670
    %3118 = vmatpush.msra.mxu0 %v1662
    %3119 = vmatpush.msra.mxu0 %v1654
    %3120 = vmatpush.msra.mxu0 %v1646
    %3121 = vmatpush.msra.mxu0 %v1638
    %3122 = vmatpush.msra.mxu0 %v1630
    %3123 = vmatpush.msra.mxu0 %v1622
    %3124 = vmatpush.msra.mxu0 %v1614
    %3125 = vmatpush.msra.mxu0 %v1606
    %3126 = vmatmul.f32.gmra.mxu0 %v2847
    %v3127 = vpop.f32.mrf.mxu0
    %v3128 = vadd.f32 %v3108, %v3127
    %3129 = vdwg.mxu0
    %3130 = vmatpush.msra.mxu0 %v1599
    %3131 = vmatpush.msra.mxu0 %v1591
    %3132 = vmatpush.msra.mxu0 %v1583
    %3133 = vmatpush.msra.mxu0 %v1575
    %3134 = vmatpush.msra.mxu0 %v1567
    %3135 = vmatpush.msra.mxu0 %v1559
    %3136 = vmatpush.msra.mxu0 %v1551
    %3137 = vmatpush.msra.mxu0 %v1543
    %3138 = vmatpush.msra.mxu0 %v1535
    %3139 = vmatpush.msra.mxu0 %v1527
    %3140 = vmatpush.msra.mxu0 %v1519
    %3141 = vmatpush.msra.mxu0 %v1511
    %3142 = vmatpush.msra.mxu0 %v1503
    %3143 = vmatpush.msra.mxu0 %v1495
    %3144 = vmatpush.msra.mxu0 %v1487
    %3145 = vmatpush.msra.mxu0 %v1479
    %3146 = vmatmul.f32.gmra.mxu0 %v2846
    %v3147 = vpop.f32.mrf.mxu0
    %v3148 = vadd.f32 0.0, %v3147
    %3149 = vdwg.mxu0
    %3150 = vmatpush.msra.mxu0 %v1727
    %3151 = vmatpush.msra.mxu0 %v1719
    %3152 = vmatpush.msra.mxu0 %v1711
    %3153 = vmatpush.msra.mxu0 %v1703
    %3154 = vmatpush.msra.mxu0 %v1695
    %3155 = vmatpush.msra.mxu0 %v1687
    %3156 = vmatpush.msra.mxu0 %v1679
    %3157 = vmatpush.msra.mxu0 %v1671
    %3158 = vmatpush.msra.mxu0 %v1663
    %3159 = vmatpush.msra.mxu0 %v1655
    %3160 = vmatpush.msra.mxu0 %v1647
    %3161 = vmatpush.msra.mxu0 %v1639
    %3162 = vmatpush.msra.mxu0 %v1631
    %3163 = vmatpush.msra.mxu0 %v1623
    %3164 = vmatpush.msra.mxu0 %v1615
    %3165 = vmatpush.msra.mxu0 %v1607
    %3166 = vmatmul.f32.gmra.mxu0 %v2847
    %v3167 = vpop.f32.mrf.mxu0
    %v3168 = vadd.f32 %v3148, %v3167
    %3169 = vdwg.mxu0
    %v3170 = vld [vmem:[#allocation2 + $0xc0] sm:$0xff]
    %v3171 = vld [vmem:[#allocation2 + $0xc8] sm:$0xff]
    %v3172 = vld [vmem:[#allocation2 + $0xd0] sm:$0xff]
    %v3173 = vld [vmem:[#allocation2 + $0xd8] sm:$0xff]
    %v3174 = vadd.f32 %v2888, %v3170
    %v3175 = vadd.f32 %v2928, %v3171
    %v3176 = vadd.f32 %v2968, %v3172
    %v3177 = vadd.f32 %v3008, %v3173
    %v3178 = vld [vmem:[#allocation2 + $0x20] sm:$0xff]
    %v3179 = vld [vmem:[#allocation2 + $0x28] sm:$0xff]
    %v3180 = vld [vmem:[#allocation2 + $0x30] sm:$0xff]
    %v3181 = vld [vmem:[#allocation2 + $0x38] sm:$0xff]
    %v3182 = vadd.f32 %v3048, %v3178
    %v3183 = vadd.f32 %v3088, %v3179
    %v3184 = vadd.f32 %v3128, %v3180
    %v3185 = vadd.f32 %v3168, %v3181
    %v3186 = vmul.f32 %v3174, 0.5
    %v3187 = vmul.f32 %v3175, 0.5
    %v3188 = vmul.f32 %v3176, 0.5
    %v3189 = vmul.f32 %v3182, 0.5
    %v3190 = vmul.f32 %v3183, 0.5
    %v3191 = vmul.f32 %v3184, 0.5
    %v3192 = vtanh.pop %v3186
    %v3193 = vtanh.pop %v3187
    %v3194 = vtanh.pop %v3188
    %v3195 = vtanh.pop %v3189
    %v3196 = vtanh.pop %v3190
    %v3197 = vtanh.pop %v3191
    %v3198 = vmul.f32 %v3192, 0.5
    %v3199 = vmul.f32 %v3193, 0.5
    %v3200 = vmul.f32 %v3194, 0.5
    %v3201 = vmul.f32 %v3195, 0.5
    %v3202 = vmul.f32 %v3196, 0.5
    %v3203 = vmul.f32 %v3197, 0.5
    %v3204 = vadd.f32 %v3198, 0.5
    %v3205 = vadd.f32 %v3199, 0.5
    %v3206 = vadd.f32 %v3200, 0.5
    %v3207 = vadd.f32 %v3201, 0.5
    %v3208 = vadd.f32 %v3202, 0.5
    %v3209 = vadd.f32 %v3203, 0.5
    %v3210 = vtanh.pop %v3177
    %v3211 = vtanh.pop %v3185
    %v3212 = vmul.f32 %v3205, %v2842
    %v3213 = vmul.f32 %v3208, %v2843
    %v3214 = vmul.f32 %v3204, %v3210
    %v3215 = vmul.f32 %v3207, %v3211
    %v3216 = vadd.f32 %v3212, %v3214
    %v3217 = vadd.f32 %v3213, %v3215
    %v3218 = vtanh.pop %v3216
    %v3219 = vtanh.pop %v3217
    %v3220 = vmul.f32 %v3206, %v3218
    %v3221 = vmul.f32 %v3209, %v3219
    %3222 = vst [vmem:[#allocation3 + $0x18] sm:$0xff] %v3220
    %3223 = vst [vmem:[#allocation4] sm:$0xff] %v3221
    %v3224 = vld [vmem:[#allocation3] sm:$0xff]
    %v3225 = vld [vmem:[#allocation3 + $0x8] sm:$0xff]
    %v3226 = vld [vmem:[#allocation3 + $0x10] sm:$0xff]
    %v3227 = vld [vmem:[#allocation3 + $0x18] sm:$0xff]
    %v3228 = vld [vmem:[#allocation4] sm:$0xff]
    %v3229 = vld [vmem:[#allocation4 + $0x8] sm:$0xff]
    %v3230 = vld [vmem:[#allocation4 + $0x10] sm:$0xff]
    %v3231 = vld [vmem:[#allocation4 + $0x18] sm:$0xff]
    %v3232 = vld [vmem:[#allocation29] sm:$0xff]
    %v3233 = vld [vmem:[#allocation29 + $0x8] sm:$0xff]
    %v3234 = vld [vmem:[#allocation29 + $0x10] sm:$0xff]
    %v3235 = vld [vmem:[#allocation29 + $0x18] sm:$0xff]
    %v3236 = vld [vmem:[#allocation29 + $0x20] sm:$0xff]
    %v3237 = vld [vmem:[#allocation29 + $0x28] sm:$0xff]
    %v3238 = vld [vmem:[#allocation29 + $0x30] sm:$0xff]
    %v3239 = vld [vmem:[#allocation29 + $0x38] sm:$0xff]
    %v3240 = vld [vmem:[#allocation29 + $0x40] sm:$0xff]
    %v3241 = vld [vmem:[#allocation29 + $0x48] sm:$0xff]
    %v3242 = vld [vmem:[#allocation29 + $0x50] sm:$0xff]
    %v3243 = vld [vmem:[#allocation29 + $0x58] sm:$0xff]
    %v3244 = vld [vmem:[#allocation29 + $0x60] sm:$0xff]
    %v3245 = vld [vmem:[#allocation29 + $0x68] sm:$0xff]
    %v3246 = vld [vmem:[#allocation29 + $0x70] sm:$0xff]
    %v3247 = vld [vmem:[#allocation29 + $0x78] sm:$0xff]
    %v3248 = vld [vmem:[#allocation29 + $0x80] sm:$0xff]
    %v3249 = vld [vmem:[#allocation29 + $0x88] sm:$0xff]
    %v3250 = vld [vmem:[#allocation29 + $0x90] sm:$0xff]
    %v3251 = vld [vmem:[#allocation29 + $0x98] sm:$0xff]
    %v3252 = vld [vmem:[#allocation29 + $0xa0] sm:$0xff]
    %v3253 = vld [vmem:[#allocation29 + $0xa8] sm:$0xff]
    %v3254 = vld [vmem:[#allocation29 + $0xb0] sm:$0xff]
    %v3255 = vld [vmem:[#allocation29 + $0xb8] sm:$0xff]
    %v3256 = vld [vmem:[#allocation29 + $0xc0] sm:$0xff]
    %v3257 = vld [vmem:[#allocation29 + $0xc8] sm:$0xff]
    %v3258 = vld [vmem:[#allocation29 + $0xd0] sm:$0xff]
    %v3259 = vld [vmem:[#allocation29 + $0xd8] sm:$0xff]
    %v3260 = vld [vmem:[#allocation29 + $0xe0] sm:$0xff]
    %v3261 = vld [vmem:[#allocation29 + $0xe8] sm:$0xff]
    %v3262 = vld [vmem:[#allocation29 + $0xf0] sm:$0xff]
    %v3263 = vld [vmem:[#allocation29 + $0xf8] sm:$0xff]
    %v3264 = vld [vmem:[#allocation29 + $0x100] sm:$0xff]
    %v3265 = vld [vmem:[#allocation29 + $0x108] sm:$0xff]
    %v3266 = vld [vmem:[#allocation29 + $0x110] sm:$0xff]
    %v3267 = vld [vmem:[#allocation29 + $0x118] sm:$0xff]
    %v3268 = vld [vmem:[#allocation29 + $0x120] sm:$0xff]
    %v3269 = vld [vmem:[#allocation29 + $0x128] sm:$0xff]
    %v3270 = vld [vmem:[#allocation29 + $0x130] sm:$0xff]
    %v3271 = vld [vmem:[#allocation29 + $0x138] sm:$0xff]
    %v3272 = vld [vmem:[#allocation29 + $0x140] sm:$0xff]
    %v3273 = vld [vmem:[#allocation29 + $0x148] sm:$0xff]
    %v3274 = vld [vmem:[#allocation29 + $0x150] sm:$0xff]
    %v3275 = vld [vmem:[#allocation29 + $0x158] sm:$0xff]
    %v3276 = vld [vmem:[#allocation29 + $0x160] sm:$0xff]
    %v3277 = vld [vmem:[#allocation29 + $0x168] sm:$0xff]
    %v3278 = vld [vmem:[#allocation29 + $0x170] sm:$0xff]
    %v3279 = vld [vmem:[#allocation29 + $0x178] sm:$0xff]
    %v3280 = vld [vmem:[#allocation29 + $0x180] sm:$0xff]
    %v3281 = vld [vmem:[#allocation29 + $0x188] sm:$0xff]
    %v3282 = vld [vmem:[#allocation29 + $0x190] sm:$0xff]
    %v3283 = vld [vmem:[#allocation29 + $0x198] sm:$0xff]
    %v3284 = vld [vmem:[#allocation29 + $0x1a0] sm:$0xff]
    %v3285 = vld [vmem:[#allocation29 + $0x1a8] sm:$0xff]
    %v3286 = vld [vmem:[#allocation29 + $0x1b0] sm:$0xff]
    %v3287 = vld [vmem:[#allocation29 + $0x1b8] sm:$0xff]
    %v3288 = vld [vmem:[#allocation29 + $0x1c0] sm:$0xff]
    %v3289 = vld [vmem:[#allocation29 + $0x1c8] sm:$0xff]
    %v3290 = vld [vmem:[#allocation29 + $0x1d0] sm:$0xff]
    %v3291 = vld [vmem:[#allocation29 + $0x1d8] sm:$0xff]
    %v3292 = vld [vmem:[#allocation29 + $0x1e0] sm:$0xff]
    %v3293 = vld [vmem:[#allocation29 + $0x1e8] sm:$0xff]
    %v3294 = vld [vmem:[#allocation29 + $0x1f0] sm:$0xff]
    %v3295 = vld [vmem:[#allocation29 + $0x1f8] sm:$0xff]
    %v3296 = vld [vmem:[#allocation29 + $0x200] sm:$0xff]
    %v3297 = vld [vmem:[#allocation29 + $0x208] sm:$0xff]
    %v3298 = vld [vmem:[#allocation29 + $0x210] sm:$0xff]
    %v3299 = vld [vmem:[#allocation29 + $0x218] sm:$0xff]
    %v3300 = vld [vmem:[#allocation29 + $0x220] sm:$0xff]
    %v3301 = vld [vmem:[#allocation29 + $0x228] sm:$0xff]
    %v3302 = vld [vmem:[#allocation29 + $0x230] sm:$0xff]
    %v3303 = vld [vmem:[#allocation29 + $0x238] sm:$0xff]
    %v3304 = vld [vmem:[#allocation29 + $0x240] sm:$0xff]
    %v3305 = vld [vmem:[#allocation29 + $0x248] sm:$0xff]
    %v3306 = vld [vmem:[#allocation29 + $0x250] sm:$0xff]
    %v3307 = vld [vmem:[#allocation29 + $0x258] sm:$0xff]
    %v3308 = vld [vmem:[#allocation29 + $0x260] sm:$0xff]
    %v3309 = vld [vmem:[#allocation29 + $0x268] sm:$0xff]
    %v3310 = vld [vmem:[#allocation29 + $0x270] sm:$0xff]
    %v3311 = vld [vmem:[#allocation29 + $0x278] sm:$0xff]
    %v3312 = vld [vmem:[#allocation29 + $0x280] sm:$0xff]
    %v3313 = vld [vmem:[#allocation29 + $0x288] sm:$0xff]
    %v3314 = vld [vmem:[#allocation29 + $0x290] sm:$0xff]
    %v3315 = vld [vmem:[#allocation29 + $0x298] sm:$0xff]
    %v3316 = vld [vmem:[#allocation29 + $0x2a0] sm:$0xff]
    %v3317 = vld [vmem:[#allocation29 + $0x2a8] sm:$0xff]
    %v3318 = vld [vmem:[#allocation29 + $0x2b0] sm:$0xff]
    %v3319 = vld [vmem:[#allocation29 + $0x2b8] sm:$0xff]
    %v3320 = vld [vmem:[#allocation29 + $0x2c0] sm:$0xff]
    %v3321 = vld [vmem:[#allocation29 + $0x2c8] sm:$0xff]
    %v3322 = vld [vmem:[#allocation29 + $0x2d0] sm:$0xff]
    %v3323 = vld [vmem:[#allocation29 + $0x2d8] sm:$0xff]
    %v3324 = vld [vmem:[#allocation29 + $0x2e0] sm:$0xff]
    %v3325 = vld [vmem:[#allocation29 + $0x2e8] sm:$0xff]
    %v3326 = vld [vmem:[#allocation29 + $0x2f0] sm:$0xff]
    %v3327 = vld [vmem:[#allocation29 + $0x2f8] sm:$0xff]
    %v3328 = vld [vmem:[#allocation29 + $0x300] sm:$0xff]
    %v3329 = vld [vmem:[#allocation29 + $0x308] sm:$0xff]
    %v3330 = vld [vmem:[#allocation29 + $0x310] sm:$0xff]
    %v3331 = vld [vmem:[#allocation29 + $0x318] sm:$0xff]
    %v3332 = vld [vmem:[#allocation29 + $0x320] sm:$0xff]
    %v3333 = vld [vmem:[#allocation29 + $0x328] sm:$0xff]
    %v3334 = vld [vmem:[#allocation29 + $0x330] sm:$0xff]
    %v3335 = vld [vmem:[#allocation29 + $0x338] sm:$0xff]
    %v3336 = vld [vmem:[#allocation29 + $0x340] sm:$0xff]
    %v3337 = vld [vmem:[#allocation29 + $0x348] sm:$0xff]
    %v3338 = vld [vmem:[#allocation29 + $0x350] sm:$0xff]
    %v3339 = vld [vmem:[#allocation29 + $0x358] sm:$0xff]
    %v3340 = vld [vmem:[#allocation29 + $0x360] sm:$0xff]
    %v3341 = vld [vmem:[#allocation29 + $0x368] sm:$0xff]
    %v3342 = vld [vmem:[#allocation29 + $0x370] sm:$0xff]
    %v3343 = vld [vmem:[#allocation29 + $0x378] sm:$0xff]
    %v3344 = vld [vmem:[#allocation29 + $0x380] sm:$0xff]
    %v3345 = vld [vmem:[#allocation29 + $0x388] sm:$0xff]
    %v3346 = vld [vmem:[#allocation29 + $0x390] sm:$0xff]
    %v3347 = vld [vmem:[#allocation29 + $0x398] sm:$0xff]
    %v3348 = vld [vmem:[#allocation29 + $0x3a0] sm:$0xff]
    %v3349 = vld [vmem:[#allocation29 + $0x3a8] sm:$0xff]
    %v3350 = vld [vmem:[#allocation29 + $0x3b0] sm:$0xff]
    %v3351 = vld [vmem:[#allocation29 + $0x3b8] sm:$0xff]
    %v3352 = vld [vmem:[#allocation29 + $0x3c0] sm:$0xff]
    %v3353 = vld [vmem:[#allocation29 + $0x3c8] sm:$0xff]
    %v3354 = vld [vmem:[#allocation29 + $0x3d0] sm:$0xff]
    %v3355 = vld [vmem:[#allocation29 + $0x3d8] sm:$0xff]
    %v3356 = vld [vmem:[#allocation29 + $0x3e0] sm:$0xff]
    %v3357 = vld [vmem:[#allocation29 + $0x3e8] sm:$0xff]
    %v3358 = vld [vmem:[#allocation29 + $0x3f0] sm:$0xff]
    %v3359 = vld [vmem:[#allocation29 + $0x3f8] sm:$0xff]
    %v3360 = vld [vmem:[#allocation29 + $0x400] sm:$0xff]
    %v3361 = vld [vmem:[#allocation29 + $0x408] sm:$0xff]
    %v3362 = vld [vmem:[#allocation29 + $0x410] sm:$0xff]
    %v3363 = vld [vmem:[#allocation29 + $0x418] sm:$0xff]
    %v3364 = vld [vmem:[#allocation29 + $0x420] sm:$0xff]
    %v3365 = vld [vmem:[#allocation29 + $0x428] sm:$0xff]
    %v3366 = vld [vmem:[#allocation29 + $0x430] sm:$0xff]
    %v3367 = vld [vmem:[#allocation29 + $0x438] sm:$0xff]
    %v3368 = vld [vmem:[#allocation29 + $0x440] sm:$0xff]
    %v3369 = vld [vmem:[#allocation29 + $0x448] sm:$0xff]
    %v3370 = vld [vmem:[#allocation29 + $0x450] sm:$0xff]
    %v3371 = vld [vmem:[#allocation29 + $0x458] sm:$0xff]
    %v3372 = vld [vmem:[#allocation29 + $0x460] sm:$0xff]
    %v3373 = vld [vmem:[#allocation29 + $0x468] sm:$0xff]
    %v3374 = vld [vmem:[#allocation29 + $0x470] sm:$0xff]
    %v3375 = vld [vmem:[#allocation29 + $0x478] sm:$0xff]
    %v3376 = vld [vmem:[#allocation29 + $0x480] sm:$0xff]
    %v3377 = vld [vmem:[#allocation29 + $0x488] sm:$0xff]
    %v3378 = vld [vmem:[#allocation29 + $0x490] sm:$0xff]
    %v3379 = vld [vmem:[#allocation29 + $0x498] sm:$0xff]
    %v3380 = vld [vmem:[#allocation29 + $0x4a0] sm:$0xff]
    %v3381 = vld [vmem:[#allocation29 + $0x4a8] sm:$0xff]
    %v3382 = vld [vmem:[#allocation29 + $0x4b0] sm:$0xff]
    %v3383 = vld [vmem:[#allocation29 + $0x4b8] sm:$0xff]
    %v3384 = vld [vmem:[#allocation29 + $0x4c0] sm:$0xff]
    %v3385 = vld [vmem:[#allocation29 + $0x4c8] sm:$0xff]
    %v3386 = vld [vmem:[#allocation29 + $0x4d0] sm:$0xff]
    %v3387 = vld [vmem:[#allocation29 + $0x4d8] sm:$0xff]
    %v3388 = vld [vmem:[#allocation29 + $0x4e0] sm:$0xff]
    %v3389 = vld [vmem:[#allocation29 + $0x4e8] sm:$0xff]
    %v3390 = vld [vmem:[#allocation29 + $0x4f0] sm:$0xff]
    %v3391 = vld [vmem:[#allocation29 + $0x4f8] sm:$0xff]
    %v3392 = vld [vmem:[#allocation29 + $0x500] sm:$0xff]
    %v3393 = vld [vmem:[#allocation29 + $0x508] sm:$0xff]
    %v3394 = vld [vmem:[#allocation29 + $0x510] sm:$0xff]
    %v3395 = vld [vmem:[#allocation29 + $0x518] sm:$0xff]
    %v3396 = vld [vmem:[#allocation29 + $0x520] sm:$0xff]
    %v3397 = vld [vmem:[#allocation29 + $0x528] sm:$0xff]
    %v3398 = vld [vmem:[#allocation29 + $0x530] sm:$0xff]
    %v3399 = vld [vmem:[#allocation29 + $0x538] sm:$0xff]
    %v3400 = vld [vmem:[#allocation29 + $0x540] sm:$0xff]
    %v3401 = vld [vmem:[#allocation29 + $0x548] sm:$0xff]
    %v3402 = vld [vmem:[#allocation29 + $0x550] sm:$0xff]
    %v3403 = vld [vmem:[#allocation29 + $0x558] sm:$0xff]
    %v3404 = vld [vmem:[#allocation29 + $0x560] sm:$0xff]
    %v3405 = vld [vmem:[#allocation29 + $0x568] sm:$0xff]
    %v3406 = vld [vmem:[#allocation29 + $0x570] sm:$0xff]
    %v3407 = vld [vmem:[#allocation29 + $0x578] sm:$0xff]
    %v3408 = vld [vmem:[#allocation29 + $0x580] sm:$0xff]
    %v3409 = vld [vmem:[#allocation29 + $0x588] sm:$0xff]
    %v3410 = vld [vmem:[#allocation29 + $0x590] sm:$0xff]
    %v3411 = vld [vmem:[#allocation29 + $0x598] sm:$0xff]
    %v3412 = vld [vmem:[#allocation29 + $0x5a0] sm:$0xff]
    %v3413 = vld [vmem:[#allocation29 + $0x5a8] sm:$0xff]
    %v3414 = vld [vmem:[#allocation29 + $0x5b0] sm:$0xff]
    %v3415 = vld [vmem:[#allocation29 + $0x5b8] sm:$0xff]
    %v3416 = vld [vmem:[#allocation29 + $0x5c0] sm:$0xff]
    %v3417 = vld [vmem:[#allocation29 + $0x5c8] sm:$0xff]
    %v3418 = vld [vmem:[#allocation29 + $0x5d0] sm:$0xff]
    %v3419 = vld [vmem:[#allocation29 + $0x5d8] sm:$0xff]
    %v3420 = vld [vmem:[#allocation29 + $0x5e0] sm:$0xff]
    %v3421 = vld [vmem:[#allocation29 + $0x5e8] sm:$0xff]
    %v3422 = vld [vmem:[#allocation29 + $0x5f0] sm:$0xff]
    %v3423 = vld [vmem:[#allocation29 + $0x5f8] sm:$0xff]
    %v3424 = vld [vmem:[#allocation29 + $0x600] sm:$0xff]
    %v3425 = vld [vmem:[#allocation29 + $0x608] sm:$0xff]
    %v3426 = vld [vmem:[#allocation29 + $0x610] sm:$0xff]
    %v3427 = vld [vmem:[#allocation29 + $0x618] sm:$0xff]
    %v3428 = vld [vmem:[#allocation29 + $0x620] sm:$0xff]
    %v3429 = vld [vmem:[#allocation29 + $0x628] sm:$0xff]
    %v3430 = vld [vmem:[#allocation29 + $0x630] sm:$0xff]
    %v3431 = vld [vmem:[#allocation29 + $0x638] sm:$0xff]
    %v3432 = vld [vmem:[#allocation29 + $0x640] sm:$0xff]
    %v3433 = vld [vmem:[#allocation29 + $0x648] sm:$0xff]
    %v3434 = vld [vmem:[#allocation29 + $0x650] sm:$0xff]
    %v3435 = vld [vmem:[#allocation29 + $0x658] sm:$0xff]
    %v3436 = vld [vmem:[#allocation29 + $0x660] sm:$0xff]
    %v3437 = vld [vmem:[#allocation29 + $0x668] sm:$0xff]
    %v3438 = vld [vmem:[#allocation29 + $0x670] sm:$0xff]
    %v3439 = vld [vmem:[#allocation29 + $0x678] sm:$0xff]
    %v3440 = vld [vmem:[#allocation29 + $0x680] sm:$0xff]
    %v3441 = vld [vmem:[#allocation29 + $0x688] sm:$0xff]
    %v3442 = vld [vmem:[#allocation29 + $0x690] sm:$0xff]
    %v3443 = vld [vmem:[#allocation29 + $0x698] sm:$0xff]
    %v3444 = vld [vmem:[#allocation29 + $0x6a0] sm:$0xff]
    %v3445 = vld [vmem:[#allocation29 + $0x6a8] sm:$0xff]
    %v3446 = vld [vmem:[#allocation29 + $0x6b0] sm:$0xff]
    %v3447 = vld [vmem:[#allocation29 + $0x6b8] sm:$0xff]
    %v3448 = vld [vmem:[#allocation29 + $0x6c0] sm:$0xff]
    %v3449 = vld [vmem:[#allocation29 + $0x6c8] sm:$0xff]
    %v3450 = vld [vmem:[#allocation29 + $0x6d0] sm:$0xff]
    %v3451 = vld [vmem:[#allocation29 + $0x6d8] sm:$0xff]
    %v3452 = vld [vmem:[#allocation29 + $0x6e0] sm:$0xff]
    %v3453 = vld [vmem:[#allocation29 + $0x6e8] sm:$0xff]
    %v3454 = vld [vmem:[#allocation29 + $0x6f0] sm:$0xff]
    %v3455 = vld [vmem:[#allocation29 + $0x6f8] sm:$0xff]
    %v3456 = vld [vmem:[#allocation29 + $0x700] sm:$0xff]
    %v3457 = vld [vmem:[#allocation29 + $0x708] sm:$0xff]
    %v3458 = vld [vmem:[#allocation29 + $0x710] sm:$0xff]
    %v3459 = vld [vmem:[#allocation29 + $0x718] sm:$0xff]
    %v3460 = vld [vmem:[#allocation29 + $0x720] sm:$0xff]
    %v3461 = vld [vmem:[#allocation29 + $0x728] sm:$0xff]
    %v3462 = vld [vmem:[#allocation29 + $0x730] sm:$0xff]
    %v3463 = vld [vmem:[#allocation29 + $0x738] sm:$0xff]
    %v3464 = vld [vmem:[#allocation29 + $0x740] sm:$0xff]
    %v3465 = vld [vmem:[#allocation29 + $0x748] sm:$0xff]
    %v3466 = vld [vmem:[#allocation29 + $0x750] sm:$0xff]
    %v3467 = vld [vmem:[#allocation29 + $0x758] sm:$0xff]
    %v3468 = vld [vmem:[#allocation29 + $0x760] sm:$0xff]
    %v3469 = vld [vmem:[#allocation29 + $0x768] sm:$0xff]
    %v3470 = vld [vmem:[#allocation29 + $0x770] sm:$0xff]
    %v3471 = vld [vmem:[#allocation29 + $0x778] sm:$0xff]
    %v3472 = vld [vmem:[#allocation29 + $0x780] sm:$0xff]
    %v3473 = vld [vmem:[#allocation29 + $0x788] sm:$0xff]
    %v3474 = vld [vmem:[#allocation29 + $0x790] sm:$0xff]
    %v3475 = vld [vmem:[#allocation29 + $0x798] sm:$0xff]
    %v3476 = vld [vmem:[#allocation29 + $0x7a0] sm:$0xff]
    %v3477 = vld [vmem:[#allocation29 + $0x7a8] sm:$0xff]
    %v3478 = vld [vmem:[#allocation29 + $0x7b0] sm:$0xff]
    %v3479 = vld [vmem:[#allocation29 + $0x7b8] sm:$0xff]
    %v3480 = vld [vmem:[#allocation29 + $0x7c0] sm:$0xff]
    %v3481 = vld [vmem:[#allocation29 + $0x7c8] sm:$0xff]
    %v3482 = vld [vmem:[#allocation29 + $0x7d0] sm:$0xff]
    %v3483 = vld [vmem:[#allocation29 + $0x7d8] sm:$0xff]
    %v3484 = vld [vmem:[#allocation29 + $0x7e0] sm:$0xff]
    %v3485 = vld [vmem:[#allocation29 + $0x7e8] sm:$0xff]
    %v3486 = vld [vmem:[#allocation29 + $0x7f0] sm:$0xff]
    %v3487 = vld [vmem:[#allocation29 + $0x7f8] sm:$0xff]
    %v3488 = vld [vmem:[%s10] sm:$0xff]
    %v3490 = vperm.slane %v3488, 0
    %v3491 = vperm.slane %v3488, 1
    %v3492 = vperm.slane %v3488, 2
    %v3493 = vperm.slane %v3488, 3
    %v3494 = vperm.slane %v3488, 4
    %v3495 = vperm.slane %v3488, 5
    %v3496 = vperm.slane %v3488, 6
    %v3497 = vperm.slane %v3488, 7
    %3506 = vmatpush.msra.mxu0 %v3352
    %3507 = vmatpush.msra.mxu0 %v3344
    %3508 = vmatpush.msra.mxu0 %v3336
    %3509 = vmatpush.msra.mxu0 %v3328
    %3510 = vmatpush.msra.mxu0 %v3320
    %3511 = vmatpush.msra.mxu0 %v3312
    %3512 = vmatpush.msra.mxu0 %v3304
    %3513 = vmatpush.msra.mxu0 %v3296
    %3514 = vmatpush.msra.mxu0 %v3288
    %3515 = vmatpush.msra.mxu0 %v3280
    %3516 = vmatpush.msra.mxu0 %v3272
    %3517 = vmatpush.msra.mxu0 %v3264
    %3518 = vmatpush.msra.mxu0 %v3256
    %3519 = vmatpush.msra.mxu0 %v3248
    %3520 = vmatpush.msra.mxu0 %v3240
    %3521 = vmatpush.msra.mxu0 %v3232
    %3522 = vmatmul.f32.gmra.mxu0 %v3224
    %v3523 = vpop.f32.mrf.mxu0
    %v3524 = vadd.f32 %v3490, %v3523
    %3525 = vmatmul.f32.gmra.mxu0 %v3225
    %v3526 = vpop.f32.mrf.mxu0
    %v3527 = vadd.f32 %v3490, %v3526
    %3528 = vmatmul.f32.gmra.mxu0 %v3226
    %v3529 = vpop.f32.mrf.mxu0
    %v3530 = vadd.f32 %v3490, %v3529
    %3531 = vmatmul.f32.gmra.mxu0 %v3227
    %v3532 = vpop.f32.mrf.mxu0
    %v3533 = vadd.f32 %v3490, %v3532
    %3534 = vdwg.mxu0
    %3535 = vmatpush.msra.mxu0 %v3480
    %3536 = vmatpush.msra.mxu0 %v3472
    %3537 = vmatpush.msra.mxu0 %v3464
    %3538 = vmatpush.msra.mxu0 %v3456
    %3539 = vmatpush.msra.mxu0 %v3448
    %3540 = vmatpush.msra.mxu0 %v3440
    %3541 = vmatpush.msra.mxu0 %v3432
    %3542 = vmatpush.msra.mxu0 %v3424
    %3543 = vmatpush.msra.mxu0 %v3416
    %3544 = vmatpush.msra.mxu0 %v3408
    %3545 = vmatpush.msra.mxu0 %v3400
    %3546 = vmatpush.msra.mxu0 %v3392
    %3547 = vmatpush.msra.mxu0 %v3384
    %3548 = vmatpush.msra.mxu0 %v3376
    %3549 = vmatpush.msra.mxu0 %v3368
    %3550 = vmatpush.msra.mxu0 %v3360
    %3551 = vmatmul.f32.gmra.mxu0 %v3228
    %v3552 = vpop.f32.mrf.mxu0
    %v3553 = vadd.f32 %v3524, %v3552
    %3554 = vmatmul.f32.gmra.mxu0 %v3229
    %v3555 = vpop.f32.mrf.mxu0
    %v3556 = vadd.f32 %v3527, %v3555
    %3557 = vmatmul.f32.gmra.mxu0 %v3230
    %v3558 = vpop.f32.mrf.mxu0
    %v3559 = vadd.f32 %v3530, %v3558
    %3560 = vmatmul.f32.gmra.mxu0 %v3231
    %v3561 = vpop.f32.mrf.mxu0
    %v3562 = vadd.f32 %v3533, %v3561
    %3563 = vdwg.mxu0
    %3564 = vmatpush.msra.mxu0 %v3353
    %3565 = vmatpush.msra.mxu0 %v3345
    %3566 = vmatpush.msra.mxu0 %v3337
    %3567 = vmatpush.msra.mxu0 %v3329
    %3568 = vmatpush.msra.mxu0 %v3321
    %3569 = vmatpush.msra.mxu0 %v3313
    %3570 = vmatpush.msra.mxu0 %v3305
    %3571 = vmatpush.msra.mxu0 %v3297
    %3572 = vmatpush.msra.mxu0 %v3289
    %3573 = vmatpush.msra.mxu0 %v3281
    %3574 = vmatpush.msra.mxu0 %v3273
    %3575 = vmatpush.msra.mxu0 %v3265
    %3576 = vmatpush.msra.mxu0 %v3257
    %3577 = vmatpush.msra.mxu0 %v3249
    %3578 = vmatpush.msra.mxu0 %v3241
    %3579 = vmatpush.msra.mxu0 %v3233
    %3580 = vmatmul.f32.gmra.mxu0 %v3224
    %v3581 = vpop.f32.mrf.mxu0
    %v3582 = vadd.f32 %v3491, %v3581
    %3583 = vmatmul.f32.gmra.mxu0 %v3225
    %v3584 = vpop.f32.mrf.mxu0
    %v3585 = vadd.f32 %v3491, %v3584
    %3586 = vmatmul.f32.gmra.mxu0 %v3226
    %v3587 = vpop.f32.mrf.mxu0
    %v3588 = vadd.f32 %v3491, %v3587
    %3589 = vmatmul.f32.gmra.mxu0 %v3227
    %v3590 = vpop.f32.mrf.mxu0
    %v3591 = vadd.f32 %v3491, %v3590
    %3592 = vdwg.mxu0
    %3593 = vmatpush.msra.mxu0 %v3481
    %3594 = vmatpush.msra.mxu0 %v3473
    %3595 = vmatpush.msra.mxu0 %v3465
    %3596 = vmatpush.msra.mxu0 %v3457
    %3597 = vmatpush.msra.mxu0 %v3449
    %3598 = vmatpush.msra.mxu0 %v3441
    %3599 = vmatpush.msra.mxu0 %v3433
    %3600 = vmatpush.msra.mxu0 %v3425
    %3601 = vmatpush.msra.mxu0 %v3417
    %3602 = vmatpush.msra.mxu0 %v3409
    %3603 = vmatpush.msra.mxu0 %v3401
    %3604 = vmatpush.msra.mxu0 %v3393
    %3605 = vmatpush.msra.mxu0 %v3385
    %3606 = vmatpush.msra.mxu0 %v3377
    %3607 = vmatpush.msra.mxu0 %v3369
    %3608 = vmatpush.msra.mxu0 %v3361
    %3609 = vmatmul.f32.gmra.mxu0 %v3228
    %v3610 = vpop.f32.mrf.mxu0
    %v3611 = vadd.f32 %v3582, %v3610
    %3612 = vmatmul.f32.gmra.mxu0 %v3229
    %v3613 = vpop.f32.mrf.mxu0
    %v3614 = vadd.f32 %v3585, %v3613
    %3615 = vmatmul.f32.gmra.mxu0 %v3230
    %v3616 = vpop.f32.mrf.mxu0
    %v3617 = vadd.f32 %v3588, %v3616
    %3618 = vmatmul.f32.gmra.mxu0 %v3231
    %v3619 = vpop.f32.mrf.mxu0
    %v3620 = vadd.f32 %v3591, %v3619
    %3621 = vdwg.mxu0
    %3622 = vmatpush.msra.mxu0 %v3354
    %3623 = vmatpush.msra.mxu0 %v3346
    %3624 = vmatpush.msra.mxu0 %v3338
    %3625 = vmatpush.msra.mxu0 %v3330
    %3626 = vmatpush.msra.mxu0 %v3322
    %3627 = vmatpush.msra.mxu0 %v3314
    %3628 = vmatpush.msra.mxu0 %v3306
    %3629 = vmatpush.msra.mxu0 %v3298
    %3630 = vmatpush.msra.mxu0 %v3290
    %3631 = vmatpush.msra.mxu0 %v3282
    %3632 = vmatpush.msra.mxu0 %v3274
    %3633 = vmatpush.msra.mxu0 %v3266
    %3634 = vmatpush.msra.mxu0 %v3258
    %3635 = vmatpush.msra.mxu0 %v3250
    %3636 = vmatpush.msra.mxu0 %v3242
    %3637 = vmatpush.msra.mxu0 %v3234
    %3638 = vmatmul.f32.gmra.mxu0 %v3224
    %v3639 = vpop.f32.mrf.mxu0
    %v3640 = vadd.f32 %v3492, %v3639
    %3641 = vmatmul.f32.gmra.mxu0 %v3225
    %v3642 = vpop.f32.mrf.mxu0
    %v3643 = vadd.f32 %v3492, %v3642
    %3644 = vmatmul.f32.gmra.mxu0 %v3226
    %v3645 = vpop.f32.mrf.mxu0
    %v3646 = vadd.f32 %v3492, %v3645
    %3647 = vmatmul.f32.gmra.mxu0 %v3227
    %v3648 = vpop.f32.mrf.mxu0
    %v3649 = vadd.f32 %v3492, %v3648
    %3650 = vdwg.mxu0
    %3651 = vmatpush.msra.mxu0 %v3482
    %3652 = vmatpush.msra.mxu0 %v3474
    %3653 = vmatpush.msra.mxu0 %v3466
    %3654 = vmatpush.msra.mxu0 %v3458
    %3655 = vmatpush.msra.mxu0 %v3450
    %3656 = vmatpush.msra.mxu0 %v3442
    %3657 = vmatpush.msra.mxu0 %v3434
    %3658 = vmatpush.msra.mxu0 %v3426
    %3659 = vmatpush.msra.mxu0 %v3418
    %3660 = vmatpush.msra.mxu0 %v3410
    %3661 = vmatpush.msra.mxu0 %v3402
    %3662 = vmatpush.msra.mxu0 %v3394
    %3663 = vmatpush.msra.mxu0 %v3386
    %3664 = vmatpush.msra.mxu0 %v3378
    %3665 = vmatpush.msra.mxu0 %v3370
    %3666 = vmatpush.msra.mxu0 %v3362
    %3667 = vmatmul.f32.gmra.mxu0 %v3228
    %v3668 = vpop.f32.mrf.mxu0
    %v3669 = vadd.f32 %v3640, %v3668
    %3670 = vmatmul.f32.gmra.mxu0 %v3229
    %v3671 = vpop.f32.mrf.mxu0
    %v3672 = vadd.f32 %v3643, %v3671
    %3673 = vmatmul.f32.gmra.mxu0 %v3230
    %v3674 = vpop.f32.mrf.mxu0
    %v3675 = vadd.f32 %v3646, %v3674
    %3676 = vmatmul.f32.gmra.mxu0 %v3231
    %v3677 = vpop.f32.mrf.mxu0
    %v3678 = vadd.f32 %v3649, %v3677
    %3679 = vdwg.mxu0
    %3680 = vmatpush.msra.mxu0 %v3355
    %3681 = vmatpush.msra.mxu0 %v3347
    %3682 = vmatpush.msra.mxu0 %v3339
    %3683 = vmatpush.msra.mxu0 %v3331
    %3684 = vmatpush.msra.mxu0 %v3323
    %3685 = vmatpush.msra.mxu0 %v3315
    %3686 = vmatpush.msra.mxu0 %v3307
    %3687 = vmatpush.msra.mxu0 %v3299
    %3688 = vmatpush.msra.mxu0 %v3291
    %3689 = vmatpush.msra.mxu0 %v3283
    %3690 = vmatpush.msra.mxu0 %v3275
    %3691 = vmatpush.msra.mxu0 %v3267
    %3692 = vmatpush.msra.mxu0 %v3259
    %3693 = vmatpush.msra.mxu0 %v3251
    %3694 = vmatpush.msra.mxu0 %v3243
    %3695 = vmatpush.msra.mxu0 %v3235
    %3696 = vmatmul.f32.gmra.mxu0 %v3224
    %v3697 = vpop.f32.mrf.mxu0
    %v3698 = vadd.f32 %v3493, %v3697
    %3699 = vmatmul.f32.gmra.mxu0 %v3225
    %v3700 = vpop.f32.mrf.mxu0
    %v3701 = vadd.f32 %v3493, %v3700
    %3702 = vmatmul.f32.gmra.mxu0 %v3226
    %v3703 = vpop.f32.mrf.mxu0
    %v3704 = vadd.f32 %v3493, %v3703
    %3705 = vmatmul.f32.gmra.mxu0 %v3227
    %v3706 = vpop.f32.mrf.mxu0
    %v3707 = vadd.f32 %v3493, %v3706
    %3708 = vdwg.mxu0
    %3709 = vmatpush.msra.mxu0 %v3483
    %3710 = vmatpush.msra.mxu0 %v3475
    %3711 = vmatpush.msra.mxu0 %v3467
    %3712 = vmatpush.msra.mxu0 %v3459
    %3713 = vmatpush.msra.mxu0 %v3451
    %3714 = vmatpush.msra.mxu0 %v3443
    %3715 = vmatpush.msra.mxu0 %v3435
    %3716 = vmatpush.msra.mxu0 %v3427
    %3717 = vmatpush.msra.mxu0 %v3419
    %3718 = vmatpush.msra.mxu0 %v3411
    %3719 = vmatpush.msra.mxu0 %v3403
    %3720 = vmatpush.msra.mxu0 %v3395
    %3721 = vmatpush.msra.mxu0 %v3387
    %3722 = vmatpush.msra.mxu0 %v3379
    %3723 = vmatpush.msra.mxu0 %v3371
    %3724 = vmatpush.msra.mxu0 %v3363
    %3725 = vmatmul.f32.gmra.mxu0 %v3228
    %v3726 = vpop.f32.mrf.mxu0
    %v3727 = vadd.f32 %v3698, %v3726
    %3728 = vmatmul.f32.gmra.mxu0 %v3229
    %v3729 = vpop.f32.mrf.mxu0
    %v3730 = vadd.f32 %v3701, %v3729
    %3731 = vmatmul.f32.gmra.mxu0 %v3230
    %v3732 = vpop.f32.mrf.mxu0
    %v3733 = vadd.f32 %v3704, %v3732
    %3734 = vmatmul.f32.gmra.mxu0 %v3231
    %v3735 = vpop.f32.mrf.mxu0
    %v3736 = vadd.f32 %v3707, %v3735
    %3737 = vdwg.mxu0
    %3738 = vmatpush.msra.mxu0 %v3356
    %3739 = vmatpush.msra.mxu0 %v3348
    %3740 = vmatpush.msra.mxu0 %v3340
    %3741 = vmatpush.msra.mxu0 %v3332
    %3742 = vmatpush.msra.mxu0 %v3324
    %3743 = vmatpush.msra.mxu0 %v3316
    %3744 = vmatpush.msra.mxu0 %v3308
    %3745 = vmatpush.msra.mxu0 %v3300
    %3746 = vmatpush.msra.mxu0 %v3292
    %3747 = vmatpush.msra.mxu0 %v3284
    %3748 = vmatpush.msra.mxu0 %v3276
    %3749 = vmatpush.msra.mxu0 %v3268
    %3750 = vmatpush.msra.mxu0 %v3260
    %3751 = vmatpush.msra.mxu0 %v3252
    %3752 = vmatpush.msra.mxu0 %v3244
    %3753 = vmatpush.msra.mxu0 %v3236
    %3754 = vmatmul.f32.gmra.mxu0 %v3224
    %v3755 = vpop.f32.mrf.mxu0
    %v3756 = vadd.f32 %v3494, %v3755
    %3757 = vmatmul.f32.gmra.mxu0 %v3225
    %v3758 = vpop.f32.mrf.mxu0
    %v3759 = vadd.f32 %v3494, %v3758
    %3760 = vmatmul.f32.gmra.mxu0 %v3226
    %v3761 = vpop.f32.mrf.mxu0
    %v3762 = vadd.f32 %v3494, %v3761
    %3763 = vmatmul.f32.gmra.mxu0 %v3227
    %v3764 = vpop.f32.mrf.mxu0
    %v3765 = vadd.f32 %v3494, %v3764
    %3766 = vdwg.mxu0
    %3767 = vmatpush.msra.mxu0 %v3484
    %3768 = vmatpush.msra.mxu0 %v3476
    %3769 = vmatpush.msra.mxu0 %v3468
    %3770 = vmatpush.msra.mxu0 %v3460
    %3771 = vmatpush.msra.mxu0 %v3452
    %3772 = vmatpush.msra.mxu0 %v3444
    %3773 = vmatpush.msra.mxu0 %v3436
    %3774 = vmatpush.msra.mxu0 %v3428
    %3775 = vmatpush.msra.mxu0 %v3420
    %3776 = vmatpush.msra.mxu0 %v3412
    %3777 = vmatpush.msra.mxu0 %v3404
    %3778 = vmatpush.msra.mxu0 %v3396
    %3779 = vmatpush.msra.mxu0 %v3388
    %3780 = vmatpush.msra.mxu0 %v3380
    %3781 = vmatpush.msra.mxu0 %v3372
    %3782 = vmatpush.msra.mxu0 %v3364
    %3783 = vmatmul.f32.gmra.mxu0 %v3228
    %v3784 = vpop.f32.mrf.mxu0
    %v3785 = vadd.f32 %v3756, %v3784
    %3786 = vmatmul.f32.gmra.mxu0 %v3229
    %v3787 = vpop.f32.mrf.mxu0
    %v3788 = vadd.f32 %v3759, %v3787
    %3789 = vmatmul.f32.gmra.mxu0 %v3230
    %v3790 = vpop.f32.mrf.mxu0
    %v3791 = vadd.f32 %v3762, %v3790
    %3792 = vmatmul.f32.gmra.mxu0 %v3231
    %v3793 = vpop.f32.mrf.mxu0
    %v3794 = vadd.f32 %v3765, %v3793
    %3795 = vdwg.mxu0
    %3796 = vmatpush.msra.mxu0 %v3357
    %3797 = vmatpush.msra.mxu0 %v3349
    %3798 = vmatpush.msra.mxu0 %v3341
    %3799 = vmatpush.msra.mxu0 %v3333
    %3800 = vmatpush.msra.mxu0 %v3325
    %3801 = vmatpush.msra.mxu0 %v3317
    %3802 = vmatpush.msra.mxu0 %v3309
    %3803 = vmatpush.msra.mxu0 %v3301
    %3804 = vmatpush.msra.mxu0 %v3293
    %3805 = vmatpush.msra.mxu0 %v3285
    %3806 = vmatpush.msra.mxu0 %v3277
    %3807 = vmatpush.msra.mxu0 %v3269
    %3808 = vmatpush.msra.mxu0 %v3261
    %3809 = vmatpush.msra.mxu0 %v3253
    %3810 = vmatpush.msra.mxu0 %v3245
    %3811 = vmatpush.msra.mxu0 %v3237
    %3812 = vmatmul.f32.gmra.mxu0 %v3224
    %v3813 = vpop.f32.mrf.mxu0
    %v3814 = vadd.f32 %v3495, %v3813
    %3815 = vmatmul.f32.gmra.mxu0 %v3225
    %v3816 = vpop.f32.mrf.mxu0
    %v3817 = vadd.f32 %v3495, %v3816
    %3818 = vmatmul.f32.gmra.mxu0 %v3226
    %v3819 = vpop.f32.mrf.mxu0
    %v3820 = vadd.f32 %v3495, %v3819
    %3821 = vmatmul.f32.gmra.mxu0 %v3227
    %v3822 = vpop.f32.mrf.mxu0
    %v3823 = vadd.f32 %v3495, %v3822
    %3824 = vdwg.mxu0
    %3825 = vmatpush.msra.mxu0 %v3485
    %3826 = vmatpush.msra.mxu0 %v3477
    %3827 = vmatpush.msra.mxu0 %v3469
    %3828 = vmatpush.msra.mxu0 %v3461
    %3829 = vmatpush.msra.mxu0 %v3453
    %3830 = vmatpush.msra.mxu0 %v3445
    %3831 = vmatpush.msra.mxu0 %v3437
    %3832 = vmatpush.msra.mxu0 %v3429
    %3833 = vmatpush.msra.mxu0 %v3421
    %3834 = vmatpush.msra.mxu0 %v3413
    %3835 = vmatpush.msra.mxu0 %v3405
    %3836 = vmatpush.msra.mxu0 %v3397
    %3837 = vmatpush.msra.mxu0 %v3389
    %3838 = vmatpush.msra.mxu0 %v3381
    %3839 = vmatpush.msra.mxu0 %v3373
    %3840 = vmatpush.msra.mxu0 %v3365
    %3841 = vmatmul.f32.gmra.mxu0 %v3228
    %v3842 = vpop.f32.mrf.mxu0
    %v3843 = vadd.f32 %v3814, %v3842
    %3844 = vmatmul.f32.gmra.mxu0 %v3229
    %v3845 = vpop.f32.mrf.mxu0
    %v3846 = vadd.f32 %v3817, %v3845
    %3847 = vmatmul.f32.gmra.mxu0 %v3230
    %v3848 = vpop.f32.mrf.mxu0
    %v3849 = vadd.f32 %v3820, %v3848
    %3850 = vmatmul.f32.gmra.mxu0 %v3231
    %v3851 = vpop.f32.mrf.mxu0
    %v3852 = vadd.f32 %v3823, %v3851
    %3853 = vdwg.mxu0
    %3854 = vmatpush.msra.mxu0 %v3358
    %3855 = vmatpush.msra.mxu0 %v3350
    %3856 = vmatpush.msra.mxu0 %v3342
    %3857 = vmatpush.msra.mxu0 %v3334
    %3858 = vmatpush.msra.mxu0 %v3326
    %3859 = vmatpush.msra.mxu0 %v3318
    %3860 = vmatpush.msra.mxu0 %v3310
    %3861 = vmatpush.msra.mxu0 %v3302
    %3862 = vmatpush.msra.mxu0 %v3294
    %3863 = vmatpush.msra.mxu0 %v3286
    %3864 = vmatpush.msra.mxu0 %v3278
    %3865 = vmatpush.msra.mxu0 %v3270
    %3866 = vmatpush.msra.mxu0 %v3262
    %3867 = vmatpush.msra.mxu0 %v3254
    %3868 = vmatpush.msra.mxu0 %v3246
    %3869 = vmatpush.msra.mxu0 %v3238
    %3870 = vmatmul.f32.gmra.mxu0 %v3224
    %v3871 = vpop.f32.mrf.mxu0
    %v3872 = vadd.f32 %v3496, %v3871
    %3873 = vmatmul.f32.gmra.mxu0 %v3225
    %v3874 = vpop.f32.mrf.mxu0
    %v3875 = vadd.f32 %v3496, %v3874
    %3876 = vmatmul.f32.gmra.mxu0 %v3226
    %v3877 = vpop.f32.mrf.mxu0
    %v3878 = vadd.f32 %v3496, %v3877
    %3879 = vmatmul.f32.gmra.mxu0 %v3227
    %v3880 = vpop.f32.mrf.mxu0
    %v3881 = vadd.f32 %v3496, %v3880
    %3882 = vdwg.mxu0
    %3883 = vmatpush.msra.mxu0 %v3486
    %3884 = vmatpush.msra.mxu0 %v3478
    %3885 = vmatpush.msra.mxu0 %v3470
    %3886 = vmatpush.msra.mxu0 %v3462
    %3887 = vmatpush.msra.mxu0 %v3454
    %3888 = vmatpush.msra.mxu0 %v3446
    %3889 = vmatpush.msra.mxu0 %v3438
    %3890 = vmatpush.msra.mxu0 %v3430
    %3891 = vmatpush.msra.mxu0 %v3422
    %3892 = vmatpush.msra.mxu0 %v3414
    %3893 = vmatpush.msra.mxu0 %v3406
    %3894 = vmatpush.msra.mxu0 %v3398
    %3895 = vmatpush.msra.mxu0 %v3390
    %3896 = vmatpush.msra.mxu0 %v3382
    %3897 = vmatpush.msra.mxu0 %v3374
    %3898 = vmatpush.msra.mxu0 %v3366
    %3899 = vmatmul.f32.gmra.mxu0 %v3228
    %v3900 = vpop.f32.mrf.mxu0
    %v3901 = vadd.f32 %v3872, %v3900
    %3902 = vmatmul.f32.gmra.mxu0 %v3229
    %v3903 = vpop.f32.mrf.mxu0
    %v3904 = vadd.f32 %v3875, %v3903
    %3905 = vmatmul.f32.gmra.mxu0 %v3230
    %v3906 = vpop.f32.mrf.mxu0
    %v3907 = vadd.f32 %v3878, %v3906
    %3908 = vmatmul.f32.gmra.mxu0 %v3231
    %v3909 = vpop.f32.mrf.mxu0
    %v3910 = vadd.f32 %v3881, %v3909
    %3911 = vdwg.mxu0
    %3912 = vmatpush.msra.mxu0 %v3359
    %3913 = vmatpush.msra.mxu0 %v3351
    %3914 = vmatpush.msra.mxu0 %v3343
    %3915 = vmatpush.msra.mxu0 %v3335
    %3916 = vmatpush.msra.mxu0 %v3327
    %3917 = vmatpush.msra.mxu0 %v3319
    %3918 = vmatpush.msra.mxu0 %v3311
    %3919 = vmatpush.msra.mxu0 %v3303
    %3920 = vmatpush.msra.mxu0 %v3295
    %3921 = vmatpush.msra.mxu0 %v3287
    %3922 = vmatpush.msra.mxu0 %v3279
    %3923 = vmatpush.msra.mxu0 %v3271
    %3924 = vmatpush.msra.mxu0 %v3263
    %3925 = vmatpush.msra.mxu0 %v3255
    %3926 = vmatpush.msra.mxu0 %v3247
    %3927 = vmatpush.msra.mxu0 %v3239
    %3928 = vmatmul.f32.gmra.mxu0 %v3224
    %v3929 = vpop.f32.mrf.mxu0
    %v3930 = vadd.f32 %v3497, %v3929
    %3931 = vmatmul.f32.gmra.mxu0 %v3225
    %v3932 = vpop.f32.mrf.mxu0
    %v3933 = vadd.f32 %v3497, %v3932
    %3934 = vmatmul.f32.gmra.mxu0 %v3226
    %v3935 = vpop.f32.mrf.mxu0
    %v3936 = vadd.f32 %v3497, %v3935
    %3937 = vmatmul.f32.gmra.mxu0 %v3227
    %v3938 = vpop.f32.mrf.mxu0
    %v3939 = vadd.f32 %v3497, %v3938
    %3940 = vdwg.mxu0
    %3941 = vmatpush.msra.mxu0 %v3487
    %3942 = vmatpush.msra.mxu0 %v3479
    %3943 = vmatpush.msra.mxu0 %v3471
    %3944 = vmatpush.msra.mxu0 %v3463
    %3945 = vmatpush.msra.mxu0 %v3455
    %3946 = vmatpush.msra.mxu0 %v3447
    %3947 = vmatpush.msra.mxu0 %v3439
    %3948 = vmatpush.msra.mxu0 %v3431
    %3949 = vmatpush.msra.mxu0 %v3423
    %3950 = vmatpush.msra.mxu0 %v3415
    %3951 = vmatpush.msra.mxu0 %v3407
    %3952 = vmatpush.msra.mxu0 %v3399
    %3953 = vmatpush.msra.mxu0 %v3391
    %3954 = vmatpush.msra.mxu0 %v3383
    %3955 = vmatpush.msra.mxu0 %v3375
    %3956 = vmatpush.msra.mxu0 %v3367
    %3957 = vmatmul.f32.gmra.mxu0 %v3228
    %v3958 = vpop.f32.mrf.mxu0
    %v3959 = vadd.f32 %v3930, %v3958
    %3960 = vmatmul.f32.gmra.mxu0 %v3229
    %v3961 = vpop.f32.mrf.mxu0
    %v3962 = vadd.f32 %v3933, %v3961
    %3963 = vmatmul.f32.gmra.mxu0 %v3230
    %v3964 = vpop.f32.mrf.mxu0
    %v3965 = vadd.f32 %v3936, %v3964
    %3966 = vmatmul.f32.gmra.mxu0 %v3231
    %v3967 = vpop.f32.mrf.mxu0
    %v3968 = vadd.f32 %v3939, %v3967
    %3969 = vdwg.mxu0
    %3970 = vst [vmem:[#allocation2] sm:$0xff] %v3553
    %3971 = vst [vmem:[#allocation2 + $0x8] sm:$0xff] %v3611
    %3972 = vst [vmem:[#allocation2 + $0x10] sm:$0xff] %v3669
    %3973 = vst [vmem:[#allocation2 + $0x18] sm:$0xff] %v3727
    %3974 = vst [vmem:[#allocation2 + $0x20] sm:$0xff] %v3785
    %3975 = vst [vmem:[#allocation2 + $0x28] sm:$0xff] %v3843
    %3976 = vst [vmem:[#allocation2 + $0x30] sm:$0xff] %v3901
    %3977 = vst [vmem:[#allocation2 + $0x38] sm:$0xff] %v3959
    %3978 = vst [vmem:[#allocation2 + $0x40] sm:$0xff] %v3556
    %3979 = vst [vmem:[#allocation2 + $0x48] sm:$0xff] %v3614
    %3980 = vst [vmem:[#allocation2 + $0x50] sm:$0xff] %v3672
    %3981 = vst [vmem:[#allocation2 + $0x58] sm:$0xff] %v3730
    %3982 = vst [vmem:[#allocation2 + $0x60] sm:$0xff] %v3788
    %3983 = vst [vmem:[#allocation2 + $0x68] sm:$0xff] %v3846
    %3984 = vst [vmem:[#allocation2 + $0x70] sm:$0xff] %v3904
    %3985 = vst [vmem:[#allocation2 + $0x78] sm:$0xff] %v3962
    %3986 = vst [vmem:[#allocation2 + $0x80] sm:$0xff] %v3559
    %3987 = vst [vmem:[#allocation2 + $0x88] sm:$0xff] %v3617
    %3988 = vst [vmem:[#allocation2 + $0x90] sm:$0xff] %v3675
    %3989 = vst [vmem:[#allocation2 + $0x98] sm:$0xff] %v3733
    %3990 = vst [vmem:[#allocation2 + $0xa0] sm:$0xff] %v3791
    %3991 = vst [vmem:[#allocation2 + $0xa8] sm:$0xff] %v3849
    %3992 = vst [vmem:[#allocation2 + $0xb0] sm:$0xff] %v3907
    %3993 = vst [vmem:[#allocation2 + $0xb8] sm:$0xff] %v3965
    %3994 = vst [vmem:[#allocation2 + $0xc0] sm:$0xff] %v3562
    %3995 = vst [vmem:[#allocation2 + $0xc8] sm:$0xff] %v3620
    %3996 = vst [vmem:[#allocation2 + $0xd0] sm:$0xff] %v3678
    %3997 = vst [vmem:[#allocation2 + $0xd8] sm:$0xff] %v3736
    %3998 = vst [vmem:[#allocation2 + $0xe0] sm:$0xff] %v3794
    %3999 = vst [vmem:[#allocation2 + $0xe8] sm:$0xff] %v3852
    %4000 = vst [vmem:[#allocation2 + $0xf0] sm:$0xff] %v3910
    %4001 = vst [vmem:[#allocation2 + $0xf8] sm:$0xff] %v3968
    %v4002 = vld [vmem:[#allocation31] sm:$0xff]
    %v4003 = vld [vmem:[#allocation31 + $0x8] sm:$0xff]
    %v4004 = vld [vmem:[#allocation31 + $0x10] sm:$0xff]
    %v4005 = vld [vmem:[#allocation31 + $0x18] sm:$0xff]
    %v4006 = vld [vmem:[#allocation31 + $0x20] sm:$0xff]
    %v4007 = vld [vmem:[#allocation31 + $0x28] sm:$0xff]
    %v4008 = vld [vmem:[#allocation31 + $0x30] sm:$0xff]
    %v4009 = vld [vmem:[#allocation31 + $0x38] sm:$0xff]
    %v4010 = vld [vmem:[#allocation31 + $0x40] sm:$0xff]
    %v4011 = vld [vmem:[#allocation31 + $0x48] sm:$0xff]
    %v4012 = vld [vmem:[#allocation31 + $0x50] sm:$0xff]
    %v4013 = vld [vmem:[#allocation31 + $0x58] sm:$0xff]
    %v4014 = vld [vmem:[#allocation31 + $0x60] sm:$0xff]
    %v4015 = vld [vmem:[#allocation31 + $0x68] sm:$0xff]
    %v4016 = vld [vmem:[#allocation31 + $0x70] sm:$0xff]
    %v4017 = vld [vmem:[#allocation31 + $0x78] sm:$0xff]
    %v4018 = vld [vmem:[#allocation31 + $0x80] sm:$0xff]
    %v4019 = vld [vmem:[#allocation31 + $0x88] sm:$0xff]
    %v4020 = vld [vmem:[#allocation31 + $0x90] sm:$0xff]
    %v4021 = vld [vmem:[#allocation31 + $0x98] sm:$0xff]
    %v4022 = vld [vmem:[#allocation31 + $0xa0] sm:$0xff]
    %v4023 = vld [vmem:[#allocation31 + $0xa8] sm:$0xff]
    %v4024 = vld [vmem:[#allocation31 + $0xb0] sm:$0xff]
    %v4025 = vld [vmem:[#allocation31 + $0xb8] sm:$0xff]
    %v4026 = vld [vmem:[#allocation31 + $0xc0] sm:$0xff]
    %v4027 = vld [vmem:[#allocation31 + $0xc8] sm:$0xff]
    %v4028 = vld [vmem:[#allocation31 + $0xd0] sm:$0xff]
    %v4029 = vld [vmem:[#allocation31 + $0xd8] sm:$0xff]
    %v4030 = vld [vmem:[#allocation31 + $0xe0] sm:$0xff]
    %v4031 = vld [vmem:[#allocation31 + $0xe8] sm:$0xff]
    %v4032 = vld [vmem:[#allocation31 + $0xf0] sm:$0xff]
    %v4033 = vld [vmem:[#allocation31 + $0xf8] sm:$0xff]
    %v4034 = vld [vmem:[#allocation31 + $0x100] sm:$0xff]
    %v4035 = vld [vmem:[#allocation31 + $0x108] sm:$0xff]
    %v4036 = vld [vmem:[#allocation31 + $0x110] sm:$0xff]
    %v4037 = vld [vmem:[#allocation31 + $0x118] sm:$0xff]
    %v4038 = vld [vmem:[#allocation31 + $0x120] sm:$0xff]
    %v4039 = vld [vmem:[#allocation31 + $0x128] sm:$0xff]
    %v4040 = vld [vmem:[#allocation31 + $0x130] sm:$0xff]
    %v4041 = vld [vmem:[#allocation31 + $0x138] sm:$0xff]
    %v4042 = vld [vmem:[#allocation31 + $0x140] sm:$0xff]
    %v4043 = vld [vmem:[#allocation31 + $0x148] sm:$0xff]
    %v4044 = vld [vmem:[#allocation31 + $0x150] sm:$0xff]
    %v4045 = vld [vmem:[#allocation31 + $0x158] sm:$0xff]
    %v4046 = vld [vmem:[#allocation31 + $0x160] sm:$0xff]
    %v4047 = vld [vmem:[#allocation31 + $0x168] sm:$0xff]
    %v4048 = vld [vmem:[#allocation31 + $0x170] sm:$0xff]
    %v4049 = vld [vmem:[#allocation31 + $0x178] sm:$0xff]
    %v4050 = vld [vmem:[#allocation31 + $0x180] sm:$0xff]
    %v4051 = vld [vmem:[#allocation31 + $0x188] sm:$0xff]
    %v4052 = vld [vmem:[#allocation31 + $0x190] sm:$0xff]
    %v4053 = vld [vmem:[#allocation31 + $0x198] sm:$0xff]
    %v4054 = vld [vmem:[#allocation31 + $0x1a0] sm:$0xff]
    %v4055 = vld [vmem:[#allocation31 + $0x1a8] sm:$0xff]
    %v4056 = vld [vmem:[#allocation31 + $0x1b0] sm:$0xff]
    %v4057 = vld [vmem:[#allocation31 + $0x1b8] sm:$0xff]
    %v4058 = vld [vmem:[#allocation31 + $0x1c0] sm:$0xff]
    %v4059 = vld [vmem:[#allocation31 + $0x1c8] sm:$0xff]
    %v4060 = vld [vmem:[#allocation31 + $0x1d0] sm:$0xff]
    %v4061 = vld [vmem:[#allocation31 + $0x1d8] sm:$0xff]
    %v4062 = vld [vmem:[#allocation31 + $0x1e0] sm:$0xff]
    %v4063 = vld [vmem:[#allocation31 + $0x1e8] sm:$0xff]
    %v4064 = vld [vmem:[#allocation31 + $0x1f0] sm:$0xff]
    %v4065 = vld [vmem:[#allocation31 + $0x1f8] sm:$0xff]
    %v4066 = vld [vmem:[#allocation31 + $0x200] sm:$0xff]
    %v4067 = vld [vmem:[#allocation31 + $0x208] sm:$0xff]
    %v4068 = vld [vmem:[#allocation31 + $0x210] sm:$0xff]
    %v4069 = vld [vmem:[#allocation31 + $0x218] sm:$0xff]
    %v4070 = vld [vmem:[#allocation31 + $0x220] sm:$0xff]
    %v4071 = vld [vmem:[#allocation31 + $0x228] sm:$0xff]
    %v4072 = vld [vmem:[#allocation31 + $0x230] sm:$0xff]
    %v4073 = vld [vmem:[#allocation31 + $0x238] sm:$0xff]
    %v4074 = vld [vmem:[#allocation31 + $0x240] sm:$0xff]
    %v4075 = vld [vmem:[#allocation31 + $0x248] sm:$0xff]
    %v4076 = vld [vmem:[#allocation31 + $0x250] sm:$0xff]
    %v4077 = vld [vmem:[#allocation31 + $0x258] sm:$0xff]
    %v4078 = vld [vmem:[#allocation31 + $0x260] sm:$0xff]
    %v4079 = vld [vmem:[#allocation31 + $0x268] sm:$0xff]
    %v4080 = vld [vmem:[#allocation31 + $0x270] sm:$0xff]
    %v4081 = vld [vmem:[#allocation31 + $0x278] sm:$0xff]
    %v4082 = vld [vmem:[#allocation31 + $0x280] sm:$0xff]
    %v4083 = vld [vmem:[#allocation31 + $0x288] sm:$0xff]
    %v4084 = vld [vmem:[#allocation31 + $0x290] sm:$0xff]
    %v4085 = vld [vmem:[#allocation31 + $0x298] sm:$0xff]
    %v4086 = vld [vmem:[#allocation31 + $0x2a0] sm:$0xff]
    %v4087 = vld [vmem:[#allocation31 + $0x2a8] sm:$0xff]
    %v4088 = vld [vmem:[#allocation31 + $0x2b0] sm:$0xff]
    %v4089 = vld [vmem:[#allocation31 + $0x2b8] sm:$0xff]
    %v4090 = vld [vmem:[#allocation31 + $0x2c0] sm:$0xff]
    %v4091 = vld [vmem:[#allocation31 + $0x2c8] sm:$0xff]
    %v4092 = vld [vmem:[#allocation31 + $0x2d0] sm:$0xff]
    %v4093 = vld [vmem:[#allocation31 + $0x2d8] sm:$0xff]
    %v4094 = vld [vmem:[#allocation31 + $0x2e0] sm:$0xff]
    %v4095 = vld [vmem:[#allocation31 + $0x2e8] sm:$0xff]
    %v4096 = vld [vmem:[#allocation31 + $0x2f0] sm:$0xff]
    %v4097 = vld [vmem:[#allocation31 + $0x2f8] sm:$0xff]
    %v4098 = vld [vmem:[#allocation31 + $0x300] sm:$0xff]
    %v4099 = vld [vmem:[#allocation31 + $0x308] sm:$0xff]
    %v4100 = vld [vmem:[#allocation31 + $0x310] sm:$0xff]
    %v4101 = vld [vmem:[#allocation31 + $0x318] sm:$0xff]
    %v4102 = vld [vmem:[#allocation31 + $0x320] sm:$0xff]
    %v4103 = vld [vmem:[#allocation31 + $0x328] sm:$0xff]
    %v4104 = vld [vmem:[#allocation31 + $0x330] sm:$0xff]
    %v4105 = vld [vmem:[#allocation31 + $0x338] sm:$0xff]
    %v4106 = vld [vmem:[#allocation31 + $0x340] sm:$0xff]
    %v4107 = vld [vmem:[#allocation31 + $0x348] sm:$0xff]
    %v4108 = vld [vmem:[#allocation31 + $0x350] sm:$0xff]
    %v4109 = vld [vmem:[#allocation31 + $0x358] sm:$0xff]
    %v4110 = vld [vmem:[#allocation31 + $0x360] sm:$0xff]
    %v4111 = vld [vmem:[#allocation31 + $0x368] sm:$0xff]
    %v4112 = vld [vmem:[#allocation31 + $0x370] sm:$0xff]
    %v4113 = vld [vmem:[#allocation31 + $0x378] sm:$0xff]
    %v4114 = vld [vmem:[#allocation31 + $0x380] sm:$0xff]
    %v4115 = vld [vmem:[#allocation31 + $0x388] sm:$0xff]
    %v4116 = vld [vmem:[#allocation31 + $0x390] sm:$0xff]
    %v4117 = vld [vmem:[#allocation31 + $0x398] sm:$0xff]
    %v4118 = vld [vmem:[#allocation31 + $0x3a0] sm:$0xff]
    %v4119 = vld [vmem:[#allocation31 + $0x3a8] sm:$0xff]
    %v4120 = vld [vmem:[#allocation31 + $0x3b0] sm:$0xff]
    %v4121 = vld [vmem:[#allocation31 + $0x3b8] sm:$0xff]
    %v4122 = vld [vmem:[#allocation31 + $0x3c0] sm:$0xff]
    %v4123 = vld [vmem:[#allocation31 + $0x3c8] sm:$0xff]
    %v4124 = vld [vmem:[#allocation31 + $0x3d0] sm:$0xff]
    %v4125 = vld [vmem:[#allocation31 + $0x3d8] sm:$0xff]
    %v4126 = vld [vmem:[#allocation31 + $0x3e0] sm:$0xff]
    %v4127 = vld [vmem:[#allocation31 + $0x3e8] sm:$0xff]
    %v4128 = vld [vmem:[#allocation31 + $0x3f0] sm:$0xff]
    %v4129 = vld [vmem:[#allocation31 + $0x3f8] sm:$0xff]
    %v4130 = vld [vmem:[#allocation31 + $0x400] sm:$0xff]
    %v4131 = vld [vmem:[#allocation31 + $0x408] sm:$0xff]
    %v4132 = vld [vmem:[#allocation31 + $0x410] sm:$0xff]
    %v4133 = vld [vmem:[#allocation31 + $0x418] sm:$0xff]
    %v4134 = vld [vmem:[#allocation31 + $0x420] sm:$0xff]
    %v4135 = vld [vmem:[#allocation31 + $0x428] sm:$0xff]
    %v4136 = vld [vmem:[#allocation31 + $0x430] sm:$0xff]
    %v4137 = vld [vmem:[#allocation31 + $0x438] sm:$0xff]
    %v4138 = vld [vmem:[#allocation31 + $0x440] sm:$0xff]
    %v4139 = vld [vmem:[#allocation31 + $0x448] sm:$0xff]
    %v4140 = vld [vmem:[#allocation31 + $0x450] sm:$0xff]
    %v4141 = vld [vmem:[#allocation31 + $0x458] sm:$0xff]
    %v4142 = vld [vmem:[#allocation31 + $0x460] sm:$0xff]
    %v4143 = vld [vmem:[#allocation31 + $0x468] sm:$0xff]
    %v4144 = vld [vmem:[#allocation31 + $0x470] sm:$0xff]
    %v4145 = vld [vmem:[#allocation31 + $0x478] sm:$0xff]
    %v4146 = vld [vmem:[#allocation31 + $0x480] sm:$0xff]
    %v4147 = vld [vmem:[#allocation31 + $0x488] sm:$0xff]
    %v4148 = vld [vmem:[#allocation31 + $0x490] sm:$0xff]
    %v4149 = vld [vmem:[#allocation31 + $0x498] sm:$0xff]
    %v4150 = vld [vmem:[#allocation31 + $0x4a0] sm:$0xff]
    %v4151 = vld [vmem:[#allocation31 + $0x4a8] sm:$0xff]
    %v4152 = vld [vmem:[#allocation31 + $0x4b0] sm:$0xff]
    %v4153 = vld [vmem:[#allocation31 + $0x4b8] sm:$0xff]
    %v4154 = vld [vmem:[#allocation31 + $0x4c0] sm:$0xff]
    %v4155 = vld [vmem:[#allocation31 + $0x4c8] sm:$0xff]
    %v4156 = vld [vmem:[#allocation31 + $0x4d0] sm:$0xff]
    %v4157 = vld [vmem:[#allocation31 + $0x4d8] sm:$0xff]
    %v4158 = vld [vmem:[#allocation31 + $0x4e0] sm:$0xff]
    %v4159 = vld [vmem:[#allocation31 + $0x4e8] sm:$0xff]
    %v4160 = vld [vmem:[#allocation31 + $0x4f0] sm:$0xff]
    %v4161 = vld [vmem:[#allocation31 + $0x4f8] sm:$0xff]
    %v4162 = vld [vmem:[#allocation31 + $0x500] sm:$0xff]
    %v4163 = vld [vmem:[#allocation31 + $0x508] sm:$0xff]
    %v4164 = vld [vmem:[#allocation31 + $0x510] sm:$0xff]
    %v4165 = vld [vmem:[#allocation31 + $0x518] sm:$0xff]
    %v4166 = vld [vmem:[#allocation31 + $0x520] sm:$0xff]
    %v4167 = vld [vmem:[#allocation31 + $0x528] sm:$0xff]
    %v4168 = vld [vmem:[#allocation31 + $0x530] sm:$0xff]
    %v4169 = vld [vmem:[#allocation31 + $0x538] sm:$0xff]
    %v4170 = vld [vmem:[#allocation31 + $0x540] sm:$0xff]
    %v4171 = vld [vmem:[#allocation31 + $0x548] sm:$0xff]
    %v4172 = vld [vmem:[#allocation31 + $0x550] sm:$0xff]
    %v4173 = vld [vmem:[#allocation31 + $0x558] sm:$0xff]
    %v4174 = vld [vmem:[#allocation31 + $0x560] sm:$0xff]
    %v4175 = vld [vmem:[#allocation31 + $0x568] sm:$0xff]
    %v4176 = vld [vmem:[#allocation31 + $0x570] sm:$0xff]
    %v4177 = vld [vmem:[#allocation31 + $0x578] sm:$0xff]
    %v4178 = vld [vmem:[#allocation31 + $0x580] sm:$0xff]
    %v4179 = vld [vmem:[#allocation31 + $0x588] sm:$0xff]
    %v4180 = vld [vmem:[#allocation31 + $0x590] sm:$0xff]
    %v4181 = vld [vmem:[#allocation31 + $0x598] sm:$0xff]
    %v4182 = vld [vmem:[#allocation31 + $0x5a0] sm:$0xff]
    %v4183 = vld [vmem:[#allocation31 + $0x5a8] sm:$0xff]
    %v4184 = vld [vmem:[#allocation31 + $0x5b0] sm:$0xff]
    %v4185 = vld [vmem:[#allocation31 + $0x5b8] sm:$0xff]
    %v4186 = vld [vmem:[#allocation31 + $0x5c0] sm:$0xff]
    %v4187 = vld [vmem:[#allocation31 + $0x5c8] sm:$0xff]
    %v4188 = vld [vmem:[#allocation31 + $0x5d0] sm:$0xff]
    %v4189 = vld [vmem:[#allocation31 + $0x5d8] sm:$0xff]
    %v4190 = vld [vmem:[#allocation31 + $0x5e0] sm:$0xff]
    %v4191 = vld [vmem:[#allocation31 + $0x5e8] sm:$0xff]
    %v4192 = vld [vmem:[#allocation31 + $0x5f0] sm:$0xff]
    %v4193 = vld [vmem:[#allocation31 + $0x5f8] sm:$0xff]
    %v4194 = vld [vmem:[#allocation31 + $0x600] sm:$0xff]
    %v4195 = vld [vmem:[#allocation31 + $0x608] sm:$0xff]
    %v4196 = vld [vmem:[#allocation31 + $0x610] sm:$0xff]
    %v4197 = vld [vmem:[#allocation31 + $0x618] sm:$0xff]
    %v4198 = vld [vmem:[#allocation31 + $0x620] sm:$0xff]
    %v4199 = vld [vmem:[#allocation31 + $0x628] sm:$0xff]
    %v4200 = vld [vmem:[#allocation31 + $0x630] sm:$0xff]
    %v4201 = vld [vmem:[#allocation31 + $0x638] sm:$0xff]
    %v4202 = vld [vmem:[#allocation31 + $0x640] sm:$0xff]
    %v4203 = vld [vmem:[#allocation31 + $0x648] sm:$0xff]
    %v4204 = vld [vmem:[#allocation31 + $0x650] sm:$0xff]
    %v4205 = vld [vmem:[#allocation31 + $0x658] sm:$0xff]
    %v4206 = vld [vmem:[#allocation31 + $0x660] sm:$0xff]
    %v4207 = vld [vmem:[#allocation31 + $0x668] sm:$0xff]
    %v4208 = vld [vmem:[#allocation31 + $0x670] sm:$0xff]
    %v4209 = vld [vmem:[#allocation31 + $0x678] sm:$0xff]
    %v4210 = vld [vmem:[#allocation31 + $0x680] sm:$0xff]
    %v4211 = vld [vmem:[#allocation31 + $0x688] sm:$0xff]
    %v4212 = vld [vmem:[#allocation31 + $0x690] sm:$0xff]
    %v4213 = vld [vmem:[#allocation31 + $0x698] sm:$0xff]
    %v4214 = vld [vmem:[#allocation31 + $0x6a0] sm:$0xff]
    %v4215 = vld [vmem:[#allocation31 + $0x6a8] sm:$0xff]
    %v4216 = vld [vmem:[#allocation31 + $0x6b0] sm:$0xff]
    %v4217 = vld [vmem:[#allocation31 + $0x6b8] sm:$0xff]
    %v4218 = vld [vmem:[#allocation31 + $0x6c0] sm:$0xff]
    %v4219 = vld [vmem:[#allocation31 + $0x6c8] sm:$0xff]
    %v4220 = vld [vmem:[#allocation31 + $0x6d0] sm:$0xff]
    %v4221 = vld [vmem:[#allocation31 + $0x6d8] sm:$0xff]
    %v4222 = vld [vmem:[#allocation31 + $0x6e0] sm:$0xff]
    %v4223 = vld [vmem:[#allocation31 + $0x6e8] sm:$0xff]
    %v4224 = vld [vmem:[#allocation31 + $0x6f0] sm:$0xff]
    %v4225 = vld [vmem:[#allocation31 + $0x6f8] sm:$0xff]
    %v4226 = vld [vmem:[#allocation31 + $0x700] sm:$0xff]
    %v4227 = vld [vmem:[#allocation31 + $0x708] sm:$0xff]
    %v4228 = vld [vmem:[#allocation31 + $0x710] sm:$0xff]
    %v4229 = vld [vmem:[#allocation31 + $0x718] sm:$0xff]
    %v4230 = vld [vmem:[#allocation31 + $0x720] sm:$0xff]
    %v4231 = vld [vmem:[#allocation31 + $0x728] sm:$0xff]
    %v4232 = vld [vmem:[#allocation31 + $0x730] sm:$0xff]
    %v4233 = vld [vmem:[#allocation31 + $0x738] sm:$0xff]
    %v4234 = vld [vmem:[#allocation31 + $0x740] sm:$0xff]
    %v4235 = vld [vmem:[#allocation31 + $0x748] sm:$0xff]
    %v4236 = vld [vmem:[#allocation31 + $0x750] sm:$0xff]
    %v4237 = vld [vmem:[#allocation31 + $0x758] sm:$0xff]
    %v4238 = vld [vmem:[#allocation31 + $0x760] sm:$0xff]
    %v4239 = vld [vmem:[#allocation31 + $0x768] sm:$0xff]
    %v4240 = vld [vmem:[#allocation31 + $0x770] sm:$0xff]
    %v4241 = vld [vmem:[#allocation31 + $0x778] sm:$0xff]
    %v4242 = vld [vmem:[#allocation31 + $0x780] sm:$0xff]
    %v4243 = vld [vmem:[#allocation31 + $0x788] sm:$0xff]
    %v4244 = vld [vmem:[#allocation31 + $0x790] sm:$0xff]
    %v4245 = vld [vmem:[#allocation31 + $0x798] sm:$0xff]
    %v4246 = vld [vmem:[#allocation31 + $0x7a0] sm:$0xff]
    %v4247 = vld [vmem:[#allocation31 + $0x7a8] sm:$0xff]
    %v4248 = vld [vmem:[#allocation31 + $0x7b0] sm:$0xff]
    %v4249 = vld [vmem:[#allocation31 + $0x7b8] sm:$0xff]
    %v4250 = vld [vmem:[#allocation31 + $0x7c0] sm:$0xff]
    %v4251 = vld [vmem:[#allocation31 + $0x7c8] sm:$0xff]
    %v4252 = vld [vmem:[#allocation31 + $0x7d0] sm:$0xff]
    %v4253 = vld [vmem:[#allocation31 + $0x7d8] sm:$0xff]
    %v4254 = vld [vmem:[#allocation31 + $0x7e0] sm:$0xff]
    %v4255 = vld [vmem:[#allocation31 + $0x7e8] sm:$0xff]
    %v4256 = vld [vmem:[#allocation31 + $0x7f0] sm:$0xff]
    %v4257 = vld [vmem:[#allocation31 + $0x7f8] sm:$0xff]
    %4258 = vmatpush.msra.mxu0 %v4122
    %4259 = vmatpush.msra.mxu0 %v4114
    %4260 = vmatpush.msra.mxu0 %v4106
    %4261 = vmatpush.msra.mxu0 %v4098
    %4262 = vmatpush.msra.mxu0 %v4090
    %4263 = vmatpush.msra.mxu0 %v4082
    %4264 = vmatpush.msra.mxu0 %v4074
    %4265 = vmatpush.msra.mxu0 %v4066
    %4266 = vmatpush.msra.mxu0 %v4058
    %4267 = vmatpush.msra.mxu0 %v4050
    %4268 = vmatpush.msra.mxu0 %v4042
    %4269 = vmatpush.msra.mxu0 %v4034
    %4270 = vmatpush.msra.mxu0 %v4026
    %4271 = vmatpush.msra.mxu0 %v4018
    %4272 = vmatpush.msra.mxu0 %v4010
    %4273 = vmatpush.msra.mxu0 %v4002
    %4274 = vmatmul.f32.gmra.mxu0 0.0
    %v4275 = vpop.f32.mrf.mxu0
    %v4276 = vadd.f32 0.0, %v4275
    %4277 = vdwg.mxu0
    %4278 = vmatpush.msra.mxu0 %v4250
    %4279 = vmatpush.msra.mxu0 %v4242
    %4280 = vmatpush.msra.mxu0 %v4234
    %4281 = vmatpush.msra.mxu0 %v4226
    %4282 = vmatpush.msra.mxu0 %v4218
    %4283 = vmatpush.msra.mxu0 %v4210
    %4284 = vmatpush.msra.mxu0 %v4202
    %4285 = vmatpush.msra.mxu0 %v4194
    %4286 = vmatpush.msra.mxu0 %v4186
    %4287 = vmatpush.msra.mxu0 %v4178
    %4288 = vmatpush.msra.mxu0 %v4170
    %4289 = vmatpush.msra.mxu0 %v4162
    %4290 = vmatpush.msra.mxu0 %v4154
    %4291 = vmatpush.msra.mxu0 %v4146
    %4292 = vmatpush.msra.mxu0 %v4138
    %4293 = vmatpush.msra.mxu0 %v4130
    %4294 = vmatmul.f32.gmra.mxu0 0.0
    %v4295 = vpop.f32.mrf.mxu0
    %v4296 = vadd.f32 %v4276, %v4295
    %4297 = vdwg.mxu0
    %4298 = vmatpush.msra.mxu0 %v4123
    %4299 = vmatpush.msra.mxu0 %v4115
    %4300 = vmatpush.msra.mxu0 %v4107
    %4301 = vmatpush.msra.mxu0 %v4099
    %4302 = vmatpush.msra.mxu0 %v4091
    %4303 = vmatpush.msra.mxu0 %v4083
    %4304 = vmatpush.msra.mxu0 %v4075
    %4305 = vmatpush.msra.mxu0 %v4067
    %4306 = vmatpush.msra.mxu0 %v4059
    %4307 = vmatpush.msra.mxu0 %v4051
    %4308 = vmatpush.msra.mxu0 %v4043
    %4309 = vmatpush.msra.mxu0 %v4035
    %4310 = vmatpush.msra.mxu0 %v4027
    %4311 = vmatpush.msra.mxu0 %v4019
    %4312 = vmatpush.msra.mxu0 %v4011
    %4313 = vmatpush.msra.mxu0 %v4003
    %4314 = vmatmul.f32.gmra.mxu0 0.0
    %v4315 = vpop.f32.mrf.mxu0
    %v4316 = vadd.f32 0.0, %v4315
    %4317 = vdwg.mxu0
    %4318 = vmatpush.msra.mxu0 %v4251
    %4319 = vmatpush.msra.mxu0 %v4243
    %4320 = vmatpush.msra.mxu0 %v4235
    %4321 = vmatpush.msra.mxu0 %v4227
    %4322 = vmatpush.msra.mxu0 %v4219
    %4323 = vmatpush.msra.mxu0 %v4211
    %4324 = vmatpush.msra.mxu0 %v4203
    %4325 = vmatpush.msra.mxu0 %v4195
    %4326 = vmatpush.msra.mxu0 %v4187
    %4327 = vmatpush.msra.mxu0 %v4179
    %4328 = vmatpush.msra.mxu0 %v4171
    %4329 = vmatpush.msra.mxu0 %v4163
    %4330 = vmatpush.msra.mxu0 %v4155
    %4331 = vmatpush.msra.mxu0 %v4147
    %4332 = vmatpush.msra.mxu0 %v4139
    %4333 = vmatpush.msra.mxu0 %v4131
    %4334 = vmatmul.f32.gmra.mxu0 0.0
    %v4335 = vpop.f32.mrf.mxu0
    %v4336 = vadd.f32 %v4316, %v4335
    %4337 = vdwg.mxu0
    %4338 = vmatpush.msra.mxu0 %v4124
    %4339 = vmatpush.msra.mxu0 %v4116
    %4340 = vmatpush.msra.mxu0 %v4108
    %4341 = vmatpush.msra.mxu0 %v4100
    %4342 = vmatpush.msra.mxu0 %v4092
    %4343 = vmatpush.msra.mxu0 %v4084
    %4344 = vmatpush.msra.mxu0 %v4076
    %4345 = vmatpush.msra.mxu0 %v4068
    %4346 = vmatpush.msra.mxu0 %v4060
    %4347 = vmatpush.msra.mxu0 %v4052
    %4348 = vmatpush.msra.mxu0 %v4044
    %4349 = vmatpush.msra.mxu0 %v4036
    %4350 = vmatpush.msra.mxu0 %v4028
    %4351 = vmatpush.msra.mxu0 %v4020
    %4352 = vmatpush.msra.mxu0 %v4012
    %4353 = vmatpush.msra.mxu0 %v4004
    %4354 = vmatmul.f32.gmra.mxu0 0.0
    %v4355 = vpop.f32.mrf.mxu0
    %v4356 = vadd.f32 0.0, %v4355
    %4357 = vdwg.mxu0
    %4358 = vmatpush.msra.mxu0 %v4252
    %4359 = vmatpush.msra.mxu0 %v4244
    %4360 = vmatpush.msra.mxu0 %v4236
    %4361 = vmatpush.msra.mxu0 %v4228
    %4362 = vmatpush.msra.mxu0 %v4220
    %4363 = vmatpush.msra.mxu0 %v4212
    %4364 = vmatpush.msra.mxu0 %v4204
    %4365 = vmatpush.msra.mxu0 %v4196
    %4366 = vmatpush.msra.mxu0 %v4188
    %4367 = vmatpush.msra.mxu0 %v4180
    %4368 = vmatpush.msra.mxu0 %v4172
    %4369 = vmatpush.msra.mxu0 %v4164
    %4370 = vmatpush.msra.mxu0 %v4156
    %4371 = vmatpush.msra.mxu0 %v4148
    %4372 = vmatpush.msra.mxu0 %v4140
    %4373 = vmatpush.msra.mxu0 %v4132
    %4374 = vmatmul.f32.gmra.mxu0 0.0
    %v4375 = vpop.f32.mrf.mxu0
    %v4376 = vadd.f32 %v4356, %v4375
    %4377 = vdwg.mxu0
    %4378 = vmatpush.msra.mxu0 %v4125
    %4379 = vmatpush.msra.mxu0 %v4117
    %4380 = vmatpush.msra.mxu0 %v4109
    %4381 = vmatpush.msra.mxu0 %v4101
    %4382 = vmatpush.msra.mxu0 %v4093
    %4383 = vmatpush.msra.mxu0 %v4085
    %4384 = vmatpush.msra.mxu0 %v4077
    %4385 = vmatpush.msra.mxu0 %v4069
    %4386 = vmatpush.msra.mxu0 %v4061
    %4387 = vmatpush.msra.mxu0 %v4053
    %4388 = vmatpush.msra.mxu0 %v4045
    %4389 = vmatpush.msra.mxu0 %v4037
    %4390 = vmatpush.msra.mxu0 %v4029
    %4391 = vmatpush.msra.mxu0 %v4021
    %4392 = vmatpush.msra.mxu0 %v4013
    %4393 = vmatpush.msra.mxu0 %v4005
    %4394 = vmatmul.f32.gmra.mxu0 0.0
    %v4395 = vpop.f32.mrf.mxu0
    %v4396 = vadd.f32 0.0, %v4395
    %4397 = vdwg.mxu0
    %4398 = vmatpush.msra.mxu0 %v4253
    %4399 = vmatpush.msra.mxu0 %v4245
    %4400 = vmatpush.msra.mxu0 %v4237
    %4401 = vmatpush.msra.mxu0 %v4229
    %4402 = vmatpush.msra.mxu0 %v4221
    %4403 = vmatpush.msra.mxu0 %v4213
    %4404 = vmatpush.msra.mxu0 %v4205
    %4405 = vmatpush.msra.mxu0 %v4197
    %4406 = vmatpush.msra.mxu0 %v4189
    %4407 = vmatpush.msra.mxu0 %v4181
    %4408 = vmatpush.msra.mxu0 %v4173
    %4409 = vmatpush.msra.mxu0 %v4165
    %4410 = vmatpush.msra.mxu0 %v4157
    %4411 = vmatpush.msra.mxu0 %v4149
    %4412 = vmatpush.msra.mxu0 %v4141
    %4413 = vmatpush.msra.mxu0 %v4133
    %4414 = vmatmul.f32.gmra.mxu0 0.0
    %v4415 = vpop.f32.mrf.mxu0
    %v4416 = vadd.f32 %v4396, %v4415
    %4417 = vdwg.mxu0
    %4418 = vmatpush.msra.mxu0 %v4126
    %4419 = vmatpush.msra.mxu0 %v4118
    %4420 = vmatpush.msra.mxu0 %v4110
    %4421 = vmatpush.msra.mxu0 %v4102
    %4422 = vmatpush.msra.mxu0 %v4094
    %4423 = vmatpush.msra.mxu0 %v4086
    %4424 = vmatpush.msra.mxu0 %v4078
    %4425 = vmatpush.msra.mxu0 %v4070
    %4426 = vmatpush.msra.mxu0 %v4062
    %4427 = vmatpush.msra.mxu0 %v4054
    %4428 = vmatpush.msra.mxu0 %v4046
    %4429 = vmatpush.msra.mxu0 %v4038
    %4430 = vmatpush.msra.mxu0 %v4030
    %4431 = vmatpush.msra.mxu0 %v4022
    %4432 = vmatpush.msra.mxu0 %v4014
    %4433 = vmatpush.msra.mxu0 %v4006
    %4434 = vmatmul.f32.gmra.mxu0 0.0
    %v4435 = vpop.f32.mrf.mxu0
    %v4436 = vadd.f32 0.0, %v4435
    %4437 = vdwg.mxu0
    %4438 = vmatpush.msra.mxu0 %v4254
    %4439 = vmatpush.msra.mxu0 %v4246
    %4440 = vmatpush.msra.mxu0 %v4238
    %4441 = vmatpush.msra.mxu0 %v4230
    %4442 = vmatpush.msra.mxu0 %v4222
    %4443 = vmatpush.msra.mxu0 %v4214
    %4444 = vmatpush.msra.mxu0 %v4206
    %4445 = vmatpush.msra.mxu0 %v4198
    %4446 = vmatpush.msra.mxu0 %v4190
    %4447 = vmatpush.msra.mxu0 %v4182
    %4448 = vmatpush.msra.mxu0 %v4174
    %4449 = vmatpush.msra.mxu0 %v4166
    %4450 = vmatpush.msra.mxu0 %v4158
    %4451 = vmatpush.msra.mxu0 %v4150
    %4452 = vmatpush.msra.mxu0 %v4142
    %4453 = vmatpush.msra.mxu0 %v4134
    %4454 = vmatmul.f32.gmra.mxu0 0.0
    %v4455 = vpop.f32.mrf.mxu0
    %v4456 = vadd.f32 %v4436, %v4455
    %4457 = vdwg.mxu0
    %4458 = vmatpush.msra.mxu0 %v4127
    %4459 = vmatpush.msra.mxu0 %v4119
    %4460 = vmatpush.msra.mxu0 %v4111
    %4461 = vmatpush.msra.mxu0 %v4103
    %4462 = vmatpush.msra.mxu0 %v4095
    %4463 = vmatpush.msra.mxu0 %v4087
    %4464 = vmatpush.msra.mxu0 %v4079
    %4465 = vmatpush.msra.mxu0 %v4071
    %4466 = vmatpush.msra.mxu0 %v4063
    %4467 = vmatpush.msra.mxu0 %v4055
    %4468 = vmatpush.msra.mxu0 %v4047
    %4469 = vmatpush.msra.mxu0 %v4039
    %4470 = vmatpush.msra.mxu0 %v4031
    %4471 = vmatpush.msra.mxu0 %v4023
    %4472 = vmatpush.msra.mxu0 %v4015
    %4473 = vmatpush.msra.mxu0 %v4007
    %4474 = vmatmul.f32.gmra.mxu0 0.0
    %v4475 = vpop.f32.mrf.mxu0
    %v4476 = vadd.f32 0.0, %v4475
    %4477 = vdwg.mxu0
    %4478 = vmatpush.msra.mxu0 %v4255
    %4479 = vmatpush.msra.mxu0 %v4247
    %4480 = vmatpush.msra.mxu0 %v4239
    %4481 = vmatpush.msra.mxu0 %v4231
    %4482 = vmatpush.msra.mxu0 %v4223
    %4483 = vmatpush.msra.mxu0 %v4215
    %4484 = vmatpush.msra.mxu0 %v4207
    %4485 = vmatpush.msra.mxu0 %v4199
    %4486 = vmatpush.msra.mxu0 %v4191
    %4487 = vmatpush.msra.mxu0 %v4183
    %4488 = vmatpush.msra.mxu0 %v4175
    %4489 = vmatpush.msra.mxu0 %v4167
    %4490 = vmatpush.msra.mxu0 %v4159
    %4491 = vmatpush.msra.mxu0 %v4151
    %4492 = vmatpush.msra.mxu0 %v4143
    %4493 = vmatpush.msra.mxu0 %v4135
    %4494 = vmatmul.f32.gmra.mxu0 0.0
    %v4495 = vpop.f32.mrf.mxu0
    %v4496 = vadd.f32 %v4476, %v4495
    %4497 = vdwg.mxu0
    %4498 = vmatpush.msra.mxu0 %v4128
    %4499 = vmatpush.msra.mxu0 %v4120
    %4500 = vmatpush.msra.mxu0 %v4112
    %4501 = vmatpush.msra.mxu0 %v4104
    %4502 = vmatpush.msra.mxu0 %v4096
    %4503 = vmatpush.msra.mxu0 %v4088
    %4504 = vmatpush.msra.mxu0 %v4080
    %4505 = vmatpush.msra.mxu0 %v4072
    %4506 = vmatpush.msra.mxu0 %v4064
    %4507 = vmatpush.msra.mxu0 %v4056
    %4508 = vmatpush.msra.mxu0 %v4048
    %4509 = vmatpush.msra.mxu0 %v4040
    %4510 = vmatpush.msra.mxu0 %v4032
    %4511 = vmatpush.msra.mxu0 %v4024
    %4512 = vmatpush.msra.mxu0 %v4016
    %4513 = vmatpush.msra.mxu0 %v4008
    %4514 = vmatmul.f32.gmra.mxu0 0.0
    %v4515 = vpop.f32.mrf.mxu0
    %v4516 = vadd.f32 0.0, %v4515
    %4517 = vdwg.mxu0
    %4518 = vmatpush.msra.mxu0 %v4256
    %4519 = vmatpush.msra.mxu0 %v4248
    %4520 = vmatpush.msra.mxu0 %v4240
    %4521 = vmatpush.msra.mxu0 %v4232
    %4522 = vmatpush.msra.mxu0 %v4224
    %4523 = vmatpush.msra.mxu0 %v4216
    %4524 = vmatpush.msra.mxu0 %v4208
    %4525 = vmatpush.msra.mxu0 %v4200
    %4526 = vmatpush.msra.mxu0 %v4192
    %4527 = vmatpush.msra.mxu0 %v4184
    %4528 = vmatpush.msra.mxu0 %v4176
    %4529 = vmatpush.msra.mxu0 %v4168
    %4530 = vmatpush.msra.mxu0 %v4160
    %4531 = vmatpush.msra.mxu0 %v4152
    %4532 = vmatpush.msra.mxu0 %v4144
    %4533 = vmatpush.msra.mxu0 %v4136
    %4534 = vmatmul.f32.gmra.mxu0 0.0
    %v4535 = vpop.f32.mrf.mxu0
    %v4536 = vadd.f32 %v4516, %v4535
    %4537 = vdwg.mxu0
    %4538 = vmatpush.msra.mxu0 %v4129
    %4539 = vmatpush.msra.mxu0 %v4121
    %4540 = vmatpush.msra.mxu0 %v4113
    %4541 = vmatpush.msra.mxu0 %v4105
    %4542 = vmatpush.msra.mxu0 %v4097
    %4543 = vmatpush.msra.mxu0 %v4089
    %4544 = vmatpush.msra.mxu0 %v4081
    %4545 = vmatpush.msra.mxu0 %v4073
    %4546 = vmatpush.msra.mxu0 %v4065
    %4547 = vmatpush.msra.mxu0 %v4057
    %4548 = vmatpush.msra.mxu0 %v4049
    %4549 = vmatpush.msra.mxu0 %v4041
    %4550 = vmatpush.msra.mxu0 %v4033
    %4551 = vmatpush.msra.mxu0 %v4025
    %4552 = vmatpush.msra.mxu0 %v4017
    %4553 = vmatpush.msra.mxu0 %v4009
    %4554 = vmatmul.f32.gmra.mxu0 0.0
    %v4555 = vpop.f32.mrf.mxu0
    %v4556 = vadd.f32 0.0, %v4555
    %4557 = vdwg.mxu0
    %4558 = vmatpush.msra.mxu0 %v4257
    %4559 = vmatpush.msra.mxu0 %v4249
    %4560 = vmatpush.msra.mxu0 %v4241
    %4561 = vmatpush.msra.mxu0 %v4233
    %4562 = vmatpush.msra.mxu0 %v4225
    %4563 = vmatpush.msra.mxu0 %v4217
    %4564 = vmatpush.msra.mxu0 %v4209
    %4565 = vmatpush.msra.mxu0 %v4201
    %4566 = vmatpush.msra.mxu0 %v4193
    %4567 = vmatpush.msra.mxu0 %v4185
    %4568 = vmatpush.msra.mxu0 %v4177
    %4569 = vmatpush.msra.mxu0 %v4169
    %4570 = vmatpush.msra.mxu0 %v4161
    %4571 = vmatpush.msra.mxu0 %v4153
    %4572 = vmatpush.msra.mxu0 %v4145
    %4573 = vmatpush.msra.mxu0 %v4137
    %4574 = vmatmul.f32.gmra.mxu0 0.0
    %v4575 = vpop.f32.mrf.mxu0
    %v4576 = vadd.f32 %v4556, %v4575
    %4577 = vdwg.mxu0
    %v4578 = vld [vmem:[#allocation2] sm:$0xff]
    %v4579 = vld [vmem:[#allocation2 + $0x8] sm:$0xff]
    %v4580 = vld [vmem:[#allocation2 + $0x10] sm:$0xff]
    %v4581 = vld [vmem:[#allocation2 + $0x18] sm:$0xff]
    %v4582 = vadd.f32 %v4296, %v4578
    %v4583 = vadd.f32 %v4336, %v4579
    %v4584 = vadd.f32 %v4376, %v4580
    %v4585 = vadd.f32 %v4416, %v4581
    %v4586 = vld [vmem:[#allocation2 + $0xe0] sm:$0xff]
    %v4587 = vld [vmem:[#allocation2 + $0xe8] sm:$0xff]
    %v4588 = vld [vmem:[#allocation2 + $0xf0] sm:$0xff]
    %v4589 = vld [vmem:[#allocation2 + $0xf8] sm:$0xff]
    %v4590 = vadd.f32 %v4456, %v4586
    %v4591 = vadd.f32 %v4496, %v4587
    %v4592 = vadd.f32 %v4536, %v4588
    %v4593 = vadd.f32 %v4576, %v4589
    %v4594 = vmul.f32 %v4582, 0.5
    %v4595 = vmul.f32 %v4583, 0.5
    %v4596 = vmul.f32 %v4584, 0.5
    %v4597 = vmul.f32 %v4590, 0.5
    %v4598 = vmul.f32 %v4591, 0.5
    %v4599 = vmul.f32 %v4592, 0.5
    %v4600 = vtanh.pop %v4594
    %v4601 = vtanh.pop %v4595
    %v4602 = vtanh.pop %v4596
    %v4603 = vtanh.pop %v4597
    %v4604 = vtanh.pop %v4598
    %v4605 = vtanh.pop %v4599
    %v4606 = vmul.f32 %v4600, 0.5
    %v4607 = vmul.f32 %v4601, 0.5
    %v4608 = vmul.f32 %v4602, 0.5
    %v4609 = vmul.f32 %v4603, 0.5
    %v4610 = vmul.f32 %v4604, 0.5
    %v4611 = vmul.f32 %v4605, 0.5
    %v4612 = vadd.f32 %v4606, 0.5
    %v4613 = vadd.f32 %v4607, 0.5
    %v4614 = vadd.f32 %v4608, 0.5
    %v4615 = vadd.f32 %v4609, 0.5
    %v4616 = vadd.f32 %v4610, 0.5
    %v4617 = vadd.f32 %v4611, 0.5
    %v4618 = vtanh.pop %v4585
    %v4619 = vtanh.pop %v4593
    %v4620 = vmul.f32 %v4613, 0.0
    %v4621 = vmul.f32 %v4616, 0.0
    %v4622 = vmul.f32 %v4612, %v4618
    %v4623 = vmul.f32 %v4615, %v4619
    %v4624 = vadd.f32 %v4620, %v4622
    %v4625 = vadd.f32 %v4621, %v4623
    %v4626 = vtanh.pop %v4624
    %v4627 = vtanh.pop %v4625
    %v4628 = vmul.f32 %v4614, %v4626
    %v4629 = vmul.f32 %v4617, %v4627
    %4630 = vst [vmem:[#allocation5] sm:$0xff] %v4628
    %4631 = vst [vmem:[#allocation6 + $0x18] sm:$0xff] %v4629
    %4632 = vmatpush.msra.mxu0 %v4122
    %4633 = vmatpush.msra.mxu0 %v4114
    %4634 = vmatpush.msra.mxu0 %v4106
    %4635 = vmatpush.msra.mxu0 %v4098
    %4636 = vmatpush.msra.mxu0 %v4090
    %4637 = vmatpush.msra.mxu0 %v4082
    %4638 = vmatpush.msra.mxu0 %v4074
    %4639 = vmatpush.msra.mxu0 %v4066
    %4640 = vmatpush.msra.mxu0 %v4058
    %4641 = vmatpush.msra.mxu0 %v4050
    %4642 = vmatpush.msra.mxu0 %v4042
    %4643 = vmatpush.msra.mxu0 %v4034
    %4644 = vmatpush.msra.mxu0 %v4026
    %4645 = vmatpush.msra.mxu0 %v4018
    %4646 = vmatpush.msra.mxu0 %v4010
    %4647 = vmatpush.msra.mxu0 %v4002
    %4648 = vmatmul.f32.gmra.mxu0 %v4628
    %v4649 = vpop.f32.mrf.mxu0
    %v4650 = vadd.f32 0.0, %v4649
    %4651 = vdwg.mxu0
    %4652 = vmatpush.msra.mxu0 %v4250
    %4653 = vmatpush.msra.mxu0 %v4242
    %4654 = vmatpush.msra.mxu0 %v4234
    %4655 = vmatpush.msra.mxu0 %v4226
    %4656 = vmatpush.msra.mxu0 %v4218
    %4657 = vmatpush.msra.mxu0 %v4210
    %4658 = vmatpush.msra.mxu0 %v4202
    %4659 = vmatpush.msra.mxu0 %v4194
    %4660 = vmatpush.msra.mxu0 %v4186
    %4661 = vmatpush.msra.mxu0 %v4178
    %4662 = vmatpush.msra.mxu0 %v4170
    %4663 = vmatpush.msra.mxu0 %v4162
    %4664 = vmatpush.msra.mxu0 %v4154
    %4665 = vmatpush.msra.mxu0 %v4146
    %4666 = vmatpush.msra.mxu0 %v4138
    %4667 = vmatpush.msra.mxu0 %v4130
    %4668 = vmatmul.f32.gmra.mxu0 %v4629
    %v4669 = vpop.f32.mrf.mxu0
    %v4670 = vadd.f32 %v4650, %v4669
    %4671 = vdwg.mxu0
    %4672 = vmatpush.msra.mxu0 %v4123
    %4673 = vmatpush.msra.mxu0 %v4115
    %4674 = vmatpush.msra.mxu0 %v4107
    %4675 = vmatpush.msra.mxu0 %v4099
    %4676 = vmatpush.msra.mxu0 %v4091
    %4677 = vmatpush.msra.mxu0 %v4083
    %4678 = vmatpush.msra.mxu0 %v4075
    %4679 = vmatpush.msra.mxu0 %v4067
    %4680 = vmatpush.msra.mxu0 %v4059
    %4681 = vmatpush.msra.mxu0 %v4051
    %4682 = vmatpush.msra.mxu0 %v4043
    %4683 = vmatpush.msra.mxu0 %v4035
    %4684 = vmatpush.msra.mxu0 %v4027
    %4685 = vmatpush.msra.mxu0 %v4019
    %4686 = vmatpush.msra.mxu0 %v4011
    %4687 = vmatpush.msra.mxu0 %v4003
    %4688 = vmatmul.f32.gmra.mxu0 %v4628
    %v4689 = vpop.f32.mrf.mxu0
    %v4690 = vadd.f32 0.0, %v4689
    %4691 = vdwg.mxu0
    %4692 = vmatpush.msra.mxu0 %v4251
    %4693 = vmatpush.msra.mxu0 %v4243
    %4694 = vmatpush.msra.mxu0 %v4235
    %4695 = vmatpush.msra.mxu0 %v4227
    %4696 = vmatpush.msra.mxu0 %v4219
    %4697 = vmatpush.msra.mxu0 %v4211
    %4698 = vmatpush.msra.mxu0 %v4203
    %4699 = vmatpush.msra.mxu0 %v4195
    %4700 = vmatpush.msra.mxu0 %v4187
    %4701 = vmatpush.msra.mxu0 %v4179
    %4702 = vmatpush.msra.mxu0 %v4171
    %4703 = vmatpush.msra.mxu0 %v4163
    %4704 = vmatpush.msra.mxu0 %v4155
    %4705 = vmatpush.msra.mxu0 %v4147
    %4706 = vmatpush.msra.mxu0 %v4139
    %4707 = vmatpush.msra.mxu0 %v4131
    %4708 = vmatmul.f32.gmra.mxu0 %v4629
    %v4709 = vpop.f32.mrf.mxu0
    %v4710 = vadd.f32 %v4690, %v4709
    %4711 = vdwg.mxu0
    %4712 = vmatpush.msra.mxu0 %v4124
    %4713 = vmatpush.msra.mxu0 %v4116
    %4714 = vmatpush.msra.mxu0 %v4108
    %4715 = vmatpush.msra.mxu0 %v4100
    %4716 = vmatpush.msra.mxu0 %v4092
    %4717 = vmatpush.msra.mxu0 %v4084
    %4718 = vmatpush.msra.mxu0 %v4076
    %4719 = vmatpush.msra.mxu0 %v4068
    %4720 = vmatpush.msra.mxu0 %v4060
    %4721 = vmatpush.msra.mxu0 %v4052
    %4722 = vmatpush.msra.mxu0 %v4044
    %4723 = vmatpush.msra.mxu0 %v4036
    %4724 = vmatpush.msra.mxu0 %v4028
    %4725 = vmatpush.msra.mxu0 %v4020
    %4726 = vmatpush.msra.mxu0 %v4012
    %4727 = vmatpush.msra.mxu0 %v4004
    %4728 = vmatmul.f32.gmra.mxu0 %v4628
    %v4729 = vpop.f32.mrf.mxu0
    %v4730 = vadd.f32 0.0, %v4729
    %4731 = vdwg.mxu0
    %4732 = vmatpush.msra.mxu0 %v4252
    %4733 = vmatpush.msra.mxu0 %v4244
    %4734 = vmatpush.msra.mxu0 %v4236
    %4735 = vmatpush.msra.mxu0 %v4228
    %4736 = vmatpush.msra.mxu0 %v4220
    %4737 = vmatpush.msra.mxu0 %v4212
    %4738 = vmatpush.msra.mxu0 %v4204
    %4739 = vmatpush.msra.mxu0 %v4196
    %4740 = vmatpush.msra.mxu0 %v4188
    %4741 = vmatpush.msra.mxu0 %v4180
    %4742 = vmatpush.msra.mxu0 %v4172
    %4743 = vmatpush.msra.mxu0 %v4164
    %4744 = vmatpush.msra.mxu0 %v4156
    %4745 = vmatpush.msra.mxu0 %v4148
    %4746 = vmatpush.msra.mxu0 %v4140
    %4747 = vmatpush.msra.mxu0 %v4132
    %4748 = vmatmul.f32.gmra.mxu0 %v4629
    %v4749 = vpop.f32.mrf.mxu0
    %v4750 = vadd.f32 %v4730, %v4749
    %4751 = vdwg.mxu0
    %4752 = vmatpush.msra.mxu0 %v4125
    %4753 = vmatpush.msra.mxu0 %v4117
    %4754 = vmatpush.msra.mxu0 %v4109
    %4755 = vmatpush.msra.mxu0 %v4101
    %4756 = vmatpush.msra.mxu0 %v4093
    %4757 = vmatpush.msra.mxu0 %v4085
    %4758 = vmatpush.msra.mxu0 %v4077
    %4759 = vmatpush.msra.mxu0 %v4069
    %4760 = vmatpush.msra.mxu0 %v4061
    %4761 = vmatpush.msra.mxu0 %v4053
    %4762 = vmatpush.msra.mxu0 %v4045
    %4763 = vmatpush.msra.mxu0 %v4037
    %4764 = vmatpush.msra.mxu0 %v4029
    %4765 = vmatpush.msra.mxu0 %v4021
    %4766 = vmatpush.msra.mxu0 %v4013
    %4767 = vmatpush.msra.mxu0 %v4005
    %4768 = vmatmul.f32.gmra.mxu0 %v4628
    %v4769 = vpop.f32.mrf.mxu0
    %v4770 = vadd.f32 0.0, %v4769
    %4771 = vdwg.mxu0
    %4772 = vmatpush.msra.mxu0 %v4253
    %4773 = vmatpush.msra.mxu0 %v4245
    %4774 = vmatpush.msra.mxu0 %v4237
    %4775 = vmatpush.msra.mxu0 %v4229
    %4776 = vmatpush.msra.mxu0 %v4221
    %4777 = vmatpush.msra.mxu0 %v4213
    %4778 = vmatpush.msra.mxu0 %v4205
    %4779 = vmatpush.msra.mxu0 %v4197
    %4780 = vmatpush.msra.mxu0 %v4189
    %4781 = vmatpush.msra.mxu0 %v4181
    %4782 = vmatpush.msra.mxu0 %v4173
    %4783 = vmatpush.msra.mxu0 %v4165
    %4784 = vmatpush.msra.mxu0 %v4157
    %4785 = vmatpush.msra.mxu0 %v4149
    %4786 = vmatpush.msra.mxu0 %v4141
    %4787 = vmatpush.msra.mxu0 %v4133
    %4788 = vmatmul.f32.gmra.mxu0 %v4629
    %v4789 = vpop.f32.mrf.mxu0
    %v4790 = vadd.f32 %v4770, %v4789
    %4791 = vdwg.mxu0
    %4792 = vmatpush.msra.mxu0 %v4126
    %4793 = vmatpush.msra.mxu0 %v4118
    %4794 = vmatpush.msra.mxu0 %v4110
    %4795 = vmatpush.msra.mxu0 %v4102
    %4796 = vmatpush.msra.mxu0 %v4094
    %4797 = vmatpush.msra.mxu0 %v4086
    %4798 = vmatpush.msra.mxu0 %v4078
    %4799 = vmatpush.msra.mxu0 %v4070
    %4800 = vmatpush.msra.mxu0 %v4062
    %4801 = vmatpush.msra.mxu0 %v4054
    %4802 = vmatpush.msra.mxu0 %v4046
    %4803 = vmatpush.msra.mxu0 %v4038
    %4804 = vmatpush.msra.mxu0 %v4030
    %4805 = vmatpush.msra.mxu0 %v4022
    %4806 = vmatpush.msra.mxu0 %v4014
    %4807 = vmatpush.msra.mxu0 %v4006
    %4808 = vmatmul.f32.gmra.mxu0 %v4628
    %v4809 = vpop.f32.mrf.mxu0
    %v4810 = vadd.f32 0.0, %v4809
    %4811 = vdwg.mxu0
    %4812 = vmatpush.msra.mxu0 %v4254
    %4813 = vmatpush.msra.mxu0 %v4246
    %4814 = vmatpush.msra.mxu0 %v4238
    %4815 = vmatpush.msra.mxu0 %v4230
    %4816 = vmatpush.msra.mxu0 %v4222
    %4817 = vmatpush.msra.mxu0 %v4214
    %4818 = vmatpush.msra.mxu0 %v4206
    %4819 = vmatpush.msra.mxu0 %v4198
    %4820 = vmatpush.msra.mxu0 %v4190
    %4821 = vmatpush.msra.mxu0 %v4182
    %4822 = vmatpush.msra.mxu0 %v4174
    %4823 = vmatpush.msra.mxu0 %v4166
    %4824 = vmatpush.msra.mxu0 %v4158
    %4825 = vmatpush.msra.mxu0 %v4150
    %4826 = vmatpush.msra.mxu0 %v4142
    %4827 = vmatpush.msra.mxu0 %v4134
    %4828 = vmatmul.f32.gmra.mxu0 %v4629
    %v4829 = vpop.f32.mrf.mxu0
    %v4830 = vadd.f32 %v4810, %v4829
    %4831 = vdwg.mxu0
    %4832 = vmatpush.msra.mxu0 %v4127
    %4833 = vmatpush.msra.mxu0 %v4119
    %4834 = vmatpush.msra.mxu0 %v4111
    %4835 = vmatpush.msra.mxu0 %v4103
    %4836 = vmatpush.msra.mxu0 %v4095
    %4837 = vmatpush.msra.mxu0 %v4087
    %4838 = vmatpush.msra.mxu0 %v4079
    %4839 = vmatpush.msra.mxu0 %v4071
    %4840 = vmatpush.msra.mxu0 %v4063
    %4841 = vmatpush.msra.mxu0 %v4055
    %4842 = vmatpush.msra.mxu0 %v4047
    %4843 = vmatpush.msra.mxu0 %v4039
    %4844 = vmatpush.msra.mxu0 %v4031
    %4845 = vmatpush.msra.mxu0 %v4023
    %4846 = vmatpush.msra.mxu0 %v4015
    %4847 = vmatpush.msra.mxu0 %v4007
    %4848 = vmatmul.f32.gmra.mxu0 %v4628
    %v4849 = vpop.f32.mrf.mxu0
    %v4850 = vadd.f32 0.0, %v4849
    %4851 = vdwg.mxu0
    %4852 = vmatpush.msra.mxu0 %v4255
    %4853 = vmatpush.msra.mxu0 %v4247
    %4854 = vmatpush.msra.mxu0 %v4239
    %4855 = vmatpush.msra.mxu0 %v4231
    %4856 = vmatpush.msra.mxu0 %v4223
    %4857 = vmatpush.msra.mxu0 %v4215
    %4858 = vmatpush.msra.mxu0 %v4207
    %4859 = vmatpush.msra.mxu0 %v4199
    %4860 = vmatpush.msra.mxu0 %v4191
    %4861 = vmatpush.msra.mxu0 %v4183
    %4862 = vmatpush.msra.mxu0 %v4175
    %4863 = vmatpush.msra.mxu0 %v4167
    %4864 = vmatpush.msra.mxu0 %v4159
    %4865 = vmatpush.msra.mxu0 %v4151
    %4866 = vmatpush.msra.mxu0 %v4143
    %4867 = vmatpush.msra.mxu0 %v4135
    %4868 = vmatmul.f32.gmra.mxu0 %v4629
    %v4869 = vpop.f32.mrf.mxu0
    %v4870 = vadd.f32 %v4850, %v4869
    %4871 = vdwg.mxu0
    %4872 = vmatpush.msra.mxu0 %v4128
    %4873 = vmatpush.msra.mxu0 %v4120
    %4874 = vmatpush.msra.mxu0 %v4112
    %4875 = vmatpush.msra.mxu0 %v4104
    %4876 = vmatpush.msra.mxu0 %v4096
    %4877 = vmatpush.msra.mxu0 %v4088
    %4878 = vmatpush.msra.mxu0 %v4080
    %4879 = vmatpush.msra.mxu0 %v4072
    %4880 = vmatpush.msra.mxu0 %v4064
    %4881 = vmatpush.msra.mxu0 %v4056
    %4882 = vmatpush.msra.mxu0 %v4048
    %4883 = vmatpush.msra.mxu0 %v4040
    %4884 = vmatpush.msra.mxu0 %v4032
    %4885 = vmatpush.msra.mxu0 %v4024
    %4886 = vmatpush.msra.mxu0 %v4016
    %4887 = vmatpush.msra.mxu0 %v4008
    %4888 = vmatmul.f32.gmra.mxu0 %v4628
    %v4889 = vpop.f32.mrf.mxu0
    %v4890 = vadd.f32 0.0, %v4889
    %4891 = vdwg.mxu0
    %4892 = vmatpush.msra.mxu0 %v4256
    %4893 = vmatpush.msra.mxu0 %v4248
    %4894 = vmatpush.msra.mxu0 %v4240
    %4895 = vmatpush.msra.mxu0 %v4232
    %4896 = vmatpush.msra.mxu0 %v4224
    %4897 = vmatpush.msra.mxu0 %v4216
    %4898 = vmatpush.msra.mxu0 %v4208
    %4899 = vmatpush.msra.mxu0 %v4200
    %4900 = vmatpush.msra.mxu0 %v4192
    %4901 = vmatpush.msra.mxu0 %v4184
    %4902 = vmatpush.msra.mxu0 %v4176
    %4903 = vmatpush.msra.mxu0 %v4168
    %4904 = vmatpush.msra.mxu0 %v4160
    %4905 = vmatpush.msra.mxu0 %v4152
    %4906 = vmatpush.msra.mxu0 %v4144
    %4907 = vmatpush.msra.mxu0 %v4136
    %4908 = vmatmul.f32.gmra.mxu0 %v4629
    %v4909 = vpop.f32.mrf.mxu0
    %v4910 = vadd.f32 %v4890, %v4909
    %4911 = vdwg.mxu0
    %4912 = vmatpush.msra.mxu0 %v4129
    %4913 = vmatpush.msra.mxu0 %v4121
    %4914 = vmatpush.msra.mxu0 %v4113
    %4915 = vmatpush.msra.mxu0 %v4105
    %4916 = vmatpush.msra.mxu0 %v4097
    %4917 = vmatpush.msra.mxu0 %v4089
    %4918 = vmatpush.msra.mxu0 %v4081
    %4919 = vmatpush.msra.mxu0 %v4073
    %4920 = vmatpush.msra.mxu0 %v4065
    %4921 = vmatpush.msra.mxu0 %v4057
    %4922 = vmatpush.msra.mxu0 %v4049
    %4923 = vmatpush.msra.mxu0 %v4041
    %4924 = vmatpush.msra.mxu0 %v4033
    %4925 = vmatpush.msra.mxu0 %v4025
    %4926 = vmatpush.msra.mxu0 %v4017
    %4927 = vmatpush.msra.mxu0 %v4009
    %4928 = vmatmul.f32.gmra.mxu0 %v4628
    %v4929 = vpop.f32.mrf.mxu0
    %v4930 = vadd.f32 0.0, %v4929
    %4931 = vdwg.mxu0
    %4932 = vmatpush.msra.mxu0 %v4257
    %4933 = vmatpush.msra.mxu0 %v4249
    %4934 = vmatpush.msra.mxu0 %v4241
    %4935 = vmatpush.msra.mxu0 %v4233
    %4936 = vmatpush.msra.mxu0 %v4225
    %4937 = vmatpush.msra.mxu0 %v4217
    %4938 = vmatpush.msra.mxu0 %v4209
    %4939 = vmatpush.msra.mxu0 %v4201
    %4940 = vmatpush.msra.mxu0 %v4193
    %4941 = vmatpush.msra.mxu0 %v4185
    %4942 = vmatpush.msra.mxu0 %v4177
    %4943 = vmatpush.msra.mxu0 %v4169
    %4944 = vmatpush.msra.mxu0 %v4161
    %4945 = vmatpush.msra.mxu0 %v4153
    %4946 = vmatpush.msra.mxu0 %v4145
    %4947 = vmatpush.msra.mxu0 %v4137
    %4948 = vmatmul.f32.gmra.mxu0 %v4629
    %v4949 = vpop.f32.mrf.mxu0
    %v4950 = vadd.f32 %v4930, %v4949
    %4951 = vdwg.mxu0
    %v4952 = vld [vmem:[#allocation2 + $0x40] sm:$0xff]
    %v4953 = vld [vmem:[#allocation2 + $0x48] sm:$0xff]
    %v4954 = vld [vmem:[#allocation2 + $0x50] sm:$0xff]
    %v4955 = vld [vmem:[#allocation2 + $0x58] sm:$0xff]
    %v4956 = vadd.f32 %v4670, %v4952
    %v4957 = vadd.f32 %v4710, %v4953
    %v4958 = vadd.f32 %v4750, %v4954
    %v4959 = vadd.f32 %v4790, %v4955
    %v4960 = vld [vmem:[#allocation2 + $0xa0] sm:$0xff]
    %v4961 = vld [vmem:[#allocation2 + $0xa8] sm:$0xff]
    %v4962 = vld [vmem:[#allocation2 + $0xb0] sm:$0xff]
    %v4963 = vld [vmem:[#allocation2 + $0xb8] sm:$0xff]
    %v4964 = vadd.f32 %v4830, %v4960
    %v4965 = vadd.f32 %v4870, %v4961
    %v4966 = vadd.f32 %v4910, %v4962
    %v4967 = vadd.f32 %v4950, %v4963
    %v4968 = vmul.f32 %v4956, 0.5
    %v4969 = vmul.f32 %v4957, 0.5
    %v4970 = vmul.f32 %v4958, 0.5
    %v4971 = vmul.f32 %v4964, 0.5
    %v4972 = vmul.f32 %v4965, 0.5
    %v4973 = vmul.f32 %v4966, 0.5
    %v4974 = vtanh.pop %v4968
    %v4975 = vtanh.pop %v4969
    %v4976 = vtanh.pop %v4970
    %v4977 = vtanh.pop %v4971
    %v4978 = vtanh.pop %v4972
    %v4979 = vtanh.pop %v4973
    %v4980 = vmul.f32 %v4974, 0.5
    %v4981 = vmul.f32 %v4975, 0.5
    %v4982 = vmul.f32 %v4976, 0.5
    %v4983 = vmul.f32 %v4977, 0.5
    %v4984 = vmul.f32 %v4978, 0.5
    %v4985 = vmul.f32 %v4979, 0.5
    %v4986 = vadd.f32 %v4980, 0.5
    %v4987 = vadd.f32 %v4981, 0.5
    %v4988 = vadd.f32 %v4982, 0.5
    %v4989 = vadd.f32 %v4983, 0.5
    %v4990 = vadd.f32 %v4984, 0.5
    %v4991 = vadd.f32 %v4985, 0.5
    %v4992 = vtanh.pop %v4959
    %v4993 = vtanh.pop %v4967
    %v4994 = vmul.f32 %v4987, %v4624
    %v4995 = vmul.f32 %v4990, %v4625
    %v4996 = vmul.f32 %v4986, %v4992
    %v4997 = vmul.f32 %v4989, %v4993
    %v4998 = vadd.f32 %v4994, %v4996
    %v4999 = vadd.f32 %v4995, %v4997
    %v5000 = vtanh.pop %v4998
    %v5001 = vtanh.pop %v4999
    %v5002 = vmul.f32 %v4988, %v5000
    %v5003 = vmul.f32 %v4991, %v5001
    %5004 = vst [vmem:[#allocation5 + $0x8] sm:$0xff] %v5002
    %5005 = vst [vmem:[#allocation6 + $0x10] sm:$0xff] %v5003
    %5006 = vmatpush.msra.mxu0 %v4122
    %5007 = vmatpush.msra.mxu0 %v4114
    %5008 = vmatpush.msra.mxu0 %v4106
    %5009 = vmatpush.msra.mxu0 %v4098
    %5010 = vmatpush.msra.mxu0 %v4090
    %5011 = vmatpush.msra.mxu0 %v4082
    %5012 = vmatpush.msra.mxu0 %v4074
    %5013 = vmatpush.msra.mxu0 %v4066
    %5014 = vmatpush.msra.mxu0 %v4058
    %5015 = vmatpush.msra.mxu0 %v4050
    %5016 = vmatpush.msra.mxu0 %v4042
    %5017 = vmatpush.msra.mxu0 %v4034
    %5018 = vmatpush.msra.mxu0 %v4026
    %5019 = vmatpush.msra.mxu0 %v4018
    %5020 = vmatpush.msra.mxu0 %v4010
    %5021 = vmatpush.msra.mxu0 %v4002
    %5022 = vmatmul.f32.gmra.mxu0 %v5002
    %v5023 = vpop.f32.mrf.mxu0
    %v5024 = vadd.f32 0.0, %v5023
    %5025 = vdwg.mxu0
    %5026 = vmatpush.msra.mxu0 %v4250
    %5027 = vmatpush.msra.mxu0 %v4242
    %5028 = vmatpush.msra.mxu0 %v4234
    %5029 = vmatpush.msra.mxu0 %v4226
    %5030 = vmatpush.msra.mxu0 %v4218
    %5031 = vmatpush.msra.mxu0 %v4210
    %5032 = vmatpush.msra.mxu0 %v4202
    %5033 = vmatpush.msra.mxu0 %v4194
    %5034 = vmatpush.msra.mxu0 %v4186
    %5035 = vmatpush.msra.mxu0 %v4178
    %5036 = vmatpush.msra.mxu0 %v4170
    %5037 = vmatpush.msra.mxu0 %v4162
    %5038 = vmatpush.msra.mxu0 %v4154
    %5039 = vmatpush.msra.mxu0 %v4146
    %5040 = vmatpush.msra.mxu0 %v4138
    %5041 = vmatpush.msra.mxu0 %v4130
    %5042 = vmatmul.f32.gmra.mxu0 %v5003
    %v5043 = vpop.f32.mrf.mxu0
    %v5044 = vadd.f32 %v5024, %v5043
    %5045 = vdwg.mxu0
    %5046 = vmatpush.msra.mxu0 %v4123
    %5047 = vmatpush.msra.mxu0 %v4115
    %5048 = vmatpush.msra.mxu0 %v4107
    %5049 = vmatpush.msra.mxu0 %v4099
    %5050 = vmatpush.msra.mxu0 %v4091
    %5051 = vmatpush.msra.mxu0 %v4083
    %5052 = vmatpush.msra.mxu0 %v4075
    %5053 = vmatpush.msra.mxu0 %v4067
    %5054 = vmatpush.msra.mxu0 %v4059
    %5055 = vmatpush.msra.mxu0 %v4051
    %5056 = vmatpush.msra.mxu0 %v4043
    %5057 = vmatpush.msra.mxu0 %v4035
    %5058 = vmatpush.msra.mxu0 %v4027
    %5059 = vmatpush.msra.mxu0 %v4019
    %5060 = vmatpush.msra.mxu0 %v4011
    %5061 = vmatpush.msra.mxu0 %v4003
    %5062 = vmatmul.f32.gmra.mxu0 %v5002
    %v5063 = vpop.f32.mrf.mxu0
    %v5064 = vadd.f32 0.0, %v5063
    %5065 = vdwg.mxu0
    %5066 = vmatpush.msra.mxu0 %v4251
    %5067 = vmatpush.msra.mxu0 %v4243
    %5068 = vmatpush.msra.mxu0 %v4235
    %5069 = vmatpush.msra.mxu0 %v4227
    %5070 = vmatpush.msra.mxu0 %v4219
    %5071 = vmatpush.msra.mxu0 %v4211
    %5072 = vmatpush.msra.mxu0 %v4203
    %5073 = vmatpush.msra.mxu0 %v4195
    %5074 = vmatpush.msra.mxu0 %v4187
    %5075 = vmatpush.msra.mxu0 %v4179
    %5076 = vmatpush.msra.mxu0 %v4171
    %5077 = vmatpush.msra.mxu0 %v4163
    %5078 = vmatpush.msra.mxu0 %v4155
    %5079 = vmatpush.msra.mxu0 %v4147
    %5080 = vmatpush.msra.mxu0 %v4139
    %5081 = vmatpush.msra.mxu0 %v4131
    %5082 = vmatmul.f32.gmra.mxu0 %v5003
    %v5083 = vpop.f32.mrf.mxu0
    %v5084 = vadd.f32 %v5064, %v5083
    %5085 = vdwg.mxu0
    %5086 = vmatpush.msra.mxu0 %v4124
    %5087 = vmatpush.msra.mxu0 %v4116
    %5088 = vmatpush.msra.mxu0 %v4108
    %5089 = vmatpush.msra.mxu0 %v4100
    %5090 = vmatpush.msra.mxu0 %v4092
    %5091 = vmatpush.msra.mxu0 %v4084
    %5092 = vmatpush.msra.mxu0 %v4076
    %5093 = vmatpush.msra.mxu0 %v4068
    %5094 = vmatpush.msra.mxu0 %v4060
    %5095 = vmatpush.msra.mxu0 %v4052
    %5096 = vmatpush.msra.mxu0 %v4044
    %5097 = vmatpush.msra.mxu0 %v4036
    %5098 = vmatpush.msra.mxu0 %v4028
    %5099 = vmatpush.msra.mxu0 %v4020
    %5100 = vmatpush.msra.mxu0 %v4012
    %5101 = vmatpush.msra.mxu0 %v4004
    %5102 = vmatmul.f32.gmra.mxu0 %v5002
    %v5103 = vpop.f32.mrf.mxu0
    %v5104 = vadd.f32 0.0, %v5103
    %5105 = vdwg.mxu0
    %5106 = vmatpush.msra.mxu0 %v4252
    %5107 = vmatpush.msra.mxu0 %v4244
    %5108 = vmatpush.msra.mxu0 %v4236
    %5109 = vmatpush.msra.mxu0 %v4228
    %5110 = vmatpush.msra.mxu0 %v4220
    %5111 = vmatpush.msra.mxu0 %v4212
    %5112 = vmatpush.msra.mxu0 %v4204
    %5113 = vmatpush.msra.mxu0 %v4196
    %5114 = vmatpush.msra.mxu0 %v4188
    %5115 = vmatpush.msra.mxu0 %v4180
    %5116 = vmatpush.msra.mxu0 %v4172
    %5117 = vmatpush.msra.mxu0 %v4164
    %5118 = vmatpush.msra.mxu0 %v4156
    %5119 = vmatpush.msra.mxu0 %v4148
    %5120 = vmatpush.msra.mxu0 %v4140
    %5121 = vmatpush.msra.mxu0 %v4132
    %5122 = vmatmul.f32.gmra.mxu0 %v5003
    %v5123 = vpop.f32.mrf.mxu0
    %v5124 = vadd.f32 %v5104, %v5123
    %5125 = vdwg.mxu0
    %5126 = vmatpush.msra.mxu0 %v4125
    %5127 = vmatpush.msra.mxu0 %v4117
    %5128 = vmatpush.msra.mxu0 %v4109
    %5129 = vmatpush.msra.mxu0 %v4101
    %5130 = vmatpush.msra.mxu0 %v4093
    %5131 = vmatpush.msra.mxu0 %v4085
    %5132 = vmatpush.msra.mxu0 %v4077
    %5133 = vmatpush.msra.mxu0 %v4069
    %5134 = vmatpush.msra.mxu0 %v4061
    %5135 = vmatpush.msra.mxu0 %v4053
    %5136 = vmatpush.msra.mxu0 %v4045
    %5137 = vmatpush.msra.mxu0 %v4037
    %5138 = vmatpush.msra.mxu0 %v4029
    %5139 = vmatpush.msra.mxu0 %v4021
    %5140 = vmatpush.msra.mxu0 %v4013
    %5141 = vmatpush.msra.mxu0 %v4005
    %5142 = vmatmul.f32.gmra.mxu0 %v5002
    %v5143 = vpop.f32.mrf.mxu0
    %v5144 = vadd.f32 0.0, %v5143
    %5145 = vdwg.mxu0
    %5146 = vmatpush.msra.mxu0 %v4253
    %5147 = vmatpush.msra.mxu0 %v4245
    %5148 = vmatpush.msra.mxu0 %v4237
    %5149 = vmatpush.msra.mxu0 %v4229
    %5150 = vmatpush.msra.mxu0 %v4221
    %5151 = vmatpush.msra.mxu0 %v4213
    %5152 = vmatpush.msra.mxu0 %v4205
    %5153 = vmatpush.msra.mxu0 %v4197
    %5154 = vmatpush.msra.mxu0 %v4189
    %5155 = vmatpush.msra.mxu0 %v4181
    %5156 = vmatpush.msra.mxu0 %v4173
    %5157 = vmatpush.msra.mxu0 %v4165
    %5158 = vmatpush.msra.mxu0 %v4157
    %5159 = vmatpush.msra.mxu0 %v4149
    %5160 = vmatpush.msra.mxu0 %v4141
    %5161 = vmatpush.msra.mxu0 %v4133
    %5162 = vmatmul.f32.gmra.mxu0 %v5003
    %v5163 = vpop.f32.mrf.mxu0
    %v5164 = vadd.f32 %v5144, %v5163
    %5165 = vdwg.mxu0
    %5166 = vmatpush.msra.mxu0 %v4126
    %5167 = vmatpush.msra.mxu0 %v4118
    %5168 = vmatpush.msra.mxu0 %v4110
    %5169 = vmatpush.msra.mxu0 %v4102
    %5170 = vmatpush.msra.mxu0 %v4094
    %5171 = vmatpush.msra.mxu0 %v4086
    %5172 = vmatpush.msra.mxu0 %v4078
    %5173 = vmatpush.msra.mxu0 %v4070
    %5174 = vmatpush.msra.mxu0 %v4062
    %5175 = vmatpush.msra.mxu0 %v4054
    %5176 = vmatpush.msra.mxu0 %v4046
    %5177 = vmatpush.msra.mxu0 %v4038
    %5178 = vmatpush.msra.mxu0 %v4030
    %5179 = vmatpush.msra.mxu0 %v4022
    %5180 = vmatpush.msra.mxu0 %v4014
    %5181 = vmatpush.msra.mxu0 %v4006
    %5182 = vmatmul.f32.gmra.mxu0 %v5002
    %v5183 = vpop.f32.mrf.mxu0
    %v5184 = vadd.f32 0.0, %v5183
    %5185 = vdwg.mxu0
    %5186 = vmatpush.msra.mxu0 %v4254
    %5187 = vmatpush.msra.mxu0 %v4246
    %5188 = vmatpush.msra.mxu0 %v4238
    %5189 = vmatpush.msra.mxu0 %v4230
    %5190 = vmatpush.msra.mxu0 %v4222
    %5191 = vmatpush.msra.mxu0 %v4214
    %5192 = vmatpush.msra.mxu0 %v4206
    %5193 = vmatpush.msra.mxu0 %v4198
    %5194 = vmatpush.msra.mxu0 %v4190
    %5195 = vmatpush.msra.mxu0 %v4182
    %5196 = vmatpush.msra.mxu0 %v4174
    %5197 = vmatpush.msra.mxu0 %v4166
    %5198 = vmatpush.msra.mxu0 %v4158
    %5199 = vmatpush.msra.mxu0 %v4150
    %5200 = vmatpush.msra.mxu0 %v4142
    %5201 = vmatpush.msra.mxu0 %v4134
    %5202 = vmatmul.f32.gmra.mxu0 %v5003
    %v5203 = vpop.f32.mrf.mxu0
    %v5204 = vadd.f32 %v5184, %v5203
    %5205 = vdwg.mxu0
    %5206 = vmatpush.msra.mxu0 %v4127
    %5207 = vmatpush.msra.mxu0 %v4119
    %5208 = vmatpush.msra.mxu0 %v4111
    %5209 = vmatpush.msra.mxu0 %v4103
    %5210 = vmatpush.msra.mxu0 %v4095
    %5211 = vmatpush.msra.mxu0 %v4087
    %5212 = vmatpush.msra.mxu0 %v4079
    %5213 = vmatpush.msra.mxu0 %v4071
    %5214 = vmatpush.msra.mxu0 %v4063
    %5215 = vmatpush.msra.mxu0 %v4055
    %5216 = vmatpush.msra.mxu0 %v4047
    %5217 = vmatpush.msra.mxu0 %v4039
    %5218 = vmatpush.msra.mxu0 %v4031
    %5219 = vmatpush.msra.mxu0 %v4023
    %5220 = vmatpush.msra.mxu0 %v4015
    %5221 = vmatpush.msra.mxu0 %v4007
    %5222 = vmatmul.f32.gmra.mxu0 %v5002
    %v5223 = vpop.f32.mrf.mxu0
    %v5224 = vadd.f32 0.0, %v5223
    %5225 = vdwg.mxu0
    %5226 = vmatpush.msra.mxu0 %v4255
    %5227 = vmatpush.msra.mxu0 %v4247
    %5228 = vmatpush.msra.mxu0 %v4239
    %5229 = vmatpush.msra.mxu0 %v4231
    %5230 = vmatpush.msra.mxu0 %v4223
    %5231 = vmatpush.msra.mxu0 %v4215
    %5232 = vmatpush.msra.mxu0 %v4207
    %5233 = vmatpush.msra.mxu0 %v4199
    %5234 = vmatpush.msra.mxu0 %v4191
    %5235 = vmatpush.msra.mxu0 %v4183
    %5236 = vmatpush.msra.mxu0 %v4175
    %5237 = vmatpush.msra.mxu0 %v4167
    %5238 = vmatpush.msra.mxu0 %v4159
    %5239 = vmatpush.msra.mxu0 %v4151
    %5240 = vmatpush.msra.mxu0 %v4143
    %5241 = vmatpush.msra.mxu0 %v4135
    %5242 = vmatmul.f32.gmra.mxu0 %v5003
    %v5243 = vpop.f32.mrf.mxu0
    %v5244 = vadd.f32 %v5224, %v5243
    %5245 = vdwg.mxu0
    %5246 = vmatpush.msra.mxu0 %v4128
    %5247 = vmatpush.msra.mxu0 %v4120
    %5248 = vmatpush.msra.mxu0 %v4112
    %5249 = vmatpush.msra.mxu0 %v4104
    %5250 = vmatpush.msra.mxu0 %v4096
    %5251 = vmatpush.msra.mxu0 %v4088
    %5252 = vmatpush.msra.mxu0 %v4080
    %5253 = vmatpush.msra.mxu0 %v4072
    %5254 = vmatpush.msra.mxu0 %v4064
    %5255 = vmatpush.msra.mxu0 %v4056
    %5256 = vmatpush.msra.mxu0 %v4048
    %5257 = vmatpush.msra.mxu0 %v4040
    %5258 = vmatpush.msra.mxu0 %v4032
    %5259 = vmatpush.msra.mxu0 %v4024
    %5260 = vmatpush.msra.mxu0 %v4016
    %5261 = vmatpush.msra.mxu0 %v4008
    %5262 = vmatmul.f32.gmra.mxu0 %v5002
    %v5263 = vpop.f32.mrf.mxu0
    %v5264 = vadd.f32 0.0, %v5263
    %5265 = vdwg.mxu0
    %5266 = vmatpush.msra.mxu0 %v4256
    %5267 = vmatpush.msra.mxu0 %v4248
    %5268 = vmatpush.msra.mxu0 %v4240
    %5269 = vmatpush.msra.mxu0 %v4232
    %5270 = vmatpush.msra.mxu0 %v4224
    %5271 = vmatpush.msra.mxu0 %v4216
    %5272 = vmatpush.msra.mxu0 %v4208
    %5273 = vmatpush.msra.mxu0 %v4200
    %5274 = vmatpush.msra.mxu0 %v4192
    %5275 = vmatpush.msra.mxu0 %v4184
    %5276 = vmatpush.msra.mxu0 %v4176
    %5277 = vmatpush.msra.mxu0 %v4168
    %5278 = vmatpush.msra.mxu0 %v4160
    %5279 = vmatpush.msra.mxu0 %v4152
    %5280 = vmatpush.msra.mxu0 %v4144
    %5281 = vmatpush.msra.mxu0 %v4136
    %5282 = vmatmul.f32.gmra.mxu0 %v5003
    %v5283 = vpop.f32.mrf.mxu0
    %v5284 = vadd.f32 %v5264, %v5283
    %5285 = vdwg.mxu0
    %5286 = vmatpush.msra.mxu0 %v4129
    %5287 = vmatpush.msra.mxu0 %v4121
    %5288 = vmatpush.msra.mxu0 %v4113
    %5289 = vmatpush.msra.mxu0 %v4105
    %5290 = vmatpush.msra.mxu0 %v4097
    %5291 = vmatpush.msra.mxu0 %v4089
    %5292 = vmatpush.msra.mxu0 %v4081
    %5293 = vmatpush.msra.mxu0 %v4073
    %5294 = vmatpush.msra.mxu0 %v4065
    %5295 = vmatpush.msra.mxu0 %v4057
    %5296 = vmatpush.msra.mxu0 %v4049
    %5297 = vmatpush.msra.mxu0 %v4041
    %5298 = vmatpush.msra.mxu0 %v4033
    %5299 = vmatpush.msra.mxu0 %v4025
    %5300 = vmatpush.msra.mxu0 %v4017
    %5301 = vmatpush.msra.mxu0 %v4009
    %5302 = vmatmul.f32.gmra.mxu0 %v5002
    %v5303 = vpop.f32.mrf.mxu0
    %v5304 = vadd.f32 0.0, %v5303
    %5305 = vdwg.mxu0
    %5306 = vmatpush.msra.mxu0 %v4257
    %5307 = vmatpush.msra.mxu0 %v4249
    %5308 = vmatpush.msra.mxu0 %v4241
    %5309 = vmatpush.msra.mxu0 %v4233
    %5310 = vmatpush.msra.mxu0 %v4225
    %5311 = vmatpush.msra.mxu0 %v4217
    %5312 = vmatpush.msra.mxu0 %v4209
    %5313 = vmatpush.msra.mxu0 %v4201
    %5314 = vmatpush.msra.mxu0 %v4193
    %5315 = vmatpush.msra.mxu0 %v4185
    %5316 = vmatpush.msra.mxu0 %v4177
    %5317 = vmatpush.msra.mxu0 %v4169
    %5318 = vmatpush.msra.mxu0 %v4161
    %5319 = vmatpush.msra.mxu0 %v4153
    %5320 = vmatpush.msra.mxu0 %v4145
    %5321 = vmatpush.msra.mxu0 %v4137
    %5322 = vmatmul.f32.gmra.mxu0 %v5003
    %v5323 = vpop.f32.mrf.mxu0
    %v5324 = vadd.f32 %v5304, %v5323
    %5325 = vdwg.mxu0
    %v5326 = vld [vmem:[#allocation2 + $0x80] sm:$0xff]
    %v5327 = vld [vmem:[#allocation2 + $0x88] sm:$0xff]
    %v5328 = vld [vmem:[#allocation2 + $0x90] sm:$0xff]
    %v5329 = vld [vmem:[#allocation2 + $0x98] sm:$0xff]
    %v5330 = vadd.f32 %v5044, %v5326
    %v5331 = vadd.f32 %v5084, %v5327
    %v5332 = vadd.f32 %v5124, %v5328
    %v5333 = vadd.f32 %v5164, %v5329
    %v5334 = vld [vmem:[#allocation2 + $0x60] sm:$0xff]
    %v5335 = vld [vmem:[#allocation2 + $0x68] sm:$0xff]
    %v5336 = vld [vmem:[#allocation2 + $0x70] sm:$0xff]
    %v5337 = vld [vmem:[#allocation2 + $0x78] sm:$0xff]
    %v5338 = vadd.f32 %v5204, %v5334
    %v5339 = vadd.f32 %v5244, %v5335
    %v5340 = vadd.f32 %v5284, %v5336
    %v5341 = vadd.f32 %v5324, %v5337
    %v5342 = vmul.f32 %v5330, 0.5
    %v5343 = vmul.f32 %v5331, 0.5
    %v5344 = vmul.f32 %v5332, 0.5
    %v5345 = vmul.f32 %v5338, 0.5
    %v5346 = vmul.f32 %v5339, 0.5
    %v5347 = vmul.f32 %v5340, 0.5
    %v5348 = vtanh.pop %v5342
    %v5349 = vtanh.pop %v5343
    %v5350 = vtanh.pop %v5344
    %v5351 = vtanh.pop %v5345
    %v5352 = vtanh.pop %v5346
    %v5353 = vtanh.pop %v5347
    %v5354 = vmul.f32 %v5348, 0.5
    %v5355 = vmul.f32 %v5349, 0.5
    %v5356 = vmul.f32 %v5350, 0.5
    %v5357 = vmul.f32 %v5351, 0.5
    %v5358 = vmul.f32 %v5352, 0.5
    %v5359 = vmul.f32 %v5353, 0.5
    %v5360 = vadd.f32 %v5354, 0.5
    %v5361 = vadd.f32 %v5355, 0.5
    %v5362 = vadd.f32 %v5356, 0.5
    %v5363 = vadd.f32 %v5357, 0.5
    %v5364 = vadd.f32 %v5358, 0.5
    %v5365 = vadd.f32 %v5359, 0.5
    %v5366 = vtanh.pop %v5333
    %v5367 = vtanh.pop %v5341
    %v5368 = vmul.f32 %v5361, %v4998
    %v5369 = vmul.f32 %v5364, %v4999
    %v5370 = vmul.f32 %v5360, %v5366
    %v5371 = vmul.f32 %v5363, %v5367
    %v5372 = vadd.f32 %v5368, %v5370
    %v5373 = vadd.f32 %v5369, %v5371
    %v5374 = vtanh.pop %v5372
    %v5375 = vtanh.pop %v5373
    %v5376 = vmul.f32 %v5362, %v5374
    %v5377 = vmul.f32 %v5365, %v5375
    %5378 = vst [vmem:[#allocation5 + $0x10] sm:$0xff] %v5376
    %5379 = vst [vmem:[#allocation6 + $0x8] sm:$0xff] %v5377
    %5380 = vmatpush.msra.mxu0 %v4122
    %5381 = vmatpush.msra.mxu0 %v4114
    %5382 = vmatpush.msra.mxu0 %v4106
    %5383 = vmatpush.msra.mxu0 %v4098
    %5384 = vmatpush.msra.mxu0 %v4090
    %5385 = vmatpush.msra.mxu0 %v4082
    %5386 = vmatpush.msra.mxu0 %v4074
    %5387 = vmatpush.msra.mxu0 %v4066
    %5388 = vmatpush.msra.mxu0 %v4058
    %5389 = vmatpush.msra.mxu0 %v4050
    %5390 = vmatpush.msra.mxu0 %v4042
    %5391 = vmatpush.msra.mxu0 %v4034
    %5392 = vmatpush.msra.mxu0 %v4026
    %5393 = vmatpush.msra.mxu0 %v4018
    %5394 = vmatpush.msra.mxu0 %v4010
    %5395 = vmatpush.msra.mxu0 %v4002
    %5396 = vmatmul.f32.gmra.mxu0 %v5376
    %v5397 = vpop.f32.mrf.mxu0
    %v5398 = vadd.f32 0.0, %v5397
    %5399 = vdwg.mxu0
    %5400 = vmatpush.msra.mxu0 %v4250
    %5401 = vmatpush.msra.mxu0 %v4242
    %5402 = vmatpush.msra.mxu0 %v4234
    %5403 = vmatpush.msra.mxu0 %v4226
    %5404 = vmatpush.msra.mxu0 %v4218
    %5405 = vmatpush.msra.mxu0 %v4210
    %5406 = vmatpush.msra.mxu0 %v4202
    %5407 = vmatpush.msra.mxu0 %v4194
    %5408 = vmatpush.msra.mxu0 %v4186
    %5409 = vmatpush.msra.mxu0 %v4178
    %5410 = vmatpush.msra.mxu0 %v4170
    %5411 = vmatpush.msra.mxu0 %v4162
    %5412 = vmatpush.msra.mxu0 %v4154
    %5413 = vmatpush.msra.mxu0 %v4146
    %5414 = vmatpush.msra.mxu0 %v4138
    %5415 = vmatpush.msra.mxu0 %v4130
    %5416 = vmatmul.f32.gmra.mxu0 %v5377
    %v5417 = vpop.f32.mrf.mxu0
    %v5418 = vadd.f32 %v5398, %v5417
    %5419 = vdwg.mxu0
    %5420 = vmatpush.msra.mxu0 %v4123
    %5421 = vmatpush.msra.mxu0 %v4115
    %5422 = vmatpush.msra.mxu0 %v4107
    %5423 = vmatpush.msra.mxu0 %v4099
    %5424 = vmatpush.msra.mxu0 %v4091
    %5425 = vmatpush.msra.mxu0 %v4083
    %5426 = vmatpush.msra.mxu0 %v4075
    %5427 = vmatpush.msra.mxu0 %v4067
    %5428 = vmatpush.msra.mxu0 %v4059
    %5429 = vmatpush.msra.mxu0 %v4051
    %5430 = vmatpush.msra.mxu0 %v4043
    %5431 = vmatpush.msra.mxu0 %v4035
    %5432 = vmatpush.msra.mxu0 %v4027
    %5433 = vmatpush.msra.mxu0 %v4019
    %5434 = vmatpush.msra.mxu0 %v4011
    %5435 = vmatpush.msra.mxu0 %v4003
    %5436 = vmatmul.f32.gmra.mxu0 %v5376
    %v5437 = vpop.f32.mrf.mxu0
    %v5438 = vadd.f32 0.0, %v5437
    %5439 = vdwg.mxu0
    %5440 = vmatpush.msra.mxu0 %v4251
    %5441 = vmatpush.msra.mxu0 %v4243
    %5442 = vmatpush.msra.mxu0 %v4235
    %5443 = vmatpush.msra.mxu0 %v4227
    %5444 = vmatpush.msra.mxu0 %v4219
    %5445 = vmatpush.msra.mxu0 %v4211
    %5446 = vmatpush.msra.mxu0 %v4203
    %5447 = vmatpush.msra.mxu0 %v4195
    %5448 = vmatpush.msra.mxu0 %v4187
    %5449 = vmatpush.msra.mxu0 %v4179
    %5450 = vmatpush.msra.mxu0 %v4171
    %5451 = vmatpush.msra.mxu0 %v4163
    %5452 = vmatpush.msra.mxu0 %v4155
    %5453 = vmatpush.msra.mxu0 %v4147
    %5454 = vmatpush.msra.mxu0 %v4139
    %5455 = vmatpush.msra.mxu0 %v4131
    %5456 = vmatmul.f32.gmra.mxu0 %v5377
    %v5457 = vpop.f32.mrf.mxu0
    %v5458 = vadd.f32 %v5438, %v5457
    %5459 = vdwg.mxu0
    %5460 = vmatpush.msra.mxu0 %v4124
    %5461 = vmatpush.msra.mxu0 %v4116
    %5462 = vmatpush.msra.mxu0 %v4108
    %5463 = vmatpush.msra.mxu0 %v4100
    %5464 = vmatpush.msra.mxu0 %v4092
    %5465 = vmatpush.msra.mxu0 %v4084
    %5466 = vmatpush.msra.mxu0 %v4076
    %5467 = vmatpush.msra.mxu0 %v4068
    %5468 = vmatpush.msra.mxu0 %v4060
    %5469 = vmatpush.msra.mxu0 %v4052
    %5470 = vmatpush.msra.mxu0 %v4044
    %5471 = vmatpush.msra.mxu0 %v4036
    %5472 = vmatpush.msra.mxu0 %v4028
    %5473 = vmatpush.msra.mxu0 %v4020
    %5474 = vmatpush.msra.mxu0 %v4012
    %5475 = vmatpush.msra.mxu0 %v4004
    %5476 = vmatmul.f32.gmra.mxu0 %v5376
    %v5477 = vpop.f32.mrf.mxu0
    %v5478 = vadd.f32 0.0, %v5477
    %5479 = vdwg.mxu0
    %5480 = vmatpush.msra.mxu0 %v4252
    %5481 = vmatpush.msra.mxu0 %v4244
    %5482 = vmatpush.msra.mxu0 %v4236
    %5483 = vmatpush.msra.mxu0 %v4228
    %5484 = vmatpush.msra.mxu0 %v4220
    %5485 = vmatpush.msra.mxu0 %v4212
    %5486 = vmatpush.msra.mxu0 %v4204
    %5487 = vmatpush.msra.mxu0 %v4196
    %5488 = vmatpush.msra.mxu0 %v4188
    %5489 = vmatpush.msra.mxu0 %v4180
    %5490 = vmatpush.msra.mxu0 %v4172
    %5491 = vmatpush.msra.mxu0 %v4164
    %5492 = vmatpush.msra.mxu0 %v4156
    %5493 = vmatpush.msra.mxu0 %v4148
    %5494 = vmatpush.msra.mxu0 %v4140
    %5495 = vmatpush.msra.mxu0 %v4132
    %5496 = vmatmul.f32.gmra.mxu0 %v5377
    %v5497 = vpop.f32.mrf.mxu0
    %v5498 = vadd.f32 %v5478, %v5497
    %5499 = vdwg.mxu0
    %5500 = vmatpush.msra.mxu0 %v4125
    %5501 = vmatpush.msra.mxu0 %v4117
    %5502 = vmatpush.msra.mxu0 %v4109
    %5503 = vmatpush.msra.mxu0 %v4101
    %5504 = vmatpush.msra.mxu0 %v4093
    %5505 = vmatpush.msra.mxu0 %v4085
    %5506 = vmatpush.msra.mxu0 %v4077
    %5507 = vmatpush.msra.mxu0 %v4069
    %5508 = vmatpush.msra.mxu0 %v4061
    %5509 = vmatpush.msra.mxu0 %v4053
    %5510 = vmatpush.msra.mxu0 %v4045
    %5511 = vmatpush.msra.mxu0 %v4037
    %5512 = vmatpush.msra.mxu0 %v4029
    %5513 = vmatpush.msra.mxu0 %v4021
    %5514 = vmatpush.msra.mxu0 %v4013
    %5515 = vmatpush.msra.mxu0 %v4005
    %5516 = vmatmul.f32.gmra.mxu0 %v5376
    %v5517 = vpop.f32.mrf.mxu0
    %v5518 = vadd.f32 0.0, %v5517
    %5519 = vdwg.mxu0
    %5520 = vmatpush.msra.mxu0 %v4253
    %5521 = vmatpush.msra.mxu0 %v4245
    %5522 = vmatpush.msra.mxu0 %v4237
    %5523 = vmatpush.msra.mxu0 %v4229
    %5524 = vmatpush.msra.mxu0 %v4221
    %5525 = vmatpush.msra.mxu0 %v4213
    %5526 = vmatpush.msra.mxu0 %v4205
    %5527 = vmatpush.msra.mxu0 %v4197
    %5528 = vmatpush.msra.mxu0 %v4189
    %5529 = vmatpush.msra.mxu0 %v4181
    %5530 = vmatpush.msra.mxu0 %v4173
    %5531 = vmatpush.msra.mxu0 %v4165
    %5532 = vmatpush.msra.mxu0 %v4157
    %5533 = vmatpush.msra.mxu0 %v4149
    %5534 = vmatpush.msra.mxu0 %v4141
    %5535 = vmatpush.msra.mxu0 %v4133
    %5536 = vmatmul.f32.gmra.mxu0 %v5377
    %v5537 = vpop.f32.mrf.mxu0
    %v5538 = vadd.f32 %v5518, %v5537
    %5539 = vdwg.mxu0
    %5540 = vmatpush.msra.mxu0 %v4126
    %5541 = vmatpush.msra.mxu0 %v4118
    %5542 = vmatpush.msra.mxu0 %v4110
    %5543 = vmatpush.msra.mxu0 %v4102
    %5544 = vmatpush.msra.mxu0 %v4094
    %5545 = vmatpush.msra.mxu0 %v4086
    %5546 = vmatpush.msra.mxu0 %v4078
    %5547 = vmatpush.msra.mxu0 %v4070
    %5548 = vmatpush.msra.mxu0 %v4062
    %5549 = vmatpush.msra.mxu0 %v4054
    %5550 = vmatpush.msra.mxu0 %v4046
    %5551 = vmatpush.msra.mxu0 %v4038
    %5552 = vmatpush.msra.mxu0 %v4030
    %5553 = vmatpush.msra.mxu0 %v4022
    %5554 = vmatpush.msra.mxu0 %v4014
    %5555 = vmatpush.msra.mxu0 %v4006
    %5556 = vmatmul.f32.gmra.mxu0 %v5376
    %v5557 = vpop.f32.mrf.mxu0
    %v5558 = vadd.f32 0.0, %v5557
    %5559 = vdwg.mxu0
    %5560 = vmatpush.msra.mxu0 %v4254
    %5561 = vmatpush.msra.mxu0 %v4246
    %5562 = vmatpush.msra.mxu0 %v4238
    %5563 = vmatpush.msra.mxu0 %v4230
    %5564 = vmatpush.msra.mxu0 %v4222
    %5565 = vmatpush.msra.mxu0 %v4214
    %5566 = vmatpush.msra.mxu0 %v4206
    %5567 = vmatpush.msra.mxu0 %v4198
    %5568 = vmatpush.msra.mxu0 %v4190
    %5569 = vmatpush.msra.mxu0 %v4182
    %5570 = vmatpush.msra.mxu0 %v4174
    %5571 = vmatpush.msra.mxu0 %v4166
    %5572 = vmatpush.msra.mxu0 %v4158
    %5573 = vmatpush.msra.mxu0 %v4150
    %5574 = vmatpush.msra.mxu0 %v4142
    %5575 = vmatpush.msra.mxu0 %v4134
    %5576 = vmatmul.f32.gmra.mxu0 %v5377
    %v5577 = vpop.f32.mrf.mxu0
    %v5578 = vadd.f32 %v5558, %v5577
    %5579 = vdwg.mxu0
    %5580 = vmatpush.msra.mxu0 %v4127
    %5581 = vmatpush.msra.mxu0 %v4119
    %5582 = vmatpush.msra.mxu0 %v4111
    %5583 = vmatpush.msra.mxu0 %v4103
    %5584 = vmatpush.msra.mxu0 %v4095
    %5585 = vmatpush.msra.mxu0 %v4087
    %5586 = vmatpush.msra.mxu0 %v4079
    %5587 = vmatpush.msra.mxu0 %v4071
    %5588 = vmatpush.msra.mxu0 %v4063
    %5589 = vmatpush.msra.mxu0 %v4055
    %5590 = vmatpush.msra.mxu0 %v4047
    %5591 = vmatpush.msra.mxu0 %v4039
    %5592 = vmatpush.msra.mxu0 %v4031
    %5593 = vmatpush.msra.mxu0 %v4023
    %5594 = vmatpush.msra.mxu0 %v4015
    %5595 = vmatpush.msra.mxu0 %v4007
    %5596 = vmatmul.f32.gmra.mxu0 %v5376
    %v5597 = vpop.f32.mrf.mxu0
    %v5598 = vadd.f32 0.0, %v5597
    %5599 = vdwg.mxu0
    %5600 = vmatpush.msra.mxu0 %v4255
    %5601 = vmatpush.msra.mxu0 %v4247
    %5602 = vmatpush.msra.mxu0 %v4239
    %5603 = vmatpush.msra.mxu0 %v4231
    %5604 = vmatpush.msra.mxu0 %v4223
    %5605 = vmatpush.msra.mxu0 %v4215
    %5606 = vmatpush.msra.mxu0 %v4207
    %5607 = vmatpush.msra.mxu0 %v4199
    %5608 = vmatpush.msra.mxu0 %v4191
    %5609 = vmatpush.msra.mxu0 %v4183
    %5610 = vmatpush.msra.mxu0 %v4175
    %5611 = vmatpush.msra.mxu0 %v4167
    %5612 = vmatpush.msra.mxu0 %v4159
    %5613 = vmatpush.msra.mxu0 %v4151
    %5614 = vmatpush.msra.mxu0 %v4143
    %5615 = vmatpush.msra.mxu0 %v4135
    %5616 = vmatmul.f32.gmra.mxu0 %v5377
    %v5617 = vpop.f32.mrf.mxu0
    %v5618 = vadd.f32 %v5598, %v5617
    %5619 = vdwg.mxu0
    %5620 = vmatpush.msra.mxu0 %v4128
    %5621 = vmatpush.msra.mxu0 %v4120
    %5622 = vmatpush.msra.mxu0 %v4112
    %5623 = vmatpush.msra.mxu0 %v4104
    %5624 = vmatpush.msra.mxu0 %v4096
    %5625 = vmatpush.msra.mxu0 %v4088
    %5626 = vmatpush.msra.mxu0 %v4080
    %5627 = vmatpush.msra.mxu0 %v4072
    %5628 = vmatpush.msra.mxu0 %v4064
    %5629 = vmatpush.msra.mxu0 %v4056
    %5630 = vmatpush.msra.mxu0 %v4048
    %5631 = vmatpush.msra.mxu0 %v4040
    %5632 = vmatpush.msra.mxu0 %v4032
    %5633 = vmatpush.msra.mxu0 %v4024
    %5634 = vmatpush.msra.mxu0 %v4016
    %5635 = vmatpush.msra.mxu0 %v4008
    %5636 = vmatmul.f32.gmra.mxu0 %v5376
    %v5637 = vpop.f32.mrf.mxu0
    %v5638 = vadd.f32 0.0, %v5637
    %5639 = vdwg.mxu0
    %5640 = vmatpush.msra.mxu0 %v4256
    %5641 = vmatpush.msra.mxu0 %v4248
    %5642 = vmatpush.msra.mxu0 %v4240
    %5643 = vmatpush.msra.mxu0 %v4232
    %5644 = vmatpush.msra.mxu0 %v4224
    %5645 = vmatpush.msra.mxu0 %v4216
    %5646 = vmatpush.msra.mxu0 %v4208
    %5647 = vmatpush.msra.mxu0 %v4200
    %5648 = vmatpush.msra.mxu0 %v4192
    %5649 = vmatpush.msra.mxu0 %v4184
    %5650 = vmatpush.msra.mxu0 %v4176
    %5651 = vmatpush.msra.mxu0 %v4168
    %5652 = vmatpush.msra.mxu0 %v4160
    %5653 = vmatpush.msra.mxu0 %v4152
    %5654 = vmatpush.msra.mxu0 %v4144
    %5655 = vmatpush.msra.mxu0 %v4136
    %5656 = vmatmul.f32.gmra.mxu0 %v5377
    %v5657 = vpop.f32.mrf.mxu0
    %v5658 = vadd.f32 %v5638, %v5657
    %5659 = vdwg.mxu0
    %5660 = vmatpush.msra.mxu0 %v4129
    %5661 = vmatpush.msra.mxu0 %v4121
    %5662 = vmatpush.msra.mxu0 %v4113
    %5663 = vmatpush.msra.mxu0 %v4105
    %5664 = vmatpush.msra.mxu0 %v4097
    %5665 = vmatpush.msra.mxu0 %v4089
    %5666 = vmatpush.msra.mxu0 %v4081
    %5667 = vmatpush.msra.mxu0 %v4073
    %5668 = vmatpush.msra.mxu0 %v4065
    %5669 = vmatpush.msra.mxu0 %v4057
    %5670 = vmatpush.msra.mxu0 %v4049
    %5671 = vmatpush.msra.mxu0 %v4041
    %5672 = vmatpush.msra.mxu0 %v4033
    %5673 = vmatpush.msra.mxu0 %v4025
    %5674 = vmatpush.msra.mxu0 %v4017
    %5675 = vmatpush.msra.mxu0 %v4009
    %5676 = vmatmul.f32.gmra.mxu0 %v5376
    %v5677 = vpop.f32.mrf.mxu0
    %v5678 = vadd.f32 0.0, %v5677
    %5679 = vdwg.mxu0
    %5680 = vmatpush.msra.mxu0 %v4257
    %5681 = vmatpush.msra.mxu0 %v4249
    %5682 = vmatpush.msra.mxu0 %v4241
    %5683 = vmatpush.msra.mxu0 %v4233
    %5684 = vmatpush.msra.mxu0 %v4225
    %5685 = vmatpush.msra.mxu0 %v4217
    %5686 = vmatpush.msra.mxu0 %v4209
    %5687 = vmatpush.msra.mxu0 %v4201
    %5688 = vmatpush.msra.mxu0 %v4193
    %5689 = vmatpush.msra.mxu0 %v4185
    %5690 = vmatpush.msra.mxu0 %v4177
    %5691 = vmatpush.msra.mxu0 %v4169
    %5692 = vmatpush.msra.mxu0 %v4161
    %5693 = vmatpush.msra.mxu0 %v4153
    %5694 = vmatpush.msra.mxu0 %v4145
    %5695 = vmatpush.msra.mxu0 %v4137
    %5696 = vmatmul.f32.gmra.mxu0 %v5377
    %v5697 = vpop.f32.mrf.mxu0
    %v5698 = vadd.f32 %v5678, %v5697
    %5699 = vdwg.mxu0
    %v5700 = vld [vmem:[#allocation2 + $0xc0] sm:$0xff]
    %v5701 = vld [vmem:[#allocation2 + $0xc8] sm:$0xff]
    %v5702 = vld [vmem:[#allocation2 + $0xd0] sm:$0xff]
    %v5703 = vld [vmem:[#allocation2 + $0xd8] sm:$0xff]
    %v5704 = vadd.f32 %v5418, %v5700
    %v5705 = vadd.f32 %v5458, %v5701
    %v5706 = vadd.f32 %v5498, %v5702
    %v5707 = vadd.f32 %v5538, %v5703
    %v5708 = vld [vmem:[#allocation2 + $0x20] sm:$0xff]
    %v5709 = vld [vmem:[#allocation2 + $0x28] sm:$0xff]
    %v5710 = vld [vmem:[#allocation2 + $0x30] sm:$0xff]
    %v5711 = vld [vmem:[#allocation2 + $0x38] sm:$0xff]
    %v5712 = vadd.f32 %v5578, %v5708
    %v5713 = vadd.f32 %v5618, %v5709
    %v5714 = vadd.f32 %v5658, %v5710
    %v5715 = vadd.f32 %v5698, %v5711
    %v5716 = vmul.f32 %v5704, 0.5
    %v5717 = vmul.f32 %v5705, 0.5
    %v5718 = vmul.f32 %v5706, 0.5
    %v5719 = vmul.f32 %v5712, 0.5
    %v5720 = vmul.f32 %v5713, 0.5
    %v5721 = vmul.f32 %v5714, 0.5
    %v5722 = vtanh.pop %v5716
    %v5723 = vtanh.pop %v5717
    %v5724 = vtanh.pop %v5718
    %v5725 = vtanh.pop %v5719
    %v5726 = vtanh.pop %v5720
    %v5727 = vtanh.pop %v5721
    %v5728 = vmul.f32 %v5722, 0.5
    %v5729 = vmul.f32 %v5723, 0.5
    %v5730 = vmul.f32 %v5724, 0.5
    %v5731 = vmul.f32 %v5725, 0.5
    %v5732 = vmul.f32 %v5726, 0.5
    %v5733 = vmul.f32 %v5727, 0.5
    %v5734 = vadd.f32 %v5728, 0.5
    %v5735 = vadd.f32 %v5729, 0.5
    %v5736 = vadd.f32 %v5730, 0.5
    %v5737 = vadd.f32 %v5731, 0.5
    %v5738 = vadd.f32 %v5732, 0.5
    %v5739 = vadd.f32 %v5733, 0.5
    %v5740 = vtanh.pop %v5707
    %v5741 = vtanh.pop %v5715
    %v5742 = vmul.f32 %v5735, %v5372
    %v5743 = vmul.f32 %v5738, %v5373
    %v5744 = vmul.f32 %v5734, %v5740
    %v5745 = vmul.f32 %v5737, %v5741
    %v5746 = vadd.f32 %v5742, %v5744
    %v5747 = vadd.f32 %v5743, %v5745
    %v5748 = vtanh.pop %v5746
    %v5749 = vtanh.pop %v5747
    %v5750 = vmul.f32 %v5736, %v5748
    %v5751 = vmul.f32 %v5739, %v5749
    %5752 = vst [vmem:[#allocation5 + $0x18] sm:$0xff] %v5750
    %5753 = vst [vmem:[#allocation6] sm:$0xff] %v5751
    %v5754 = vld [vmem:[#allocation5] sm:$0xff]
    %v5755 = vld [vmem:[#allocation5 + $0x8] sm:$0xff]
    %v5756 = vld [vmem:[#allocation5 + $0x10] sm:$0xff]
    %v5757 = vld [vmem:[#allocation5 + $0x18] sm:$0xff]
    %v5758 = vld [vmem:[#allocation6] sm:$0xff]
    %v5759 = vld [vmem:[#allocation6 + $0x8] sm:$0xff]
    %v5760 = vld [vmem:[#allocation6 + $0x10] sm:$0xff]
    %v5761 = vld [vmem:[#allocation6 + $0x18] sm:$0xff]
    %v5762 = vld [vmem:[#allocation32] sm:$0xff]
    %v5763 = vld [vmem:[#allocation32 + $0x8] sm:$0xff]
    %v5764 = vld [vmem:[#allocation32 + $0x10] sm:$0xff]
    %v5765 = vld [vmem:[#allocation32 + $0x18] sm:$0xff]
    %v5766 = vld [vmem:[#allocation32 + $0x20] sm:$0xff]
    %v5767 = vld [vmem:[#allocation32 + $0x28] sm:$0xff]
    %v5768 = vld [vmem:[#allocation32 + $0x30] sm:$0xff]
    %v5769 = vld [vmem:[#allocation32 + $0x38] sm:$0xff]
    %v5770 = vld [vmem:[#allocation32 + $0x40] sm:$0xff]
    %v5771 = vld [vmem:[#allocation32 + $0x48] sm:$0xff]
    %v5772 = vld [vmem:[#allocation32 + $0x50] sm:$0xff]
    %v5773 = vld [vmem:[#allocation32 + $0x58] sm:$0xff]
    %v5774 = vld [vmem:[#allocation32 + $0x60] sm:$0xff]
    %v5775 = vld [vmem:[#allocation32 + $0x68] sm:$0xff]
    %v5776 = vld [vmem:[#allocation32 + $0x70] sm:$0xff]
    %v5777 = vld [vmem:[#allocation32 + $0x78] sm:$0xff]
    %v5778 = vld [vmem:[#allocation32 + $0x80] sm:$0xff]
    %v5779 = vld [vmem:[#allocation32 + $0x88] sm:$0xff]
    %v5780 = vld [vmem:[#allocation32 + $0x90] sm:$0xff]
    %v5781 = vld [vmem:[#allocation32 + $0x98] sm:$0xff]
    %v5782 = vld [vmem:[#allocation32 + $0xa0] sm:$0xff]
    %v5783 = vld [vmem:[#allocation32 + $0xa8] sm:$0xff]
    %v5784 = vld [vmem:[#allocation32 + $0xb0] sm:$0xff]
    %v5785 = vld [vmem:[#allocation32 + $0xb8] sm:$0xff]
    %v5786 = vld [vmem:[#allocation32 + $0xc0] sm:$0xff]
    %v5787 = vld [vmem:[#allocation32 + $0xc8] sm:$0xff]
    %v5788 = vld [vmem:[#allocation32 + $0xd0] sm:$0xff]
    %v5789 = vld [vmem:[#allocation32 + $0xd8] sm:$0xff]
    %v5790 = vld [vmem:[#allocation32 + $0xe0] sm:$0xff]
    %v5791 = vld [vmem:[#allocation32 + $0xe8] sm:$0xff]
    %v5792 = vld [vmem:[#allocation32 + $0xf0] sm:$0xff]
    %v5793 = vld [vmem:[#allocation32 + $0xf8] sm:$0xff]
    %v5794 = vld [vmem:[%s12] sm:$0x1]
    %v5796 = vperm.slane %v5794, 0
    %5798 = vmatpush.msra.mxu0 %v5777
    %5799 = vmatpush.msra.mxu0 %v5776
    %5800 = vmatpush.msra.mxu0 %v5775
    %5801 = vmatpush.msra.mxu0 %v5774
    %5802 = vmatpush.msra.mxu0 %v5773
    %5803 = vmatpush.msra.mxu0 %v5772
    %5804 = vmatpush.msra.mxu0 %v5771
    %5805 = vmatpush.msra.mxu0 %v5770
    %5806 = vmatpush.msra.mxu0 %v5769
    %5807 = vmatpush.msra.mxu0 %v5768
    %5808 = vmatpush.msra.mxu0 %v5767
    %5809 = vmatpush.msra.mxu0 %v5766
    %5810 = vmatpush.msra.mxu0 %v5765
    %5811 = vmatpush.msra.mxu0 %v5764
    %5812 = vmatpush.msra.mxu0 %v5763
    %5813 = vmatpush.msra.mxu0 %v5762
    %5814 = vmatmul.f32.gmra.mxu0 %v5754
    %v5815 = vpop.f32.mrf.mxu0
    %v5816 = vadd.f32 %v5796, %v5815
    %5817 = vmatmul.f32.gmra.mxu0 %v5755
    %v5818 = vpop.f32.mrf.mxu0
    %v5819 = vadd.f32 %v5796, %v5818
    %5820 = vmatmul.f32.gmra.mxu0 %v5756
    %v5821 = vpop.f32.mrf.mxu0
    %v5822 = vadd.f32 %v5796, %v5821
    %5823 = vmatmul.f32.gmra.mxu0 %v5757
    %v5824 = vpop.f32.mrf.mxu0
    %v5825 = vadd.f32 %v5796, %v5824
    %5826 = vdwg.mxu0
    %5827 = vmatpush.msra.mxu0 %v5793
    %5828 = vmatpush.msra.mxu0 %v5792
    %5829 = vmatpush.msra.mxu0 %v5791
    %5830 = vmatpush.msra.mxu0 %v5790
    %5831 = vmatpush.msra.mxu0 %v5789
    %5832 = vmatpush.msra.mxu0 %v5788
    %5833 = vmatpush.msra.mxu0 %v5787
    %5834 = vmatpush.msra.mxu0 %v5786
    %5835 = vmatpush.msra.mxu0 %v5785
    %5836 = vmatpush.msra.mxu0 %v5784
    %5837 = vmatpush.msra.mxu0 %v5783
    %5838 = vmatpush.msra.mxu0 %v5782
    %5839 = vmatpush.msra.mxu0 %v5781
    %5840 = vmatpush.msra.mxu0 %v5780
    %5841 = vmatpush.msra.mxu0 %v5779
    %5842 = vmatpush.msra.mxu0 %v5778
    %5843 = vmatmul.f32.gmra.mxu0 %v5758
    %v5844 = vpop.f32.mrf.mxu0
    %v5845 = vadd.f32 %v5816, %v5844
    %5846 = vmatmul.f32.gmra.mxu0 %v5759
    %v5847 = vpop.f32.mrf.mxu0
    %v5848 = vadd.f32 %v5819, %v5847
    %5849 = vmatmul.f32.gmra.mxu0 %v5760
    %v5850 = vpop.f32.mrf.mxu0
    %v5851 = vadd.f32 %v5822, %v5850
    %5852 = vmatmul.f32.gmra.mxu0 %v5761
    %v5853 = vpop.f32.mrf.mxu0
    %v5854 = vadd.f32 %v5825, %v5853
    %5855 = vdwg.mxu0
    %v5856 = vmax.f32 %v5845, 0.0
    %v5857 = vmax.f32 %v5848, 0.0
    %v5858 = vmax.f32 %v5851, 0.0
    %v5859 = vmax.f32 %v5854, 0.0
    %v5860 = vld [vmem:[%s13] sm:$0xff]
    %v5861 = vld [vmem:[%s13 + $0x8] sm:$0xff]
    %v5862 = vld [vmem:[%s13 + $0x10] sm:$0xff]
    %v5863 = vld [vmem:[%s13 + $0x18] sm:$0xff]
    %v5864 = vld [vmem:[%s13 + $0x20] sm:$0xff]
    %v5865 = vld [vmem:[%s13 + $0x28] sm:$0xff]
    %v5866 = vld [vmem:[%s13 + $0x30] sm:$0xff]
    %v5867 = vld [vmem:[%s13 + $0x38] sm:$0xff]
    %v5868 = vld [vmem:[%s13 + $0x40] sm:$0xff]
    %v5869 = vld [vmem:[%s13 + $0x48] sm:$0xff]
    %v5870 = vld [vmem:[%s13 + $0x50] sm:$0xff]
    %v5871 = vld [vmem:[%s13 + $0x58] sm:$0xff]
    %v5872 = vld [vmem:[%s13 + $0x60] sm:$0xff]
    %v5873 = vld [vmem:[%s13 + $0x68] sm:$0xff]
    %v5874 = vld [vmem:[%s13 + $0x70] sm:$0xff]
    %v5875 = vld [vmem:[%s13 + $0x78] sm:$0xff]
    %v5876 = vld [vmem:[%s14] sm:$0x1]
    %v5878 = vperm.slane %v5876, 0
    %5880 = vmatpush.msra.mxu0 %v5875
    %5881 = vmatpush.msra.mxu0 %v5874
    %5882 = vmatpush.msra.mxu0 %v5873
    %5883 = vmatpush.msra.mxu0 %v5872
    %5884 = vmatpush.msra.mxu0 %v5871
    %5885 = vmatpush.msra.mxu0 %v5870
    %5886 = vmatpush.msra.mxu0 %v5869
    %5887 = vmatpush.msra.mxu0 %v5868
    %5888 = vmatpush.msra.mxu0 %v5867
    %5889 = vmatpush.msra.mxu0 %v5866
    %5890 = vmatpush.msra.mxu0 %v5865
    %5891 = vmatpush.msra.mxu0 %v5864
    %5892 = vmatpush.msra.mxu0 %v5863
    %5893 = vmatpush.msra.mxu0 %v5862
    %5894 = vmatpush.msra.mxu0 %v5861
    %5895 = vmatpush.msra.mxu0 %v5860
    %5896 = vmatmul.f32.gmra.mxu0 %v5856
    %v5897 = vpop.f32.mrf.mxu0
    %v5898 = vadd.f32 %v5878, %v5897
    %5899 = vmatmul.f32.gmra.mxu0 %v5857
    %v5900 = vpop.f32.mrf.mxu0
    %v5901 = vadd.f32 %v5878, %v5900
    %5902 = vmatmul.f32.gmra.mxu0 %v5858
    %v5903 = vpop.f32.mrf.mxu0
    %v5904 = vadd.f32 %v5878, %v5903
    %5905 = vmatmul.f32.gmra.mxu0 %v5859
    %v5906 = vpop.f32.mrf.mxu0
    %v5907 = vadd.f32 %v5878, %v5906
    %5908 = vdwg.mxu0
    %v5909 = vmax.f32 %v5898, 0.0
    %v5910 = vmax.f32 %v5901, 0.0
    %v5911 = vmax.f32 %v5904, 0.0
    %v5912 = vmax.f32 %v5907, 0.0
    %v5913 = vld [vmem:[#allocation34] sm:$0xff]
    %v5914 = vld [vmem:[#allocation34 + $0x8] sm:$0xff]
    %v5915 = vld [vmem:[#allocation34 + $0x10] sm:$0xff]
    %v5916 = vld [vmem:[#allocation34 + $0x18] sm:$0xff]
    %v5917 = vld [vmem:[#allocation34 + $0x20] sm:$0xff]
    %v5918 = vld [vmem:[#allocation34 + $0x28] sm:$0xff]
    %v5919 = vld [vmem:[#allocation34 + $0x30] sm:$0xff]
    %v5920 = vld [vmem:[#allocation34 + $0x38] sm:$0xff]
    %v5921 = vld [vmem:[#allocation34 + $0x40] sm:$0xff]
    %v5922 = vld [vmem:[#allocation34 + $0x48] sm:$0xff]
    %v5923 = vld [vmem:[#allocation34 + $0x50] sm:$0xff]
    %v5924 = vld [vmem:[#allocation34 + $0x58] sm:$0xff]
    %v5925 = vld [vmem:[#allocation34 + $0x60] sm:$0xff]
    %v5926 = vld [vmem:[#allocation34 + $0x68] sm:$0xff]
    %v5927 = vld [vmem:[#allocation34 + $0x70] sm:$0xff]
    %v5928 = vld [vmem:[#allocation34 + $0x78] sm:$0xff]
    %v5929 = vld [vmem:[%s16] sm:$0x1]
    %v5931 = vperm.slane %v5929, 0
    %5933 = vmatpush.msra.mxu0 %v5928
    %5934 = vmatpush.msra.mxu0 %v5927
    %5935 = vmatpush.msra.mxu0 %v5926
    %5936 = vmatpush.msra.mxu0 %v5925
    %5937 = vmatpush.msra.mxu0 %v5924
    %5938 = vmatpush.msra.mxu0 %v5923
    %5939 = vmatpush.msra.mxu0 %v5922
    %5940 = vmatpush.msra.mxu0 %v5921
    %5941 = vmatpush.msra.mxu0 %v5920
    %5942 = vmatpush.msra.mxu0 %v5919
    %5943 = vmatpush.msra.mxu0 %v5918
    %5944 = vmatpush.msra.mxu0 %v5917
    %5945 = vmatpush.msra.mxu0 %v5916
    %5946 = vmatpush.msra.mxu0 %v5915
    %5947 = vmatpush.msra.mxu0 %v5914
    %5948 = vmatpush.msra.mxu0 %v5913
    %5949 = vmatmul.f32.gmra.mxu0 %v5909
    %v5950 = vpop.f32.mrf.mxu0
    %v5951 = vadd.f32 %v5931, %v5950
    %5952 = vmatmul.f32.gmra.mxu0 %v5910
    %v5953 = vpop.f32.mrf.mxu0
    %v5954 = vadd.f32 %v5931, %v5953
    %5955 = vmatmul.f32.gmra.mxu0 %v5911
    %v5956 = vpop.f32.mrf.mxu0
    %v5957 = vadd.f32 %v5931, %v5956
    %5958 = vmatmul.f32.gmra.mxu0 %v5912
    %v5959 = vpop.f32.mrf.mxu0
    %v5960 = vadd.f32 %v5931, %v5959
    %5961 = vdwg.mxu0
    %5962 = vst [vmem:[%s22] sm:$0xff] %v5951
    %5963 = vst [vmem:[%s22 + $0x8] sm:$0xff] %v5954
    %5964 = vst [vmem:[%s22 + $0x10] sm:$0xff] %v5957
    %5965 = vst [vmem:[%s22 + $0x18] sm:$0xff] %v5960
    // Predicated region
    $region106: #{model_forward_pallas.2} parent=1 // pred_check
      _
    $region107: #{model_forward_pallas.2} parent=1 // pred_check_branch
      %5967 = sbr.rel (0) target = $region109
    $region108: #{model_forward_pallas.2} parent=1 // pred_region
      _
    $region109: #{model_forward_pallas.2} parent=1 // pred_fallthru
      _
    // Predicated region
    $region110: #{model_forward_pallas.2} parent=1 // pred_check
      _
    $region111: #{model_forward_pallas.2} parent=1 // pred_check_branch
      %5969 = sbr.rel (0) target = $region113
    $region112: #{model_forward_pallas.2} parent=1 // pred_region
      _
    $region113: #{model_forward_pallas.2} parent=1 // pred_fallthru
      _
    %5970 = vsyncpa [#allocation28], 1
    %5971 = vsyncpa [#allocation30], 1
    %5972 = vsyncpa [#allocation33], 1

</llo_original>
